<compile_context>
chip_gen: v6e
topology: v6e:2x2x1
jax: 0.10.0
libtpu: 0.0.40
codegen_flags: <defaults>
</compile_context>

<pallas_src>
import math

import numpy as np
import jax
import jax.numpy as jnp
from jax import lax
from jax.experimental import pallas as pl
from jax.experimental.pallas import tpu as pltpu


def _sds(start, size, stride):
    """Slice helper: unit-stride pl.ds for stride 1, strided pl.ds otherwise."""
    return pl.ds(start, size) if stride == 1 else pl.ds(start, size, stride)


def _make_kernel(H, W, Cin, Co, Ho, Wo, stride, equal_in_out, cdt):
    """Fused BasicBlock kernel for ONE batch sample (grid iterates over N)."""

    def kernel(*refs):
        if equal_in_out:
            (x_ref, s1_ref, b1_ref, w1_ref, b2_ref, w2_ref,
             out_ref, pad1, pad2) = refs
            wsc_ref = None
        else:
            (x_ref, s1_ref, b1_ref, w1_ref, b2_ref, w2_ref, wsc_ref,
             out_ref, pad1, pad2) = refs

        x = x_ref[...]                                     # (H, W, Cin) f32

        # --- BN1 (folded scale/bias) + ReLU, f32 on the VPU ----------------
        a1 = jnp.maximum(x * s1_ref[...] + b1_ref[...], 0.0)

        # --- padded act1: single interior write + halo-only zeroing --------
        pad1[1:H + 1, 1:W + 1, :] = a1
        zrow = jnp.zeros((1, W + 2, Cin), pad1.dtype)
        zcol = jnp.zeros((H + 2, 1, Cin), pad1.dtype)
        pad1[0:1, :, :] = zrow
        pad1[H + 1:H + 2, :, :] = zrow
        pad1[:, 0:1, :] = zcol
        pad1[:, W + 1:W + 2, :] = zcol

        # --- conv1: 3x3, stride=stride, padding=1 -> (Ho*Wo, Co) -----------
        # Per-tap MXU matmuls; operands cast to the compute dtype (bf16) so
        # the MXU runs at native rate, accumulation kept in f32.
        # (For very small Cin an im2col fusion to K=9*Cin would feed the MXU
        #  better; per-tap K=Cin is fine at realistic WRN channel counts.)
        def tap1(kh, kw):
            p = pad1[_sds(kh, Ho, stride), _sds(kw, Wo, stride), :]
            return jnp.dot(p.astype(cdt).reshape(Ho * Wo, Cin),
                           w1_ref[kh, kw],
                           preferred_element_type=jnp.float32)

        acc1 = tap1(0, 0)                                  # init from first tap
        for kh in range(3):
            for kw in range(3):
                if (kh, kw) != (0, 0):
                    acc1 = acc1 + tap1(kh, kw)

        # --- BN2: scale already folded into w1; only bias + ReLU here ------
        act2 = jnp.maximum(acc1 + b2_ref[...], 0.0)        # (Ho*Wo, Co) f32
        # TODO(synk): F.dropout for droprate > 0 (training mode) not
        # implemented; default droprate=0.0 makes it a no-op.

        # --- padded act2 ----------------------------------------------------
        pad2[1:Ho + 1, 1:Wo + 1, :] = act2.reshape(Ho, Wo, Co)
        zrow2 = jnp.zeros((1, Wo + 2, Co), pad2.dtype)
        zcol2 = jnp.zeros((Ho + 2, 1, Co), pad2.dtype)
        pad2[0:1, :, :] = zrow2
        pad2[Ho + 1:Ho + 2, :, :] = zrow2
        pad2[:, 0:1, :] = zcol2
        pad2[:, Wo + 1:Wo + 2, :] = zcol2

        # --- conv2: 3x3, stride=1, padding=1 -> (Ho*Wo, Co) ----------------
        def tap2(kh, kw):
            p = pad2[kh:kh + Ho, kw:kw + Wo, :]
            return jnp.dot(p.astype(cdt).reshape(Ho * Wo, Co),
                           w2_ref[kh, kw],
                           preferred_element_type=jnp.float32)

        acc2 = tap2(0, 0)
        for kh in range(3):
            for kw in range(3):
                if (kh, kw) != (0, 0):
                    acc2 = acc2 + tap2(kh, kw)

        # --- residual / shortcut --------------------------------------------
        if equal_in_out:
            short = x.reshape(Ho * Wo, Co)                 # identity on raw x (f32)
        else:
            # 1x1 conv (stride) on relu(bn1(x)), read back (decimated) from pad1
            a1s = pad1[_sds(1, Ho, stride), _sds(1, Wo, stride), :]
            short = jnp.dot(a1s.astype(cdt).reshape(Ho * Wo, Cin),
                            wsc_ref[...],
                            preferred_element_type=jnp.float32)

        out_ref[...] = (short + acc2).reshape(Ho, Wo, Co).astype(out_ref.dtype)

    return kernel


def basic_block_forward(x_nchw, params, stride, equal_in_out,
                        *, compute_dtype=jnp.bfloat16):
    """Pallas forward.  x_nchw: (N, Cin, H, W) f32 -> (N, Co, Ho, Wo) f32."""
    N, Cin, H, W = x_nchw.shape
    w1 = params["w1"]                                      # (3, 3, Cin, Co) HWIO
    Co = w1.shape[-1]
    if equal_in_out:
        assert Cin == Co and stride == 1, "equalInOut requires Cin==Co, stride==1"

    Ho = (H - 1) // stride + 1
    Wo = (W - 1) // stride + 1

    eps = 1e-5
    # BN1 -> per-channel scale / bias (applied in-kernel on the VPU).
    inv1 = params["bn1_gamma"] / jnp.sqrt(params["bn1_var"] + eps)
    s1 = inv1.reshape(1, 1, Cin).astype(jnp.float32)
    b1 = (params["bn1_beta"] - params["bn1_mean"] * inv1).reshape(1, 1, Cin)
    # BN2 -> scale folded into conv1's output channels (conv1 is linear);
    # its bias stays as a per-channel add before the in-kernel ReLU.
    inv2 = params["bn2_gamma"] / jnp.sqrt(params["bn2_var"] + eps)
    w1f = (w1 * inv2.reshape(1, 1, 1, Co)).astype(compute_dtype)
    b2 = (params["bn2_beta"] - params["bn2_mean"] * inv2).reshape(1, Co)
    w2 = params["w2"].astype(compute_dtype)

    x = jnp.transpose(x_nchw, (0, 2, 3, 1)).astype(jnp.float32)   # NCHW -> NHWC

    kernel = _make_kernel(H, W, Cin, Co, Ho, Wo, stride, equal_in_out,
                          compute_dtype)

    inputs = [x, s1, b1, w1f, b2, w2]
    in_specs = [
        pl.BlockSpec((None, H, W, Cin), lambda n: (n, 0, 0, 0)),   # per-sample
        pl.BlockSpec((1, 1, Cin), lambda n: (0, 0, 0)),
        pl.BlockSpec((1, 1, Cin), lambda n: (0, 0, 0)),
        pl.BlockSpec((3, 3, Cin, Co), lambda n: (0, 0, 0, 0)),
        pl.BlockSpec((1, Co), lambda n: (0, 0)),
        pl.BlockSpec((3, 3, Co, Co), lambda n: (0, 0, 0, 0)),
    ]
    if not equal_in_out:
        inputs.append(params["wsc"].astype(compute_dtype))          # (Cin, Co)
        in_specs.append(pl.BlockSpec((Cin, Co), lambda n: (0, 0)))

    # VMEM budget: double-buffered per-sample in/out blocks + weights + scratch.
    wbytes = jnp.dtype(compute_dtype).itemsize
    est = (2 * H * W * Cin * 4 + 2 * Ho * Wo * Co * 4
           + (9 * Cin * Co + 9 * Co * Co + Cin * Co) * wbytes
           + ((H + 2) * (W + 2) * Cin + (Ho + 2) * (Wo + 2) * Co) * 4
           + (2 * Cin + 2 * Co) * 4)
    # Explicit scoped-VMEM limit (v5e default is only 16 MiB); cap well below
    # v7x's 64 MiB physical VMEM.
    vmem_limit = int(min(max(4 * est, 32 * 1024 * 1024), 48 * 1024 * 1024))

    out_nhwc = pl.pallas_call(
        kernel,
        out_shape=jax.ShapeDtypeStruct((N, Ho, Wo, Co), jnp.float32),
        grid_spec=pltpu.PrefetchScalarGridSpec(
            num_scalar_prefetch=0,
            grid=(N,),                                     # batch axis
            in_specs=in_specs,
            out_specs=pl.BlockSpec((None, Ho, Wo, Co), lambda n: (n, 0, 0, 0)),
            scratch_shapes=[
                pltpu.VMEM((H + 2, W + 2, Cin), jnp.float32),      # padded act1
                pltpu.VMEM((Ho + 2, Wo + 2, Co), jnp.float32),     # padded act2
            ]),
        compiler_params=pltpu.CompilerParams(
            dimension_semantics=("parallel",),   # shard batch across v7x's 2 TCs
            vmem_limit_bytes=vmem_limit),
    )(*inputs)

    return jnp.transpose(out_nhwc, (0, 3, 1, 2))           # NHWC -> NCHW


# ----------------------------- pure-JAX reference -----------------------------
def basic_block_ref(x, params, stride, equal_in_out):
    eps = 1e-5

    def bn(h, g, b, m, v):
        g, b, m, v = (t.reshape(1, -1, 1, 1) for t in (g, b, m, v))
        return (h - m) / jnp.sqrt(v + eps) * g + b

    def conv(h, w_hwio, s, pad):
        return lax.conv_general_dilated(
            h, w_hwio, (s, s), [(pad, pad), (pad, pad)],
            dimension_numbers=("NCHW", "HWIO", "NCHW"))

    a1 = jax.nn.relu(bn(x, params["bn1_gamma"], params["bn1_beta"],
                        params["bn1_mean"], params["bn1_var"]))
    if equal_in_out:
        sc = x
    else:
        wsc = params["wsc"].reshape(1, 1, *params["wsc"].shape)
        sc = conv(a1, wsc, stride, 0)
    h = conv(a1, params["w1"], stride, 1)
    h = jax.nn.relu(bn(h, params["bn2_gamma"], params["bn2_beta"],
                       params["bn2_mean"], params["bn2_var"]))
    h = conv(h, params["w2"], 1, 1)
    return sc + h


# ----------------------------- deterministic init ------------------------------
def init_params(key, Cin, Co, equal_in_out):
    ks = jax.random.split(key, 12)
    p = {
        "bn1_gamma": jax.random.uniform(ks[0], (Cin,), jnp.float32, 0.5, 1.5),
        "bn1_beta":  0.1 * jax.random.normal(ks[1], (Cin,), jnp.float32),
        "bn1_mean":  0.1 * jax.random.normal(ks[2], (Cin,), jnp.float32),
        "bn1_var":   jax.random.uniform(ks[3], (Cin,), jnp.float32, 0.5, 1.5),
        "bn2_gamma": jax.random.uniform(ks[4], (Co,), jnp.float32, 0.5, 1.5),
        "bn2_beta":  0.1 * jax.random.normal(ks[5], (Co,), jnp.float32),
        "bn2_mean":  0.1 * jax.random.normal(ks[6], (Co,), jnp.float32),
        "bn2_var":   jax.random.uniform(ks[7], (Co,), jnp.float32, 0.5, 1.5),
        "w1": jax.random.normal(ks[8], (3, 3, Cin, Co), jnp.float32)
              * math.sqrt(2.0 / (9 * Cin)),
        "w2": jax.random.normal(ks[9], (3, 3, Co, Co), jnp.float32)
              * math.sqrt(2.0 / (9 * Co)),
    }
    if not equal_in_out:
        p["wsc"] = jax.random.normal(ks[10], (Cin, Co), jnp.float32) \
                   * math.sqrt(2.0 / Cin)
    return p


if __name__ == "__main__":
    key = jax.random.PRNGKey(0)
    kx, kp1, kp2 = jax.random.split(key, 3)

    N, Cin, Co, H, W, stride = 2, 4, 8, 16, 16, 1
    x = jax.random.normal(kx, (N, Cin, H, W), jnp.float32)

    # Case 1: in_planes != out_planes -> 1x1 conv shortcut branch
    params = init_params(kp1, Cin, Co, equal_in_out=False)
    y_ref = basic_block_ref(x, params, stride, False)

    # fp32 compute path: exact check of the fused structure
    y32 = jax.block_until_ready(
        basic_block_forward(x, params, stride, False, compute_dtype=jnp.float32))
    assert y32.shape == (N, Co, H, W)
    np.testing.assert_allclose(np.asarray(y32), np.asarray(y_ref),
                               atol=1e-4, rtol=1e-4)

    # default bf16-MXU path (fp32 accumulation): relaxed tolerance
    ybf = jax.block_until_ready(basic_block_forward(x, params, stride, False))
    np.testing.assert_allclose(np.asarray(ybf), np.asarray(y_ref),
                               atol=1.5e-1, rtol=5e-2)

    # Case 2: in_planes == out_planes -> identity shortcut branch
    params_eq = init_params(kp2, Cin, Cin, equal_in_out=True)
    y2_ref = basic_block_ref(x, params_eq, 1, True)

    y2_32 = jax.block_until_ready(
        basic_block_forward(x, params_eq, 1, True, compute_dtype=jnp.float32))
    np.testing.assert_allclose(np.asarray(y2_32), np.asarray(y2_ref),
                               atol=1e-4, rtol=1e-4)

    y2_bf = jax.block_until_ready(basic_block_forward(x, params_eq, 1, True))
    np.testing.assert_allclose(np.asarray(y2_bf), np.asarray(y2_ref),
                               atol=1.5e-1, rtol=5e-2)

    print("KERNEL_OK")
</pallas_src>

<mosaic_0001>
module attributes {stable_mosaic.version = 11 : i64} {
  func.func @kernel(%arg0: i32, %arg1: memref<1x16x16x4xf32, #tpu.memory_space<vmem>>, %arg2: memref<1x1x4xf32, #tpu.memory_space<vmem>>, %arg3: memref<1x1x4xf32, #tpu.memory_space<vmem>>, %arg4: memref<3x3x4x8xf32, #tpu.memory_space<vmem>>, %arg5: memref<1x8xf32, #tpu.memory_space<vmem>>, %arg6: memref<3x3x8x8xf32, #tpu.memory_space<vmem>>, %arg7: memref<4x8xf32, #tpu.memory_space<vmem>>, %arg8: memref<1x16x16x8xf32, #tpu.memory_space<vmem>>, %arg9: memref<18x18x4xf32, #tpu.memory_space<vmem>>, %arg10: memref<18x18x8xf32, #tpu.memory_space<vmem>>) attributes {dimension_semantics = [#tpu.dimension_semantics<parallel>], iteration_bounds = array<i64: 2>, scalar_prefetch = 0 : i64, scratch_operands = 2 : i64, tpu.core_type = #tpu.core_type<tc>, window_params = [{transform_indices = @transform_0, window_bounds = array<i64: 1, 16, 16, 4>}, {pipeline_mode = #tpu.pipeline_mode<synchronous>, transform_indices = @transform_1, window_bounds = array<i64: 1, 1, 4>}, {pipeline_mode = #tpu.pipeline_mode<synchronous>, transform_indices = @transform_2, window_bounds = array<i64: 1, 1, 4>}, {pipeline_mode = #tpu.pipeline_mode<synchronous>, transform_indices = @transform_3, window_bounds = array<i64: 3, 3, 4, 8>}, {pipeline_mode = #tpu.pipeline_mode<synchronous>, transform_indices = @transform_4, window_bounds = array<i64: 1, 8>}, {pipeline_mode = #tpu.pipeline_mode<synchronous>, transform_indices = @transform_5, window_bounds = array<i64: 3, 3, 8, 8>}, {pipeline_mode = #tpu.pipeline_mode<synchronous>, transform_indices = @transform_6, window_bounds = array<i64: 4, 8>}, {transform_indices = @transform_7, window_bounds = array<i64: 1, 16, 16, 8>}]} {
    %c0 = arith.constant 0 : index
    %c0_0 = arith.constant 0 : index
    %c0_1 = arith.constant 0 : index
    %c0_2 = arith.constant 0 : index
    %0 = vector.load %arg1[%c0, %c0_0, %c0_1, %c0_2] : memref<1x16x16x4xf32, #tpu.memory_space<vmem>>, vector<1x16x16x4xf32>
    %1 = vector.shape_cast %0 : vector<1x16x16x4xf32> to vector<16x16x4xf32>
    %c0_3 = arith.constant 0 : index
    %c0_4 = arith.constant 0 : index
    %c0_5 = arith.constant 0 : index
    %2 = vector.load %arg2[%c0_3, %c0_4, %c0_5] : memref<1x1x4xf32, #tpu.memory_space<vmem>>, vector<1x1x4xf32>
    %3 = vector.broadcast %2 : vector<1x1x4xf32> to vector<16x16x4xf32>
    %4 = arith.mulf %1, %3 : vector<16x16x4xf32>
    %c0_6 = arith.constant 0 : index
    %c0_7 = arith.constant 0 : index
    %c0_8 = arith.constant 0 : index
    %5 = vector.load %arg3[%c0_6, %c0_7, %c0_8] : memref<1x1x4xf32, #tpu.memory_space<vmem>>, vector<1x1x4xf32>
    %6 = vector.broadcast %5 : vector<1x1x4xf32> to vector<16x16x4xf32>
    %7 = arith.addf %4, %6 : vector<16x16x4xf32>
    %cst = arith.constant 0.000000e+00 : f32
    %8 = vector.broadcast %cst : f32 to vector<16x16x4xf32>
    %9 = arith.maximumf %7, %8 : vector<16x16x4xf32>
    %c1 = arith.constant 1 : index
    %c1_9 = arith.constant 1 : index
    %c0_10 = arith.constant 0 : index
    %10 = vector.load %arg9[%c1, %c1_9, %c0_10] : memref<18x18x4xf32, #tpu.memory_space<vmem>>, vector<16x16x4xf32>
    tpu.vector_store %arg9[%c1, %c1_9, %c0_10], %9 {strides = array<i32>} : memref<18x18x4xf32, #tpu.memory_space<vmem>>, vector<16x16x4xf32>,
    %cst_11 = arith.constant 0.000000e+00 : f32
    %11 = vector.broadcast %cst_11 : f32 to vector<1x18x4xf32>
    %cst_12 = arith.constant 0.000000e+00 : f32
    %12 = vector.broadcast %cst_12 : f32 to vector<18x1x4xf32>
    %c0_13 = arith.constant 0 : index
    %c0_14 = arith.constant 0 : index
    %c0_15 = arith.constant 0 : index
    %13 = vector.load %arg9[%c0_13, %c0_14, %c0_15] : memref<18x18x4xf32, #tpu.memory_space<vmem>>, vector<1x18x4xf32>
    tpu.vector_store %arg9[%c0_13, %c0_14, %c0_15], %11 {strides = array<i32>} : memref<18x18x4xf32, #tpu.memory_space<vmem>>, vector<1x18x4xf32>,
    %c17 = arith.constant 17 : index
    %c0_16 = arith.constant 0 : index
    %c0_17 = arith.constant 0 : index
    %14 = vector.load %arg9[%c17, %c0_16, %c0_17] : memref<18x18x4xf32, #tpu.memory_space<vmem>>, vector<1x18x4xf32>
    tpu.vector_store %arg9[%c17, %c0_16, %c0_17], %11 {strides = array<i32>} : memref<18x18x4xf32, #tpu.memory_space<vmem>>, vector<1x18x4xf32>,
    %c0_18 = arith.constant 0 : index
    %c0_19 = arith.constant 0 : index
    %c0_20 = arith.constant 0 : index
    %15 = vector.load %arg9[%c0_18, %c0_19, %c0_20] : memref<18x18x4xf32, #tpu.memory_space<vmem>>, vector<18x1x4xf32>
    tpu.vector_store %arg9[%c0_18, %c0_19, %c0_20], %12 {strides = array<i32>} : memref<18x18x4xf32, #tpu.memory_space<vmem>>, vector<18x1x4xf32>,
    %c0_21 = arith.constant 0 : index
    %c17_22 = arith.constant 17 : index
    %c0_23 = arith.constant 0 : index
    %16 = vector.load %arg9[%c0_21, %c17_22, %c0_23] : memref<18x18x4xf32, #tpu.memory_space<vmem>>, vector<18x1x4xf32>
    tpu.vector_store %arg9[%c0_21, %c17_22, %c0_23], %12 {strides = array<i32>} : memref<18x18x4xf32, #tpu.memory_space<vmem>>, vector<18x1x4xf32>,
    %c0_24 = arith.constant 0 : index
    %c0_25 = arith.constant 0 : index
    %c0_26 = arith.constant 0 : index
    %17 = vector.load %arg9[%c0_24, %c0_25, %c0_26] : memref<18x18x4xf32, #tpu.memory_space<vmem>>, vector<16x16x4xf32>
    %18 = vector.shape_cast %17 : vector<16x16x4xf32> to vector<256x4xf32>
    %c0_27 = arith.constant 0 : index
    %c0_28 = arith.constant 0 : index
    %c0_29 = arith.constant 0 : index
    %c0_30 = arith.constant 0 : index
    %19 = vector.load %arg4[%c0_27, %c0_28, %c0_29, %c0_30] : memref<3x3x4x8xf32, #tpu.memory_space<vmem>>, vector<1x1x4x8xf32>
    %20 = vector.shape_cast %19 : vector<1x1x4x8xf32> to vector<4x8xf32>
    %cst_31 = arith.constant dense<0.000000e+00> : vector<256x8xf32>
    %21 = tpu.matmul %18, %20, %cst_31 {dimension_numbers = #tpu.dot_dimension_numbers<[1], [0], [0], [1], [0, 0, 1, 1], [], []>} : vector<256x4xf32>, vector<4x8xf32>, vector<256x8xf32> -> vector<256x8xf32>
    %c0_32 = arith.constant 0 : index
    %c1_33 = arith.constant 1 : index
    %c0_34 = arith.constant 0 : index
    %22 = vector.load %arg9[%c0_32, %c1_33, %c0_34] : memref<18x18x4xf32, #tpu.memory_space<vmem>>, vector<16x16x4xf32>
    %23 = vector.shape_cast %22 : vector<16x16x4xf32> to vector<256x4xf32>
    %c0_35 = arith.constant 0 : index
    %c1_36 = arith.constant 1 : index
    %c0_37 = arith.constant 0 : index
    %c0_38 = arith.constant 0 : index
    %24 = vector.load %arg4[%c0_35, %c1_36, %c0_37, %c0_38] : memref<3x3x4x8xf32, #tpu.memory_space<vmem>>, vector<1x1x4x8xf32>
    %25 = vector.shape_cast %24 : vector<1x1x4x8xf32> to vector<4x8xf32>
    %cst_39 = arith.constant dense<0.000000e+00> : vector<256x8xf32>
    %26 = tpu.matmul %23, %25, %cst_39 {dimension_numbers = #tpu.dot_dimension_numbers<[1], [0], [0], [1], [0, 0, 1, 1], [], []>} : vector<256x4xf32>, vector<4x8xf32>, vector<256x8xf32> -> vector<256x8xf32>
    %27 = arith.addf %21, %26 : vector<256x8xf32>
    %c0_40 = arith.constant 0 : index
    %c2 = arith.constant 2 : index
    %c0_41 = arith.constant 0 : index
    %28 = vector.load %arg9[%c0_40, %c2, %c0_41] : memref<18x18x4xf32, #tpu.memory_space<vmem>>, vector<16x16x4xf32>
    %29 = vector.shape_cast %28 : vector<16x16x4xf32> to vector<256x4xf32>
    %c0_42 = arith.constant 0 : index
    %c2_43 = arith.constant 2 : index
    %c0_44 = arith.constant 0 : index
    %c0_45 = arith.constant 0 : index
    %30 = vector.load %arg4[%c0_42, %c2_43, %c0_44, %c0_45] : memref<3x3x4x8xf32, #tpu.memory_space<vmem>>, vector<1x1x4x8xf32>
    %31 = vector.shape_cast %30 : vector<1x1x4x8xf32> to vector<4x8xf32>
    %cst_46 = arith.constant dense<0.000000e+00> : vector<256x8xf32>
    %32 = tpu.matmul %29, %31, %cst_46 {dimension_numbers = #tpu.dot_dimension_numbers<[1], [0], [0], [1], [0, 0, 1, 1], [], []>} : vector<256x4xf32>, vector<4x8xf32>, vector<256x8xf32> -> vector<256x8xf32>
    %33 = arith.addf %27, %32 : vector<256x8xf32>
    %c1_47 = arith.constant 1 : index
    %c0_48 = arith.constant 0 : index
    %c0_49 = arith.constant 0 : index
    %34 = vector.load %arg9[%c1_47, %c0_48, %c0_49] : memref<18x18x4xf32, #tpu.memory_space<vmem>>, vector<16x16x4xf32>
    %35 = vector.shape_cast %34 : vector<16x16x4xf32> to vector<256x4xf32>
    %c1_50 = arith.constant 1 : index
    %c0_51 = arith.constant 0 : index
    %c0_52 = arith.constant 0 : index
    %c0_53 = arith.constant 0 : index
    %36 = vector.load %arg4[%c1_50, %c0_51, %c0_52, %c0_53] : memref<3x3x4x8xf32, #tpu.memory_space<vmem>>, vector<1x1x4x8xf32>
    %37 = vector.shape_cast %36 : vector<1x1x4x8xf32> to vector<4x8xf32>
    %cst_54 = arith.constant dense<0.000000e+00> : vector<256x8xf32>
    %38 = tpu.matmul %35, %37, %cst_54 {dimension_numbers = #tpu.dot_dimension_numbers<[1], [0], [0], [1], [0, 0, 1, 1], [], []>} : vector<256x4xf32>, vector<4x8xf32>, vector<256x8xf32> -> vector<256x8xf32>
    %39 = arith.addf %33, %38 : vector<256x8xf32>
    %c1_55 = arith.constant 1 : index
    %c1_56 = arith.constant 1 : index
    %c0_57 = arith.constant 0 : index
    %40 = vector.load %arg9[%c1_55, %c1_56, %c0_57] : memref<18x18x4xf32, #tpu.memory_space<vmem>>, vector<16x16x4xf32>
    %41 = vector.shape_cast %40 : vector<16x16x4xf32> to vector<256x4xf32>
    %c1_58 = arith.constant 1 : index
    %c1_59 = arith.constant 1 : index
    %c0_60 = arith.constant 0 : index
    %c0_61 = arith.constant 0 : index
    %42 = vector.load %arg4[%c1_58, %c1_59, %c0_60, %c0_61] : memref<3x3x4x8xf32, #tpu.memory_space<vmem>>, vector<1x1x4x8xf32>
    %43 = vector.shape_cast %42 : vector<1x1x4x8xf32> to vector<4x8xf32>
    %cst_62 = arith.constant dense<0.000000e+00> : vector<256x8xf32>
    %44 = tpu.matmul %41, %43, %cst_62 {dimension_numbers = #tpu.dot_dimension_numbers<[1], [0], [0], [1], [0, 0, 1, 1], [], []>} : vector<256x4xf32>, vector<4x8xf32>, vector<256x8xf32> -> vector<256x8xf32>
    %45 = arith.addf %39, %44 : vector<256x8xf32>
    %c1_63 = arith.constant 1 : index
    %c2_64 = arith.constant 2 : index
    %c0_65 = arith.constant 0 : index
    %46 = vector.load %arg9[%c1_63, %c2_64, %c0_65] : memref<18x18x4xf32, #tpu.memory_space<vmem>>, vector<16x16x4xf32>
    %47 = vector.shape_cast %46 : vector<16x16x4xf32> to vector<256x4xf32>
    %c1_66 = arith.constant 1 : index
    %c2_67 = arith.constant 2 : index
    %c0_68 = arith.constant 0 : index
    %c0_69 = arith.constant 0 : index
    %48 = vector.load %arg4[%c1_66, %c2_67, %c0_68, %c0_69] : memref<3x3x4x8xf32, #tpu.memory_space<vmem>>, vector<1x1x4x8xf32>
    %49 = vector.shape_cast %48 : vector<1x1x4x8xf32> to vector<4x8xf32>
    %cst_70 = arith.constant dense<0.000000e+00> : vector<256x8xf32>
    %50 = tpu.matmul %47, %49, %cst_70 {dimension_numbers = #tpu.dot_dimension_numbers<[1], [0], [0], [1], [0, 0, 1, 1], [], []>} : vector<256x4xf32>, vector<4x8xf32>, vector<256x8xf32> -> vector<256x8xf32>
    %51 = arith.addf %45, %50 : vector<256x8xf32>
    %c2_71 = arith.constant 2 : index
    %c0_72 = arith.constant 0 : index
    %c0_73 = arith.constant 0 : index
    %52 = vector.load %arg9[%c2_71, %c0_72, %c0_73] : memref<18x18x4xf32, #tpu.memory_space<vmem>>, vector<16x16x4xf32>
    %53 = vector.shape_cast %52 : vector<16x16x4xf32> to vector<256x4xf32>
    %c2_74 = arith.constant 2 : index
    %c0_75 = arith.constant 0 : index
    %c0_76 = arith.constant 0 : index
    %c0_77 = arith.constant 0 : index
    %54 = vector.load %arg4[%c2_74, %c0_75, %c0_76, %c0_77] : memref<3x3x4x8xf32, #tpu.memory_space<vmem>>, vector<1x1x4x8xf32>
    %55 = vector.shape_cast %54 : vector<1x1x4x8xf32> to vector<4x8xf32>
    %cst_78 = arith.constant dense<0.000000e+00> : vector<256x8xf32>
    %56 = tpu.matmul %53, %55, %cst_78 {dimension_numbers = #tpu.dot_dimension_numbers<[1], [0], [0], [1], [0, 0, 1, 1], [], []>} : vector<256x4xf32>, vector<4x8xf32>, vector<256x8xf32> -> vector<256x8xf32>
    %57 = arith.addf %51, %56 : vector<256x8xf32>
    %c2_79 = arith.constant 2 : index
    %c1_80 = arith.constant 1 : index
    %c0_81 = arith.constant 0 : index
    %58 = vector.load %arg9[%c2_79, %c1_80, %c0_81] : memref<18x18x4xf32, #tpu.memory_space<vmem>>, vector<16x16x4xf32>
    %59 = vector.shape_cast %58 : vector<16x16x4xf32> to vector<256x4xf32>
    %c2_82 = arith.constant 2 : index
    %c1_83 = arith.constant 1 : index
    %c0_84 = arith.constant 0 : index
    %c0_85 = arith.constant 0 : index
    %60 = vector.load %arg4[%c2_82, %c1_83, %c0_84, %c0_85] : memref<3x3x4x8xf32, #tpu.memory_space<vmem>>, vector<1x1x4x8xf32>
    %61 = vector.shape_cast %60 : vector<1x1x4x8xf32> to vector<4x8xf32>
    %cst_86 = arith.constant dense<0.000000e+00> : vector<256x8xf32>
    %62 = tpu.matmul %59, %61, %cst_86 {dimension_numbers = #tpu.dot_dimension_numbers<[1], [0], [0], [1], [0, 0, 1, 1], [], []>} : vector<256x4xf32>, vector<4x8xf32>, vector<256x8xf32> -> vector<256x8xf32>
    %63 = arith.addf %57, %62 : vector<256x8xf32>
    %c2_87 = arith.constant 2 : index
    %c2_88 = arith.constant 2 : index
    %c0_89 = arith.constant 0 : index
    %64 = vector.load %arg9[%c2_87, %c2_88, %c0_89] : memref<18x18x4xf32, #tpu.memory_space<vmem>>, vector<16x16x4xf32>
    %65 = vector.shape_cast %64 : vector<16x16x4xf32> to vector<256x4xf32>
    %c2_90 = arith.constant 2 : index
    %c2_91 = arith.constant 2 : index
    %c0_92 = arith.constant 0 : index
    %c0_93 = arith.constant 0 : index
    %66 = vector.load %arg4[%c2_90, %c2_91, %c0_92, %c0_93] : memref<3x3x4x8xf32, #tpu.memory_space<vmem>>, vector<1x1x4x8xf32>
    %67 = vector.shape_cast %66 : vector<1x1x4x8xf32> to vector<4x8xf32>
    %cst_94 = arith.constant dense<0.000000e+00> : vector<256x8xf32>
    %68 = tpu.matmul %65, %67, %cst_94 {dimension_numbers = #tpu.dot_dimension_numbers<[1], [0], [0], [1], [0, 0, 1, 1], [], []>} : vector<256x4xf32>, vector<4x8xf32>, vector<256x8xf32> -> vector<256x8xf32>
    %69 = arith.addf %63, %68 : vector<256x8xf32>
    %c0_95 = arith.constant 0 : index
    %c0_96 = arith.constant 0 : index
    %70 = vector.load %arg5[%c0_95, %c0_96] : memref<1x8xf32, #tpu.memory_space<vmem>>, vector<1x8xf32>
    %71 = vector.broadcast %70 : vector<1x8xf32> to vector<256x8xf32>
    %72 = arith.addf %69, %71 : vector<256x8xf32>
    %cst_97 = arith.constant 0.000000e+00 : f32
    %73 = vector.broadcast %cst_97 : f32 to vector<256x8xf32>
    %74 = arith.maximumf %72, %73 : vector<256x8xf32>
    %75 = vector.shape_cast %74 : vector<256x8xf32> to vector<16x16x8xf32>
    %c1_98 = arith.constant 1 : index
    %c1_99 = arith.constant 1 : index
    %c0_100 = arith.constant 0 : index
    %76 = vector.load %arg10[%c1_98, %c1_99, %c0_100] : memref<18x18x8xf32, #tpu.memory_space<vmem>>, vector<16x16x8xf32>
    tpu.vector_store %arg10[%c1_98, %c1_99, %c0_100], %75 {strides = array<i32>} : memref<18x18x8xf32, #tpu.memory_space<vmem>>, vector<16x16x8xf32>,
    %cst_101 = arith.constant 0.000000e+00 : f32
    %77 = vector.broadcast %cst_101 : f32 to vector<1x18x8xf32>
    %cst_102 = arith.constant 0.000000e+00 : f32
    %78 = vector.broadcast %cst_102 : f32 to vector<18x1x8xf32>
    %c0_103 = arith.constant 0 : index
    %c0_104 = arith.constant 0 : index
    %c0_105 = arith.constant 0 : index
    %79 = vector.load %arg10[%c0_103, %c0_104, %c0_105] : memref<18x18x8xf32, #tpu.memory_space<vmem>>, vector<1x18x8xf32>
    tpu.vector_store %arg10[%c0_103, %c0_104, %c0_105], %77 {strides = array<i32>} : memref<18x18x8xf32, #tpu.memory_space<vmem>>, vector<1x18x8xf32>,
    %c17_106 = arith.constant 17 : index
    %c0_107 = arith.constant 0 : index
    %c0_108 = arith.constant 0 : index
    %80 = vector.load %arg10[%c17_106, %c0_107, %c0_108] : memref<18x18x8xf32, #tpu.memory_space<vmem>>, vector<1x18x8xf32>
    tpu.vector_store %arg10[%c17_106, %c0_107, %c0_108], %77 {strides = array<i32>} : memref<18x18x8xf32, #tpu.memory_space<vmem>>, vector<1x18x8xf32>,
    %c0_109 = arith.constant 0 : index
    %c0_110 = arith.constant 0 : index
    %c0_111 = arith.constant 0 : index
    %81 = vector.load %arg10[%c0_109, %c0_110, %c0_111] : memref<18x18x8xf32, #tpu.memory_space<vmem>>, vector<18x1x8xf32>
    tpu.vector_store %arg10[%c0_109, %c0_110, %c0_111], %78 {strides = array<i32>} : memref<18x18x8xf32, #tpu.memory_space<vmem>>, vector<18x1x8xf32>,
    %c0_112 = arith.constant 0 : index
    %c17_113 = arith.constant 17 : index
    %c0_114 = arith.constant 0 : index
    %82 = vector.load %arg10[%c0_112, %c17_113, %c0_114] : memref<18x18x8xf32, #tpu.memory_space<vmem>>, vector<18x1x8xf32>
    tpu.vector_store %arg10[%c0_112, %c17_113, %c0_114], %78 {strides = array<i32>} : memref<18x18x8xf32, #tpu.memory_space<vmem>>, vector<18x1x8xf32>,
    %c0_115 = arith.constant 0 : index
    %c0_116 = arith.constant 0 : index
    %c0_117 = arith.constant 0 : index
    %83 = vector.load %arg10[%c0_115, %c0_116, %c0_117] : memref<18x18x8xf32, #tpu.memory_space<vmem>>, vector<16x16x8xf32>
    %84 = vector.shape_cast %83 : vector<16x16x8xf32> to vector<256x8xf32>
    %c0_118 = arith.constant 0 : index
    %c0_119 = arith.constant 0 : index
    %c0_120 = arith.constant 0 : index
    %c0_121 = arith.constant 0 : index
    %85 = vector.load %arg6[%c0_118, %c0_119, %c0_120, %c0_121] : memref<3x3x8x8xf32, #tpu.memory_space<vmem>>, vector<1x1x8x8xf32>
    %86 = vector.shape_cast %85 : vector<1x1x8x8xf32> to vector<8x8xf32>
    %cst_122 = arith.constant dense<0.000000e+00> : vector<256x8xf32>
    %87 = tpu.matmul %84, %86, %cst_122 {dimension_numbers = #tpu.dot_dimension_numbers<[1], [0], [0], [1], [0, 0, 1, 1], [], []>} : vector<256x8xf32>, vector<8x8xf32>, vector<256x8xf32> -> vector<256x8xf32>
    %c0_123 = arith.constant 0 : index
    %c1_124 = arith.constant 1 : index
    %c0_125 = arith.constant 0 : index
    %88 = vector.load %arg10[%c0_123, %c1_124, %c0_125] : memref<18x18x8xf32, #tpu.memory_space<vmem>>, vector<16x16x8xf32>
    %89 = vector.shape_cast %88 : vector<16x16x8xf32> to vector<256x8xf32>
    %c0_126 = arith.constant 0 : index
    %c1_127 = arith.constant 1 : index
    %c0_128 = arith.constant 0 : index
    %c0_129 = arith.constant 0 : index
    %90 = vector.load %arg6[%c0_126, %c1_127, %c0_128, %c0_129] : memref<3x3x8x8xf32, #tpu.memory_space<vmem>>, vector<1x1x8x8xf32>
    %91 = vector.shape_cast %90 : vector<1x1x8x8xf32> to vector<8x8xf32>
    %cst_130 = arith.constant dense<0.000000e+00> : vector<256x8xf32>
    %92 = tpu.matmul %89, %91, %cst_130 {dimension_numbers = #tpu.dot_dimension_numbers<[1], [0], [0], [1], [0, 0, 1, 1], [], []>} : vector<256x8xf32>, vector<8x8xf32>, vector<256x8xf32> -> vector<256x8xf32>
    %93 = arith.addf %87, %92 : vector<256x8xf32>
    %c0_131 = arith.constant 0 : index
    %c2_132 = arith.constant 2 : index
    %c0_133 = arith.constant 0 : index
    %94 = vector.load %arg10[%c0_131, %c2_132, %c0_133] : memref<18x18x8xf32, #tpu.memory_space<vmem>>, vector<16x16x8xf32>
    %95 = vector.shape_cast %94 : vector<16x16x8xf32> to vector<256x8xf32>
    %c0_134 = arith.constant 0 : index
    %c2_135 = arith.constant 2 : index
    %c0_136 = arith.constant 0 : index
    %c0_137 = arith.constant 0 : index
    %96 = vector.load %arg6[%c0_134, %c2_135, %c0_136, %c0_137] : memref<3x3x8x8xf32, #tpu.memory_space<vmem>>, vector<1x1x8x8xf32>
    %97 = vector.shape_cast %96 : vector<1x1x8x8xf32> to vector<8x8xf32>
    %cst_138 = arith.constant dense<0.000000e+00> : vector<256x8xf32>
    %98 = tpu.matmul %95, %97, %cst_138 {dimension_numbers = #tpu.dot_dimension_numbers<[1], [0], [0], [1], [0, 0, 1, 1], [], []>} : vector<256x8xf32>, vector<8x8xf32>, vector<256x8xf32> -> vector<256x8xf32>
    %99 = arith.addf %93, %98 : vector<256x8xf32>
    %c1_139 = arith.constant 1 : index
    %c0_140 = arith.constant 0 : index
    %c0_141 = arith.constant 0 : index
    %100 = vector.load %arg10[%c1_139, %c0_140, %c0_141] : memref<18x18x8xf32, #tpu.memory_space<vmem>>, vector<16x16x8xf32>
    %101 = vector.shape_cast %100 : vector<16x16x8xf32> to vector<256x8xf32>
    %c1_142 = arith.constant 1 : index
    %c0_143 = arith.constant 0 : index
    %c0_144 = arith.constant 0 : index
    %c0_145 = arith.constant 0 : index
    %102 = vector.load %arg6[%c1_142, %c0_143, %c0_144, %c0_145] : memref<3x3x8x8xf32, #tpu.memory_space<vmem>>, vector<1x1x8x8xf32>
    %103 = vector.shape_cast %102 : vector<1x1x8x8xf32> to vector<8x8xf32>
    %cst_146 = arith.constant dense<0.000000e+00> : vector<256x8xf32>
    %104 = tpu.matmul %101, %103, %cst_146 {dimension_numbers = #tpu.dot_dimension_numbers<[1], [0], [0], [1], [0, 0, 1, 1], [], []>} : vector<256x8xf32>, vector<8x8xf32>, vector<256x8xf32> -> vector<256x8xf32>
    %105 = arith.addf %99, %104 : vector<256x8xf32>
    %c1_147 = arith.constant 1 : index
    %c1_148 = arith.constant 1 : index
    %c0_149 = arith.constant 0 : index
    %106 = vector.load %arg10[%c1_147, %c1_148, %c0_149] : memref<18x18x8xf32, #tpu.memory_space<vmem>>, vector<16x16x8xf32>
    %107 = vector.shape_cast %106 : vector<16x16x8xf32> to vector<256x8xf32>
    %c1_150 = arith.constant 1 : index
    %c1_151 = arith.constant 1 : index
    %c0_152 = arith.constant 0 : index
    %c0_153 = arith.constant 0 : index
    %108 = vector.load %arg6[%c1_150, %c1_151, %c0_152, %c0_153] : memref<3x3x8x8xf32, #tpu.memory_space<vmem>>, vector<1x1x8x8xf32>
    %109 = vector.shape_cast %108 : vector<1x1x8x8xf32> to vector<8x8xf32>
    %cst_154 = arith.constant dense<0.000000e+00> : vector<256x8xf32>
    %110 = tpu.matmul %107, %109, %cst_154 {dimension_numbers = #tpu.dot_dimension_numbers<[1], [0], [0], [1], [0, 0, 1, 1], [], []>} : vector<256x8xf32>, vector<8x8xf32>, vector<256x8xf32> -> vector<256x8xf32>
    %111 = arith.addf %105, %110 : vector<256x8xf32>
    %c1_155 = arith.constant 1 : index
    %c2_156 = arith.constant 2 : index
    %c0_157 = arith.constant 0 : index
    %112 = vector.load %arg10[%c1_155, %c2_156, %c0_157] : memref<18x18x8xf32, #tpu.memory_space<vmem>>, vector<16x16x8xf32>
    %113 = vector.shape_cast %112 : vector<16x16x8xf32> to vector<256x8xf32>
    %c1_158 = arith.constant 1 : index
    %c2_159 = arith.constant 2 : index
    %c0_160 = arith.constant 0 : index
    %c0_161 = arith.constant 0 : index
    %114 = vector.load %arg6[%c1_158, %c2_159, %c0_160, %c0_161] : memref<3x3x8x8xf32, #tpu.memory_space<vmem>>, vector<1x1x8x8xf32>
    %115 = vector.shape_cast %114 : vector<1x1x8x8xf32> to vector<8x8xf32>
    %cst_162 = arith.constant dense<0.000000e+00> : vector<256x8xf32>
    %116 = tpu.matmul %113, %115, %cst_162 {dimension_numbers = #tpu.dot_dimension_numbers<[1], [0], [0], [1], [0, 0, 1, 1], [], []>} : vector<256x8xf32>, vector<8x8xf32>, vector<256x8xf32> -> vector<256x8xf32>
    %117 = arith.addf %111, %116 : vector<256x8xf32>
    %c2_163 = arith.constant 2 : index
    %c0_164 = arith.constant 0 : index
    %c0_165 = arith.constant 0 : index
    %118 = vector.load %arg10[%c2_163, %c0_164, %c0_165] : memref<18x18x8xf32, #tpu.memory_space<vmem>>, vector<16x16x8xf32>
    %119 = vector.shape_cast %118 : vector<16x16x8xf32> to vector<256x8xf32>
    %c2_166 = arith.constant 2 : index
    %c0_167 = arith.constant 0 : index
    %c0_168 = arith.constant 0 : index
    %c0_169 = arith.constant 0 : index
    %120 = vector.load %arg6[%c2_166, %c0_167, %c0_168, %c0_169] : memref<3x3x8x8xf32, #tpu.memory_space<vmem>>, vector<1x1x8x8xf32>
    %121 = vector.shape_cast %120 : vector<1x1x8x8xf32> to vector<8x8xf32>
    %cst_170 = arith.constant dense<0.000000e+00> : vector<256x8xf32>
    %122 = tpu.matmul %119, %121, %cst_170 {dimension_numbers = #tpu.dot_dimension_numbers<[1], [0], [0], [1], [0, 0, 1, 1], [], []>} : vector<256x8xf32>, vector<8x8xf32>, vector<256x8xf32> -> vector<256x8xf32>
    %123 = arith.addf %117, %122 : vector<256x8xf32>
    %c2_171 = arith.constant 2 : index
    %c1_172 = arith.constant 1 : index
    %c0_173 = arith.constant 0 : index
    %124 = vector.load %arg10[%c2_171, %c1_172, %c0_173] : memref<18x18x8xf32, #tpu.memory_space<vmem>>, vector<16x16x8xf32>
    %125 = vector.shape_cast %124 : vector<16x16x8xf32> to vector<256x8xf32>
    %c2_174 = arith.constant 2 : index
    %c1_175 = arith.constant 1 : index
    %c0_176 = arith.constant 0 : index
    %c0_177 = arith.constant 0 : index
    %126 = vector.load %arg6[%c2_174, %c1_175, %c0_176, %c0_177] : memref<3x3x8x8xf32, #tpu.memory_space<vmem>>, vector<1x1x8x8xf32>
    %127 = vector.shape_cast %126 : vector<1x1x8x8xf32> to vector<8x8xf32>
    %cst_178 = arith.constant dense<0.000000e+00> : vector<256x8xf32>
    %128 = tpu.matmul %125, %127, %cst_178 {dimension_numbers = #tpu.dot_dimension_numbers<[1], [0], [0], [1], [0, 0, 1, 1], [], []>} : vector<256x8xf32>, vector<8x8xf32>, vector<256x8xf32> -> vector<256x8xf32>
    %129 = arith.addf %123, %128 : vector<256x8xf32>
    %c2_179 = arith.constant 2 : index
    %c2_180 = arith.constant 2 : index
    %c0_181 = arith.constant 0 : index
    %130 = vector.load %arg10[%c2_179, %c2_180, %c0_181] : memref<18x18x8xf32, #tpu.memory_space<vmem>>, vector<16x16x8xf32>
    %131 = vector.shape_cast %130 : vector<16x16x8xf32> to vector<256x8xf32>
    %c2_182 = arith.constant 2 : index
    %c2_183 = arith.constant 2 : index
    %c0_184 = arith.constant 0 : index
    %c0_185 = arith.constant 0 : index
    %132 = vector.load %arg6[%c2_182, %c2_183, %c0_184, %c0_185] : memref<3x3x8x8xf32, #tpu.memory_space<vmem>>, vector<1x1x8x8xf32>
    %133 = vector.shape_cast %132 : vector<1x1x8x8xf32> to vector<8x8xf32>
    %cst_186 = arith.constant dense<0.000000e+00> : vector<256x8xf32>
    %134 = tpu.matmul %131, %133, %cst_186 {dimension_numbers = #tpu.dot_dimension_numbers<[1], [0], [0], [1], [0, 0, 1, 1], [], []>} : vector<256x8xf32>, vector<8x8xf32>, vector<256x8xf32> -> vector<256x8xf32>
    %135 = arith.addf %129, %134 : vector<256x8xf32>
    %c1_187 = arith.constant 1 : index
    %c1_188 = arith.constant 1 : index
    %c0_189 = arith.constant 0 : index
    %136 = vector.load %arg9[%c1_187, %c1_188, %c0_189] : memref<18x18x4xf32, #tpu.memory_space<vmem>>, vector<16x16x4xf32>
    %137 = vector.shape_cast %136 : vector<16x16x4xf32> to vector<256x4xf32>
    %c0_190 = arith.constant 0 : index
    %c0_191 = arith.constant 0 : index
    %138 = vector.load %arg7[%c0_190, %c0_191] : memref<4x8xf32, #tpu.memory_space<vmem>>, vector<4x8xf32>
    %cst_192 = arith.constant dense<0.000000e+00> : vector<256x8xf32>
    %139 = tpu.matmul %137, %138, %cst_192 {dimension_numbers = #tpu.dot_dimension_numbers<[1], [0], [0], [1], [0, 0, 1, 1], [], []>} : vector<256x4xf32>, vector<4x8xf32>, vector<256x8xf32> -> vector<256x8xf32>
    %140 = arith.addf %139, %135 : vector<256x8xf32>
    %141 = vector.shape_cast %140 : vector<256x8xf32> to vector<16x16x8xf32>
    %c0_193 = arith.constant 0 : index
    %c0_194 = arith.constant 0 : index
    %c0_195 = arith.constant 0 : index
    %c0_196 = arith.constant 0 : index
    %142 = vector.load %arg8[%c0_193, %c0_194, %c0_195, %c0_196] : memref<1x16x16x8xf32, #tpu.memory_space<vmem>>, vector<1x16x16x8xf32>
    %143 = vector.shape_cast %142 : vector<1x16x16x8xf32> to vector<16x16x8xf32>
    %144 = vector.shape_cast %141 : vector<16x16x8xf32> to vector<1x16x16x8xf32>
    tpu.vector_store %arg8[%c0_193, %c0_194, %c0_195, %c0_196], %144 {strides = array<i32>} : memref<1x16x16x8xf32, #tpu.memory_space<vmem>>, vector<1x16x16x8xf32>,
    return
  }
  func.func @transform_0(%arg0: i32) -> (i32, i32, i32, i32) {
    %c0_i32 = arith.constant 0 : i32
    %c0_i32_0 = arith.constant 0 : i32
    %c0_i32_1 = arith.constant 0 : i32
    %c0_i32_2 = arith.constant 0 : i32
    return %arg0, %c0_i32, %c0_i32_0, %c0_i32_1 : i32, i32, i32, i32
  }
  func.func @transform_1(%arg0: i32) -> (i32, i32, i32) {
    %c0_i32 = arith.constant 0 : i32
    %c0_i32_0 = arith.constant 0 : i32
    %c0_i32_1 = arith.constant 0 : i32
    %c0_i32_2 = arith.constant 0 : i32
    return %c0_i32, %c0_i32_0, %c0_i32_1 : i32, i32, i32
  }
  func.func @transform_2(%arg0: i32) -> (i32, i32, i32) {
    %c0_i32 = arith.constant 0 : i32
    %c0_i32_0 = arith.constant 0 : i32
    %c0_i32_1 = arith.constant 0 : i32
    %c0_i32_2 = arith.constant 0 : i32
    return %c0_i32, %c0_i32_0, %c0_i32_1 : i32, i32, i32
  }
  func.func @transform_3(%arg0: i32) -> (i32, i32, i32, i32) {
    %c0_i32 = arith.constant 0 : i32
    %c0_i32_0 = arith.constant 0 : i32
    %c0_i32_1 = arith.constant 0 : i32
    %c0_i32_2 = arith.constant 0 : i32
    %c0_i32_3 = arith.constant 0 : i32
    return %c0_i32, %c0_i32_0, %c0_i32_1, %c0_i32_2 : i32, i32, i32, i32
  }
  func.func @transform_4(%arg0: i32) -> (i32, i32) {
    %c0_i32 = arith.constant 0 : i32
    %c0_i32_0 = arith.constant 0 : i32
    %c0_i32_1 = arith.constant 0 : i32
    return %c0_i32, %c0_i32_0 : i32, i32
  }
  func.func @transform_5(%arg0: i32) -> (i32, i32, i32, i32) {
    %c0_i32 = arith.constant 0 : i32
    %c0_i32_0 = arith.constant 0 : i32
    %c0_i32_1 = arith.constant 0 : i32
    %c0_i32_2 = arith.constant 0 : i32
    %c0_i32_3 = arith.constant 0 : i32
    return %c0_i32, %c0_i32_0, %c0_i32_1, %c0_i32_2 : i32, i32, i32, i32
  }
  func.func @transform_6(%arg0: i32) -> (i32, i32) {
    %c0_i32 = arith.constant 0 : i32
    %c0_i32_0 = arith.constant 0 : i32
    %c0_i32_1 = arith.constant 0 : i32
    return %c0_i32, %c0_i32_0 : i32, i32
  }
  func.func @transform_7(%arg0: i32) -> (i32, i32, i32, i32) {
    %c0_i32 = arith.constant 0 : i32
    %c0_i32_0 = arith.constant 0 : i32
    %c0_i32_1 = arith.constant 0 : i32
    %c0_i32_2 = arith.constant 0 : i32
    return %arg0, %c0_i32, %c0_i32_0, %c0_i32_1 : i32, i32, i32, i32
  }
}

</mosaic_0001>

<llo_original>
// kernel: tpu_custom_call.1
$region0: #{tpu_custom_call.1}
  #allocation0 [shape = 'u32[]', space=smem, size = 0x4, offset = 0x4, fixed_abs, tag = 'smem constant byte address 0x4 - core index']
  #allocation1 [shape = 'u32[144,128]{1,0:T(1,128)}', space=vmem, size = 0x12000, scoped, tag = 'internal scratch']
  #allocation2 [shape = 'f32[18,18,4]{2,1,0:T(8,128)}', space=vmem, size = 0x36000, scoped, tag = 'scratch operand']
  #allocation3 [shape = 'f32[18,18,8]{2,1,0:T(8,128)}', space=vmem, size = 0x36000, scoped, tag = 'scratch operand']
  %s0 = inlined_call_operand.vmem [shape: f32[2,16,16,4], index: 0, kind: input, shape index: {}]
  %s1 = inlined_call_operand.vmem [shape: f32[1,1,4], index: 1, kind: input, shape index: {}]
  %s2 = inlined_call_operand.vmem [shape: f32[1,1,4], index: 2, kind: input, shape index: {}]
  %s3 = inlined_call_operand.vmem [shape: f32[3,3,4,8], index: 3, kind: input, shape index: {}]
  %s4 = inlined_call_operand.vmem [shape: f32[1,8], index: 4, kind: input, shape index: {}]
  %s5 = inlined_call_operand.vmem [shape: f32[3,3,8,8], index: 5, kind: input, shape index: {}]
  %s6 = inlined_call_operand.vmem [shape: f32[4,8], index: 6, kind: input, shape index: {}]
  %s7 = inlined_call_operand.vmem [shape: f32[2,16,16,8], index: 7, kind: output, shape index: {}]
  %s8 = sld [smem:[#allocation0]]
  $region61: #{tpu_custom_call.1} parent=0
    _
  %s10 = ssub.s32 1, %s8
  %s11 = scalar_select 0, %s10, %s8
  loop: start=0, step=1, limit=4
  $region2: #{tpu_custom_call.1} parent=0 // loop_pre_header
    _
  $region3: #{tpu_custom_call.1} parent=0 // loop_header
    %s13 = sphi 0, %s17
    %p14 = scmp.ge.s32.totalorder %s13, 4
    %s23 = sphi 0, %s25
    %s26 = sphi 0, %s23
    %s27 = sphi 0, %s26
    %s43 = sphi 0, %s27
    %s47 = sphi 0, %s47
    %s49 = sphi 0, %s47
    %s50 = sphi 0, %s49
    %s64 = sphi 0, %s50
    %s68 = sphi 0, %s68
    %s70 = sphi 0, %s68
    %s71 = sphi 0, %s70
    %s85 = sphi 0, %s71
    %s89 = sphi 0, %s89
    %s91 = sphi 0, %s89
    %s92 = sphi 0, %s91
    %s106 = sphi 0, %s92
    %s110 = sphi 0, %s110
    %s112 = sphi 0, %s110
    %s113 = sphi 0, %s112
    %s127 = sphi 0, %s113
    %s131 = sphi 0, %s131
    %s133 = sphi 0, %s131
    %s134 = sphi 0, %s133
    %s148 = sphi 0, %s134
    %s152 = sphi 0, %s152
    %s154 = sphi 0, %s152
    %s155 = sphi 0, %s154
    %s169 = sphi 0, %s155
    %s175 = sphi 0, %s177
    %s178 = sphi 0, %s175
    %s179 = sphi 0, %s178
    %s195 = sphi 0, %s179
  $region4: #{tpu_custom_call.1} parent=0 // loop_header_branch
    %16 = sbr.rel (%p14) target = $region8
  $region5: #{tpu_custom_call.1} parent=0 // loop_body
    %s18 = ssub.s32 %s13, 1
    %s19 = ssub.s32 %s13, 2
    %s20 = sadd.s32 %s13, 1
    %s21 = ssub.s32 %s13, %s20
    %p22 = scmp.eq.s32.totalorder %s21, 0
    %s24 = sadd.s32 %s23, 1
    %s25 = scalar_select %p22, %s23, %s24
    %p28 = pneg %p22
    %p29 = scmp.eq.s32.totalorder %s13, 1
    %p30 = por %p28, %p29
    %p31 = scmp.ne.s32.totalorder %s23, %s26
    %p32 = scmp.eq.s32.totalorder %s13, 0
    %p33 = por %p31, %p32
    %p34 = scmp.ne.s32.totalorder %s23, %s26
    %p35 = scmp.eq.s32.totalorder %s18, 1
    %p36 = por %p34, %p35
    %p37 = scmp.ne.s32.totalorder %s26, %s27
    %p38 = scmp.eq.s32.totalorder %s18, 0
    %p39 = por %p37, %p38
    %p40 = scmp.ne.s32.totalorder %s26, %s27
    %p41 = scmp.eq.s32.totalorder %s19, 1
    %p42 = por %p40, %p41
    %p44 = scmp.ne.s32.totalorder %s27, %s43
    %p45 = scmp.eq.s32.totalorder %s19, 0
    %p46 = por %p44, %p45
    %s48 = sadd.s32 %s47, 1
    %p51 = scmp.eq.s32.totalorder %s13, 1
    %p52 = scmp.ne.s32.totalorder %s47, %s49
    %p53 = scmp.eq.s32.totalorder %s13, 0
    %p54 = por %p52, %p53
    %p55 = scmp.ne.s32.totalorder %s47, %s49
    %p56 = scmp.eq.s32.totalorder %s18, 1
    %p57 = por %p55, %p56
    %p58 = scmp.ne.s32.totalorder %s49, %s50
    %p59 = scmp.eq.s32.totalorder %s18, 0
    %p60 = por %p58, %p59
    %p61 = scmp.ne.s32.totalorder %s49, %s50
    %p62 = scmp.eq.s32.totalorder %s19, 1
    %p63 = por %p61, %p62
    %p65 = scmp.ne.s32.totalorder %s50, %s64
    %p66 = scmp.eq.s32.totalorder %s19, 0
    %p67 = por %p65, %p66
    %s69 = sadd.s32 %s68, 1
    %p72 = scmp.eq.s32.totalorder %s13, 1
    %p73 = scmp.ne.s32.totalorder %s68, %s70
    %p74 = scmp.eq.s32.totalorder %s13, 0
    %p75 = por %p73, %p74
    %p76 = scmp.ne.s32.totalorder %s68, %s70
    %p77 = scmp.eq.s32.totalorder %s18, 1
    %p78 = por %p76, %p77
    %p79 = scmp.ne.s32.totalorder %s70, %s71
    %p80 = scmp.eq.s32.totalorder %s18, 0
    %p81 = por %p79, %p80
    %p82 = scmp.ne.s32.totalorder %s70, %s71
    %p83 = scmp.eq.s32.totalorder %s19, 1
    %p84 = por %p82, %p83
    %p86 = scmp.ne.s32.totalorder %s71, %s85
    %p87 = scmp.eq.s32.totalorder %s19, 0
    %p88 = por %p86, %p87
    %s90 = sadd.s32 %s89, 1
    %p93 = scmp.eq.s32.totalorder %s13, 1
    %p94 = scmp.ne.s32.totalorder %s89, %s91
    %p95 = scmp.eq.s32.totalorder %s13, 0
    %p96 = por %p94, %p95
    %p97 = scmp.ne.s32.totalorder %s89, %s91
    %p98 = scmp.eq.s32.totalorder %s18, 1
    %p99 = por %p97, %p98
    %p100 = scmp.ne.s32.totalorder %s91, %s92
    %p101 = scmp.eq.s32.totalorder %s18, 0
    %p102 = por %p100, %p101
    %p103 = scmp.ne.s32.totalorder %s91, %s92
    %p104 = scmp.eq.s32.totalorder %s19, 1
    %p105 = por %p103, %p104
    %p107 = scmp.ne.s32.totalorder %s92, %s106
    %p108 = scmp.eq.s32.totalorder %s19, 0
    %p109 = por %p107, %p108
    %s111 = sadd.s32 %s110, 1
    %p114 = scmp.eq.s32.totalorder %s13, 1
    %p115 = scmp.ne.s32.totalorder %s110, %s112
    %p116 = scmp.eq.s32.totalorder %s13, 0
    %p117 = por %p115, %p116
    %p118 = scmp.ne.s32.totalorder %s110, %s112
    %p119 = scmp.eq.s32.totalorder %s18, 1
    %p120 = por %p118, %p119
    %p121 = scmp.ne.s32.totalorder %s112, %s113
    %p122 = scmp.eq.s32.totalorder %s18, 0
    %p123 = por %p121, %p122
    %p124 = scmp.ne.s32.totalorder %s112, %s113
    %p125 = scmp.eq.s32.totalorder %s19, 1
    %p126 = por %p124, %p125
    %p128 = scmp.ne.s32.totalorder %s113, %s127
    %p129 = scmp.eq.s32.totalorder %s19, 0
    %p130 = por %p128, %p129
    %s132 = sadd.s32 %s131, 1
    %p135 = scmp.eq.s32.totalorder %s13, 1
    %p136 = scmp.ne.s32.totalorder %s131, %s133
    %p137 = scmp.eq.s32.totalorder %s13, 0
    %p138 = por %p136, %p137
    %p139 = scmp.ne.s32.totalorder %s131, %s133
    %p140 = scmp.eq.s32.totalorder %s18, 1
    %p141 = por %p139, %p140
    %p142 = scmp.ne.s32.totalorder %s133, %s134
    %p143 = scmp.eq.s32.totalorder %s18, 0
    %p144 = por %p142, %p143
    %p145 = scmp.ne.s32.totalorder %s133, %s134
    %p146 = scmp.eq.s32.totalorder %s19, 1
    %p147 = por %p145, %p146
    %p149 = scmp.ne.s32.totalorder %s134, %s148
    %p150 = scmp.eq.s32.totalorder %s19, 0
    %p151 = por %p149, %p150
    %s153 = sadd.s32 %s152, 1
    %p156 = scmp.eq.s32.totalorder %s13, 1
    %p157 = scmp.ne.s32.totalorder %s152, %s154
    %p158 = scmp.eq.s32.totalorder %s13, 0
    %p159 = por %p157, %p158
    %p160 = scmp.ne.s32.totalorder %s152, %s154
    %p161 = scmp.eq.s32.totalorder %s18, 1
    %p162 = por %p160, %p161
    %p163 = scmp.ne.s32.totalorder %s154, %s155
    %p164 = scmp.eq.s32.totalorder %s18, 0
    %p165 = por %p163, %p164
    %p166 = scmp.ne.s32.totalorder %s154, %s155
    %p167 = scmp.eq.s32.totalorder %s19, 1
    %p168 = por %p166, %p167
    %p170 = scmp.ne.s32.totalorder %s155, %s169
    %p171 = scmp.eq.s32.totalorder %s19, 0
    %p172 = por %p170, %p171
    %s173 = ssub.s32 %s13, %s20
    %p174 = scmp.eq.s32.totalorder %s173, 0
    %s176 = sadd.s32 %s175, 1
    %s177 = scalar_select %p174, %s175, %s176
    %p180 = pneg %p174
    %p181 = scmp.eq.s32.totalorder %s13, 1
    %p182 = por %p180, %p181
    %p183 = scmp.ne.s32.totalorder %s175, %s178
    %p184 = scmp.eq.s32.totalorder %s13, 0
    %p185 = por %p183, %p184
    %p186 = scmp.ne.s32.totalorder %s175, %s178
    %p187 = scmp.eq.s32.totalorder %s18, 1
    %p188 = por %p186, %p187
    %p189 = scmp.ne.s32.totalorder %s178, %s179
    %p190 = scmp.eq.s32.totalorder %s18, 0
    %p191 = por %p189, %p190
    %p192 = scmp.ne.s32.totalorder %s178, %s179
    %p193 = scmp.eq.s32.totalorder %s19, 1
    %p194 = por %p192, %p193
    %p196 = scmp.ne.s32.totalorder %s179, %s195
    %p197 = scmp.eq.s32.totalorder %s19, 0
    %p198 = por %p196, %p197
    %p199 = scmp.le.s32.totalorder 1, %s13
    %p200 = scmp.lt.s32.totalorder %s13, 3
    %p201 = pnand %p199, %p200
    %p202 = pneg %p201
    // Predicated region
    $region9: #{tpu_custom_call.1} parent=5 // pred_check
      _
    $region10: #{tpu_custom_call.1} parent=5 // pred_check_branch
      %204 = sbr.rel (%p201) target = $region12
    $region11: #{tpu_custom_call.1} parent=5 // pred_region
      %s205 = ssub.s32 %s13, 1
      // Predicated region
      $region13: #{tpu_custom_call.1} parent=11 // pred_check
        %p206 = pneg %p60
      $region14: #{tpu_custom_call.1} parent=11 // pred_check_branch
        %208 = sbr.rel (%p206) target = $region16
      $region15: #{tpu_custom_call.1} parent=11 // pred_region
        _
      $region16: #{tpu_custom_call.1} parent=11 // pred_fallthru
        _
      // Predicated region
      $region17: #{tpu_custom_call.1} parent=11 // pred_check
        %p209 = pneg %p81
      $region18: #{tpu_custom_call.1} parent=11 // pred_check_branch
        %211 = sbr.rel (%p209) target = $region20
      $region19: #{tpu_custom_call.1} parent=11 // pred_region
        _
      $region20: #{tpu_custom_call.1} parent=11 // pred_fallthru
        _
      // Predicated region
      $region21: #{tpu_custom_call.1} parent=11 // pred_check
        %p212 = pneg %p102
      $region22: #{tpu_custom_call.1} parent=11 // pred_check_branch
        %214 = sbr.rel (%p212) target = $region24
      $region23: #{tpu_custom_call.1} parent=11 // pred_region
        _
      $region24: #{tpu_custom_call.1} parent=11 // pred_fallthru
        _
      // Predicated region
      $region25: #{tpu_custom_call.1} parent=11 // pred_check
        %p215 = pneg %p123
      $region26: #{tpu_custom_call.1} parent=11 // pred_check_branch
        %217 = sbr.rel (%p215) target = $region28
      $region27: #{tpu_custom_call.1} parent=11 // pred_region
        _
      $region28: #{tpu_custom_call.1} parent=11 // pred_fallthru
        _
      // Predicated region
      $region29: #{tpu_custom_call.1} parent=11 // pred_check
        %p218 = pneg %p144
      $region30: #{tpu_custom_call.1} parent=11 // pred_check_branch
        %220 = sbr.rel (%p218) target = $region32
      $region31: #{tpu_custom_call.1} parent=11 // pred_region
        _
      $region32: #{tpu_custom_call.1} parent=11 // pred_fallthru
        _
      // Predicated region
      $region33: #{tpu_custom_call.1} parent=11 // pred_check
        %p221 = pneg %p165
      $region34: #{tpu_custom_call.1} parent=11 // pred_check_branch
        %223 = sbr.rel (%p221) target = $region36
      $region35: #{tpu_custom_call.1} parent=11 // pred_region
        _
      $region36: #{tpu_custom_call.1} parent=11 // pred_fallthru
        _
    $region12: #{tpu_custom_call.1} parent=5 // pred_fallthru
      _
    %p224 = scmp.lt.s32.totalorder %s13, 2
    // Predicated region
    $region37: #{tpu_custom_call.1} parent=5 // pred_check
      %p225 = pneg %p224
    $region38: #{tpu_custom_call.1} parent=5 // pred_check_branch
      %227 = sbr.rel (%p225) target = $region40
    $region39: #{tpu_custom_call.1} parent=5 // pred_region
      // Predicated region
      $region41: #{tpu_custom_call.1} parent=39 // pred_check
        %p228 = pneg %p33
      $region42: #{tpu_custom_call.1} parent=39 // pred_check_branch
        %230 = sbr.rel (%p228) target = $region44
      $region43: #{tpu_custom_call.1} parent=39 // pred_region
        %p231 = scmp.lt.s32.totalorder %s13, 1
        %s232 = scalar_select %p231, %s13, 1
        %s233 = smul.addr %s232, 32
        %s234 = smul.addr %s233, 8
        %s235 = scalar_lea.vmem %s0, %s234
      $region44: #{tpu_custom_call.1} parent=39 // pred_fallthru
        _
    $region40: #{tpu_custom_call.1} parent=5 // pred_fallthru
      _
    %p236 = scmp.le.s32.totalorder 1, %s13
    %p237 = scmp.lt.s32.totalorder %s13, 3
    %p238 = pnand %p236, %p237
    %p239 = pneg %p238
    // Predicated region
    $region45: #{tpu_custom_call.1} parent=5 // pred_check
      _
    $region46: #{tpu_custom_call.1} parent=5 // pred_check_branch
      %241 = sbr.rel (%p238) target = $region48
    $region47: #{tpu_custom_call.1} parent=5 // pred_region
      %s242 = ssub.s32 %s13, 1
      %p243 = scmp.lt.s32.totalorder %s18, 1
      %s244 = scalar_select %p243, %s18, 1
      %s245 = smul.addr %s244, 32
      %s246 = smul.addr %s245, 8
      %s247 = scalar_lea.vmem %s0, %s246
      %p248 = pneg %p39
      %p249 = pneg %p36
      %p250 = pneg %p60
      %p251 = pneg %p57
      %p252 = pneg %p81
      %p253 = pneg %p78
      %p254 = pneg %p102
      %p255 = pneg %p99
      %p256 = pneg %p123
      %p257 = pneg %p120
      %p258 = pneg %p144
      %p259 = pneg %p141
      %p260 = pneg %p165
      %p261 = pneg %p162
      %p262 = pneg %p191
      %p263 = pneg %p188
      %p264 = scmp.lt.s32.totalorder %s18, 1
      %s265 = scalar_select %p264, %s18, 1
      %s266 = smul.addr %s265, 32
      %s267 = smul.addr %s266, 8
      %s268 = scalar_lea.vmem %s7, %s267
      %p269 = scmp.lt.s32.totalorder %s18, 1
      %s270 = scalar_select %p269, %s18, 1
      %s271 = smul.addr %s270, 32
      %s272 = smul.addr %s271, 8
      %s273 = scalar_lea.vmem %s0, %s272
      %p274 = scmp.lt.s32.totalorder %s18, 1
      %s275 = scalar_select %p274, %s18, 1
      %s276 = smul.addr %s275, 32
      %s277 = smul.addr %s276, 8
      %s278 = scalar_lea.vmem %s7, %s277
      %v279 = vld [vmem:[%s273] sm:$0xff]
      %v280 = vld [vmem:[%s273 + $0x8] sm:$0xff]
      %v281 = vld [vmem:[%s273 + $0x10] sm:$0xff]
      %v282 = vld [vmem:[%s273 + $0x18] sm:$0xff]
      %v283 = vld [vmem:[%s273 + $0x20] sm:$0xff]
      %v284 = vld [vmem:[%s273 + $0x28] sm:$0xff]
      %v285 = vld [vmem:[%s273 + $0x30] sm:$0xff]
      %v286 = vld [vmem:[%s273 + $0x38] sm:$0xff]
      %v287 = vld [vmem:[%s273 + $0x40] sm:$0xff]
      %v288 = vld [vmem:[%s273 + $0x48] sm:$0xff]
      %v289 = vld [vmem:[%s273 + $0x50] sm:$0xff]
      %v290 = vld [vmem:[%s273 + $0x58] sm:$0xff]
      %v291 = vld [vmem:[%s273 + $0x60] sm:$0xff]
      %v292 = vld [vmem:[%s273 + $0x68] sm:$0xff]
      %v293 = vld [vmem:[%s273 + $0x70] sm:$0xff]
      %v294 = vld [vmem:[%s273 + $0x78] sm:$0xff]
      %v295 = vld [vmem:[%s273 + $0x80] sm:$0xff]
      %v296 = vld [vmem:[%s273 + $0x88] sm:$0xff]
      %v297 = vld [vmem:[%s273 + $0x90] sm:$0xff]
      %v298 = vld [vmem:[%s273 + $0x98] sm:$0xff]
      %v299 = vld [vmem:[%s273 + $0xa0] sm:$0xff]
      %v300 = vld [vmem:[%s273 + $0xa8] sm:$0xff]
      %v301 = vld [vmem:[%s273 + $0xb0] sm:$0xff]
      %v302 = vld [vmem:[%s273 + $0xb8] sm:$0xff]
      %v303 = vld [vmem:[%s273 + $0xc0] sm:$0xff]
      %v304 = vld [vmem:[%s273 + $0xc8] sm:$0xff]
      %v305 = vld [vmem:[%s273 + $0xd0] sm:$0xff]
      %v306 = vld [vmem:[%s273 + $0xd8] sm:$0xff]
      %v307 = vld [vmem:[%s273 + $0xe0] sm:$0xff]
      %v308 = vld [vmem:[%s273 + $0xe8] sm:$0xff]
      %v309 = vld [vmem:[%s273 + $0xf0] sm:$0xff]
      %v310 = vld [vmem:[%s273 + $0xf8] sm:$0xff]
      %v311 = vld [vmem:[%s1] sm:$0x1]
      %v313 = vlaneseq
      %v314 = vshrl.u32 %v313, 7
      %v315 = vsub.s32 0, %v314
      %v316 = vrot.slane %v311, %v315
      %v318 = vmul.f32 %v279, %v316
      %v319 = vmul.f32 %v280, %v316
      %v320 = vmul.f32 %v281, %v316
      %v321 = vmul.f32 %v282, %v316
      %v322 = vmul.f32 %v283, %v316
      %v323 = vmul.f32 %v284, %v316
      %v324 = vmul.f32 %v285, %v316
      %v325 = vmul.f32 %v286, %v316
      %v326 = vmul.f32 %v287, %v316
      %v327 = vmul.f32 %v288, %v316
      %v328 = vmul.f32 %v289, %v316
      %v329 = vmul.f32 %v290, %v316
      %v330 = vmul.f32 %v291, %v316
      %v331 = vmul.f32 %v292, %v316
      %v332 = vmul.f32 %v293, %v316
      %v333 = vmul.f32 %v294, %v316
      %v334 = vmul.f32 %v295, %v316
      %v335 = vmul.f32 %v296, %v316
      %v336 = vmul.f32 %v297, %v316
      %v337 = vmul.f32 %v298, %v316
      %v338 = vmul.f32 %v299, %v316
      %v339 = vmul.f32 %v300, %v316
      %v340 = vmul.f32 %v301, %v316
      %v341 = vmul.f32 %v302, %v316
      %v342 = vmul.f32 %v303, %v316
      %v343 = vmul.f32 %v304, %v316
      %v344 = vmul.f32 %v305, %v316
      %v345 = vmul.f32 %v306, %v316
      %v346 = vmul.f32 %v307, %v316
      %v347 = vmul.f32 %v308, %v316
      %v348 = vmul.f32 %v309, %v316
      %v349 = vmul.f32 %v310, %v316
      %v350 = vld [vmem:[%s2] sm:$0x1]
      %v352 = vlaneseq
      %v353 = vshrl.u32 %v352, 7
      %v354 = vsub.s32 0, %v353
      %v355 = vrot.slane %v350, %v354
      %v357 = vadd.f32 %v318, %v355
      %v358 = vadd.f32 %v319, %v355
      %v359 = vadd.f32 %v320, %v355
      %v360 = vadd.f32 %v321, %v355
      %v361 = vadd.f32 %v322, %v355
      %v362 = vadd.f32 %v323, %v355
      %v363 = vadd.f32 %v324, %v355
      %v364 = vadd.f32 %v325, %v355
      %v365 = vadd.f32 %v326, %v355
      %v366 = vadd.f32 %v327, %v355
      %v367 = vadd.f32 %v328, %v355
      %v368 = vadd.f32 %v329, %v355
      %v369 = vadd.f32 %v330, %v355
      %v370 = vadd.f32 %v331, %v355
      %v371 = vadd.f32 %v332, %v355
      %v372 = vadd.f32 %v333, %v355
      %v373 = vadd.f32 %v334, %v355
      %v374 = vadd.f32 %v335, %v355
      %v375 = vadd.f32 %v336, %v355
      %v376 = vadd.f32 %v337, %v355
      %v377 = vadd.f32 %v338, %v355
      %v378 = vadd.f32 %v339, %v355
      %v379 = vadd.f32 %v340, %v355
      %v380 = vadd.f32 %v341, %v355
      %v381 = vadd.f32 %v342, %v355
      %v382 = vadd.f32 %v343, %v355
      %v383 = vadd.f32 %v344, %v355
      %v384 = vadd.f32 %v345, %v355
      %v385 = vadd.f32 %v346, %v355
      %v386 = vadd.f32 %v347, %v355
      %v387 = vadd.f32 %v348, %v355
      %v388 = vadd.f32 %v349, %v355
      %v389 = vmax.f32 %v357, 0.0
      %v390 = vmax.f32 %v358, 0.0
      %v391 = vmax.f32 %v359, 0.0
      %v392 = vmax.f32 %v360, 0.0
      %v393 = vmax.f32 %v361, 0.0
      %v394 = vmax.f32 %v362, 0.0
      %v395 = vmax.f32 %v363, 0.0
      %v396 = vmax.f32 %v364, 0.0
      %v397 = vmax.f32 %v365, 0.0
      %v398 = vmax.f32 %v366, 0.0
      %v399 = vmax.f32 %v367, 0.0
      %v400 = vmax.f32 %v368, 0.0
      %v401 = vmax.f32 %v369, 0.0
      %v402 = vmax.f32 %v370, 0.0
      %v403 = vmax.f32 %v371, 0.0
      %v404 = vmax.f32 %v372, 0.0
      %v405 = vmax.f32 %v373, 0.0
      %v406 = vmax.f32 %v374, 0.0
      %v407 = vmax.f32 %v375, 0.0
      %v408 = vmax.f32 %v376, 0.0
      %v409 = vmax.f32 %v377, 0.0
      %v410 = vmax.f32 %v378, 0.0
      %v411 = vmax.f32 %v379, 0.0
      %v412 = vmax.f32 %v380, 0.0
      %v413 = vmax.f32 %v381, 0.0
      %v414 = vmax.f32 %v382, 0.0
      %v415 = vmax.f32 %v383, 0.0
      %v416 = vmax.f32 %v384, 0.0
      %v417 = vmax.f32 %v385, 0.0
      %v418 = vmax.f32 %v386, 0.0
      %v419 = vmax.f32 %v387, 0.0
      %v420 = vmax.f32 %v388, 0.0
      %s421 = scalar_lea.vmem [#allocation2], 24
      %vm422 = vcmask 31744
      %423 = vst.msk [vmem:[%s421 + $0x1] sm:$0xff] %vm422, %v389
      %424 = vst.msk [vmem:[%s421 + $0x9] sm:$0xff] %vm422, %v390
      %425 = vst.msk [vmem:[%s421 + $0x19] sm:$0xff] %vm422, %v391
      %426 = vst.msk [vmem:[%s421 + $0x21] sm:$0xff] %vm422, %v392
      %427 = vst.msk [vmem:[%s421 + $0x31] sm:$0xff] %vm422, %v393
      %428 = vst.msk [vmem:[%s421 + $0x39] sm:$0xff] %vm422, %v394
      %429 = vst.msk [vmem:[%s421 + $0x49] sm:$0xff] %vm422, %v395
      %430 = vst.msk [vmem:[%s421 + $0x51] sm:$0xff] %vm422, %v396
      %431 = vst.msk [vmem:[%s421 + $0x61] sm:$0xff] %vm422, %v397
      %432 = vst.msk [vmem:[%s421 + $0x69] sm:$0xff] %vm422, %v398
      %433 = vst.msk [vmem:[%s421 + $0x79] sm:$0xff] %vm422, %v399
      %434 = vst.msk [vmem:[%s421 + $0x81] sm:$0xff] %vm422, %v400
      %435 = vst.msk [vmem:[%s421 + $0x91] sm:$0xff] %vm422, %v401
      %436 = vst.msk [vmem:[%s421 + $0x99] sm:$0xff] %vm422, %v402
      %437 = vst.msk [vmem:[%s421 + $0xa9] sm:$0xff] %vm422, %v403
      %438 = vst.msk [vmem:[%s421 + $0xb1] sm:$0xff] %vm422, %v404
      %439 = vst.msk [vmem:[%s421 + $0xc1] sm:$0xff] %vm422, %v405
      %440 = vst.msk [vmem:[%s421 + $0xc9] sm:$0xff] %vm422, %v406
      %441 = vst.msk [vmem:[%s421 + $0xd9] sm:$0xff] %vm422, %v407
      %442 = vst.msk [vmem:[%s421 + $0xe1] sm:$0xff] %vm422, %v408
      %443 = vst.msk [vmem:[%s421 + $0xf1] sm:$0xff] %vm422, %v409
      %444 = vst.msk [vmem:[%s421 + $0xf9] sm:$0xff] %vm422, %v410
      %445 = vst.msk [vmem:[%s421 + $0x109] sm:$0xff] %vm422, %v411
      %446 = vst.msk [vmem:[%s421 + $0x111] sm:$0xff] %vm422, %v412
      %447 = vst.msk [vmem:[%s421 + $0x121] sm:$0xff] %vm422, %v413
      %448 = vst.msk [vmem:[%s421 + $0x129] sm:$0xff] %vm422, %v414
      %449 = vst.msk [vmem:[%s421 + $0x139] sm:$0xff] %vm422, %v415
      %450 = vst.msk [vmem:[%s421 + $0x141] sm:$0xff] %vm422, %v416
      %451 = vst.msk [vmem:[%s421 + $0x151] sm:$0xff] %vm422, %v417
      %452 = vst.msk [vmem:[%s421 + $0x159] sm:$0xff] %vm422, %v418
      %453 = vst.msk [vmem:[%s421 + $0x169] sm:$0xff] %vm422, %v419
      %454 = vst.msk [vmem:[%s421 + $0x171] sm:$0xff] %vm422, %v420
      %455 = vst.msk [vmem:[#allocation2] sm:$0xff] %vm422, 0.0
      %456 = vst.msk [vmem:[#allocation2 + $0x8] sm:$0xff] %vm422, 0.0
      %vm457 = vcmask 25600
      %458 = vst.msk [vmem:[#allocation2 + $0x10] sm:$0x3] %vm457, 0.0
      %s459 = scalar_lea.vmem [#allocation2], 408
      %460 = vst.msk [vmem:[%s459] sm:$0xff] %vm422, 0.0
      %461 = vst.msk [vmem:[%s459 + $0x8] sm:$0xff] %vm422, 0.0
      %462 = vst.msk [vmem:[%s459 + $0x10] sm:$0x3] %vm457, 0.0
      %vm463 = vcmask 24576
      %464 = vst.msk [vmem:[#allocation2] sm:$0x1] %vm463, 0.0
      %465 = vst.msk [vmem:[#allocation2 + $0x18] sm:$0x1] %vm463, 0.0
      %466 = vst.msk [vmem:[#allocation2 + $0x30] sm:$0x1] %vm463, 0.0
      %467 = vst.msk [vmem:[#allocation2 + $0x48] sm:$0x1] %vm463, 0.0
      %468 = vst.msk [vmem:[#allocation2 + $0x60] sm:$0x1] %vm463, 0.0
      %469 = vst.msk [vmem:[#allocation2 + $0x78] sm:$0x1] %vm463, 0.0
      %470 = vst.msk [vmem:[#allocation2 + $0x90] sm:$0x1] %vm463, 0.0
      %471 = vst.msk [vmem:[#allocation2 + $0xa8] sm:$0x1] %vm463, 0.0
      %472 = vst.msk [vmem:[#allocation2 + $0xc0] sm:$0x1] %vm463, 0.0
      %473 = vst.msk [vmem:[#allocation2 + $0xd8] sm:$0x1] %vm463, 0.0
      %474 = vst.msk [vmem:[#allocation2 + $0xf0] sm:$0x1] %vm463, 0.0
      %475 = vst.msk [vmem:[#allocation2 + $0x108] sm:$0x1] %vm463, 0.0
      %476 = vst.msk [vmem:[#allocation2 + $0x120] sm:$0x1] %vm463, 0.0
      %477 = vst.msk [vmem:[#allocation2 + $0x138] sm:$0x1] %vm463, 0.0
      %478 = vst.msk [vmem:[#allocation2 + $0x150] sm:$0x1] %vm463, 0.0
      %479 = vst.msk [vmem:[#allocation2 + $0x168] sm:$0x1] %vm463, 0.0
      %480 = vst.msk [vmem:[#allocation2 + $0x180] sm:$0x1] %vm463, 0.0
      %481 = vst.msk [vmem:[#allocation2 + $0x198] sm:$0x1] %vm463, 0.0
      %482 = vst.msk [vmem:[#allocation2 + $0x11] sm:$0x1] %vm463, 0.0
      %483 = vst.msk [vmem:[#allocation2 + $0x29] sm:$0x1] %vm463, 0.0
      %484 = vst.msk [vmem:[#allocation2 + $0x41] sm:$0x1] %vm463, 0.0
      %485 = vst.msk [vmem:[#allocation2 + $0x59] sm:$0x1] %vm463, 0.0
      %486 = vst.msk [vmem:[#allocation2 + $0x71] sm:$0x1] %vm463, 0.0
      %487 = vst.msk [vmem:[#allocation2 + $0x89] sm:$0x1] %vm463, 0.0
      %488 = vst.msk [vmem:[#allocation2 + $0xa1] sm:$0x1] %vm463, 0.0
      %489 = vst.msk [vmem:[#allocation2 + $0xb9] sm:$0x1] %vm463, 0.0
      %490 = vst.msk [vmem:[#allocation2 + $0xd1] sm:$0x1] %vm463, 0.0
      %491 = vst.msk [vmem:[#allocation2 + $0xe9] sm:$0x1] %vm463, 0.0
      %492 = vst.msk [vmem:[#allocation2 + $0x101] sm:$0x1] %vm463, 0.0
      %493 = vst.msk [vmem:[#allocation2 + $0x119] sm:$0x1] %vm463, 0.0
      %494 = vst.msk [vmem:[#allocation2 + $0x131] sm:$0x1] %vm463, 0.0
      %495 = vst.msk [vmem:[#allocation2 + $0x149] sm:$0x1] %vm463, 0.0
      %496 = vst.msk [vmem:[#allocation2 + $0x161] sm:$0x1] %vm463, 0.0
      %497 = vst.msk [vmem:[#allocation2 + $0x179] sm:$0x1] %vm463, 0.0
      %498 = vst.msk [vmem:[#allocation2 + $0x191] sm:$0x1] %vm463, 0.0
      %499 = vst.msk [vmem:[#allocation2 + $0x1a9] sm:$0x1] %vm463, 0.0
      %v500 = vld [vmem:[#allocation2] sm:$0xff]
      %v501 = vld [vmem:[#allocation2 + $0x8] sm:$0xff]
      %v502 = vld [vmem:[#allocation2 + $0x18] sm:$0xff]
      %v503 = vld [vmem:[#allocation2 + $0x20] sm:$0xff]
      %v504 = vld [vmem:[#allocation2 + $0x30] sm:$0xff]
      %v505 = vld [vmem:[#allocation2 + $0x38] sm:$0xff]
      %v506 = vld [vmem:[#allocation2 + $0x48] sm:$0xff]
      %v507 = vld [vmem:[#allocation2 + $0x50] sm:$0xff]
      %v508 = vld [vmem:[#allocation2 + $0x60] sm:$0xff]
      %v509 = vld [vmem:[#allocation2 + $0x68] sm:$0xff]
      %v510 = vld [vmem:[#allocation2 + $0x78] sm:$0xff]
      %v511 = vld [vmem:[#allocation2 + $0x80] sm:$0xff]
      %v512 = vld [vmem:[#allocation2 + $0x90] sm:$0xff]
      %v513 = vld [vmem:[#allocation2 + $0x98] sm:$0xff]
      %v514 = vld [vmem:[#allocation2 + $0xa8] sm:$0xff]
      %v515 = vld [vmem:[#allocation2 + $0xb0] sm:$0xff]
      %v516 = vld [vmem:[#allocation2 + $0xc0] sm:$0xff]
      %v517 = vld [vmem:[#allocation2 + $0xc8] sm:$0xff]
      %v518 = vld [vmem:[#allocation2 + $0xd8] sm:$0xff]
      %v519 = vld [vmem:[#allocation2 + $0xe0] sm:$0xff]
      %v520 = vld [vmem:[#allocation2 + $0xf0] sm:$0xff]
      %v521 = vld [vmem:[#allocation2 + $0xf8] sm:$0xff]
      %v522 = vld [vmem:[#allocation2 + $0x108] sm:$0xff]
      %v523 = vld [vmem:[#allocation2 + $0x110] sm:$0xff]
      %v524 = vld [vmem:[#allocation2 + $0x120] sm:$0xff]
      %v525 = vld [vmem:[#allocation2 + $0x128] sm:$0xff]
      %v526 = vld [vmem:[#allocation2 + $0x138] sm:$0xff]
      %v527 = vld [vmem:[#allocation2 + $0x140] sm:$0xff]
      %v528 = vld [vmem:[#allocation2 + $0x150] sm:$0xff]
      %v529 = vld [vmem:[#allocation2 + $0x158] sm:$0xff]
      %v530 = vld [vmem:[#allocation2 + $0x168] sm:$0xff]
      %v531 = vld [vmem:[#allocation2 + $0x170] sm:$0xff]
      %v532 = vld [vmem:[%s3] sm:$0xf]
      %v533 = vld [vmem:[#allocation2 + $0x1] sm:$0xff]
      %v534 = vld [vmem:[#allocation2 + $0x9] sm:$0xff]
      %v535 = vld [vmem:[#allocation2 + $0x19] sm:$0xff]
      %v536 = vld [vmem:[#allocation2 + $0x21] sm:$0xff]
      %v537 = vld [vmem:[#allocation2 + $0x31] sm:$0xff]
      %v538 = vld [vmem:[#allocation2 + $0x39] sm:$0xff]
      %v539 = vld [vmem:[#allocation2 + $0x49] sm:$0xff]
      %v540 = vld [vmem:[#allocation2 + $0x51] sm:$0xff]
      %v541 = vld [vmem:[#allocation2 + $0x61] sm:$0xff]
      %v542 = vld [vmem:[#allocation2 + $0x69] sm:$0xff]
      %v543 = vld [vmem:[#allocation2 + $0x79] sm:$0xff]
      %v544 = vld [vmem:[#allocation2 + $0x81] sm:$0xff]
      %v545 = vld [vmem:[#allocation2 + $0x91] sm:$0xff]
      %v546 = vld [vmem:[#allocation2 + $0x99] sm:$0xff]
      %v547 = vld [vmem:[#allocation2 + $0xa9] sm:$0xff]
      %v548 = vld [vmem:[#allocation2 + $0xb1] sm:$0xff]
      %v549 = vld [vmem:[#allocation2 + $0xc1] sm:$0xff]
      %v550 = vld [vmem:[#allocation2 + $0xc9] sm:$0xff]
      %v551 = vld [vmem:[#allocation2 + $0xd9] sm:$0xff]
      %v552 = vld [vmem:[#allocation2 + $0xe1] sm:$0xff]
      %v553 = vld [vmem:[#allocation2 + $0xf1] sm:$0xff]
      %v554 = vld [vmem:[#allocation2 + $0xf9] sm:$0xff]
      %v555 = vld [vmem:[#allocation2 + $0x109] sm:$0xff]
      %v556 = vld [vmem:[#allocation2 + $0x111] sm:$0xff]
      %v557 = vld [vmem:[#allocation2 + $0x121] sm:$0xff]
      %v558 = vld [vmem:[#allocation2 + $0x129] sm:$0xff]
      %v559 = vld [vmem:[#allocation2 + $0x139] sm:$0xff]
      %v560 = vld [vmem:[#allocation2 + $0x141] sm:$0xff]
      %v561 = vld [vmem:[#allocation2 + $0x151] sm:$0xff]
      %v562 = vld [vmem:[#allocation2 + $0x159] sm:$0xff]
      %v563 = vld [vmem:[#allocation2 + $0x169] sm:$0xff]
      %v564 = vld [vmem:[#allocation2 + $0x171] sm:$0xff]
      %s565 = scalar_lea.vmem %s3, 4
      %v566 = vld [vmem:[%s565] sm:$0xf]
      %v568 = vsel %vm422, %v533, 0
      %v571 = vsel %vm422, %v534, 0
      %v574 = vsel %vm422, %v535, 0
      %v577 = vsel %vm422, %v536, 0
      %v580 = vsel %vm422, %v537, 0
      %v583 = vsel %vm422, %v538, 0
      %v586 = vsel %vm422, %v539, 0
      %v589 = vsel %vm422, %v540, 0
      %v592 = vsel %vm422, %v541, 0
      %v595 = vsel %vm422, %v542, 0
      %v598 = vsel %vm422, %v543, 0
      %v601 = vsel %vm422, %v544, 0
      %v604 = vsel %vm422, %v545, 0
      %v607 = vsel %vm422, %v546, 0
      %v610 = vsel %vm422, %v547, 0
      %v613 = vsel %vm422, %v548, 0
      %v616 = vsel %vm422, %v549, 0
      %v619 = vsel %vm422, %v550, 0
      %v622 = vsel %vm422, %v551, 0
      %v625 = vsel %vm422, %v552, 0
      %v628 = vsel %vm422, %v553, 0
      %v631 = vsel %vm422, %v554, 0
      %v634 = vsel %vm422, %v555, 0
      %v637 = vsel %vm422, %v556, 0
      %v640 = vsel %vm422, %v557, 0
      %v643 = vsel %vm422, %v558, 0
      %v646 = vsel %vm422, %v559, 0
      %v649 = vsel %vm422, %v560, 0
      %v652 = vsel %vm422, %v561, 0
      %v655 = vsel %vm422, %v562, 0
      %v658 = vsel %vm422, %v563, 0
      %v661 = vsel %vm422, %v564, 0
      %vm663 = vcmask 1043456
      %v665 = vsel %vm663, %v566, 0
      %667 = vmatprep.subr.mxu0 0.0
      %668 = vmatpush1.msra.mxu0 0.0
      %669 = vmatprep.subr.mxu0 0.0
      %670 = vmatpush1.msra.mxu0 0.0
      %671 = vmatprep.subr.mxu0 0.0
      %672 = vmatpush1.msra.mxu0 0.0
      %673 = vmatprep.subr.mxu0 0.0
      %674 = vmatpush1.msra.mxu0 0.0
      %675 = vmatprep.subr.mxu0 0.0
      %676 = vmatpush1.msra.mxu0 0.0
      %677 = vmatprep.subr.mxu0 0.0
      %678 = vmatpush1.msra.mxu0 0.0
      %679 = vmatprep.subr.mxu0 0.0
      %680 = vmatpush1.msra.mxu0 0.0
      %681 = vmatprep.subr.mxu0 0.0
      %682 = vmatpush1.msra.mxu0 0.0
      %683 = vmatprep.subr.mxu0 0.0
      %684 = vmatpush1.msra.mxu0 0.0
      %685 = vmatprep.subr.mxu0 0.0
      %686 = vmatpush1.msra.mxu0 0.0
      %687 = vmatprep.subr.mxu0 0.0
      %688 = vmatpush1.msra.mxu0 0.0
      %689 = vmatprep.subr.mxu0 0.0
      %690 = vmatpush1.msra.mxu0 0.0
      %691 = vmatprep.subr.mxu0 0.0
      %692 = vmatpush1.msra.mxu0 0.0
      %693 = vmatprep.subr.mxu0 0.0
      %694 = vmatpush1.msra.mxu0 0.0
      %695 = vmatprep.subr.mxu0 0.0
      %696 = vmatpush1.msra.mxu0 0.0
      %697 = vmatprep.subr.mxu0 0.0
      %698 = vmatpush1.msra.mxu0 %v665
      %699 = vmatprep.subr.mxu0 0.0
      %700 = vmatpush2.msra.mxu0 0.0
      %701 = vmatprep.subr.mxu0 0.0
      %702 = vmatpush2.msra.mxu0 0.0
      %703 = vmatprep.subr.mxu0 0.0
      %704 = vmatpush2.msra.mxu0 0.0
      %705 = vmatprep.subr.mxu0 0.0
      %706 = vmatpush2.msra.mxu0 0.0
      %707 = vmatprep.subr.mxu0 0.0
      %708 = vmatpush2.msra.mxu0 0.0
      %709 = vmatprep.subr.mxu0 0.0
      %710 = vmatpush2.msra.mxu0 0.0
      %711 = vmatprep.subr.mxu0 0.0
      %712 = vmatpush2.msra.mxu0 0.0
      %713 = vmatprep.subr.mxu0 0.0
      %714 = vmatpush2.msra.mxu0 0.0
      %715 = vmatprep.subr.mxu0 0.0
      %716 = vmatpush2.msra.mxu0 0.0
      %717 = vmatprep.subr.mxu0 0.0
      %718 = vmatpush2.msra.mxu0 0.0
      %719 = vmatprep.subr.mxu0 0.0
      %720 = vmatpush2.msra.mxu0 0.0
      %721 = vmatprep.subr.mxu0 0.0
      %722 = vmatpush2.msra.mxu0 0.0
      %723 = vmatprep.subr.mxu0 0.0
      %724 = vmatpush2.msra.mxu0 0.0
      %725 = vmatprep.subr.mxu0 0.0
      %726 = vmatpush2.msra.mxu0 0.0
      %727 = vmatprep.subr.mxu0 0.0
      %728 = vmatpush2.msra.mxu0 0.0
      %729 = vmatprep.subr.mxu0 0.0
      %730 = vmatpush2.msra.mxu0 0.0
      %731 = vmatprep.mubr.f32.mxu0 0.0
      %732 = vmatmul.mubr.f32.gmra.mxu0 %v568
      %v733 = vpop.f32.mrf.mxu0
      %v734 = vadd.f32 0.0, %v733
      %v735 = vpop.f32.mrf.mxu0
      %736 = vmatprep.mubr.f32.mxu0 0.0
      %737 = vmatmul.mubr.f32.gmra.mxu0 %v571
      %v738 = vpop.f32.mrf.mxu0
      %v739 = vadd.f32 0.0, %v738
      %v740 = vpop.f32.mrf.mxu0
      %741 = vmatprep.mubr.f32.mxu0 0.0
      %742 = vmatmul.mubr.f32.gmra.mxu0 %v574
      %v743 = vpop.f32.mrf.mxu0
      %v744 = vadd.f32 0.0, %v743
      %v745 = vpop.f32.mrf.mxu0
      %746 = vmatprep.mubr.f32.mxu0 0.0
      %747 = vmatmul.mubr.f32.gmra.mxu0 %v577
      %v748 = vpop.f32.mrf.mxu0
      %v749 = vadd.f32 0.0, %v748
      %v750 = vpop.f32.mrf.mxu0
      %751 = vmatprep.mubr.f32.mxu0 0.0
      %752 = vmatmul.mubr.f32.gmra.mxu0 %v580
      %v753 = vpop.f32.mrf.mxu0
      %v754 = vadd.f32 0.0, %v753
      %v755 = vpop.f32.mrf.mxu0
      %756 = vmatprep.mubr.f32.mxu0 0.0
      %757 = vmatmul.mubr.f32.gmra.mxu0 %v583
      %v758 = vpop.f32.mrf.mxu0
      %v759 = vadd.f32 0.0, %v758
      %v760 = vpop.f32.mrf.mxu0
      %761 = vmatprep.mubr.f32.mxu0 0.0
      %762 = vmatmul.mubr.f32.gmra.mxu0 %v586
      %v763 = vpop.f32.mrf.mxu0
      %v764 = vadd.f32 0.0, %v763
      %v765 = vpop.f32.mrf.mxu0
      %766 = vmatprep.mubr.f32.mxu0 0.0
      %767 = vmatmul.mubr.f32.gmra.mxu0 %v589
      %v768 = vpop.f32.mrf.mxu0
      %v769 = vadd.f32 0.0, %v768
      %v770 = vpop.f32.mrf.mxu0
      %771 = vmatprep.mubr.f32.mxu0 0.0
      %772 = vmatmul.mubr.f32.gmra.mxu0 %v592
      %v773 = vpop.f32.mrf.mxu0
      %v774 = vadd.f32 0.0, %v773
      %v775 = vpop.f32.mrf.mxu0
      %776 = vmatprep.mubr.f32.mxu0 0.0
      %777 = vmatmul.mubr.f32.gmra.mxu0 %v595
      %v778 = vpop.f32.mrf.mxu0
      %v779 = vadd.f32 0.0, %v778
      %v780 = vpop.f32.mrf.mxu0
      %781 = vmatprep.mubr.f32.mxu0 0.0
      %782 = vmatmul.mubr.f32.gmra.mxu0 %v598
      %v783 = vpop.f32.mrf.mxu0
      %v784 = vadd.f32 0.0, %v783
      %v785 = vpop.f32.mrf.mxu0
      %786 = vmatprep.mubr.f32.mxu0 0.0
      %787 = vmatmul.mubr.f32.gmra.mxu0 %v601
      %v788 = vpop.f32.mrf.mxu0
      %v789 = vadd.f32 0.0, %v788
      %v790 = vpop.f32.mrf.mxu0
      %791 = vmatprep.mubr.f32.mxu0 0.0
      %792 = vmatmul.mubr.f32.gmra.mxu0 %v604
      %v793 = vpop.f32.mrf.mxu0
      %v794 = vadd.f32 0.0, %v793
      %v795 = vpop.f32.mrf.mxu0
      %796 = vmatprep.mubr.f32.mxu0 0.0
      %797 = vmatmul.mubr.f32.gmra.mxu0 %v607
      %v798 = vpop.f32.mrf.mxu0
      %v799 = vadd.f32 0.0, %v798
      %v800 = vpop.f32.mrf.mxu0
      %801 = vmatprep.mubr.f32.mxu0 0.0
      %802 = vmatmul.mubr.f32.gmra.mxu0 %v610
      %v803 = vpop.f32.mrf.mxu0
      %v804 = vadd.f32 0.0, %v803
      %v805 = vpop.f32.mrf.mxu0
      %806 = vmatprep.mubr.f32.mxu0 0.0
      %807 = vmatmul.mubr.f32.gmra.mxu0 %v613
      %v808 = vpop.f32.mrf.mxu0
      %v809 = vadd.f32 0.0, %v808
      %v810 = vpop.f32.mrf.mxu0
      %811 = vmatprep.mubr.f32.mxu0 0.0
      %812 = vmatmul.mubr.f32.gmra.mxu0 %v616
      %v813 = vpop.f32.mrf.mxu0
      %v814 = vadd.f32 0.0, %v813
      %v815 = vpop.f32.mrf.mxu0
      %816 = vmatprep.mubr.f32.mxu0 0.0
      %817 = vmatmul.mubr.f32.gmra.mxu0 %v619
      %v818 = vpop.f32.mrf.mxu0
      %v819 = vadd.f32 0.0, %v818
      %v820 = vpop.f32.mrf.mxu0
      %821 = vmatprep.mubr.f32.mxu0 0.0
      %822 = vmatmul.mubr.f32.gmra.mxu0 %v622
      %v823 = vpop.f32.mrf.mxu0
      %v824 = vadd.f32 0.0, %v823
      %v825 = vpop.f32.mrf.mxu0
      %826 = vmatprep.mubr.f32.mxu0 0.0
      %827 = vmatmul.mubr.f32.gmra.mxu0 %v625
      %v828 = vpop.f32.mrf.mxu0
      %v829 = vadd.f32 0.0, %v828
      %v830 = vpop.f32.mrf.mxu0
      %831 = vmatprep.mubr.f32.mxu0 0.0
      %832 = vmatmul.mubr.f32.gmra.mxu0 %v628
      %v833 = vpop.f32.mrf.mxu0
      %v834 = vadd.f32 0.0, %v833
      %v835 = vpop.f32.mrf.mxu0
      %836 = vmatprep.mubr.f32.mxu0 0.0
      %837 = vmatmul.mubr.f32.gmra.mxu0 %v631
      %v838 = vpop.f32.mrf.mxu0
      %v839 = vadd.f32 0.0, %v838
      %v840 = vpop.f32.mrf.mxu0
      %841 = vmatprep.mubr.f32.mxu0 0.0
      %842 = vmatmul.mubr.f32.gmra.mxu0 %v634
      %v843 = vpop.f32.mrf.mxu0
      %v844 = vadd.f32 0.0, %v843
      %v845 = vpop.f32.mrf.mxu0
      %846 = vmatprep.mubr.f32.mxu0 0.0
      %847 = vmatmul.mubr.f32.gmra.mxu0 %v637
      %v848 = vpop.f32.mrf.mxu0
      %v849 = vadd.f32 0.0, %v848
      %v850 = vpop.f32.mrf.mxu0
      %851 = vmatprep.mubr.f32.mxu0 0.0
      %852 = vmatmul.mubr.f32.gmra.mxu0 %v640
      %v853 = vpop.f32.mrf.mxu0
      %v854 = vadd.f32 0.0, %v853
      %v855 = vpop.f32.mrf.mxu0
      %856 = vmatprep.mubr.f32.mxu0 0.0
      %857 = vmatmul.mubr.f32.gmra.mxu0 %v643
      %v858 = vpop.f32.mrf.mxu0
      %v859 = vadd.f32 0.0, %v858
      %v860 = vpop.f32.mrf.mxu0
      %861 = vmatprep.mubr.f32.mxu0 0.0
      %862 = vmatmul.mubr.f32.gmra.mxu0 %v646
      %v863 = vpop.f32.mrf.mxu0
      %v864 = vadd.f32 0.0, %v863
      %v865 = vpop.f32.mrf.mxu0
      %866 = vmatprep.mubr.f32.mxu0 0.0
      %867 = vmatmul.mubr.f32.gmra.mxu0 %v649
      %v868 = vpop.f32.mrf.mxu0
      %v869 = vadd.f32 0.0, %v868
      %v870 = vpop.f32.mrf.mxu0
      %871 = vmatprep.mubr.f32.mxu0 0.0
      %872 = vmatmul.mubr.f32.gmra.mxu0 %v652
      %v873 = vpop.f32.mrf.mxu0
      %v874 = vadd.f32 0.0, %v873
      %v875 = vpop.f32.mrf.mxu0
      %876 = vmatprep.mubr.f32.mxu0 0.0
      %877 = vmatmul.mubr.f32.gmra.mxu0 %v655
      %v878 = vpop.f32.mrf.mxu0
      %v879 = vadd.f32 0.0, %v878
      %v880 = vpop.f32.mrf.mxu0
      %881 = vmatprep.mubr.f32.mxu0 0.0
      %882 = vmatmul.mubr.f32.gmra.mxu0 %v658
      %v883 = vpop.f32.mrf.mxu0
      %v884 = vadd.f32 0.0, %v883
      %v885 = vpop.f32.mrf.mxu0
      %886 = vmatprep.mubr.f32.mxu0 0.0
      %887 = vmatmul.mubr.f32.gmra.mxu0 %v661
      %v888 = vpop.f32.mrf.mxu0
      %v889 = vadd.f32 0.0, %v888
      %v890 = vpop.f32.mrf.mxu0
      %891 = vdwg.mxu0
      %v893 = vsel %vm422, %v500, 0
      %v896 = vsel %vm422, %v501, 0
      %v899 = vsel %vm422, %v502, 0
      %v902 = vsel %vm422, %v503, 0
      %v905 = vsel %vm422, %v504, 0
      %v908 = vsel %vm422, %v505, 0
      %v911 = vsel %vm422, %v506, 0
      %v914 = vsel %vm422, %v507, 0
      %v917 = vsel %vm422, %v508, 0
      %v920 = vsel %vm422, %v509, 0
      %v923 = vsel %vm422, %v510, 0
      %v926 = vsel %vm422, %v511, 0
      %v929 = vsel %vm422, %v512, 0
      %v932 = vsel %vm422, %v513, 0
      %v935 = vsel %vm422, %v514, 0
      %v938 = vsel %vm422, %v515, 0
      %v941 = vsel %vm422, %v516, 0
      %v944 = vsel %vm422, %v517, 0
      %v947 = vsel %vm422, %v518, 0
      %v950 = vsel %vm422, %v519, 0
      %v953 = vsel %vm422, %v520, 0
      %v956 = vsel %vm422, %v521, 0
      %v959 = vsel %vm422, %v522, 0
      %v962 = vsel %vm422, %v523, 0
      %v965 = vsel %vm422, %v524, 0
      %v968 = vsel %vm422, %v525, 0
      %v971 = vsel %vm422, %v526, 0
      %v974 = vsel %vm422, %v527, 0
      %v977 = vsel %vm422, %v528, 0
      %v980 = vsel %vm422, %v529, 0
      %v983 = vsel %vm422, %v530, 0
      %v986 = vsel %vm422, %v531, 0
      %v989 = vsel %vm663, %v532, 0
      %991 = vmatprep.subr.mxu0 0.0
      %992 = vmatpush1.msra.mxu0 0.0
      %993 = vmatprep.subr.mxu0 0.0
      %994 = vmatpush1.msra.mxu0 0.0
      %995 = vmatprep.subr.mxu0 0.0
      %996 = vmatpush1.msra.mxu0 0.0
      %997 = vmatprep.subr.mxu0 0.0
      %998 = vmatpush1.msra.mxu0 0.0
      %999 = vmatprep.subr.mxu0 0.0
      %1000 = vmatpush1.msra.mxu0 0.0
      %1001 = vmatprep.subr.mxu0 0.0
      %1002 = vmatpush1.msra.mxu0 0.0
      %1003 = vmatprep.subr.mxu0 0.0
      %1004 = vmatpush1.msra.mxu0 0.0
      %1005 = vmatprep.subr.mxu0 0.0
      %1006 = vmatpush1.msra.mxu0 0.0
      %1007 = vmatprep.subr.mxu0 0.0
      %1008 = vmatpush1.msra.mxu0 0.0
      %1009 = vmatprep.subr.mxu0 0.0
      %1010 = vmatpush1.msra.mxu0 0.0
      %1011 = vmatprep.subr.mxu0 0.0
      %1012 = vmatpush1.msra.mxu0 0.0
      %1013 = vmatprep.subr.mxu0 0.0
      %1014 = vmatpush1.msra.mxu0 0.0
      %1015 = vmatprep.subr.mxu0 0.0
      %1016 = vmatpush1.msra.mxu0 0.0
      %1017 = vmatprep.subr.mxu0 0.0
      %1018 = vmatpush1.msra.mxu0 0.0
      %1019 = vmatprep.subr.mxu0 0.0
      %1020 = vmatpush1.msra.mxu0 0.0
      %1021 = vmatprep.subr.mxu0 0.0
      %1022 = vmatpush1.msra.mxu0 %v989
      %1023 = vmatprep.subr.mxu0 0.0
      %1024 = vmatpush2.msra.mxu0 0.0
      %1025 = vmatprep.subr.mxu0 0.0
      %1026 = vmatpush2.msra.mxu0 0.0
      %1027 = vmatprep.subr.mxu0 0.0
      %1028 = vmatpush2.msra.mxu0 0.0
      %1029 = vmatprep.subr.mxu0 0.0
      %1030 = vmatpush2.msra.mxu0 0.0
      %1031 = vmatprep.subr.mxu0 0.0
      %1032 = vmatpush2.msra.mxu0 0.0
      %1033 = vmatprep.subr.mxu0 0.0
      %1034 = vmatpush2.msra.mxu0 0.0
      %1035 = vmatprep.subr.mxu0 0.0
      %1036 = vmatpush2.msra.mxu0 0.0
      %1037 = vmatprep.subr.mxu0 0.0
      %1038 = vmatpush2.msra.mxu0 0.0
      %1039 = vmatprep.subr.mxu0 0.0
      %1040 = vmatpush2.msra.mxu0 0.0
      %1041 = vmatprep.subr.mxu0 0.0
      %1042 = vmatpush2.msra.mxu0 0.0
      %1043 = vmatprep.subr.mxu0 0.0
      %1044 = vmatpush2.msra.mxu0 0.0
      %1045 = vmatprep.subr.mxu0 0.0
      %1046 = vmatpush2.msra.mxu0 0.0
      %1047 = vmatprep.subr.mxu0 0.0
      %1048 = vmatpush2.msra.mxu0 0.0
      %1049 = vmatprep.subr.mxu0 0.0
      %1050 = vmatpush2.msra.mxu0 0.0
      %1051 = vmatprep.subr.mxu0 0.0
      %1052 = vmatpush2.msra.mxu0 0.0
      %1053 = vmatprep.subr.mxu0 0.0
      %1054 = vmatpush2.msra.mxu0 0.0
      %1055 = vmatprep.mubr.f32.mxu0 0.0
      %1056 = vmatmul.mubr.f32.gmra.mxu0 %v893
      %v1057 = vpop.f32.mrf.mxu0
      %v1058 = vadd.f32 %v734, %v1057
      %v1059 = vpop.f32.mrf.mxu0
      %1060 = vmatprep.mubr.f32.mxu0 0.0
      %1061 = vmatmul.mubr.f32.gmra.mxu0 %v896
      %v1062 = vpop.f32.mrf.mxu0
      %v1063 = vadd.f32 %v739, %v1062
      %v1064 = vpop.f32.mrf.mxu0
      %1065 = vmatprep.mubr.f32.mxu0 0.0
      %1066 = vmatmul.mubr.f32.gmra.mxu0 %v899
      %v1067 = vpop.f32.mrf.mxu0
      %v1068 = vadd.f32 %v744, %v1067
      %v1069 = vpop.f32.mrf.mxu0
      %1070 = vmatprep.mubr.f32.mxu0 0.0
      %1071 = vmatmul.mubr.f32.gmra.mxu0 %v902
      %v1072 = vpop.f32.mrf.mxu0
      %v1073 = vadd.f32 %v749, %v1072
      %v1074 = vpop.f32.mrf.mxu0
      %1075 = vmatprep.mubr.f32.mxu0 0.0
      %1076 = vmatmul.mubr.f32.gmra.mxu0 %v905
      %v1077 = vpop.f32.mrf.mxu0
      %v1078 = vadd.f32 %v754, %v1077
      %v1079 = vpop.f32.mrf.mxu0
      %1080 = vmatprep.mubr.f32.mxu0 0.0
      %1081 = vmatmul.mubr.f32.gmra.mxu0 %v908
      %v1082 = vpop.f32.mrf.mxu0
      %v1083 = vadd.f32 %v759, %v1082
      %v1084 = vpop.f32.mrf.mxu0
      %1085 = vmatprep.mubr.f32.mxu0 0.0
      %1086 = vmatmul.mubr.f32.gmra.mxu0 %v911
      %v1087 = vpop.f32.mrf.mxu0
      %v1088 = vadd.f32 %v764, %v1087
      %v1089 = vpop.f32.mrf.mxu0
      %1090 = vmatprep.mubr.f32.mxu0 0.0
      %1091 = vmatmul.mubr.f32.gmra.mxu0 %v914
      %v1092 = vpop.f32.mrf.mxu0
      %v1093 = vadd.f32 %v769, %v1092
      %v1094 = vpop.f32.mrf.mxu0
      %1095 = vmatprep.mubr.f32.mxu0 0.0
      %1096 = vmatmul.mubr.f32.gmra.mxu0 %v917
      %v1097 = vpop.f32.mrf.mxu0
      %v1098 = vadd.f32 %v774, %v1097
      %v1099 = vpop.f32.mrf.mxu0
      %1100 = vmatprep.mubr.f32.mxu0 0.0
      %1101 = vmatmul.mubr.f32.gmra.mxu0 %v920
      %v1102 = vpop.f32.mrf.mxu0
      %v1103 = vadd.f32 %v779, %v1102
      %v1104 = vpop.f32.mrf.mxu0
      %1105 = vmatprep.mubr.f32.mxu0 0.0
      %1106 = vmatmul.mubr.f32.gmra.mxu0 %v923
      %v1107 = vpop.f32.mrf.mxu0
      %v1108 = vadd.f32 %v784, %v1107
      %v1109 = vpop.f32.mrf.mxu0
      %1110 = vmatprep.mubr.f32.mxu0 0.0
      %1111 = vmatmul.mubr.f32.gmra.mxu0 %v926
      %v1112 = vpop.f32.mrf.mxu0
      %v1113 = vadd.f32 %v789, %v1112
      %v1114 = vpop.f32.mrf.mxu0
      %1115 = vmatprep.mubr.f32.mxu0 0.0
      %1116 = vmatmul.mubr.f32.gmra.mxu0 %v929
      %v1117 = vpop.f32.mrf.mxu0
      %v1118 = vadd.f32 %v794, %v1117
      %v1119 = vpop.f32.mrf.mxu0
      %1120 = vmatprep.mubr.f32.mxu0 0.0
      %1121 = vmatmul.mubr.f32.gmra.mxu0 %v932
      %v1122 = vpop.f32.mrf.mxu0
      %v1123 = vadd.f32 %v799, %v1122
      %v1124 = vpop.f32.mrf.mxu0
      %1125 = vmatprep.mubr.f32.mxu0 0.0
      %1126 = vmatmul.mubr.f32.gmra.mxu0 %v935
      %v1127 = vpop.f32.mrf.mxu0
      %v1128 = vadd.f32 %v804, %v1127
      %v1129 = vpop.f32.mrf.mxu0
      %1130 = vmatprep.mubr.f32.mxu0 0.0
      %1131 = vmatmul.mubr.f32.gmra.mxu0 %v938
      %v1132 = vpop.f32.mrf.mxu0
      %v1133 = vadd.f32 %v809, %v1132
      %v1134 = vpop.f32.mrf.mxu0
      %1135 = vmatprep.mubr.f32.mxu0 0.0
      %1136 = vmatmul.mubr.f32.gmra.mxu0 %v941
      %v1137 = vpop.f32.mrf.mxu0
      %v1138 = vadd.f32 %v814, %v1137
      %v1139 = vpop.f32.mrf.mxu0
      %1140 = vmatprep.mubr.f32.mxu0 0.0
      %1141 = vmatmul.mubr.f32.gmra.mxu0 %v944
      %v1142 = vpop.f32.mrf.mxu0
      %v1143 = vadd.f32 %v819, %v1142
      %v1144 = vpop.f32.mrf.mxu0
      %1145 = vmatprep.mubr.f32.mxu0 0.0
      %1146 = vmatmul.mubr.f32.gmra.mxu0 %v947
      %v1147 = vpop.f32.mrf.mxu0
      %v1148 = vadd.f32 %v824, %v1147
      %v1149 = vpop.f32.mrf.mxu0
      %1150 = vmatprep.mubr.f32.mxu0 0.0
      %1151 = vmatmul.mubr.f32.gmra.mxu0 %v950
      %v1152 = vpop.f32.mrf.mxu0
      %v1153 = vadd.f32 %v829, %v1152
      %v1154 = vpop.f32.mrf.mxu0
      %1155 = vmatprep.mubr.f32.mxu0 0.0
      %1156 = vmatmul.mubr.f32.gmra.mxu0 %v953
      %v1157 = vpop.f32.mrf.mxu0
      %v1158 = vadd.f32 %v834, %v1157
      %v1159 = vpop.f32.mrf.mxu0
      %1160 = vmatprep.mubr.f32.mxu0 0.0
      %1161 = vmatmul.mubr.f32.gmra.mxu0 %v956
      %v1162 = vpop.f32.mrf.mxu0
      %v1163 = vadd.f32 %v839, %v1162
      %v1164 = vpop.f32.mrf.mxu0
      %1165 = vmatprep.mubr.f32.mxu0 0.0
      %1166 = vmatmul.mubr.f32.gmra.mxu0 %v959
      %v1167 = vpop.f32.mrf.mxu0
      %v1168 = vadd.f32 %v844, %v1167
      %v1169 = vpop.f32.mrf.mxu0
      %1170 = vmatprep.mubr.f32.mxu0 0.0
      %1171 = vmatmul.mubr.f32.gmra.mxu0 %v962
      %v1172 = vpop.f32.mrf.mxu0
      %v1173 = vadd.f32 %v849, %v1172
      %v1174 = vpop.f32.mrf.mxu0
      %1175 = vmatprep.mubr.f32.mxu0 0.0
      %1176 = vmatmul.mubr.f32.gmra.mxu0 %v965
      %v1177 = vpop.f32.mrf.mxu0
      %v1178 = vadd.f32 %v854, %v1177
      %v1179 = vpop.f32.mrf.mxu0
      %1180 = vmatprep.mubr.f32.mxu0 0.0
      %1181 = vmatmul.mubr.f32.gmra.mxu0 %v968
      %v1182 = vpop.f32.mrf.mxu0
      %v1183 = vadd.f32 %v859, %v1182
      %v1184 = vpop.f32.mrf.mxu0
      %1185 = vmatprep.mubr.f32.mxu0 0.0
      %1186 = vmatmul.mubr.f32.gmra.mxu0 %v971
      %v1187 = vpop.f32.mrf.mxu0
      %v1188 = vadd.f32 %v864, %v1187
      %v1189 = vpop.f32.mrf.mxu0
      %1190 = vmatprep.mubr.f32.mxu0 0.0
      %1191 = vmatmul.mubr.f32.gmra.mxu0 %v974
      %v1192 = vpop.f32.mrf.mxu0
      %v1193 = vadd.f32 %v869, %v1192
      %v1194 = vpop.f32.mrf.mxu0
      %1195 = vmatprep.mubr.f32.mxu0 0.0
      %1196 = vmatmul.mubr.f32.gmra.mxu0 %v977
      %v1197 = vpop.f32.mrf.mxu0
      %v1198 = vadd.f32 %v874, %v1197
      %v1199 = vpop.f32.mrf.mxu0
      %1200 = vmatprep.mubr.f32.mxu0 0.0
      %1201 = vmatmul.mubr.f32.gmra.mxu0 %v980
      %v1202 = vpop.f32.mrf.mxu0
      %v1203 = vadd.f32 %v879, %v1202
      %v1204 = vpop.f32.mrf.mxu0
      %1205 = vmatprep.mubr.f32.mxu0 0.0
      %1206 = vmatmul.mubr.f32.gmra.mxu0 %v983
      %v1207 = vpop.f32.mrf.mxu0
      %v1208 = vadd.f32 %v884, %v1207
      %v1209 = vpop.f32.mrf.mxu0
      %1210 = vmatprep.mubr.f32.mxu0 0.0
      %1211 = vmatmul.mubr.f32.gmra.mxu0 %v986
      %v1212 = vpop.f32.mrf.mxu0
      %v1213 = vadd.f32 %v889, %v1212
      %v1214 = vpop.f32.mrf.mxu0
      %1215 = vdwg.mxu0
      %v1216 = vld [vmem:[#allocation2 + $0x2] sm:$0xff]
      %v1217 = vld [vmem:[#allocation2 + $0xa] sm:$0xff]
      %v1218 = vld [vmem:[#allocation2 + $0x1a] sm:$0xff]
      %v1219 = vld [vmem:[#allocation2 + $0x22] sm:$0xff]
      %v1220 = vld [vmem:[#allocation2 + $0x32] sm:$0xff]
      %v1221 = vld [vmem:[#allocation2 + $0x3a] sm:$0xff]
      %v1222 = vld [vmem:[#allocation2 + $0x4a] sm:$0xff]
      %v1223 = vld [vmem:[#allocation2 + $0x52] sm:$0xff]
      %v1224 = vld [vmem:[#allocation2 + $0x62] sm:$0xff]
      %v1225 = vld [vmem:[#allocation2 + $0x6a] sm:$0xff]
      %v1226 = vld [vmem:[#allocation2 + $0x7a] sm:$0xff]
      %v1227 = vld [vmem:[#allocation2 + $0x82] sm:$0xff]
      %v1228 = vld [vmem:[#allocation2 + $0x92] sm:$0xff]
      %v1229 = vld [vmem:[#allocation2 + $0x9a] sm:$0xff]
      %v1230 = vld [vmem:[#allocation2 + $0xaa] sm:$0xff]
      %v1231 = vld [vmem:[#allocation2 + $0xb2] sm:$0xff]
      %v1232 = vld [vmem:[#allocation2 + $0xc2] sm:$0xff]
      %v1233 = vld [vmem:[#allocation2 + $0xca] sm:$0xff]
      %v1234 = vld [vmem:[#allocation2 + $0xda] sm:$0xff]
      %v1235 = vld [vmem:[#allocation2 + $0xe2] sm:$0xff]
      %v1236 = vld [vmem:[#allocation2 + $0xf2] sm:$0xff]
      %v1237 = vld [vmem:[#allocation2 + $0xfa] sm:$0xff]
      %v1238 = vld [vmem:[#allocation2 + $0x10a] sm:$0xff]
      %v1239 = vld [vmem:[#allocation2 + $0x112] sm:$0xff]
      %v1240 = vld [vmem:[#allocation2 + $0x122] sm:$0xff]
      %v1241 = vld [vmem:[#allocation2 + $0x12a] sm:$0xff]
      %v1242 = vld [vmem:[#allocation2 + $0x13a] sm:$0xff]
      %v1243 = vld [vmem:[#allocation2 + $0x142] sm:$0xff]
      %v1244 = vld [vmem:[#allocation2 + $0x152] sm:$0xff]
      %v1245 = vld [vmem:[#allocation2 + $0x15a] sm:$0xff]
      %v1246 = vld [vmem:[#allocation2 + $0x16a] sm:$0xff]
      %v1247 = vld [vmem:[#allocation2 + $0x172] sm:$0xff]
      %s1248 = scalar_lea.vmem %s3, 8
      %v1249 = vld [vmem:[%s1248] sm:$0xf]
      %v1251 = vsel %vm422, %v1216, 0
      %v1254 = vsel %vm422, %v1217, 0
      %v1257 = vsel %vm422, %v1218, 0
      %v1260 = vsel %vm422, %v1219, 0
      %v1263 = vsel %vm422, %v1220, 0
      %v1266 = vsel %vm422, %v1221, 0
      %v1269 = vsel %vm422, %v1222, 0
      %v1272 = vsel %vm422, %v1223, 0
      %v1275 = vsel %vm422, %v1224, 0
      %v1278 = vsel %vm422, %v1225, 0
      %v1281 = vsel %vm422, %v1226, 0
      %v1284 = vsel %vm422, %v1227, 0
      %v1287 = vsel %vm422, %v1228, 0
      %v1290 = vsel %vm422, %v1229, 0
      %v1293 = vsel %vm422, %v1230, 0
      %v1296 = vsel %vm422, %v1231, 0
      %v1299 = vsel %vm422, %v1232, 0
      %v1302 = vsel %vm422, %v1233, 0
      %v1305 = vsel %vm422, %v1234, 0
      %v1308 = vsel %vm422, %v1235, 0
      %v1311 = vsel %vm422, %v1236, 0
      %v1314 = vsel %vm422, %v1237, 0
      %v1317 = vsel %vm422, %v1238, 0
      %v1320 = vsel %vm422, %v1239, 0
      %v1323 = vsel %vm422, %v1240, 0
      %v1326 = vsel %vm422, %v1241, 0
      %v1329 = vsel %vm422, %v1242, 0
      %v1332 = vsel %vm422, %v1243, 0
      %v1335 = vsel %vm422, %v1244, 0
      %v1338 = vsel %vm422, %v1245, 0
      %v1341 = vsel %vm422, %v1246, 0
      %v1344 = vsel %vm422, %v1247, 0
      %v1347 = vsel %vm663, %v1249, 0
      %1349 = vmatprep.subr.mxu0 0.0
      %1350 = vmatpush1.msra.mxu0 0.0
      %1351 = vmatprep.subr.mxu0 0.0
      %1352 = vmatpush1.msra.mxu0 0.0
      %1353 = vmatprep.subr.mxu0 0.0
      %1354 = vmatpush1.msra.mxu0 0.0
      %1355 = vmatprep.subr.mxu0 0.0
      %1356 = vmatpush1.msra.mxu0 0.0
      %1357 = vmatprep.subr.mxu0 0.0
      %1358 = vmatpush1.msra.mxu0 0.0
      %1359 = vmatprep.subr.mxu0 0.0
      %1360 = vmatpush1.msra.mxu0 0.0
      %1361 = vmatprep.subr.mxu0 0.0
      %1362 = vmatpush1.msra.mxu0 0.0
      %1363 = vmatprep.subr.mxu0 0.0
      %1364 = vmatpush1.msra.mxu0 0.0
      %1365 = vmatprep.subr.mxu0 0.0
      %1366 = vmatpush1.msra.mxu0 0.0
      %1367 = vmatprep.subr.mxu0 0.0
      %1368 = vmatpush1.msra.mxu0 0.0
      %1369 = vmatprep.subr.mxu0 0.0
      %1370 = vmatpush1.msra.mxu0 0.0
      %1371 = vmatprep.subr.mxu0 0.0
      %1372 = vmatpush1.msra.mxu0 0.0
      %1373 = vmatprep.subr.mxu0 0.0
      %1374 = vmatpush1.msra.mxu0 0.0
      %1375 = vmatprep.subr.mxu0 0.0
      %1376 = vmatpush1.msra.mxu0 0.0
      %1377 = vmatprep.subr.mxu0 0.0
      %1378 = vmatpush1.msra.mxu0 0.0
      %1379 = vmatprep.subr.mxu0 0.0
      %1380 = vmatpush1.msra.mxu0 %v1347
      %1381 = vmatprep.subr.mxu0 0.0
      %1382 = vmatpush2.msra.mxu0 0.0
      %1383 = vmatprep.subr.mxu0 0.0
      %1384 = vmatpush2.msra.mxu0 0.0
      %1385 = vmatprep.subr.mxu0 0.0
      %1386 = vmatpush2.msra.mxu0 0.0
      %1387 = vmatprep.subr.mxu0 0.0
      %1388 = vmatpush2.msra.mxu0 0.0
      %1389 = vmatprep.subr.mxu0 0.0
      %1390 = vmatpush2.msra.mxu0 0.0
      %1391 = vmatprep.subr.mxu0 0.0
      %1392 = vmatpush2.msra.mxu0 0.0
      %1393 = vmatprep.subr.mxu0 0.0
      %1394 = vmatpush2.msra.mxu0 0.0
      %1395 = vmatprep.subr.mxu0 0.0
      %1396 = vmatpush2.msra.mxu0 0.0
      %1397 = vmatprep.subr.mxu0 0.0
      %1398 = vmatpush2.msra.mxu0 0.0
      %1399 = vmatprep.subr.mxu0 0.0
      %1400 = vmatpush2.msra.mxu0 0.0
      %1401 = vmatprep.subr.mxu0 0.0
      %1402 = vmatpush2.msra.mxu0 0.0
      %1403 = vmatprep.subr.mxu0 0.0
      %1404 = vmatpush2.msra.mxu0 0.0
      %1405 = vmatprep.subr.mxu0 0.0
      %1406 = vmatpush2.msra.mxu0 0.0
      %1407 = vmatprep.subr.mxu0 0.0
      %1408 = vmatpush2.msra.mxu0 0.0
      %1409 = vmatprep.subr.mxu0 0.0
      %1410 = vmatpush2.msra.mxu0 0.0
      %1411 = vmatprep.subr.mxu0 0.0
      %1412 = vmatpush2.msra.mxu0 0.0
      %1413 = vmatprep.mubr.f32.mxu0 0.0
      %1414 = vmatmul.mubr.f32.gmra.mxu0 %v1251
      %v1415 = vpop.f32.mrf.mxu0
      %v1416 = vadd.f32 0.0, %v1415
      %v1417 = vpop.f32.mrf.mxu0
      %1418 = vmatprep.mubr.f32.mxu0 0.0
      %1419 = vmatmul.mubr.f32.gmra.mxu0 %v1254
      %v1420 = vpop.f32.mrf.mxu0
      %v1421 = vadd.f32 0.0, %v1420
      %v1422 = vpop.f32.mrf.mxu0
      %1423 = vmatprep.mubr.f32.mxu0 0.0
      %1424 = vmatmul.mubr.f32.gmra.mxu0 %v1257
      %v1425 = vpop.f32.mrf.mxu0
      %v1426 = vadd.f32 0.0, %v1425
      %v1427 = vpop.f32.mrf.mxu0
      %1428 = vmatprep.mubr.f32.mxu0 0.0
      %1429 = vmatmul.mubr.f32.gmra.mxu0 %v1260
      %v1430 = vpop.f32.mrf.mxu0
      %v1431 = vadd.f32 0.0, %v1430
      %v1432 = vpop.f32.mrf.mxu0
      %1433 = vmatprep.mubr.f32.mxu0 0.0
      %1434 = vmatmul.mubr.f32.gmra.mxu0 %v1263
      %v1435 = vpop.f32.mrf.mxu0
      %v1436 = vadd.f32 0.0, %v1435
      %v1437 = vpop.f32.mrf.mxu0
      %1438 = vmatprep.mubr.f32.mxu0 0.0
      %1439 = vmatmul.mubr.f32.gmra.mxu0 %v1266
      %v1440 = vpop.f32.mrf.mxu0
      %v1441 = vadd.f32 0.0, %v1440
      %v1442 = vpop.f32.mrf.mxu0
      %1443 = vmatprep.mubr.f32.mxu0 0.0
      %1444 = vmatmul.mubr.f32.gmra.mxu0 %v1269
      %v1445 = vpop.f32.mrf.mxu0
      %v1446 = vadd.f32 0.0, %v1445
      %v1447 = vpop.f32.mrf.mxu0
      %1448 = vmatprep.mubr.f32.mxu0 0.0
      %1449 = vmatmul.mubr.f32.gmra.mxu0 %v1272
      %v1450 = vpop.f32.mrf.mxu0
      %v1451 = vadd.f32 0.0, %v1450
      %v1452 = vpop.f32.mrf.mxu0
      %1453 = vmatprep.mubr.f32.mxu0 0.0
      %1454 = vmatmul.mubr.f32.gmra.mxu0 %v1275
      %v1455 = vpop.f32.mrf.mxu0
      %v1456 = vadd.f32 0.0, %v1455
      %v1457 = vpop.f32.mrf.mxu0
      %1458 = vmatprep.mubr.f32.mxu0 0.0
      %1459 = vmatmul.mubr.f32.gmra.mxu0 %v1278
      %v1460 = vpop.f32.mrf.mxu0
      %v1461 = vadd.f32 0.0, %v1460
      %v1462 = vpop.f32.mrf.mxu0
      %1463 = vmatprep.mubr.f32.mxu0 0.0
      %1464 = vmatmul.mubr.f32.gmra.mxu0 %v1281
      %v1465 = vpop.f32.mrf.mxu0
      %v1466 = vadd.f32 0.0, %v1465
      %v1467 = vpop.f32.mrf.mxu0
      %1468 = vmatprep.mubr.f32.mxu0 0.0
      %1469 = vmatmul.mubr.f32.gmra.mxu0 %v1284
      %v1470 = vpop.f32.mrf.mxu0
      %v1471 = vadd.f32 0.0, %v1470
      %v1472 = vpop.f32.mrf.mxu0
      %1473 = vmatprep.mubr.f32.mxu0 0.0
      %1474 = vmatmul.mubr.f32.gmra.mxu0 %v1287
      %v1475 = vpop.f32.mrf.mxu0
      %v1476 = vadd.f32 0.0, %v1475
      %v1477 = vpop.f32.mrf.mxu0
      %1478 = vmatprep.mubr.f32.mxu0 0.0
      %1479 = vmatmul.mubr.f32.gmra.mxu0 %v1290
      %v1480 = vpop.f32.mrf.mxu0
      %v1481 = vadd.f32 0.0, %v1480
      %v1482 = vpop.f32.mrf.mxu0
      %1483 = vmatprep.mubr.f32.mxu0 0.0
      %1484 = vmatmul.mubr.f32.gmra.mxu0 %v1293
      %v1485 = vpop.f32.mrf.mxu0
      %v1486 = vadd.f32 0.0, %v1485
      %v1487 = vpop.f32.mrf.mxu0
      %1488 = vmatprep.mubr.f32.mxu0 0.0
      %1489 = vmatmul.mubr.f32.gmra.mxu0 %v1296
      %v1490 = vpop.f32.mrf.mxu0
      %v1491 = vadd.f32 0.0, %v1490
      %v1492 = vpop.f32.mrf.mxu0
      %1493 = vmatprep.mubr.f32.mxu0 0.0
      %1494 = vmatmul.mubr.f32.gmra.mxu0 %v1299
      %v1495 = vpop.f32.mrf.mxu0
      %v1496 = vadd.f32 0.0, %v1495
      %v1497 = vpop.f32.mrf.mxu0
      %1498 = vmatprep.mubr.f32.mxu0 0.0
      %1499 = vmatmul.mubr.f32.gmra.mxu0 %v1302
      %v1500 = vpop.f32.mrf.mxu0
      %v1501 = vadd.f32 0.0, %v1500
      %v1502 = vpop.f32.mrf.mxu0
      %1503 = vmatprep.mubr.f32.mxu0 0.0
      %1504 = vmatmul.mubr.f32.gmra.mxu0 %v1305
      %v1505 = vpop.f32.mrf.mxu0
      %v1506 = vadd.f32 0.0, %v1505
      %v1507 = vpop.f32.mrf.mxu0
      %1508 = vmatprep.mubr.f32.mxu0 0.0
      %1509 = vmatmul.mubr.f32.gmra.mxu0 %v1308
      %v1510 = vpop.f32.mrf.mxu0
      %v1511 = vadd.f32 0.0, %v1510
      %v1512 = vpop.f32.mrf.mxu0
      %1513 = vmatprep.mubr.f32.mxu0 0.0
      %1514 = vmatmul.mubr.f32.gmra.mxu0 %v1311
      %v1515 = vpop.f32.mrf.mxu0
      %v1516 = vadd.f32 0.0, %v1515
      %v1517 = vpop.f32.mrf.mxu0
      %1518 = vmatprep.mubr.f32.mxu0 0.0
      %1519 = vmatmul.mubr.f32.gmra.mxu0 %v1314
      %v1520 = vpop.f32.mrf.mxu0
      %v1521 = vadd.f32 0.0, %v1520
      %v1522 = vpop.f32.mrf.mxu0
      %1523 = vmatprep.mubr.f32.mxu0 0.0
      %1524 = vmatmul.mubr.f32.gmra.mxu0 %v1317
      %v1525 = vpop.f32.mrf.mxu0
      %v1526 = vadd.f32 0.0, %v1525
      %v1527 = vpop.f32.mrf.mxu0
      %1528 = vmatprep.mubr.f32.mxu0 0.0
      %1529 = vmatmul.mubr.f32.gmra.mxu0 %v1320
      %v1530 = vpop.f32.mrf.mxu0
      %v1531 = vadd.f32 0.0, %v1530
      %v1532 = vpop.f32.mrf.mxu0
      %1533 = vmatprep.mubr.f32.mxu0 0.0
      %1534 = vmatmul.mubr.f32.gmra.mxu0 %v1323
      %v1535 = vpop.f32.mrf.mxu0
      %v1536 = vadd.f32 0.0, %v1535
      %v1537 = vpop.f32.mrf.mxu0
      %1538 = vmatprep.mubr.f32.mxu0 0.0
      %1539 = vmatmul.mubr.f32.gmra.mxu0 %v1326
      %v1540 = vpop.f32.mrf.mxu0
      %v1541 = vadd.f32 0.0, %v1540
      %v1542 = vpop.f32.mrf.mxu0
      %1543 = vmatprep.mubr.f32.mxu0 0.0
      %1544 = vmatmul.mubr.f32.gmra.mxu0 %v1329
      %v1545 = vpop.f32.mrf.mxu0
      %v1546 = vadd.f32 0.0, %v1545
      %v1547 = vpop.f32.mrf.mxu0
      %1548 = vmatprep.mubr.f32.mxu0 0.0
      %1549 = vmatmul.mubr.f32.gmra.mxu0 %v1332
      %v1550 = vpop.f32.mrf.mxu0
      %v1551 = vadd.f32 0.0, %v1550
      %v1552 = vpop.f32.mrf.mxu0
      %1553 = vmatprep.mubr.f32.mxu0 0.0
      %1554 = vmatmul.mubr.f32.gmra.mxu0 %v1335
      %v1555 = vpop.f32.mrf.mxu0
      %v1556 = vadd.f32 0.0, %v1555
      %v1557 = vpop.f32.mrf.mxu0
      %1558 = vmatprep.mubr.f32.mxu0 0.0
      %1559 = vmatmul.mubr.f32.gmra.mxu0 %v1338
      %v1560 = vpop.f32.mrf.mxu0
      %v1561 = vadd.f32 0.0, %v1560
      %v1562 = vpop.f32.mrf.mxu0
      %1563 = vmatprep.mubr.f32.mxu0 0.0
      %1564 = vmatmul.mubr.f32.gmra.mxu0 %v1341
      %v1565 = vpop.f32.mrf.mxu0
      %v1566 = vadd.f32 0.0, %v1565
      %v1567 = vpop.f32.mrf.mxu0
      %1568 = vmatprep.mubr.f32.mxu0 0.0
      %1569 = vmatmul.mubr.f32.gmra.mxu0 %v1344
      %v1570 = vpop.f32.mrf.mxu0
      %v1571 = vadd.f32 0.0, %v1570
      %v1572 = vpop.f32.mrf.mxu0
      %1573 = vdwg.mxu0
      %v1574 = vadd.f32 %v1058, %v1416
      %v1575 = vadd.f32 %v1063, %v1421
      %v1576 = vadd.f32 %v1068, %v1426
      %v1577 = vadd.f32 %v1073, %v1431
      %v1578 = vadd.f32 %v1078, %v1436
      %v1579 = vadd.f32 %v1083, %v1441
      %v1580 = vadd.f32 %v1088, %v1446
      %v1581 = vadd.f32 %v1093, %v1451
      %v1582 = vadd.f32 %v1098, %v1456
      %v1583 = vadd.f32 %v1103, %v1461
      %v1584 = vadd.f32 %v1108, %v1466
      %v1585 = vadd.f32 %v1113, %v1471
      %v1586 = vadd.f32 %v1118, %v1476
      %v1587 = vadd.f32 %v1123, %v1481
      %v1588 = vadd.f32 %v1128, %v1486
      %v1589 = vadd.f32 %v1133, %v1491
      %v1590 = vadd.f32 %v1138, %v1496
      %v1591 = vadd.f32 %v1143, %v1501
      %v1592 = vadd.f32 %v1148, %v1506
      %v1593 = vadd.f32 %v1153, %v1511
      %v1594 = vadd.f32 %v1158, %v1516
      %v1595 = vadd.f32 %v1163, %v1521
      %v1596 = vadd.f32 %v1168, %v1526
      %v1597 = vadd.f32 %v1173, %v1531
      %v1598 = vadd.f32 %v1178, %v1536
      %v1599 = vadd.f32 %v1183, %v1541
      %v1600 = vadd.f32 %v1188, %v1546
      %v1601 = vadd.f32 %v1193, %v1551
      %v1602 = vadd.f32 %v1198, %v1556
      %v1603 = vadd.f32 %v1203, %v1561
      %v1604 = vadd.f32 %v1208, %v1566
      %v1605 = vadd.f32 %v1213, %v1571
      %v1606 = vld [vmem:[%s421] sm:$0xff]
      %v1607 = vld [vmem:[%s421 + $0x8] sm:$0xff]
      %v1608 = vld [vmem:[%s421 + $0x18] sm:$0xff]
      %v1609 = vld [vmem:[%s421 + $0x20] sm:$0xff]
      %v1610 = vld [vmem:[%s421 + $0x30] sm:$0xff]
      %v1611 = vld [vmem:[%s421 + $0x38] sm:$0xff]
      %v1612 = vld [vmem:[%s421 + $0x48] sm:$0xff]
      %v1613 = vld [vmem:[%s421 + $0x50] sm:$0xff]
      %v1614 = vld [vmem:[%s421 + $0x60] sm:$0xff]
      %v1615 = vld [vmem:[%s421 + $0x68] sm:$0xff]
      %v1616 = vld [vmem:[%s421 + $0x78] sm:$0xff]
      %v1617 = vld [vmem:[%s421 + $0x80] sm:$0xff]
      %v1618 = vld [vmem:[%s421 + $0x90] sm:$0xff]
      %v1619 = vld [vmem:[%s421 + $0x98] sm:$0xff]
      %v1620 = vld [vmem:[%s421 + $0xa8] sm:$0xff]
      %v1621 = vld [vmem:[%s421 + $0xb0] sm:$0xff]
      %v1622 = vld [vmem:[%s421 + $0xc0] sm:$0xff]
      %v1623 = vld [vmem:[%s421 + $0xc8] sm:$0xff]
      %v1624 = vld [vmem:[%s421 + $0xd8] sm:$0xff]
      %v1625 = vld [vmem:[%s421 + $0xe0] sm:$0xff]
      %v1626 = vld [vmem:[%s421 + $0xf0] sm:$0xff]
      %v1627 = vld [vmem:[%s421 + $0xf8] sm:$0xff]
      %v1628 = vld [vmem:[%s421 + $0x108] sm:$0xff]
      %v1629 = vld [vmem:[%s421 + $0x110] sm:$0xff]
      %v1630 = vld [vmem:[%s421 + $0x120] sm:$0xff]
      %v1631 = vld [vmem:[%s421 + $0x128] sm:$0xff]
      %v1632 = vld [vmem:[%s421 + $0x138] sm:$0xff]
      %v1633 = vld [vmem:[%s421 + $0x140] sm:$0xff]
      %v1634 = vld [vmem:[%s421 + $0x150] sm:$0xff]
      %v1635 = vld [vmem:[%s421 + $0x158] sm:$0xff]
      %v1636 = vld [vmem:[%s421 + $0x168] sm:$0xff]
      %v1637 = vld [vmem:[%s421 + $0x170] sm:$0xff]
      %s1638 = scalar_lea.vmem %s3, 12
      %v1639 = vld [vmem:[%s1638] sm:$0xf]
      %v1641 = vsel %vm422, %v1606, 0
      %v1644 = vsel %vm422, %v1607, 0
      %v1647 = vsel %vm422, %v1608, 0
      %v1650 = vsel %vm422, %v1609, 0
      %v1653 = vsel %vm422, %v1610, 0
      %v1656 = vsel %vm422, %v1611, 0
      %v1659 = vsel %vm422, %v1612, 0
      %v1662 = vsel %vm422, %v1613, 0
      %v1665 = vsel %vm422, %v1614, 0
      %v1668 = vsel %vm422, %v1615, 0
      %v1671 = vsel %vm422, %v1616, 0
      %v1674 = vsel %vm422, %v1617, 0
      %v1677 = vsel %vm422, %v1618, 0
      %v1680 = vsel %vm422, %v1619, 0
      %v1683 = vsel %vm422, %v1620, 0
      %v1686 = vsel %vm422, %v1621, 0
      %v1689 = vsel %vm422, %v1622, 0
      %v1692 = vsel %vm422, %v1623, 0
      %v1695 = vsel %vm422, %v1624, 0
      %v1698 = vsel %vm422, %v1625, 0
      %v1701 = vsel %vm422, %v1626, 0
      %v1704 = vsel %vm422, %v1627, 0
      %v1707 = vsel %vm422, %v1628, 0
      %v1710 = vsel %vm422, %v1629, 0
      %v1713 = vsel %vm422, %v1630, 0
      %v1716 = vsel %vm422, %v1631, 0
      %v1719 = vsel %vm422, %v1632, 0
      %v1722 = vsel %vm422, %v1633, 0
      %v1725 = vsel %vm422, %v1634, 0
      %v1728 = vsel %vm422, %v1635, 0
      %v1731 = vsel %vm422, %v1636, 0
      %v1734 = vsel %vm422, %v1637, 0
      %v1737 = vsel %vm663, %v1639, 0
      %1739 = vmatprep.subr.mxu0 0.0
      %1740 = vmatpush1.msra.mxu0 0.0
      %1741 = vmatprep.subr.mxu0 0.0
      %1742 = vmatpush1.msra.mxu0 0.0
      %1743 = vmatprep.subr.mxu0 0.0
      %1744 = vmatpush1.msra.mxu0 0.0
      %1745 = vmatprep.subr.mxu0 0.0
      %1746 = vmatpush1.msra.mxu0 0.0
      %1747 = vmatprep.subr.mxu0 0.0
      %1748 = vmatpush1.msra.mxu0 0.0
      %1749 = vmatprep.subr.mxu0 0.0
      %1750 = vmatpush1.msra.mxu0 0.0
      %1751 = vmatprep.subr.mxu0 0.0
      %1752 = vmatpush1.msra.mxu0 0.0
      %1753 = vmatprep.subr.mxu0 0.0
      %1754 = vmatpush1.msra.mxu0 0.0
      %1755 = vmatprep.subr.mxu0 0.0
      %1756 = vmatpush1.msra.mxu0 0.0
      %1757 = vmatprep.subr.mxu0 0.0
      %1758 = vmatpush1.msra.mxu0 0.0
      %1759 = vmatprep.subr.mxu0 0.0
      %1760 = vmatpush1.msra.mxu0 0.0
      %1761 = vmatprep.subr.mxu0 0.0
      %1762 = vmatpush1.msra.mxu0 0.0
      %1763 = vmatprep.subr.mxu0 0.0
      %1764 = vmatpush1.msra.mxu0 0.0
      %1765 = vmatprep.subr.mxu0 0.0
      %1766 = vmatpush1.msra.mxu0 0.0
      %1767 = vmatprep.subr.mxu0 0.0
      %1768 = vmatpush1.msra.mxu0 0.0
      %1769 = vmatprep.subr.mxu0 0.0
      %1770 = vmatpush1.msra.mxu0 %v1737
      %1771 = vmatprep.subr.mxu0 0.0
      %1772 = vmatpush2.msra.mxu0 0.0
      %1773 = vmatprep.subr.mxu0 0.0
      %1774 = vmatpush2.msra.mxu0 0.0
      %1775 = vmatprep.subr.mxu0 0.0
      %1776 = vmatpush2.msra.mxu0 0.0
      %1777 = vmatprep.subr.mxu0 0.0
      %1778 = vmatpush2.msra.mxu0 0.0
      %1779 = vmatprep.subr.mxu0 0.0
      %1780 = vmatpush2.msra.mxu0 0.0
      %1781 = vmatprep.subr.mxu0 0.0
      %1782 = vmatpush2.msra.mxu0 0.0
      %1783 = vmatprep.subr.mxu0 0.0
      %1784 = vmatpush2.msra.mxu0 0.0
      %1785 = vmatprep.subr.mxu0 0.0
      %1786 = vmatpush2.msra.mxu0 0.0
      %1787 = vmatprep.subr.mxu0 0.0
      %1788 = vmatpush2.msra.mxu0 0.0
      %1789 = vmatprep.subr.mxu0 0.0
      %1790 = vmatpush2.msra.mxu0 0.0
      %1791 = vmatprep.subr.mxu0 0.0
      %1792 = vmatpush2.msra.mxu0 0.0
      %1793 = vmatprep.subr.mxu0 0.0
      %1794 = vmatpush2.msra.mxu0 0.0
      %1795 = vmatprep.subr.mxu0 0.0
      %1796 = vmatpush2.msra.mxu0 0.0
      %1797 = vmatprep.subr.mxu0 0.0
      %1798 = vmatpush2.msra.mxu0 0.0
      %1799 = vmatprep.subr.mxu0 0.0
      %1800 = vmatpush2.msra.mxu0 0.0
      %1801 = vmatprep.subr.mxu0 0.0
      %1802 = vmatpush2.msra.mxu0 0.0
      %1803 = vmatprep.mubr.f32.mxu0 0.0
      %1804 = vmatmul.mubr.f32.gmra.mxu0 %v1641
      %v1805 = vpop.f32.mrf.mxu0
      %v1806 = vadd.f32 0.0, %v1805
      %v1807 = vpop.f32.mrf.mxu0
      %1808 = vmatprep.mubr.f32.mxu0 0.0
      %1809 = vmatmul.mubr.f32.gmra.mxu0 %v1644
      %v1810 = vpop.f32.mrf.mxu0
      %v1811 = vadd.f32 0.0, %v1810
      %v1812 = vpop.f32.mrf.mxu0
      %1813 = vmatprep.mubr.f32.mxu0 0.0
      %1814 = vmatmul.mubr.f32.gmra.mxu0 %v1647
      %v1815 = vpop.f32.mrf.mxu0
      %v1816 = vadd.f32 0.0, %v1815
      %v1817 = vpop.f32.mrf.mxu0
      %1818 = vmatprep.mubr.f32.mxu0 0.0
      %1819 = vmatmul.mubr.f32.gmra.mxu0 %v1650
      %v1820 = vpop.f32.mrf.mxu0
      %v1821 = vadd.f32 0.0, %v1820
      %v1822 = vpop.f32.mrf.mxu0
      %1823 = vmatprep.mubr.f32.mxu0 0.0
      %1824 = vmatmul.mubr.f32.gmra.mxu0 %v1653
      %v1825 = vpop.f32.mrf.mxu0
      %v1826 = vadd.f32 0.0, %v1825
      %v1827 = vpop.f32.mrf.mxu0
      %1828 = vmatprep.mubr.f32.mxu0 0.0
      %1829 = vmatmul.mubr.f32.gmra.mxu0 %v1656
      %v1830 = vpop.f32.mrf.mxu0
      %v1831 = vadd.f32 0.0, %v1830
      %v1832 = vpop.f32.mrf.mxu0
      %1833 = vmatprep.mubr.f32.mxu0 0.0
      %1834 = vmatmul.mubr.f32.gmra.mxu0 %v1659
      %v1835 = vpop.f32.mrf.mxu0
      %v1836 = vadd.f32 0.0, %v1835
      %v1837 = vpop.f32.mrf.mxu0
      %1838 = vmatprep.mubr.f32.mxu0 0.0
      %1839 = vmatmul.mubr.f32.gmra.mxu0 %v1662
      %v1840 = vpop.f32.mrf.mxu0
      %v1841 = vadd.f32 0.0, %v1840
      %v1842 = vpop.f32.mrf.mxu0
      %1843 = vmatprep.mubr.f32.mxu0 0.0
      %1844 = vmatmul.mubr.f32.gmra.mxu0 %v1665
      %v1845 = vpop.f32.mrf.mxu0
      %v1846 = vadd.f32 0.0, %v1845
      %v1847 = vpop.f32.mrf.mxu0
      %1848 = vmatprep.mubr.f32.mxu0 0.0
      %1849 = vmatmul.mubr.f32.gmra.mxu0 %v1668
      %v1850 = vpop.f32.mrf.mxu0
      %v1851 = vadd.f32 0.0, %v1850
      %v1852 = vpop.f32.mrf.mxu0
      %1853 = vmatprep.mubr.f32.mxu0 0.0
      %1854 = vmatmul.mubr.f32.gmra.mxu0 %v1671
      %v1855 = vpop.f32.mrf.mxu0
      %v1856 = vadd.f32 0.0, %v1855
      %v1857 = vpop.f32.mrf.mxu0
      %1858 = vmatprep.mubr.f32.mxu0 0.0
      %1859 = vmatmul.mubr.f32.gmra.mxu0 %v1674
      %v1860 = vpop.f32.mrf.mxu0
      %v1861 = vadd.f32 0.0, %v1860
      %v1862 = vpop.f32.mrf.mxu0
      %1863 = vmatprep.mubr.f32.mxu0 0.0
      %1864 = vmatmul.mubr.f32.gmra.mxu0 %v1677
      %v1865 = vpop.f32.mrf.mxu0
      %v1866 = vadd.f32 0.0, %v1865
      %v1867 = vpop.f32.mrf.mxu0
      %1868 = vmatprep.mubr.f32.mxu0 0.0
      %1869 = vmatmul.mubr.f32.gmra.mxu0 %v1680
      %v1870 = vpop.f32.mrf.mxu0
      %v1871 = vadd.f32 0.0, %v1870
      %v1872 = vpop.f32.mrf.mxu0
      %1873 = vmatprep.mubr.f32.mxu0 0.0
      %1874 = vmatmul.mubr.f32.gmra.mxu0 %v1683
      %v1875 = vpop.f32.mrf.mxu0
      %v1876 = vadd.f32 0.0, %v1875
      %v1877 = vpop.f32.mrf.mxu0
      %1878 = vmatprep.mubr.f32.mxu0 0.0
      %1879 = vmatmul.mubr.f32.gmra.mxu0 %v1686
      %v1880 = vpop.f32.mrf.mxu0
      %v1881 = vadd.f32 0.0, %v1880
      %v1882 = vpop.f32.mrf.mxu0
      %1883 = vmatprep.mubr.f32.mxu0 0.0
      %1884 = vmatmul.mubr.f32.gmra.mxu0 %v1689
      %v1885 = vpop.f32.mrf.mxu0
      %v1886 = vadd.f32 0.0, %v1885
      %v1887 = vpop.f32.mrf.mxu0
      %1888 = vmatprep.mubr.f32.mxu0 0.0
      %1889 = vmatmul.mubr.f32.gmra.mxu0 %v1692
      %v1890 = vpop.f32.mrf.mxu0
      %v1891 = vadd.f32 0.0, %v1890
      %v1892 = vpop.f32.mrf.mxu0
      %1893 = vmatprep.mubr.f32.mxu0 0.0
      %1894 = vmatmul.mubr.f32.gmra.mxu0 %v1695
      %v1895 = vpop.f32.mrf.mxu0
      %v1896 = vadd.f32 0.0, %v1895
      %v1897 = vpop.f32.mrf.mxu0
      %1898 = vmatprep.mubr.f32.mxu0 0.0
      %1899 = vmatmul.mubr.f32.gmra.mxu0 %v1698
      %v1900 = vpop.f32.mrf.mxu0
      %v1901 = vadd.f32 0.0, %v1900
      %v1902 = vpop.f32.mrf.mxu0
      %1903 = vmatprep.mubr.f32.mxu0 0.0
      %1904 = vmatmul.mubr.f32.gmra.mxu0 %v1701
      %v1905 = vpop.f32.mrf.mxu0
      %v1906 = vadd.f32 0.0, %v1905
      %v1907 = vpop.f32.mrf.mxu0
      %1908 = vmatprep.mubr.f32.mxu0 0.0
      %1909 = vmatmul.mubr.f32.gmra.mxu0 %v1704
      %v1910 = vpop.f32.mrf.mxu0
      %v1911 = vadd.f32 0.0, %v1910
      %v1912 = vpop.f32.mrf.mxu0
      %1913 = vmatprep.mubr.f32.mxu0 0.0
      %1914 = vmatmul.mubr.f32.gmra.mxu0 %v1707
      %v1915 = vpop.f32.mrf.mxu0
      %v1916 = vadd.f32 0.0, %v1915
      %v1917 = vpop.f32.mrf.mxu0
      %1918 = vmatprep.mubr.f32.mxu0 0.0
      %1919 = vmatmul.mubr.f32.gmra.mxu0 %v1710
      %v1920 = vpop.f32.mrf.mxu0
      %v1921 = vadd.f32 0.0, %v1920
      %v1922 = vpop.f32.mrf.mxu0
      %1923 = vmatprep.mubr.f32.mxu0 0.0
      %1924 = vmatmul.mubr.f32.gmra.mxu0 %v1713
      %v1925 = vpop.f32.mrf.mxu0
      %v1926 = vadd.f32 0.0, %v1925
      %v1927 = vpop.f32.mrf.mxu0
      %1928 = vmatprep.mubr.f32.mxu0 0.0
      %1929 = vmatmul.mubr.f32.gmra.mxu0 %v1716
      %v1930 = vpop.f32.mrf.mxu0
      %v1931 = vadd.f32 0.0, %v1930
      %v1932 = vpop.f32.mrf.mxu0
      %1933 = vmatprep.mubr.f32.mxu0 0.0
      %1934 = vmatmul.mubr.f32.gmra.mxu0 %v1719
      %v1935 = vpop.f32.mrf.mxu0
      %v1936 = vadd.f32 0.0, %v1935
      %v1937 = vpop.f32.mrf.mxu0
      %1938 = vmatprep.mubr.f32.mxu0 0.0
      %1939 = vmatmul.mubr.f32.gmra.mxu0 %v1722
      %v1940 = vpop.f32.mrf.mxu0
      %v1941 = vadd.f32 0.0, %v1940
      %v1942 = vpop.f32.mrf.mxu0
      %1943 = vmatprep.mubr.f32.mxu0 0.0
      %1944 = vmatmul.mubr.f32.gmra.mxu0 %v1725
      %v1945 = vpop.f32.mrf.mxu0
      %v1946 = vadd.f32 0.0, %v1945
      %v1947 = vpop.f32.mrf.mxu0
      %1948 = vmatprep.mubr.f32.mxu0 0.0
      %1949 = vmatmul.mubr.f32.gmra.mxu0 %v1728
      %v1950 = vpop.f32.mrf.mxu0
      %v1951 = vadd.f32 0.0, %v1950
      %v1952 = vpop.f32.mrf.mxu0
      %1953 = vmatprep.mubr.f32.mxu0 0.0
      %1954 = vmatmul.mubr.f32.gmra.mxu0 %v1731
      %v1955 = vpop.f32.mrf.mxu0
      %v1956 = vadd.f32 0.0, %v1955
      %v1957 = vpop.f32.mrf.mxu0
      %1958 = vmatprep.mubr.f32.mxu0 0.0
      %1959 = vmatmul.mubr.f32.gmra.mxu0 %v1734
      %v1960 = vpop.f32.mrf.mxu0
      %v1961 = vadd.f32 0.0, %v1960
      %v1962 = vpop.f32.mrf.mxu0
      %1963 = vdwg.mxu0
      %v1964 = vadd.f32 %v1574, %v1806
      %v1965 = vadd.f32 %v1575, %v1811
      %v1966 = vadd.f32 %v1576, %v1816
      %v1967 = vadd.f32 %v1577, %v1821
      %v1968 = vadd.f32 %v1578, %v1826
      %v1969 = vadd.f32 %v1579, %v1831
      %v1970 = vadd.f32 %v1580, %v1836
      %v1971 = vadd.f32 %v1581, %v1841
      %v1972 = vadd.f32 %v1582, %v1846
      %v1973 = vadd.f32 %v1583, %v1851
      %v1974 = vadd.f32 %v1584, %v1856
      %v1975 = vadd.f32 %v1585, %v1861
      %v1976 = vadd.f32 %v1586, %v1866
      %v1977 = vadd.f32 %v1587, %v1871
      %v1978 = vadd.f32 %v1588, %v1876
      %v1979 = vadd.f32 %v1589, %v1881
      %v1980 = vadd.f32 %v1590, %v1886
      %v1981 = vadd.f32 %v1591, %v1891
      %v1982 = vadd.f32 %v1592, %v1896
      %v1983 = vadd.f32 %v1593, %v1901
      %v1984 = vadd.f32 %v1594, %v1906
      %v1985 = vadd.f32 %v1595, %v1911
      %v1986 = vadd.f32 %v1596, %v1916
      %v1987 = vadd.f32 %v1597, %v1921
      %v1988 = vadd.f32 %v1598, %v1926
      %v1989 = vadd.f32 %v1599, %v1931
      %v1990 = vadd.f32 %v1600, %v1936
      %v1991 = vadd.f32 %v1601, %v1941
      %v1992 = vadd.f32 %v1602, %v1946
      %v1993 = vadd.f32 %v1603, %v1951
      %v1994 = vadd.f32 %v1604, %v1956
      %v1995 = vadd.f32 %v1605, %v1961
      %v1996 = vld [vmem:[%s421 + $0x1] sm:$0xff]
      %v1997 = vld [vmem:[%s421 + $0x9] sm:$0xff]
      %v1998 = vld [vmem:[%s421 + $0x19] sm:$0xff]
      %v1999 = vld [vmem:[%s421 + $0x21] sm:$0xff]
      %v2000 = vld [vmem:[%s421 + $0x31] sm:$0xff]
      %v2001 = vld [vmem:[%s421 + $0x39] sm:$0xff]
      %v2002 = vld [vmem:[%s421 + $0x49] sm:$0xff]
      %v2003 = vld [vmem:[%s421 + $0x51] sm:$0xff]
      %v2004 = vld [vmem:[%s421 + $0x61] sm:$0xff]
      %v2005 = vld [vmem:[%s421 + $0x69] sm:$0xff]
      %v2006 = vld [vmem:[%s421 + $0x79] sm:$0xff]
      %v2007 = vld [vmem:[%s421 + $0x81] sm:$0xff]
      %v2008 = vld [vmem:[%s421 + $0x91] sm:$0xff]
      %v2009 = vld [vmem:[%s421 + $0x99] sm:$0xff]
      %v2010 = vld [vmem:[%s421 + $0xa9] sm:$0xff]
      %v2011 = vld [vmem:[%s421 + $0xb1] sm:$0xff]
      %v2012 = vld [vmem:[%s421 + $0xc1] sm:$0xff]
      %v2013 = vld [vmem:[%s421 + $0xc9] sm:$0xff]
      %v2014 = vld [vmem:[%s421 + $0xd9] sm:$0xff]
      %v2015 = vld [vmem:[%s421 + $0xe1] sm:$0xff]
      %v2016 = vld [vmem:[%s421 + $0xf1] sm:$0xff]
      %v2017 = vld [vmem:[%s421 + $0xf9] sm:$0xff]
      %v2018 = vld [vmem:[%s421 + $0x109] sm:$0xff]
      %v2019 = vld [vmem:[%s421 + $0x111] sm:$0xff]
      %v2020 = vld [vmem:[%s421 + $0x121] sm:$0xff]
      %v2021 = vld [vmem:[%s421 + $0x129] sm:$0xff]
      %v2022 = vld [vmem:[%s421 + $0x139] sm:$0xff]
      %v2023 = vld [vmem:[%s421 + $0x141] sm:$0xff]
      %v2024 = vld [vmem:[%s421 + $0x151] sm:$0xff]
      %v2025 = vld [vmem:[%s421 + $0x159] sm:$0xff]
      %v2026 = vld [vmem:[%s421 + $0x169] sm:$0xff]
      %v2027 = vld [vmem:[%s421 + $0x171] sm:$0xff]
      %s2028 = scalar_lea.vmem %s3, 16
      %v2029 = vld [vmem:[%s2028] sm:$0xf]
      %v2031 = vsel %vm422, %v1996, 0
      %v2034 = vsel %vm422, %v1997, 0
      %v2037 = vsel %vm422, %v1998, 0
      %v2040 = vsel %vm422, %v1999, 0
      %v2043 = vsel %vm422, %v2000, 0
      %v2046 = vsel %vm422, %v2001, 0
      %v2049 = vsel %vm422, %v2002, 0
      %v2052 = vsel %vm422, %v2003, 0
      %v2055 = vsel %vm422, %v2004, 0
      %v2058 = vsel %vm422, %v2005, 0
      %v2061 = vsel %vm422, %v2006, 0
      %v2064 = vsel %vm422, %v2007, 0
      %v2067 = vsel %vm422, %v2008, 0
      %v2070 = vsel %vm422, %v2009, 0
      %v2073 = vsel %vm422, %v2010, 0
      %v2076 = vsel %vm422, %v2011, 0
      %v2079 = vsel %vm422, %v2012, 0
      %v2082 = vsel %vm422, %v2013, 0
      %v2085 = vsel %vm422, %v2014, 0
      %v2088 = vsel %vm422, %v2015, 0
      %v2091 = vsel %vm422, %v2016, 0
      %v2094 = vsel %vm422, %v2017, 0
      %v2097 = vsel %vm422, %v2018, 0
      %v2100 = vsel %vm422, %v2019, 0
      %v2103 = vsel %vm422, %v2020, 0
      %v2106 = vsel %vm422, %v2021, 0
      %v2109 = vsel %vm422, %v2022, 0
      %v2112 = vsel %vm422, %v2023, 0
      %v2115 = vsel %vm422, %v2024, 0
      %v2118 = vsel %vm422, %v2025, 0
      %v2121 = vsel %vm422, %v2026, 0
      %v2124 = vsel %vm422, %v2027, 0
      %v2127 = vsel %vm663, %v2029, 0
      %2129 = vmatprep.subr.mxu0 0.0
      %2130 = vmatpush1.msra.mxu0 0.0
      %2131 = vmatprep.subr.mxu0 0.0
      %2132 = vmatpush1.msra.mxu0 0.0
      %2133 = vmatprep.subr.mxu0 0.0
      %2134 = vmatpush1.msra.mxu0 0.0
      %2135 = vmatprep.subr.mxu0 0.0
      %2136 = vmatpush1.msra.mxu0 0.0
      %2137 = vmatprep.subr.mxu0 0.0
      %2138 = vmatpush1.msra.mxu0 0.0
      %2139 = vmatprep.subr.mxu0 0.0
      %2140 = vmatpush1.msra.mxu0 0.0
      %2141 = vmatprep.subr.mxu0 0.0
      %2142 = vmatpush1.msra.mxu0 0.0
      %2143 = vmatprep.subr.mxu0 0.0
      %2144 = vmatpush1.msra.mxu0 0.0
      %2145 = vmatprep.subr.mxu0 0.0
      %2146 = vmatpush1.msra.mxu0 0.0
      %2147 = vmatprep.subr.mxu0 0.0
      %2148 = vmatpush1.msra.mxu0 0.0
      %2149 = vmatprep.subr.mxu0 0.0
      %2150 = vmatpush1.msra.mxu0 0.0
      %2151 = vmatprep.subr.mxu0 0.0
      %2152 = vmatpush1.msra.mxu0 0.0
      %2153 = vmatprep.subr.mxu0 0.0
      %2154 = vmatpush1.msra.mxu0 0.0
      %2155 = vmatprep.subr.mxu0 0.0
      %2156 = vmatpush1.msra.mxu0 0.0
      %2157 = vmatprep.subr.mxu0 0.0
      %2158 = vmatpush1.msra.mxu0 0.0
      %2159 = vmatprep.subr.mxu0 0.0
      %2160 = vmatpush1.msra.mxu0 %v2127
      %2161 = vmatprep.subr.mxu0 0.0
      %2162 = vmatpush2.msra.mxu0 0.0
      %2163 = vmatprep.subr.mxu0 0.0
      %2164 = vmatpush2.msra.mxu0 0.0
      %2165 = vmatprep.subr.mxu0 0.0
      %2166 = vmatpush2.msra.mxu0 0.0
      %2167 = vmatprep.subr.mxu0 0.0
      %2168 = vmatpush2.msra.mxu0 0.0
      %2169 = vmatprep.subr.mxu0 0.0
      %2170 = vmatpush2.msra.mxu0 0.0
      %2171 = vmatprep.subr.mxu0 0.0
      %2172 = vmatpush2.msra.mxu0 0.0
      %2173 = vmatprep.subr.mxu0 0.0
      %2174 = vmatpush2.msra.mxu0 0.0
      %2175 = vmatprep.subr.mxu0 0.0
      %2176 = vmatpush2.msra.mxu0 0.0
      %2177 = vmatprep.subr.mxu0 0.0
      %2178 = vmatpush2.msra.mxu0 0.0
      %2179 = vmatprep.subr.mxu0 0.0
      %2180 = vmatpush2.msra.mxu0 0.0
      %2181 = vmatprep.subr.mxu0 0.0
      %2182 = vmatpush2.msra.mxu0 0.0
      %2183 = vmatprep.subr.mxu0 0.0
      %2184 = vmatpush2.msra.mxu0 0.0
      %2185 = vmatprep.subr.mxu0 0.0
      %2186 = vmatpush2.msra.mxu0 0.0
      %2187 = vmatprep.subr.mxu0 0.0
      %2188 = vmatpush2.msra.mxu0 0.0
      %2189 = vmatprep.subr.mxu0 0.0
      %2190 = vmatpush2.msra.mxu0 0.0
      %2191 = vmatprep.subr.mxu0 0.0
      %2192 = vmatpush2.msra.mxu0 0.0
      %2193 = vmatprep.mubr.f32.mxu0 0.0
      %2194 = vmatmul.mubr.f32.gmra.mxu0 %v2031
      %v2195 = vpop.f32.mrf.mxu0
      %v2196 = vadd.f32 0.0, %v2195
      %v2197 = vpop.f32.mrf.mxu0
      %2198 = vmatprep.mubr.f32.mxu0 0.0
      %2199 = vmatmul.mubr.f32.gmra.mxu0 %v2034
      %v2200 = vpop.f32.mrf.mxu0
      %v2201 = vadd.f32 0.0, %v2200
      %v2202 = vpop.f32.mrf.mxu0
      %2203 = vmatprep.mubr.f32.mxu0 0.0
      %2204 = vmatmul.mubr.f32.gmra.mxu0 %v2037
      %v2205 = vpop.f32.mrf.mxu0
      %v2206 = vadd.f32 0.0, %v2205
      %v2207 = vpop.f32.mrf.mxu0
      %2208 = vmatprep.mubr.f32.mxu0 0.0
      %2209 = vmatmul.mubr.f32.gmra.mxu0 %v2040
      %v2210 = vpop.f32.mrf.mxu0
      %v2211 = vadd.f32 0.0, %v2210
      %v2212 = vpop.f32.mrf.mxu0
      %2213 = vmatprep.mubr.f32.mxu0 0.0
      %2214 = vmatmul.mubr.f32.gmra.mxu0 %v2043
      %v2215 = vpop.f32.mrf.mxu0
      %v2216 = vadd.f32 0.0, %v2215
      %v2217 = vpop.f32.mrf.mxu0
      %2218 = vmatprep.mubr.f32.mxu0 0.0
      %2219 = vmatmul.mubr.f32.gmra.mxu0 %v2046
      %v2220 = vpop.f32.mrf.mxu0
      %v2221 = vadd.f32 0.0, %v2220
      %v2222 = vpop.f32.mrf.mxu0
      %2223 = vmatprep.mubr.f32.mxu0 0.0
      %2224 = vmatmul.mubr.f32.gmra.mxu0 %v2049
      %v2225 = vpop.f32.mrf.mxu0
      %v2226 = vadd.f32 0.0, %v2225
      %v2227 = vpop.f32.mrf.mxu0
      %2228 = vmatprep.mubr.f32.mxu0 0.0
      %2229 = vmatmul.mubr.f32.gmra.mxu0 %v2052
      %v2230 = vpop.f32.mrf.mxu0
      %v2231 = vadd.f32 0.0, %v2230
      %v2232 = vpop.f32.mrf.mxu0
      %2233 = vmatprep.mubr.f32.mxu0 0.0
      %2234 = vmatmul.mubr.f32.gmra.mxu0 %v2055
      %v2235 = vpop.f32.mrf.mxu0
      %v2236 = vadd.f32 0.0, %v2235
      %v2237 = vpop.f32.mrf.mxu0
      %2238 = vmatprep.mubr.f32.mxu0 0.0
      %2239 = vmatmul.mubr.f32.gmra.mxu0 %v2058
      %v2240 = vpop.f32.mrf.mxu0
      %v2241 = vadd.f32 0.0, %v2240
      %v2242 = vpop.f32.mrf.mxu0
      %2243 = vmatprep.mubr.f32.mxu0 0.0
      %2244 = vmatmul.mubr.f32.gmra.mxu0 %v2061
      %v2245 = vpop.f32.mrf.mxu0
      %v2246 = vadd.f32 0.0, %v2245
      %v2247 = vpop.f32.mrf.mxu0
      %2248 = vmatprep.mubr.f32.mxu0 0.0
      %2249 = vmatmul.mubr.f32.gmra.mxu0 %v2064
      %v2250 = vpop.f32.mrf.mxu0
      %v2251 = vadd.f32 0.0, %v2250
      %v2252 = vpop.f32.mrf.mxu0
      %2253 = vmatprep.mubr.f32.mxu0 0.0
      %2254 = vmatmul.mubr.f32.gmra.mxu0 %v2067
      %v2255 = vpop.f32.mrf.mxu0
      %v2256 = vadd.f32 0.0, %v2255
      %v2257 = vpop.f32.mrf.mxu0
      %2258 = vmatprep.mubr.f32.mxu0 0.0
      %2259 = vmatmul.mubr.f32.gmra.mxu0 %v2070
      %v2260 = vpop.f32.mrf.mxu0
      %v2261 = vadd.f32 0.0, %v2260
      %v2262 = vpop.f32.mrf.mxu0
      %2263 = vmatprep.mubr.f32.mxu0 0.0
      %2264 = vmatmul.mubr.f32.gmra.mxu0 %v2073
      %v2265 = vpop.f32.mrf.mxu0
      %v2266 = vadd.f32 0.0, %v2265
      %v2267 = vpop.f32.mrf.mxu0
      %2268 = vmatprep.mubr.f32.mxu0 0.0
      %2269 = vmatmul.mubr.f32.gmra.mxu0 %v2076
      %v2270 = vpop.f32.mrf.mxu0
      %v2271 = vadd.f32 0.0, %v2270
      %v2272 = vpop.f32.mrf.mxu0
      %2273 = vmatprep.mubr.f32.mxu0 0.0
      %2274 = vmatmul.mubr.f32.gmra.mxu0 %v2079
      %v2275 = vpop.f32.mrf.mxu0
      %v2276 = vadd.f32 0.0, %v2275
      %v2277 = vpop.f32.mrf.mxu0
      %2278 = vmatprep.mubr.f32.mxu0 0.0
      %2279 = vmatmul.mubr.f32.gmra.mxu0 %v2082
      %v2280 = vpop.f32.mrf.mxu0
      %v2281 = vadd.f32 0.0, %v2280
      %v2282 = vpop.f32.mrf.mxu0
      %2283 = vmatprep.mubr.f32.mxu0 0.0
      %2284 = vmatmul.mubr.f32.gmra.mxu0 %v2085
      %v2285 = vpop.f32.mrf.mxu0
      %v2286 = vadd.f32 0.0, %v2285
      %v2287 = vpop.f32.mrf.mxu0
      %2288 = vmatprep.mubr.f32.mxu0 0.0
      %2289 = vmatmul.mubr.f32.gmra.mxu0 %v2088
      %v2290 = vpop.f32.mrf.mxu0
      %v2291 = vadd.f32 0.0, %v2290
      %v2292 = vpop.f32.mrf.mxu0
      %2293 = vmatprep.mubr.f32.mxu0 0.0
      %2294 = vmatmul.mubr.f32.gmra.mxu0 %v2091
      %v2295 = vpop.f32.mrf.mxu0
      %v2296 = vadd.f32 0.0, %v2295
      %v2297 = vpop.f32.mrf.mxu0
      %2298 = vmatprep.mubr.f32.mxu0 0.0
      %2299 = vmatmul.mubr.f32.gmra.mxu0 %v2094
      %v2300 = vpop.f32.mrf.mxu0
      %v2301 = vadd.f32 0.0, %v2300
      %v2302 = vpop.f32.mrf.mxu0
      %2303 = vmatprep.mubr.f32.mxu0 0.0
      %2304 = vmatmul.mubr.f32.gmra.mxu0 %v2097
      %v2305 = vpop.f32.mrf.mxu0
      %v2306 = vadd.f32 0.0, %v2305
      %v2307 = vpop.f32.mrf.mxu0
      %2308 = vmatprep.mubr.f32.mxu0 0.0
      %2309 = vmatmul.mubr.f32.gmra.mxu0 %v2100
      %v2310 = vpop.f32.mrf.mxu0
      %v2311 = vadd.f32 0.0, %v2310
      %v2312 = vpop.f32.mrf.mxu0
      %2313 = vmatprep.mubr.f32.mxu0 0.0
      %2314 = vmatmul.mubr.f32.gmra.mxu0 %v2103
      %v2315 = vpop.f32.mrf.mxu0
      %v2316 = vadd.f32 0.0, %v2315
      %v2317 = vpop.f32.mrf.mxu0
      %2318 = vmatprep.mubr.f32.mxu0 0.0
      %2319 = vmatmul.mubr.f32.gmra.mxu0 %v2106
      %v2320 = vpop.f32.mrf.mxu0
      %v2321 = vadd.f32 0.0, %v2320
      %v2322 = vpop.f32.mrf.mxu0
      %2323 = vmatprep.mubr.f32.mxu0 0.0
      %2324 = vmatmul.mubr.f32.gmra.mxu0 %v2109
      %v2325 = vpop.f32.mrf.mxu0
      %v2326 = vadd.f32 0.0, %v2325
      %v2327 = vpop.f32.mrf.mxu0
      %2328 = vmatprep.mubr.f32.mxu0 0.0
      %2329 = vmatmul.mubr.f32.gmra.mxu0 %v2112
      %v2330 = vpop.f32.mrf.mxu0
      %v2331 = vadd.f32 0.0, %v2330
      %v2332 = vpop.f32.mrf.mxu0
      %2333 = vmatprep.mubr.f32.mxu0 0.0
      %2334 = vmatmul.mubr.f32.gmra.mxu0 %v2115
      %v2335 = vpop.f32.mrf.mxu0
      %v2336 = vadd.f32 0.0, %v2335
      %v2337 = vpop.f32.mrf.mxu0
      %2338 = vmatprep.mubr.f32.mxu0 0.0
      %2339 = vmatmul.mubr.f32.gmra.mxu0 %v2118
      %v2340 = vpop.f32.mrf.mxu0
      %v2341 = vadd.f32 0.0, %v2340
      %v2342 = vpop.f32.mrf.mxu0
      %2343 = vmatprep.mubr.f32.mxu0 0.0
      %2344 = vmatmul.mubr.f32.gmra.mxu0 %v2121
      %v2345 = vpop.f32.mrf.mxu0
      %v2346 = vadd.f32 0.0, %v2345
      %v2347 = vpop.f32.mrf.mxu0
      %2348 = vmatprep.mubr.f32.mxu0 0.0
      %2349 = vmatmul.mubr.f32.gmra.mxu0 %v2124
      %v2350 = vpop.f32.mrf.mxu0
      %v2351 = vadd.f32 0.0, %v2350
      %v2352 = vpop.f32.mrf.mxu0
      %2353 = vdwg.mxu0
      %v2354 = vadd.f32 %v1964, %v2196
      %v2355 = vadd.f32 %v1965, %v2201
      %v2356 = vadd.f32 %v1966, %v2206
      %v2357 = vadd.f32 %v1967, %v2211
      %v2358 = vadd.f32 %v1968, %v2216
      %v2359 = vadd.f32 %v1969, %v2221
      %v2360 = vadd.f32 %v1970, %v2226
      %v2361 = vadd.f32 %v1971, %v2231
      %v2362 = vadd.f32 %v1972, %v2236
      %v2363 = vadd.f32 %v1973, %v2241
      %v2364 = vadd.f32 %v1974, %v2246
      %v2365 = vadd.f32 %v1975, %v2251
      %v2366 = vadd.f32 %v1976, %v2256
      %v2367 = vadd.f32 %v1977, %v2261
      %v2368 = vadd.f32 %v1978, %v2266
      %v2369 = vadd.f32 %v1979, %v2271
      %v2370 = vadd.f32 %v1980, %v2276
      %v2371 = vadd.f32 %v1981, %v2281
      %v2372 = vadd.f32 %v1982, %v2286
      %v2373 = vadd.f32 %v1983, %v2291
      %v2374 = vadd.f32 %v1984, %v2296
      %v2375 = vadd.f32 %v1985, %v2301
      %v2376 = vadd.f32 %v1986, %v2306
      %v2377 = vadd.f32 %v1987, %v2311
      %v2378 = vadd.f32 %v1988, %v2316
      %v2379 = vadd.f32 %v1989, %v2321
      %v2380 = vadd.f32 %v1990, %v2326
      %v2381 = vadd.f32 %v1991, %v2331
      %v2382 = vadd.f32 %v1992, %v2336
      %v2383 = vadd.f32 %v1993, %v2341
      %v2384 = vadd.f32 %v1994, %v2346
      %v2385 = vadd.f32 %v1995, %v2351
      %v2386 = vld [vmem:[%s421 + $0x2] sm:$0xff]
      %v2387 = vld [vmem:[%s421 + $0xa] sm:$0xff]
      %v2388 = vld [vmem:[%s421 + $0x1a] sm:$0xff]
      %v2389 = vld [vmem:[%s421 + $0x22] sm:$0xff]
      %v2390 = vld [vmem:[%s421 + $0x32] sm:$0xff]
      %v2391 = vld [vmem:[%s421 + $0x3a] sm:$0xff]
      %v2392 = vld [vmem:[%s421 + $0x4a] sm:$0xff]
      %v2393 = vld [vmem:[%s421 + $0x52] sm:$0xff]
      %v2394 = vld [vmem:[%s421 + $0x62] sm:$0xff]
      %v2395 = vld [vmem:[%s421 + $0x6a] sm:$0xff]
      %v2396 = vld [vmem:[%s421 + $0x7a] sm:$0xff]
      %v2397 = vld [vmem:[%s421 + $0x82] sm:$0xff]
      %v2398 = vld [vmem:[%s421 + $0x92] sm:$0xff]
      %v2399 = vld [vmem:[%s421 + $0x9a] sm:$0xff]
      %v2400 = vld [vmem:[%s421 + $0xaa] sm:$0xff]
      %v2401 = vld [vmem:[%s421 + $0xb2] sm:$0xff]
      %v2402 = vld [vmem:[%s421 + $0xc2] sm:$0xff]
      %v2403 = vld [vmem:[%s421 + $0xca] sm:$0xff]
      %v2404 = vld [vmem:[%s421 + $0xda] sm:$0xff]
      %v2405 = vld [vmem:[%s421 + $0xe2] sm:$0xff]
      %v2406 = vld [vmem:[%s421 + $0xf2] sm:$0xff]
      %v2407 = vld [vmem:[%s421 + $0xfa] sm:$0xff]
      %v2408 = vld [vmem:[%s421 + $0x10a] sm:$0xff]
      %v2409 = vld [vmem:[%s421 + $0x112] sm:$0xff]
      %v2410 = vld [vmem:[%s421 + $0x122] sm:$0xff]
      %v2411 = vld [vmem:[%s421 + $0x12a] sm:$0xff]
      %v2412 = vld [vmem:[%s421 + $0x13a] sm:$0xff]
      %v2413 = vld [vmem:[%s421 + $0x142] sm:$0xff]
      %v2414 = vld [vmem:[%s421 + $0x152] sm:$0xff]
      %v2415 = vld [vmem:[%s421 + $0x15a] sm:$0xff]
      %v2416 = vld [vmem:[%s421 + $0x16a] sm:$0xff]
      %v2417 = vld [vmem:[%s421 + $0x172] sm:$0xff]
      %s2418 = scalar_lea.vmem %s3, 20
      %v2419 = vld [vmem:[%s2418] sm:$0xf]
      %v2421 = vsel %vm422, %v2386, 0
      %v2424 = vsel %vm422, %v2387, 0
      %v2427 = vsel %vm422, %v2388, 0
      %v2430 = vsel %vm422, %v2389, 0
      %v2433 = vsel %vm422, %v2390, 0
      %v2436 = vsel %vm422, %v2391, 0
      %v2439 = vsel %vm422, %v2392, 0
      %v2442 = vsel %vm422, %v2393, 0
      %v2445 = vsel %vm422, %v2394, 0
      %v2448 = vsel %vm422, %v2395, 0
      %v2451 = vsel %vm422, %v2396, 0
      %v2454 = vsel %vm422, %v2397, 0
      %v2457 = vsel %vm422, %v2398, 0
      %v2460 = vsel %vm422, %v2399, 0
      %v2463 = vsel %vm422, %v2400, 0
      %v2466 = vsel %vm422, %v2401, 0
      %v2469 = vsel %vm422, %v2402, 0
      %v2472 = vsel %vm422, %v2403, 0
      %v2475 = vsel %vm422, %v2404, 0
      %v2478 = vsel %vm422, %v2405, 0
      %v2481 = vsel %vm422, %v2406, 0
      %v2484 = vsel %vm422, %v2407, 0
      %v2487 = vsel %vm422, %v2408, 0
      %v2490 = vsel %vm422, %v2409, 0
      %v2493 = vsel %vm422, %v2410, 0
      %v2496 = vsel %vm422, %v2411, 0
      %v2499 = vsel %vm422, %v2412, 0
      %v2502 = vsel %vm422, %v2413, 0
      %v2505 = vsel %vm422, %v2414, 0
      %v2508 = vsel %vm422, %v2415, 0
      %v2511 = vsel %vm422, %v2416, 0
      %v2514 = vsel %vm422, %v2417, 0
      %v2517 = vsel %vm663, %v2419, 0
      %2519 = vmatprep.subr.mxu0 0.0
      %2520 = vmatpush1.msra.mxu0 0.0
      %2521 = vmatprep.subr.mxu0 0.0
      %2522 = vmatpush1.msra.mxu0 0.0
      %2523 = vmatprep.subr.mxu0 0.0
      %2524 = vmatpush1.msra.mxu0 0.0
      %2525 = vmatprep.subr.mxu0 0.0
      %2526 = vmatpush1.msra.mxu0 0.0
      %2527 = vmatprep.subr.mxu0 0.0
      %2528 = vmatpush1.msra.mxu0 0.0
      %2529 = vmatprep.subr.mxu0 0.0
      %2530 = vmatpush1.msra.mxu0 0.0
      %2531 = vmatprep.subr.mxu0 0.0
      %2532 = vmatpush1.msra.mxu0 0.0
      %2533 = vmatprep.subr.mxu0 0.0
      %2534 = vmatpush1.msra.mxu0 0.0
      %2535 = vmatprep.subr.mxu0 0.0
      %2536 = vmatpush1.msra.mxu0 0.0
      %2537 = vmatprep.subr.mxu0 0.0
      %2538 = vmatpush1.msra.mxu0 0.0
      %2539 = vmatprep.subr.mxu0 0.0
      %2540 = vmatpush1.msra.mxu0 0.0
      %2541 = vmatprep.subr.mxu0 0.0
      %2542 = vmatpush1.msra.mxu0 0.0
      %2543 = vmatprep.subr.mxu0 0.0
      %2544 = vmatpush1.msra.mxu0 0.0
      %2545 = vmatprep.subr.mxu0 0.0
      %2546 = vmatpush1.msra.mxu0 0.0
      %2547 = vmatprep.subr.mxu0 0.0
      %2548 = vmatpush1.msra.mxu0 0.0
      %2549 = vmatprep.subr.mxu0 0.0
      %2550 = vmatpush1.msra.mxu0 %v2517
      %2551 = vmatprep.subr.mxu0 0.0
      %2552 = vmatpush2.msra.mxu0 0.0
      %2553 = vmatprep.subr.mxu0 0.0
      %2554 = vmatpush2.msra.mxu0 0.0
      %2555 = vmatprep.subr.mxu0 0.0
      %2556 = vmatpush2.msra.mxu0 0.0
      %2557 = vmatprep.subr.mxu0 0.0
      %2558 = vmatpush2.msra.mxu0 0.0
      %2559 = vmatprep.subr.mxu0 0.0
      %2560 = vmatpush2.msra.mxu0 0.0
      %2561 = vmatprep.subr.mxu0 0.0
      %2562 = vmatpush2.msra.mxu0 0.0
      %2563 = vmatprep.subr.mxu0 0.0
      %2564 = vmatpush2.msra.mxu0 0.0
      %2565 = vmatprep.subr.mxu0 0.0
      %2566 = vmatpush2.msra.mxu0 0.0
      %2567 = vmatprep.subr.mxu0 0.0
      %2568 = vmatpush2.msra.mxu0 0.0
      %2569 = vmatprep.subr.mxu0 0.0
      %2570 = vmatpush2.msra.mxu0 0.0
      %2571 = vmatprep.subr.mxu0 0.0
      %2572 = vmatpush2.msra.mxu0 0.0
      %2573 = vmatprep.subr.mxu0 0.0
      %2574 = vmatpush2.msra.mxu0 0.0
      %2575 = vmatprep.subr.mxu0 0.0
      %2576 = vmatpush2.msra.mxu0 0.0
      %2577 = vmatprep.subr.mxu0 0.0
      %2578 = vmatpush2.msra.mxu0 0.0
      %2579 = vmatprep.subr.mxu0 0.0
      %2580 = vmatpush2.msra.mxu0 0.0
      %2581 = vmatprep.subr.mxu0 0.0
      %2582 = vmatpush2.msra.mxu0 0.0
      %2583 = vmatprep.mubr.f32.mxu0 0.0
      %2584 = vmatmul.mubr.f32.gmra.mxu0 %v2421
      %v2585 = vpop.f32.mrf.mxu0
      %v2586 = vadd.f32 0.0, %v2585
      %v2587 = vpop.f32.mrf.mxu0
      %2588 = vmatprep.mubr.f32.mxu0 0.0
      %2589 = vmatmul.mubr.f32.gmra.mxu0 %v2424
      %v2590 = vpop.f32.mrf.mxu0
      %v2591 = vadd.f32 0.0, %v2590
      %v2592 = vpop.f32.mrf.mxu0
      %2593 = vmatprep.mubr.f32.mxu0 0.0
      %2594 = vmatmul.mubr.f32.gmra.mxu0 %v2427
      %v2595 = vpop.f32.mrf.mxu0
      %v2596 = vadd.f32 0.0, %v2595
      %v2597 = vpop.f32.mrf.mxu0
      %2598 = vmatprep.mubr.f32.mxu0 0.0
      %2599 = vmatmul.mubr.f32.gmra.mxu0 %v2430
      %v2600 = vpop.f32.mrf.mxu0
      %v2601 = vadd.f32 0.0, %v2600
      %v2602 = vpop.f32.mrf.mxu0
      %2603 = vmatprep.mubr.f32.mxu0 0.0
      %2604 = vmatmul.mubr.f32.gmra.mxu0 %v2433
      %v2605 = vpop.f32.mrf.mxu0
      %v2606 = vadd.f32 0.0, %v2605
      %v2607 = vpop.f32.mrf.mxu0
      %2608 = vmatprep.mubr.f32.mxu0 0.0
      %2609 = vmatmul.mubr.f32.gmra.mxu0 %v2436
      %v2610 = vpop.f32.mrf.mxu0
      %v2611 = vadd.f32 0.0, %v2610
      %v2612 = vpop.f32.mrf.mxu0
      %2613 = vmatprep.mubr.f32.mxu0 0.0
      %2614 = vmatmul.mubr.f32.gmra.mxu0 %v2439
      %v2615 = vpop.f32.mrf.mxu0
      %v2616 = vadd.f32 0.0, %v2615
      %v2617 = vpop.f32.mrf.mxu0
      %2618 = vmatprep.mubr.f32.mxu0 0.0
      %2619 = vmatmul.mubr.f32.gmra.mxu0 %v2442
      %v2620 = vpop.f32.mrf.mxu0
      %v2621 = vadd.f32 0.0, %v2620
      %v2622 = vpop.f32.mrf.mxu0
      %2623 = vmatprep.mubr.f32.mxu0 0.0
      %2624 = vmatmul.mubr.f32.gmra.mxu0 %v2445
      %v2625 = vpop.f32.mrf.mxu0
      %v2626 = vadd.f32 0.0, %v2625
      %v2627 = vpop.f32.mrf.mxu0
      %2628 = vmatprep.mubr.f32.mxu0 0.0
      %2629 = vmatmul.mubr.f32.gmra.mxu0 %v2448
      %v2630 = vpop.f32.mrf.mxu0
      %v2631 = vadd.f32 0.0, %v2630
      %v2632 = vpop.f32.mrf.mxu0
      %2633 = vmatprep.mubr.f32.mxu0 0.0
      %2634 = vmatmul.mubr.f32.gmra.mxu0 %v2451
      %v2635 = vpop.f32.mrf.mxu0
      %v2636 = vadd.f32 0.0, %v2635
      %v2637 = vpop.f32.mrf.mxu0
      %2638 = vmatprep.mubr.f32.mxu0 0.0
      %2639 = vmatmul.mubr.f32.gmra.mxu0 %v2454
      %v2640 = vpop.f32.mrf.mxu0
      %v2641 = vadd.f32 0.0, %v2640
      %v2642 = vpop.f32.mrf.mxu0
      %2643 = vmatprep.mubr.f32.mxu0 0.0
      %2644 = vmatmul.mubr.f32.gmra.mxu0 %v2457
      %v2645 = vpop.f32.mrf.mxu0
      %v2646 = vadd.f32 0.0, %v2645
      %v2647 = vpop.f32.mrf.mxu0
      %2648 = vmatprep.mubr.f32.mxu0 0.0
      %2649 = vmatmul.mubr.f32.gmra.mxu0 %v2460
      %v2650 = vpop.f32.mrf.mxu0
      %v2651 = vadd.f32 0.0, %v2650
      %v2652 = vpop.f32.mrf.mxu0
      %2653 = vmatprep.mubr.f32.mxu0 0.0
      %2654 = vmatmul.mubr.f32.gmra.mxu0 %v2463
      %v2655 = vpop.f32.mrf.mxu0
      %v2656 = vadd.f32 0.0, %v2655
      %v2657 = vpop.f32.mrf.mxu0
      %2658 = vmatprep.mubr.f32.mxu0 0.0
      %2659 = vmatmul.mubr.f32.gmra.mxu0 %v2466
      %v2660 = vpop.f32.mrf.mxu0
      %v2661 = vadd.f32 0.0, %v2660
      %v2662 = vpop.f32.mrf.mxu0
      %2663 = vmatprep.mubr.f32.mxu0 0.0
      %2664 = vmatmul.mubr.f32.gmra.mxu0 %v2469
      %v2665 = vpop.f32.mrf.mxu0
      %v2666 = vadd.f32 0.0, %v2665
      %v2667 = vpop.f32.mrf.mxu0
      %2668 = vmatprep.mubr.f32.mxu0 0.0
      %2669 = vmatmul.mubr.f32.gmra.mxu0 %v2472
      %v2670 = vpop.f32.mrf.mxu0
      %v2671 = vadd.f32 0.0, %v2670
      %v2672 = vpop.f32.mrf.mxu0
      %2673 = vmatprep.mubr.f32.mxu0 0.0
      %2674 = vmatmul.mubr.f32.gmra.mxu0 %v2475
      %v2675 = vpop.f32.mrf.mxu0
      %v2676 = vadd.f32 0.0, %v2675
      %v2677 = vpop.f32.mrf.mxu0
      %2678 = vmatprep.mubr.f32.mxu0 0.0
      %2679 = vmatmul.mubr.f32.gmra.mxu0 %v2478
      %v2680 = vpop.f32.mrf.mxu0
      %v2681 = vadd.f32 0.0, %v2680
      %v2682 = vpop.f32.mrf.mxu0
      %2683 = vmatprep.mubr.f32.mxu0 0.0
      %2684 = vmatmul.mubr.f32.gmra.mxu0 %v2481
      %v2685 = vpop.f32.mrf.mxu0
      %v2686 = vadd.f32 0.0, %v2685
      %v2687 = vpop.f32.mrf.mxu0
      %2688 = vmatprep.mubr.f32.mxu0 0.0
      %2689 = vmatmul.mubr.f32.gmra.mxu0 %v2484
      %v2690 = vpop.f32.mrf.mxu0
      %v2691 = vadd.f32 0.0, %v2690
      %v2692 = vpop.f32.mrf.mxu0
      %2693 = vmatprep.mubr.f32.mxu0 0.0
      %2694 = vmatmul.mubr.f32.gmra.mxu0 %v2487
      %v2695 = vpop.f32.mrf.mxu0
      %v2696 = vadd.f32 0.0, %v2695
      %v2697 = vpop.f32.mrf.mxu0
      %2698 = vmatprep.mubr.f32.mxu0 0.0
      %2699 = vmatmul.mubr.f32.gmra.mxu0 %v2490
      %v2700 = vpop.f32.mrf.mxu0
      %v2701 = vadd.f32 0.0, %v2700
      %v2702 = vpop.f32.mrf.mxu0
      %2703 = vmatprep.mubr.f32.mxu0 0.0
      %2704 = vmatmul.mubr.f32.gmra.mxu0 %v2493
      %v2705 = vpop.f32.mrf.mxu0
      %v2706 = vadd.f32 0.0, %v2705
      %v2707 = vpop.f32.mrf.mxu0
      %2708 = vmatprep.mubr.f32.mxu0 0.0
      %2709 = vmatmul.mubr.f32.gmra.mxu0 %v2496
      %v2710 = vpop.f32.mrf.mxu0
      %v2711 = vadd.f32 0.0, %v2710
      %v2712 = vpop.f32.mrf.mxu0
      %2713 = vmatprep.mubr.f32.mxu0 0.0
      %2714 = vmatmul.mubr.f32.gmra.mxu0 %v2499
      %v2715 = vpop.f32.mrf.mxu0
      %v2716 = vadd.f32 0.0, %v2715
      %v2717 = vpop.f32.mrf.mxu0
      %2718 = vmatprep.mubr.f32.mxu0 0.0
      %2719 = vmatmul.mubr.f32.gmra.mxu0 %v2502
      %v2720 = vpop.f32.mrf.mxu0
      %v2721 = vadd.f32 0.0, %v2720
      %v2722 = vpop.f32.mrf.mxu0
      %2723 = vmatprep.mubr.f32.mxu0 0.0
      %2724 = vmatmul.mubr.f32.gmra.mxu0 %v2505
      %v2725 = vpop.f32.mrf.mxu0
      %v2726 = vadd.f32 0.0, %v2725
      %v2727 = vpop.f32.mrf.mxu0
      %2728 = vmatprep.mubr.f32.mxu0 0.0
      %2729 = vmatmul.mubr.f32.gmra.mxu0 %v2508
      %v2730 = vpop.f32.mrf.mxu0
      %v2731 = vadd.f32 0.0, %v2730
      %v2732 = vpop.f32.mrf.mxu0
      %2733 = vmatprep.mubr.f32.mxu0 0.0
      %2734 = vmatmul.mubr.f32.gmra.mxu0 %v2511
      %v2735 = vpop.f32.mrf.mxu0
      %v2736 = vadd.f32 0.0, %v2735
      %v2737 = vpop.f32.mrf.mxu0
      %2738 = vmatprep.mubr.f32.mxu0 0.0
      %2739 = vmatmul.mubr.f32.gmra.mxu0 %v2514
      %v2740 = vpop.f32.mrf.mxu0
      %v2741 = vadd.f32 0.0, %v2740
      %v2742 = vpop.f32.mrf.mxu0
      %2743 = vdwg.mxu0
      %v2744 = vadd.f32 %v2354, %v2586
      %v2745 = vadd.f32 %v2355, %v2591
      %v2746 = vadd.f32 %v2356, %v2596
      %v2747 = vadd.f32 %v2357, %v2601
      %v2748 = vadd.f32 %v2358, %v2606
      %v2749 = vadd.f32 %v2359, %v2611
      %v2750 = vadd.f32 %v2360, %v2616
      %v2751 = vadd.f32 %v2361, %v2621
      %v2752 = vadd.f32 %v2362, %v2626
      %v2753 = vadd.f32 %v2363, %v2631
      %v2754 = vadd.f32 %v2364, %v2636
      %v2755 = vadd.f32 %v2365, %v2641
      %v2756 = vadd.f32 %v2366, %v2646
      %v2757 = vadd.f32 %v2367, %v2651
      %v2758 = vadd.f32 %v2368, %v2656
      %v2759 = vadd.f32 %v2369, %v2661
      %v2760 = vadd.f32 %v2370, %v2666
      %v2761 = vadd.f32 %v2371, %v2671
      %v2762 = vadd.f32 %v2372, %v2676
      %v2763 = vadd.f32 %v2373, %v2681
      %v2764 = vadd.f32 %v2374, %v2686
      %v2765 = vadd.f32 %v2375, %v2691
      %v2766 = vadd.f32 %v2376, %v2696
      %v2767 = vadd.f32 %v2377, %v2701
      %v2768 = vadd.f32 %v2378, %v2706
      %v2769 = vadd.f32 %v2379, %v2711
      %v2770 = vadd.f32 %v2380, %v2716
      %v2771 = vadd.f32 %v2381, %v2721
      %v2772 = vadd.f32 %v2382, %v2726
      %v2773 = vadd.f32 %v2383, %v2731
      %v2774 = vadd.f32 %v2384, %v2736
      %v2775 = vadd.f32 %v2385, %v2741
      %s2776 = scalar_lea.vmem [#allocation2], 48
      %v2777 = vld [vmem:[%s2776] sm:$0xff]
      %v2778 = vld [vmem:[%s2776 + $0x8] sm:$0xff]
      %v2779 = vld [vmem:[%s2776 + $0x18] sm:$0xff]
      %v2780 = vld [vmem:[%s2776 + $0x20] sm:$0xff]
      %v2781 = vld [vmem:[%s2776 + $0x30] sm:$0xff]
      %v2782 = vld [vmem:[%s2776 + $0x38] sm:$0xff]
      %v2783 = vld [vmem:[%s2776 + $0x48] sm:$0xff]
      %v2784 = vld [vmem:[%s2776 + $0x50] sm:$0xff]
      %v2785 = vld [vmem:[%s2776 + $0x60] sm:$0xff]
      %v2786 = vld [vmem:[%s2776 + $0x68] sm:$0xff]
      %v2787 = vld [vmem:[%s2776 + $0x78] sm:$0xff]
      %v2788 = vld [vmem:[%s2776 + $0x80] sm:$0xff]
      %v2789 = vld [vmem:[%s2776 + $0x90] sm:$0xff]
      %v2790 = vld [vmem:[%s2776 + $0x98] sm:$0xff]
      %v2791 = vld [vmem:[%s2776 + $0xa8] sm:$0xff]
      %v2792 = vld [vmem:[%s2776 + $0xb0] sm:$0xff]
      %v2793 = vld [vmem:[%s2776 + $0xc0] sm:$0xff]
      %v2794 = vld [vmem:[%s2776 + $0xc8] sm:$0xff]
      %v2795 = vld [vmem:[%s2776 + $0xd8] sm:$0xff]
      %v2796 = vld [vmem:[%s2776 + $0xe0] sm:$0xff]
      %v2797 = vld [vmem:[%s2776 + $0xf0] sm:$0xff]
      %v2798 = vld [vmem:[%s2776 + $0xf8] sm:$0xff]
      %v2799 = vld [vmem:[%s2776 + $0x108] sm:$0xff]
      %v2800 = vld [vmem:[%s2776 + $0x110] sm:$0xff]
      %v2801 = vld [vmem:[%s2776 + $0x120] sm:$0xff]
      %v2802 = vld [vmem:[%s2776 + $0x128] sm:$0xff]
      %v2803 = vld [vmem:[%s2776 + $0x138] sm:$0xff]
      %v2804 = vld [vmem:[%s2776 + $0x140] sm:$0xff]
      %v2805 = vld [vmem:[%s2776 + $0x150] sm:$0xff]
      %v2806 = vld [vmem:[%s2776 + $0x158] sm:$0xff]
      %v2807 = vld [vmem:[%s2776 + $0x168] sm:$0xff]
      %v2808 = vld [vmem:[%s2776 + $0x170] sm:$0xff]
      %s2809 = scalar_lea.vmem %s3, 24
      %v2810 = vld [vmem:[%s2809] sm:$0xf]
      %v2812 = vsel %vm422, %v2777, 0
      %v2815 = vsel %vm422, %v2778, 0
      %v2818 = vsel %vm422, %v2779, 0
      %v2821 = vsel %vm422, %v2780, 0
      %v2824 = vsel %vm422, %v2781, 0
      %v2827 = vsel %vm422, %v2782, 0
      %v2830 = vsel %vm422, %v2783, 0
      %v2833 = vsel %vm422, %v2784, 0
      %v2836 = vsel %vm422, %v2785, 0
      %v2839 = vsel %vm422, %v2786, 0
      %v2842 = vsel %vm422, %v2787, 0
      %v2845 = vsel %vm422, %v2788, 0
      %v2848 = vsel %vm422, %v2789, 0
      %v2851 = vsel %vm422, %v2790, 0
      %v2854 = vsel %vm422, %v2791, 0
      %v2857 = vsel %vm422, %v2792, 0
      %v2860 = vsel %vm422, %v2793, 0
      %v2863 = vsel %vm422, %v2794, 0
      %v2866 = vsel %vm422, %v2795, 0
      %v2869 = vsel %vm422, %v2796, 0
      %v2872 = vsel %vm422, %v2797, 0
      %v2875 = vsel %vm422, %v2798, 0
      %v2878 = vsel %vm422, %v2799, 0
      %v2881 = vsel %vm422, %v2800, 0
      %v2884 = vsel %vm422, %v2801, 0
      %v2887 = vsel %vm422, %v2802, 0
      %v2890 = vsel %vm422, %v2803, 0
      %v2893 = vsel %vm422, %v2804, 0
      %v2896 = vsel %vm422, %v2805, 0
      %v2899 = vsel %vm422, %v2806, 0
      %v2902 = vsel %vm422, %v2807, 0
      %v2905 = vsel %vm422, %v2808, 0
      %v2908 = vsel %vm663, %v2810, 0
      %2910 = vmatprep.subr.mxu0 0.0
      %2911 = vmatpush1.msra.mxu0 0.0
      %2912 = vmatprep.subr.mxu0 0.0
      %2913 = vmatpush1.msra.mxu0 0.0
      %2914 = vmatprep.subr.mxu0 0.0
      %2915 = vmatpush1.msra.mxu0 0.0
      %2916 = vmatprep.subr.mxu0 0.0
      %2917 = vmatpush1.msra.mxu0 0.0
      %2918 = vmatprep.subr.mxu0 0.0
      %2919 = vmatpush1.msra.mxu0 0.0
      %2920 = vmatprep.subr.mxu0 0.0
      %2921 = vmatpush1.msra.mxu0 0.0
      %2922 = vmatprep.subr.mxu0 0.0
      %2923 = vmatpush1.msra.mxu0 0.0
      %2924 = vmatprep.subr.mxu0 0.0
      %2925 = vmatpush1.msra.mxu0 0.0
      %2926 = vmatprep.subr.mxu0 0.0
      %2927 = vmatpush1.msra.mxu0 0.0
      %2928 = vmatprep.subr.mxu0 0.0
      %2929 = vmatpush1.msra.mxu0 0.0
      %2930 = vmatprep.subr.mxu0 0.0
      %2931 = vmatpush1.msra.mxu0 0.0
      %2932 = vmatprep.subr.mxu0 0.0
      %2933 = vmatpush1.msra.mxu0 0.0
      %2934 = vmatprep.subr.mxu0 0.0
      %2935 = vmatpush1.msra.mxu0 0.0
      %2936 = vmatprep.subr.mxu0 0.0
      %2937 = vmatpush1.msra.mxu0 0.0
      %2938 = vmatprep.subr.mxu0 0.0
      %2939 = vmatpush1.msra.mxu0 0.0
      %2940 = vmatprep.subr.mxu0 0.0
      %2941 = vmatpush1.msra.mxu0 %v2908
      %2942 = vmatprep.subr.mxu0 0.0
      %2943 = vmatpush2.msra.mxu0 0.0
      %2944 = vmatprep.subr.mxu0 0.0
      %2945 = vmatpush2.msra.mxu0 0.0
      %2946 = vmatprep.subr.mxu0 0.0
      %2947 = vmatpush2.msra.mxu0 0.0
      %2948 = vmatprep.subr.mxu0 0.0
      %2949 = vmatpush2.msra.mxu0 0.0
      %2950 = vmatprep.subr.mxu0 0.0
      %2951 = vmatpush2.msra.mxu0 0.0
      %2952 = vmatprep.subr.mxu0 0.0
      %2953 = vmatpush2.msra.mxu0 0.0
      %2954 = vmatprep.subr.mxu0 0.0
      %2955 = vmatpush2.msra.mxu0 0.0
      %2956 = vmatprep.subr.mxu0 0.0
      %2957 = vmatpush2.msra.mxu0 0.0
      %2958 = vmatprep.subr.mxu0 0.0
      %2959 = vmatpush2.msra.mxu0 0.0
      %2960 = vmatprep.subr.mxu0 0.0
      %2961 = vmatpush2.msra.mxu0 0.0
      %2962 = vmatprep.subr.mxu0 0.0
      %2963 = vmatpush2.msra.mxu0 0.0
      %2964 = vmatprep.subr.mxu0 0.0
      %2965 = vmatpush2.msra.mxu0 0.0
      %2966 = vmatprep.subr.mxu0 0.0
      %2967 = vmatpush2.msra.mxu0 0.0
      %2968 = vmatprep.subr.mxu0 0.0
      %2969 = vmatpush2.msra.mxu0 0.0
      %2970 = vmatprep.subr.mxu0 0.0
      %2971 = vmatpush2.msra.mxu0 0.0
      %2972 = vmatprep.subr.mxu0 0.0
      %2973 = vmatpush2.msra.mxu0 0.0
      %2974 = vmatprep.mubr.f32.mxu0 0.0
      %2975 = vmatmul.mubr.f32.gmra.mxu0 %v2812
      %v2976 = vpop.f32.mrf.mxu0
      %v2977 = vadd.f32 0.0, %v2976
      %v2978 = vpop.f32.mrf.mxu0
      %2979 = vmatprep.mubr.f32.mxu0 0.0
      %2980 = vmatmul.mubr.f32.gmra.mxu0 %v2815
      %v2981 = vpop.f32.mrf.mxu0
      %v2982 = vadd.f32 0.0, %v2981
      %v2983 = vpop.f32.mrf.mxu0
      %2984 = vmatprep.mubr.f32.mxu0 0.0
      %2985 = vmatmul.mubr.f32.gmra.mxu0 %v2818
      %v2986 = vpop.f32.mrf.mxu0
      %v2987 = vadd.f32 0.0, %v2986
      %v2988 = vpop.f32.mrf.mxu0
      %2989 = vmatprep.mubr.f32.mxu0 0.0
      %2990 = vmatmul.mubr.f32.gmra.mxu0 %v2821
      %v2991 = vpop.f32.mrf.mxu0
      %v2992 = vadd.f32 0.0, %v2991
      %v2993 = vpop.f32.mrf.mxu0
      %2994 = vmatprep.mubr.f32.mxu0 0.0
      %2995 = vmatmul.mubr.f32.gmra.mxu0 %v2824
      %v2996 = vpop.f32.mrf.mxu0
      %v2997 = vadd.f32 0.0, %v2996
      %v2998 = vpop.f32.mrf.mxu0
      %2999 = vmatprep.mubr.f32.mxu0 0.0
      %3000 = vmatmul.mubr.f32.gmra.mxu0 %v2827
      %v3001 = vpop.f32.mrf.mxu0
      %v3002 = vadd.f32 0.0, %v3001
      %v3003 = vpop.f32.mrf.mxu0
      %3004 = vmatprep.mubr.f32.mxu0 0.0
      %3005 = vmatmul.mubr.f32.gmra.mxu0 %v2830
      %v3006 = vpop.f32.mrf.mxu0
      %v3007 = vadd.f32 0.0, %v3006
      %v3008 = vpop.f32.mrf.mxu0
      %3009 = vmatprep.mubr.f32.mxu0 0.0
      %3010 = vmatmul.mubr.f32.gmra.mxu0 %v2833
      %v3011 = vpop.f32.mrf.mxu0
      %v3012 = vadd.f32 0.0, %v3011
      %v3013 = vpop.f32.mrf.mxu0
      %3014 = vmatprep.mubr.f32.mxu0 0.0
      %3015 = vmatmul.mubr.f32.gmra.mxu0 %v2836
      %v3016 = vpop.f32.mrf.mxu0
      %v3017 = vadd.f32 0.0, %v3016
      %v3018 = vpop.f32.mrf.mxu0
      %3019 = vmatprep.mubr.f32.mxu0 0.0
      %3020 = vmatmul.mubr.f32.gmra.mxu0 %v2839
      %v3021 = vpop.f32.mrf.mxu0
      %v3022 = vadd.f32 0.0, %v3021
      %v3023 = vpop.f32.mrf.mxu0
      %3024 = vmatprep.mubr.f32.mxu0 0.0
      %3025 = vmatmul.mubr.f32.gmra.mxu0 %v2842
      %v3026 = vpop.f32.mrf.mxu0
      %v3027 = vadd.f32 0.0, %v3026
      %v3028 = vpop.f32.mrf.mxu0
      %3029 = vmatprep.mubr.f32.mxu0 0.0
      %3030 = vmatmul.mubr.f32.gmra.mxu0 %v2845
      %v3031 = vpop.f32.mrf.mxu0
      %v3032 = vadd.f32 0.0, %v3031
      %v3033 = vpop.f32.mrf.mxu0
      %3034 = vmatprep.mubr.f32.mxu0 0.0
      %3035 = vmatmul.mubr.f32.gmra.mxu0 %v2848
      %v3036 = vpop.f32.mrf.mxu0
      %v3037 = vadd.f32 0.0, %v3036
      %v3038 = vpop.f32.mrf.mxu0
      %3039 = vmatprep.mubr.f32.mxu0 0.0
      %3040 = vmatmul.mubr.f32.gmra.mxu0 %v2851
      %v3041 = vpop.f32.mrf.mxu0
      %v3042 = vadd.f32 0.0, %v3041
      %v3043 = vpop.f32.mrf.mxu0
      %3044 = vmatprep.mubr.f32.mxu0 0.0
      %3045 = vmatmul.mubr.f32.gmra.mxu0 %v2854
      %v3046 = vpop.f32.mrf.mxu0
      %v3047 = vadd.f32 0.0, %v3046
      %v3048 = vpop.f32.mrf.mxu0
      %3049 = vmatprep.mubr.f32.mxu0 0.0
      %3050 = vmatmul.mubr.f32.gmra.mxu0 %v2857
      %v3051 = vpop.f32.mrf.mxu0
      %v3052 = vadd.f32 0.0, %v3051
      %v3053 = vpop.f32.mrf.mxu0
      %3054 = vmatprep.mubr.f32.mxu0 0.0
      %3055 = vmatmul.mubr.f32.gmra.mxu0 %v2860
      %v3056 = vpop.f32.mrf.mxu0
      %v3057 = vadd.f32 0.0, %v3056
      %v3058 = vpop.f32.mrf.mxu0
      %3059 = vmatprep.mubr.f32.mxu0 0.0
      %3060 = vmatmul.mubr.f32.gmra.mxu0 %v2863
      %v3061 = vpop.f32.mrf.mxu0
      %v3062 = vadd.f32 0.0, %v3061
      %v3063 = vpop.f32.mrf.mxu0
      %3064 = vmatprep.mubr.f32.mxu0 0.0
      %3065 = vmatmul.mubr.f32.gmra.mxu0 %v2866
      %v3066 = vpop.f32.mrf.mxu0
      %v3067 = vadd.f32 0.0, %v3066
      %v3068 = vpop.f32.mrf.mxu0
      %3069 = vmatprep.mubr.f32.mxu0 0.0
      %3070 = vmatmul.mubr.f32.gmra.mxu0 %v2869
      %v3071 = vpop.f32.mrf.mxu0
      %v3072 = vadd.f32 0.0, %v3071
      %v3073 = vpop.f32.mrf.mxu0
      %3074 = vmatprep.mubr.f32.mxu0 0.0
      %3075 = vmatmul.mubr.f32.gmra.mxu0 %v2872
      %v3076 = vpop.f32.mrf.mxu0
      %v3077 = vadd.f32 0.0, %v3076
      %v3078 = vpop.f32.mrf.mxu0
      %3079 = vmatprep.mubr.f32.mxu0 0.0
      %3080 = vmatmul.mubr.f32.gmra.mxu0 %v2875
      %v3081 = vpop.f32.mrf.mxu0
      %v3082 = vadd.f32 0.0, %v3081
      %v3083 = vpop.f32.mrf.mxu0
      %3084 = vmatprep.mubr.f32.mxu0 0.0
      %3085 = vmatmul.mubr.f32.gmra.mxu0 %v2878
      %v3086 = vpop.f32.mrf.mxu0
      %v3087 = vadd.f32 0.0, %v3086
      %v3088 = vpop.f32.mrf.mxu0
      %3089 = vmatprep.mubr.f32.mxu0 0.0
      %3090 = vmatmul.mubr.f32.gmra.mxu0 %v2881
      %v3091 = vpop.f32.mrf.mxu0
      %v3092 = vadd.f32 0.0, %v3091
      %v3093 = vpop.f32.mrf.mxu0
      %3094 = vmatprep.mubr.f32.mxu0 0.0
      %3095 = vmatmul.mubr.f32.gmra.mxu0 %v2884
      %v3096 = vpop.f32.mrf.mxu0
      %v3097 = vadd.f32 0.0, %v3096
      %v3098 = vpop.f32.mrf.mxu0
      %3099 = vmatprep.mubr.f32.mxu0 0.0
      %3100 = vmatmul.mubr.f32.gmra.mxu0 %v2887
      %v3101 = vpop.f32.mrf.mxu0
      %v3102 = vadd.f32 0.0, %v3101
      %v3103 = vpop.f32.mrf.mxu0
      %3104 = vmatprep.mubr.f32.mxu0 0.0
      %3105 = vmatmul.mubr.f32.gmra.mxu0 %v2890
      %v3106 = vpop.f32.mrf.mxu0
      %v3107 = vadd.f32 0.0, %v3106
      %v3108 = vpop.f32.mrf.mxu0
      %3109 = vmatprep.mubr.f32.mxu0 0.0
      %3110 = vmatmul.mubr.f32.gmra.mxu0 %v2893
      %v3111 = vpop.f32.mrf.mxu0
      %v3112 = vadd.f32 0.0, %v3111
      %v3113 = vpop.f32.mrf.mxu0
      %3114 = vmatprep.mubr.f32.mxu0 0.0
      %3115 = vmatmul.mubr.f32.gmra.mxu0 %v2896
      %v3116 = vpop.f32.mrf.mxu0
      %v3117 = vadd.f32 0.0, %v3116
      %v3118 = vpop.f32.mrf.mxu0
      %3119 = vmatprep.mubr.f32.mxu0 0.0
      %3120 = vmatmul.mubr.f32.gmra.mxu0 %v2899
      %v3121 = vpop.f32.mrf.mxu0
      %v3122 = vadd.f32 0.0, %v3121
      %v3123 = vpop.f32.mrf.mxu0
      %3124 = vmatprep.mubr.f32.mxu0 0.0
      %3125 = vmatmul.mubr.f32.gmra.mxu0 %v2902
      %v3126 = vpop.f32.mrf.mxu0
      %v3127 = vadd.f32 0.0, %v3126
      %v3128 = vpop.f32.mrf.mxu0
      %3129 = vmatprep.mubr.f32.mxu0 0.0
      %3130 = vmatmul.mubr.f32.gmra.mxu0 %v2905
      %v3131 = vpop.f32.mrf.mxu0
      %v3132 = vadd.f32 0.0, %v3131
      %v3133 = vpop.f32.mrf.mxu0
      %3134 = vdwg.mxu0
      %v3135 = vadd.f32 %v2744, %v2977
      %v3136 = vadd.f32 %v2745, %v2982
      %v3137 = vadd.f32 %v2746, %v2987
      %v3138 = vadd.f32 %v2747, %v2992
      %v3139 = vadd.f32 %v2748, %v2997
      %v3140 = vadd.f32 %v2749, %v3002
      %v3141 = vadd.f32 %v2750, %v3007
      %v3142 = vadd.f32 %v2751, %v3012
      %v3143 = vadd.f32 %v2752, %v3017
      %v3144 = vadd.f32 %v2753, %v3022
      %v3145 = vadd.f32 %v2754, %v3027
      %v3146 = vadd.f32 %v2755, %v3032
      %v3147 = vadd.f32 %v2756, %v3037
      %v3148 = vadd.f32 %v2757, %v3042
      %v3149 = vadd.f32 %v2758, %v3047
      %v3150 = vadd.f32 %v2759, %v3052
      %v3151 = vadd.f32 %v2760, %v3057
      %v3152 = vadd.f32 %v2761, %v3062
      %v3153 = vadd.f32 %v2762, %v3067
      %v3154 = vadd.f32 %v2763, %v3072
      %v3155 = vadd.f32 %v2764, %v3077
      %v3156 = vadd.f32 %v2765, %v3082
      %v3157 = vadd.f32 %v2766, %v3087
      %v3158 = vadd.f32 %v2767, %v3092
      %v3159 = vadd.f32 %v2768, %v3097
      %v3160 = vadd.f32 %v2769, %v3102
      %v3161 = vadd.f32 %v2770, %v3107
      %v3162 = vadd.f32 %v2771, %v3112
      %v3163 = vadd.f32 %v2772, %v3117
      %v3164 = vadd.f32 %v2773, %v3122
      %v3165 = vadd.f32 %v2774, %v3127
      %v3166 = vadd.f32 %v2775, %v3132
      %v3167 = vld [vmem:[%s2776 + $0x1] sm:$0xff]
      %v3168 = vld [vmem:[%s2776 + $0x9] sm:$0xff]
      %v3169 = vld [vmem:[%s2776 + $0x19] sm:$0xff]
      %v3170 = vld [vmem:[%s2776 + $0x21] sm:$0xff]
      %v3171 = vld [vmem:[%s2776 + $0x31] sm:$0xff]
      %v3172 = vld [vmem:[%s2776 + $0x39] sm:$0xff]
      %v3173 = vld [vmem:[%s2776 + $0x49] sm:$0xff]
      %v3174 = vld [vmem:[%s2776 + $0x51] sm:$0xff]
      %v3175 = vld [vmem:[%s2776 + $0x61] sm:$0xff]
      %v3176 = vld [vmem:[%s2776 + $0x69] sm:$0xff]
      %v3177 = vld [vmem:[%s2776 + $0x79] sm:$0xff]
      %v3178 = vld [vmem:[%s2776 + $0x81] sm:$0xff]
      %v3179 = vld [vmem:[%s2776 + $0x91] sm:$0xff]
      %v3180 = vld [vmem:[%s2776 + $0x99] sm:$0xff]
      %v3181 = vld [vmem:[%s2776 + $0xa9] sm:$0xff]
      %v3182 = vld [vmem:[%s2776 + $0xb1] sm:$0xff]
      %v3183 = vld [vmem:[%s2776 + $0xc1] sm:$0xff]
      %v3184 = vld [vmem:[%s2776 + $0xc9] sm:$0xff]
      %v3185 = vld [vmem:[%s2776 + $0xd9] sm:$0xff]
      %v3186 = vld [vmem:[%s2776 + $0xe1] sm:$0xff]
      %v3187 = vld [vmem:[%s2776 + $0xf1] sm:$0xff]
      %v3188 = vld [vmem:[%s2776 + $0xf9] sm:$0xff]
      %v3189 = vld [vmem:[%s2776 + $0x109] sm:$0xff]
      %v3190 = vld [vmem:[%s2776 + $0x111] sm:$0xff]
      %v3191 = vld [vmem:[%s2776 + $0x121] sm:$0xff]
      %v3192 = vld [vmem:[%s2776 + $0x129] sm:$0xff]
      %v3193 = vld [vmem:[%s2776 + $0x139] sm:$0xff]
      %v3194 = vld [vmem:[%s2776 + $0x141] sm:$0xff]
      %v3195 = vld [vmem:[%s2776 + $0x151] sm:$0xff]
      %v3196 = vld [vmem:[%s2776 + $0x159] sm:$0xff]
      %v3197 = vld [vmem:[%s2776 + $0x169] sm:$0xff]
      %v3198 = vld [vmem:[%s2776 + $0x171] sm:$0xff]
      %s3199 = scalar_lea.vmem %s3, 28
      %v3200 = vld [vmem:[%s3199] sm:$0xf]
      %v3202 = vsel %vm422, %v3167, 0
      %v3205 = vsel %vm422, %v3168, 0
      %v3208 = vsel %vm422, %v3169, 0
      %v3211 = vsel %vm422, %v3170, 0
      %v3214 = vsel %vm422, %v3171, 0
      %v3217 = vsel %vm422, %v3172, 0
      %v3220 = vsel %vm422, %v3173, 0
      %v3223 = vsel %vm422, %v3174, 0
      %v3226 = vsel %vm422, %v3175, 0
      %v3229 = vsel %vm422, %v3176, 0
      %v3232 = vsel %vm422, %v3177, 0
      %v3235 = vsel %vm422, %v3178, 0
      %v3238 = vsel %vm422, %v3179, 0
      %v3241 = vsel %vm422, %v3180, 0
      %v3244 = vsel %vm422, %v3181, 0
      %v3247 = vsel %vm422, %v3182, 0
      %v3250 = vsel %vm422, %v3183, 0
      %v3253 = vsel %vm422, %v3184, 0
      %v3256 = vsel %vm422, %v3185, 0
      %v3259 = vsel %vm422, %v3186, 0
      %v3262 = vsel %vm422, %v3187, 0
      %v3265 = vsel %vm422, %v3188, 0
      %v3268 = vsel %vm422, %v3189, 0
      %v3271 = vsel %vm422, %v3190, 0
      %v3274 = vsel %vm422, %v3191, 0
      %v3277 = vsel %vm422, %v3192, 0
      %v3280 = vsel %vm422, %v3193, 0
      %v3283 = vsel %vm422, %v3194, 0
      %v3286 = vsel %vm422, %v3195, 0
      %v3289 = vsel %vm422, %v3196, 0
      %v3292 = vsel %vm422, %v3197, 0
      %v3295 = vsel %vm422, %v3198, 0
      %v3298 = vsel %vm663, %v3200, 0
      %3300 = vmatprep.subr.mxu0 0.0
      %3301 = vmatpush1.msra.mxu0 0.0
      %3302 = vmatprep.subr.mxu0 0.0
      %3303 = vmatpush1.msra.mxu0 0.0
      %3304 = vmatprep.subr.mxu0 0.0
      %3305 = vmatpush1.msra.mxu0 0.0
      %3306 = vmatprep.subr.mxu0 0.0
      %3307 = vmatpush1.msra.mxu0 0.0
      %3308 = vmatprep.subr.mxu0 0.0
      %3309 = vmatpush1.msra.mxu0 0.0
      %3310 = vmatprep.subr.mxu0 0.0
      %3311 = vmatpush1.msra.mxu0 0.0
      %3312 = vmatprep.subr.mxu0 0.0
      %3313 = vmatpush1.msra.mxu0 0.0
      %3314 = vmatprep.subr.mxu0 0.0
      %3315 = vmatpush1.msra.mxu0 0.0
      %3316 = vmatprep.subr.mxu0 0.0
      %3317 = vmatpush1.msra.mxu0 0.0
      %3318 = vmatprep.subr.mxu0 0.0
      %3319 = vmatpush1.msra.mxu0 0.0
      %3320 = vmatprep.subr.mxu0 0.0
      %3321 = vmatpush1.msra.mxu0 0.0
      %3322 = vmatprep.subr.mxu0 0.0
      %3323 = vmatpush1.msra.mxu0 0.0
      %3324 = vmatprep.subr.mxu0 0.0
      %3325 = vmatpush1.msra.mxu0 0.0
      %3326 = vmatprep.subr.mxu0 0.0
      %3327 = vmatpush1.msra.mxu0 0.0
      %3328 = vmatprep.subr.mxu0 0.0
      %3329 = vmatpush1.msra.mxu0 0.0
      %3330 = vmatprep.subr.mxu0 0.0
      %3331 = vmatpush1.msra.mxu0 %v3298
      %3332 = vmatprep.subr.mxu0 0.0
      %3333 = vmatpush2.msra.mxu0 0.0
      %3334 = vmatprep.subr.mxu0 0.0
      %3335 = vmatpush2.msra.mxu0 0.0
      %3336 = vmatprep.subr.mxu0 0.0
      %3337 = vmatpush2.msra.mxu0 0.0
      %3338 = vmatprep.subr.mxu0 0.0
      %3339 = vmatpush2.msra.mxu0 0.0
      %3340 = vmatprep.subr.mxu0 0.0
      %3341 = vmatpush2.msra.mxu0 0.0
      %3342 = vmatprep.subr.mxu0 0.0
      %3343 = vmatpush2.msra.mxu0 0.0
      %3344 = vmatprep.subr.mxu0 0.0
      %3345 = vmatpush2.msra.mxu0 0.0
      %3346 = vmatprep.subr.mxu0 0.0
      %3347 = vmatpush2.msra.mxu0 0.0
      %3348 = vmatprep.subr.mxu0 0.0
      %3349 = vmatpush2.msra.mxu0 0.0
      %3350 = vmatprep.subr.mxu0 0.0
      %3351 = vmatpush2.msra.mxu0 0.0
      %3352 = vmatprep.subr.mxu0 0.0
      %3353 = vmatpush2.msra.mxu0 0.0
      %3354 = vmatprep.subr.mxu0 0.0
      %3355 = vmatpush2.msra.mxu0 0.0
      %3356 = vmatprep.subr.mxu0 0.0
      %3357 = vmatpush2.msra.mxu0 0.0
      %3358 = vmatprep.subr.mxu0 0.0
      %3359 = vmatpush2.msra.mxu0 0.0
      %3360 = vmatprep.subr.mxu0 0.0
      %3361 = vmatpush2.msra.mxu0 0.0
      %3362 = vmatprep.subr.mxu0 0.0
      %3363 = vmatpush2.msra.mxu0 0.0
      %3364 = vmatprep.mubr.f32.mxu0 0.0
      %3365 = vmatmul.mubr.f32.gmra.mxu0 %v3202
      %v3366 = vpop.f32.mrf.mxu0
      %v3367 = vadd.f32 0.0, %v3366
      %v3368 = vpop.f32.mrf.mxu0
      %3369 = vmatprep.mubr.f32.mxu0 0.0
      %3370 = vmatmul.mubr.f32.gmra.mxu0 %v3205
      %v3371 = vpop.f32.mrf.mxu0
      %v3372 = vadd.f32 0.0, %v3371
      %v3373 = vpop.f32.mrf.mxu0
      %3374 = vmatprep.mubr.f32.mxu0 0.0
      %3375 = vmatmul.mubr.f32.gmra.mxu0 %v3208
      %v3376 = vpop.f32.mrf.mxu0
      %v3377 = vadd.f32 0.0, %v3376
      %v3378 = vpop.f32.mrf.mxu0
      %3379 = vmatprep.mubr.f32.mxu0 0.0
      %3380 = vmatmul.mubr.f32.gmra.mxu0 %v3211
      %v3381 = vpop.f32.mrf.mxu0
      %v3382 = vadd.f32 0.0, %v3381
      %v3383 = vpop.f32.mrf.mxu0
      %3384 = vmatprep.mubr.f32.mxu0 0.0
      %3385 = vmatmul.mubr.f32.gmra.mxu0 %v3214
      %v3386 = vpop.f32.mrf.mxu0
      %v3387 = vadd.f32 0.0, %v3386
      %v3388 = vpop.f32.mrf.mxu0
      %3389 = vmatprep.mubr.f32.mxu0 0.0
      %3390 = vmatmul.mubr.f32.gmra.mxu0 %v3217
      %v3391 = vpop.f32.mrf.mxu0
      %v3392 = vadd.f32 0.0, %v3391
      %v3393 = vpop.f32.mrf.mxu0
      %3394 = vmatprep.mubr.f32.mxu0 0.0
      %3395 = vmatmul.mubr.f32.gmra.mxu0 %v3220
      %v3396 = vpop.f32.mrf.mxu0
      %v3397 = vadd.f32 0.0, %v3396
      %v3398 = vpop.f32.mrf.mxu0
      %3399 = vmatprep.mubr.f32.mxu0 0.0
      %3400 = vmatmul.mubr.f32.gmra.mxu0 %v3223
      %v3401 = vpop.f32.mrf.mxu0
      %v3402 = vadd.f32 0.0, %v3401
      %v3403 = vpop.f32.mrf.mxu0
      %3404 = vmatprep.mubr.f32.mxu0 0.0
      %3405 = vmatmul.mubr.f32.gmra.mxu0 %v3226
      %v3406 = vpop.f32.mrf.mxu0
      %v3407 = vadd.f32 0.0, %v3406
      %v3408 = vpop.f32.mrf.mxu0
      %3409 = vmatprep.mubr.f32.mxu0 0.0
      %3410 = vmatmul.mubr.f32.gmra.mxu0 %v3229
      %v3411 = vpop.f32.mrf.mxu0
      %v3412 = vadd.f32 0.0, %v3411
      %v3413 = vpop.f32.mrf.mxu0
      %3414 = vmatprep.mubr.f32.mxu0 0.0
      %3415 = vmatmul.mubr.f32.gmra.mxu0 %v3232
      %v3416 = vpop.f32.mrf.mxu0
      %v3417 = vadd.f32 0.0, %v3416
      %v3418 = vpop.f32.mrf.mxu0
      %3419 = vmatprep.mubr.f32.mxu0 0.0
      %3420 = vmatmul.mubr.f32.gmra.mxu0 %v3235
      %v3421 = vpop.f32.mrf.mxu0
      %v3422 = vadd.f32 0.0, %v3421
      %v3423 = vpop.f32.mrf.mxu0
      %3424 = vmatprep.mubr.f32.mxu0 0.0
      %3425 = vmatmul.mubr.f32.gmra.mxu0 %v3238
      %v3426 = vpop.f32.mrf.mxu0
      %v3427 = vadd.f32 0.0, %v3426
      %v3428 = vpop.f32.mrf.mxu0
      %3429 = vmatprep.mubr.f32.mxu0 0.0
      %3430 = vmatmul.mubr.f32.gmra.mxu0 %v3241
      %v3431 = vpop.f32.mrf.mxu0
      %v3432 = vadd.f32 0.0, %v3431
      %v3433 = vpop.f32.mrf.mxu0
      %3434 = vmatprep.mubr.f32.mxu0 0.0
      %3435 = vmatmul.mubr.f32.gmra.mxu0 %v3244
      %v3436 = vpop.f32.mrf.mxu0
      %v3437 = vadd.f32 0.0, %v3436
      %v3438 = vpop.f32.mrf.mxu0
      %3439 = vmatprep.mubr.f32.mxu0 0.0
      %3440 = vmatmul.mubr.f32.gmra.mxu0 %v3247
      %v3441 = vpop.f32.mrf.mxu0
      %v3442 = vadd.f32 0.0, %v3441
      %v3443 = vpop.f32.mrf.mxu0
      %3444 = vmatprep.mubr.f32.mxu0 0.0
      %3445 = vmatmul.mubr.f32.gmra.mxu0 %v3250
      %v3446 = vpop.f32.mrf.mxu0
      %v3447 = vadd.f32 0.0, %v3446
      %v3448 = vpop.f32.mrf.mxu0
      %3449 = vmatprep.mubr.f32.mxu0 0.0
      %3450 = vmatmul.mubr.f32.gmra.mxu0 %v3253
      %v3451 = vpop.f32.mrf.mxu0
      %v3452 = vadd.f32 0.0, %v3451
      %v3453 = vpop.f32.mrf.mxu0
      %3454 = vmatprep.mubr.f32.mxu0 0.0
      %3455 = vmatmul.mubr.f32.gmra.mxu0 %v3256
      %v3456 = vpop.f32.mrf.mxu0
      %v3457 = vadd.f32 0.0, %v3456
      %v3458 = vpop.f32.mrf.mxu0
      %3459 = vmatprep.mubr.f32.mxu0 0.0
      %3460 = vmatmul.mubr.f32.gmra.mxu0 %v3259
      %v3461 = vpop.f32.mrf.mxu0
      %v3462 = vadd.f32 0.0, %v3461
      %v3463 = vpop.f32.mrf.mxu0
      %3464 = vmatprep.mubr.f32.mxu0 0.0
      %3465 = vmatmul.mubr.f32.gmra.mxu0 %v3262
      %v3466 = vpop.f32.mrf.mxu0
      %v3467 = vadd.f32 0.0, %v3466
      %v3468 = vpop.f32.mrf.mxu0
      %3469 = vmatprep.mubr.f32.mxu0 0.0
      %3470 = vmatmul.mubr.f32.gmra.mxu0 %v3265
      %v3471 = vpop.f32.mrf.mxu0
      %v3472 = vadd.f32 0.0, %v3471
      %v3473 = vpop.f32.mrf.mxu0
      %3474 = vmatprep.mubr.f32.mxu0 0.0
      %3475 = vmatmul.mubr.f32.gmra.mxu0 %v3268
      %v3476 = vpop.f32.mrf.mxu0
      %v3477 = vadd.f32 0.0, %v3476
      %v3478 = vpop.f32.mrf.mxu0
      %3479 = vmatprep.mubr.f32.mxu0 0.0
      %3480 = vmatmul.mubr.f32.gmra.mxu0 %v3271
      %v3481 = vpop.f32.mrf.mxu0
      %v3482 = vadd.f32 0.0, %v3481
      %v3483 = vpop.f32.mrf.mxu0
      %3484 = vmatprep.mubr.f32.mxu0 0.0
      %3485 = vmatmul.mubr.f32.gmra.mxu0 %v3274
      %v3486 = vpop.f32.mrf.mxu0
      %v3487 = vadd.f32 0.0, %v3486
      %v3488 = vpop.f32.mrf.mxu0
      %3489 = vmatprep.mubr.f32.mxu0 0.0
      %3490 = vmatmul.mubr.f32.gmra.mxu0 %v3277
      %v3491 = vpop.f32.mrf.mxu0
      %v3492 = vadd.f32 0.0, %v3491
      %v3493 = vpop.f32.mrf.mxu0
      %3494 = vmatprep.mubr.f32.mxu0 0.0
      %3495 = vmatmul.mubr.f32.gmra.mxu0 %v3280
      %v3496 = vpop.f32.mrf.mxu0
      %v3497 = vadd.f32 0.0, %v3496
      %v3498 = vpop.f32.mrf.mxu0
      %3499 = vmatprep.mubr.f32.mxu0 0.0
      %3500 = vmatmul.mubr.f32.gmra.mxu0 %v3283
      %v3501 = vpop.f32.mrf.mxu0
      %v3502 = vadd.f32 0.0, %v3501
      %v3503 = vpop.f32.mrf.mxu0
      %3504 = vmatprep.mubr.f32.mxu0 0.0
      %3505 = vmatmul.mubr.f32.gmra.mxu0 %v3286
      %v3506 = vpop.f32.mrf.mxu0
      %v3507 = vadd.f32 0.0, %v3506
      %v3508 = vpop.f32.mrf.mxu0
      %3509 = vmatprep.mubr.f32.mxu0 0.0
      %3510 = vmatmul.mubr.f32.gmra.mxu0 %v3289
      %v3511 = vpop.f32.mrf.mxu0
      %v3512 = vadd.f32 0.0, %v3511
      %v3513 = vpop.f32.mrf.mxu0
      %3514 = vmatprep.mubr.f32.mxu0 0.0
      %3515 = vmatmul.mubr.f32.gmra.mxu0 %v3292
      %v3516 = vpop.f32.mrf.mxu0
      %v3517 = vadd.f32 0.0, %v3516
      %v3518 = vpop.f32.mrf.mxu0
      %3519 = vmatprep.mubr.f32.mxu0 0.0
      %3520 = vmatmul.mubr.f32.gmra.mxu0 %v3295
      %v3521 = vpop.f32.mrf.mxu0
      %v3522 = vadd.f32 0.0, %v3521
      %v3523 = vpop.f32.mrf.mxu0
      %3524 = vdwg.mxu0
      %v3525 = vadd.f32 %v3135, %v3367
      %v3526 = vadd.f32 %v3136, %v3372
      %v3527 = vadd.f32 %v3137, %v3377
      %v3528 = vadd.f32 %v3138, %v3382
      %v3529 = vadd.f32 %v3139, %v3387
      %v3530 = vadd.f32 %v3140, %v3392
      %v3531 = vadd.f32 %v3141, %v3397
      %v3532 = vadd.f32 %v3142, %v3402
      %v3533 = vadd.f32 %v3143, %v3407
      %v3534 = vadd.f32 %v3144, %v3412
      %v3535 = vadd.f32 %v3145, %v3417
      %v3536 = vadd.f32 %v3146, %v3422
      %v3537 = vadd.f32 %v3147, %v3427
      %v3538 = vadd.f32 %v3148, %v3432
      %v3539 = vadd.f32 %v3149, %v3437
      %v3540 = vadd.f32 %v3150, %v3442
      %v3541 = vadd.f32 %v3151, %v3447
      %v3542 = vadd.f32 %v3152, %v3452
      %v3543 = vadd.f32 %v3153, %v3457
      %v3544 = vadd.f32 %v3154, %v3462
      %v3545 = vadd.f32 %v3155, %v3467
      %v3546 = vadd.f32 %v3156, %v3472
      %v3547 = vadd.f32 %v3157, %v3477
      %v3548 = vadd.f32 %v3158, %v3482
      %v3549 = vadd.f32 %v3159, %v3487
      %v3550 = vadd.f32 %v3160, %v3492
      %v3551 = vadd.f32 %v3161, %v3497
      %v3552 = vadd.f32 %v3162, %v3502
      %v3553 = vadd.f32 %v3163, %v3507
      %v3554 = vadd.f32 %v3164, %v3512
      %v3555 = vadd.f32 %v3165, %v3517
      %v3556 = vadd.f32 %v3166, %v3522
      %v3557 = vld [vmem:[%s2776 + $0x2] sm:$0xff]
      %v3558 = vld [vmem:[%s2776 + $0xa] sm:$0xff]
      %v3559 = vld [vmem:[%s2776 + $0x1a] sm:$0xff]
      %v3560 = vld [vmem:[%s2776 + $0x22] sm:$0xff]
      %v3561 = vld [vmem:[%s2776 + $0x32] sm:$0xff]
      %v3562 = vld [vmem:[%s2776 + $0x3a] sm:$0xff]
      %v3563 = vld [vmem:[%s2776 + $0x4a] sm:$0xff]
      %v3564 = vld [vmem:[%s2776 + $0x52] sm:$0xff]
      %v3565 = vld [vmem:[%s2776 + $0x62] sm:$0xff]
      %v3566 = vld [vmem:[%s2776 + $0x6a] sm:$0xff]
      %v3567 = vld [vmem:[%s2776 + $0x7a] sm:$0xff]
      %v3568 = vld [vmem:[%s2776 + $0x82] sm:$0xff]
      %v3569 = vld [vmem:[%s2776 + $0x92] sm:$0xff]
      %v3570 = vld [vmem:[%s2776 + $0x9a] sm:$0xff]
      %v3571 = vld [vmem:[%s2776 + $0xaa] sm:$0xff]
      %v3572 = vld [vmem:[%s2776 + $0xb2] sm:$0xff]
      %v3573 = vld [vmem:[%s2776 + $0xc2] sm:$0xff]
      %v3574 = vld [vmem:[%s2776 + $0xca] sm:$0xff]
      %v3575 = vld [vmem:[%s2776 + $0xda] sm:$0xff]
      %v3576 = vld [vmem:[%s2776 + $0xe2] sm:$0xff]
      %v3577 = vld [vmem:[%s2776 + $0xf2] sm:$0xff]
      %v3578 = vld [vmem:[%s2776 + $0xfa] sm:$0xff]
      %v3579 = vld [vmem:[%s2776 + $0x10a] sm:$0xff]
      %v3580 = vld [vmem:[%s2776 + $0x112] sm:$0xff]
      %v3581 = vld [vmem:[%s2776 + $0x122] sm:$0xff]
      %v3582 = vld [vmem:[%s2776 + $0x12a] sm:$0xff]
      %v3583 = vld [vmem:[%s2776 + $0x13a] sm:$0xff]
      %v3584 = vld [vmem:[%s2776 + $0x142] sm:$0xff]
      %v3585 = vld [vmem:[%s2776 + $0x152] sm:$0xff]
      %v3586 = vld [vmem:[%s2776 + $0x15a] sm:$0xff]
      %v3587 = vld [vmem:[%s2776 + $0x16a] sm:$0xff]
      %v3588 = vld [vmem:[%s2776 + $0x172] sm:$0xff]
      %s3589 = scalar_lea.vmem %s3, 32
      %v3590 = vld [vmem:[%s3589] sm:$0xf]
      %v3592 = vsel %vm422, %v3557, 0
      %v3595 = vsel %vm422, %v3558, 0
      %v3598 = vsel %vm422, %v3559, 0
      %v3601 = vsel %vm422, %v3560, 0
      %v3604 = vsel %vm422, %v3561, 0
      %v3607 = vsel %vm422, %v3562, 0
      %v3610 = vsel %vm422, %v3563, 0
      %v3613 = vsel %vm422, %v3564, 0
      %v3616 = vsel %vm422, %v3565, 0
      %v3619 = vsel %vm422, %v3566, 0
      %v3622 = vsel %vm422, %v3567, 0
      %v3625 = vsel %vm422, %v3568, 0
      %v3628 = vsel %vm422, %v3569, 0
      %v3631 = vsel %vm422, %v3570, 0
      %v3634 = vsel %vm422, %v3571, 0
      %v3637 = vsel %vm422, %v3572, 0
      %v3640 = vsel %vm422, %v3573, 0
      %v3643 = vsel %vm422, %v3574, 0
      %v3646 = vsel %vm422, %v3575, 0
      %v3649 = vsel %vm422, %v3576, 0
      %v3652 = vsel %vm422, %v3577, 0
      %v3655 = vsel %vm422, %v3578, 0
      %v3658 = vsel %vm422, %v3579, 0
      %v3661 = vsel %vm422, %v3580, 0
      %v3664 = vsel %vm422, %v3581, 0
      %v3667 = vsel %vm422, %v3582, 0
      %v3670 = vsel %vm422, %v3583, 0
      %v3673 = vsel %vm422, %v3584, 0
      %v3676 = vsel %vm422, %v3585, 0
      %v3679 = vsel %vm422, %v3586, 0
      %v3682 = vsel %vm422, %v3587, 0
      %v3685 = vsel %vm422, %v3588, 0
      %v3688 = vsel %vm663, %v3590, 0
      %3690 = vmatprep.subr.mxu0 0.0
      %3691 = vmatpush1.msra.mxu0 0.0
      %3692 = vmatprep.subr.mxu0 0.0
      %3693 = vmatpush1.msra.mxu0 0.0
      %3694 = vmatprep.subr.mxu0 0.0
      %3695 = vmatpush1.msra.mxu0 0.0
      %3696 = vmatprep.subr.mxu0 0.0
      %3697 = vmatpush1.msra.mxu0 0.0
      %3698 = vmatprep.subr.mxu0 0.0
      %3699 = vmatpush1.msra.mxu0 0.0
      %3700 = vmatprep.subr.mxu0 0.0
      %3701 = vmatpush1.msra.mxu0 0.0
      %3702 = vmatprep.subr.mxu0 0.0
      %3703 = vmatpush1.msra.mxu0 0.0
      %3704 = vmatprep.subr.mxu0 0.0
      %3705 = vmatpush1.msra.mxu0 0.0
      %3706 = vmatprep.subr.mxu0 0.0
      %3707 = vmatpush1.msra.mxu0 0.0
      %3708 = vmatprep.subr.mxu0 0.0
      %3709 = vmatpush1.msra.mxu0 0.0
      %3710 = vmatprep.subr.mxu0 0.0
      %3711 = vmatpush1.msra.mxu0 0.0
      %3712 = vmatprep.subr.mxu0 0.0
      %3713 = vmatpush1.msra.mxu0 0.0
      %3714 = vmatprep.subr.mxu0 0.0
      %3715 = vmatpush1.msra.mxu0 0.0
      %3716 = vmatprep.subr.mxu0 0.0
      %3717 = vmatpush1.msra.mxu0 0.0
      %3718 = vmatprep.subr.mxu0 0.0
      %3719 = vmatpush1.msra.mxu0 0.0
      %3720 = vmatprep.subr.mxu0 0.0
      %3721 = vmatpush1.msra.mxu0 %v3688
      %3722 = vmatprep.subr.mxu0 0.0
      %3723 = vmatpush2.msra.mxu0 0.0
      %3724 = vmatprep.subr.mxu0 0.0
      %3725 = vmatpush2.msra.mxu0 0.0
      %3726 = vmatprep.subr.mxu0 0.0
      %3727 = vmatpush2.msra.mxu0 0.0
      %3728 = vmatprep.subr.mxu0 0.0
      %3729 = vmatpush2.msra.mxu0 0.0
      %3730 = vmatprep.subr.mxu0 0.0
      %3731 = vmatpush2.msra.mxu0 0.0
      %3732 = vmatprep.subr.mxu0 0.0
      %3733 = vmatpush2.msra.mxu0 0.0
      %3734 = vmatprep.subr.mxu0 0.0
      %3735 = vmatpush2.msra.mxu0 0.0
      %3736 = vmatprep.subr.mxu0 0.0
      %3737 = vmatpush2.msra.mxu0 0.0
      %3738 = vmatprep.subr.mxu0 0.0
      %3739 = vmatpush2.msra.mxu0 0.0
      %3740 = vmatprep.subr.mxu0 0.0
      %3741 = vmatpush2.msra.mxu0 0.0
      %3742 = vmatprep.subr.mxu0 0.0
      %3743 = vmatpush2.msra.mxu0 0.0
      %3744 = vmatprep.subr.mxu0 0.0
      %3745 = vmatpush2.msra.mxu0 0.0
      %3746 = vmatprep.subr.mxu0 0.0
      %3747 = vmatpush2.msra.mxu0 0.0
      %3748 = vmatprep.subr.mxu0 0.0
      %3749 = vmatpush2.msra.mxu0 0.0
      %3750 = vmatprep.subr.mxu0 0.0
      %3751 = vmatpush2.msra.mxu0 0.0
      %3752 = vmatprep.subr.mxu0 0.0
      %3753 = vmatpush2.msra.mxu0 0.0
      %3754 = vmatprep.mubr.f32.mxu0 0.0
      %3755 = vmatmul.mubr.f32.gmra.mxu0 %v3592
      %v3756 = vpop.f32.mrf.mxu0
      %v3757 = vadd.f32 0.0, %v3756
      %v3758 = vpop.f32.mrf.mxu0
      %3759 = vmatprep.mubr.f32.mxu0 0.0
      %3760 = vmatmul.mubr.f32.gmra.mxu0 %v3595
      %v3761 = vpop.f32.mrf.mxu0
      %v3762 = vadd.f32 0.0, %v3761
      %v3763 = vpop.f32.mrf.mxu0
      %3764 = vmatprep.mubr.f32.mxu0 0.0
      %3765 = vmatmul.mubr.f32.gmra.mxu0 %v3598
      %v3766 = vpop.f32.mrf.mxu0
      %v3767 = vadd.f32 0.0, %v3766
      %v3768 = vpop.f32.mrf.mxu0
      %3769 = vmatprep.mubr.f32.mxu0 0.0
      %3770 = vmatmul.mubr.f32.gmra.mxu0 %v3601
      %v3771 = vpop.f32.mrf.mxu0
      %v3772 = vadd.f32 0.0, %v3771
      %v3773 = vpop.f32.mrf.mxu0
      %3774 = vmatprep.mubr.f32.mxu0 0.0
      %3775 = vmatmul.mubr.f32.gmra.mxu0 %v3604
      %v3776 = vpop.f32.mrf.mxu0
      %v3777 = vadd.f32 0.0, %v3776
      %v3778 = vpop.f32.mrf.mxu0
      %3779 = vmatprep.mubr.f32.mxu0 0.0
      %3780 = vmatmul.mubr.f32.gmra.mxu0 %v3607
      %v3781 = vpop.f32.mrf.mxu0
      %v3782 = vadd.f32 0.0, %v3781
      %v3783 = vpop.f32.mrf.mxu0
      %3784 = vmatprep.mubr.f32.mxu0 0.0
      %3785 = vmatmul.mubr.f32.gmra.mxu0 %v3610
      %v3786 = vpop.f32.mrf.mxu0
      %v3787 = vadd.f32 0.0, %v3786
      %v3788 = vpop.f32.mrf.mxu0
      %3789 = vmatprep.mubr.f32.mxu0 0.0
      %3790 = vmatmul.mubr.f32.gmra.mxu0 %v3613
      %v3791 = vpop.f32.mrf.mxu0
      %v3792 = vadd.f32 0.0, %v3791
      %v3793 = vpop.f32.mrf.mxu0
      %3794 = vmatprep.mubr.f32.mxu0 0.0
      %3795 = vmatmul.mubr.f32.gmra.mxu0 %v3616
      %v3796 = vpop.f32.mrf.mxu0
      %v3797 = vadd.f32 0.0, %v3796
      %v3798 = vpop.f32.mrf.mxu0
      %3799 = vmatprep.mubr.f32.mxu0 0.0
      %3800 = vmatmul.mubr.f32.gmra.mxu0 %v3619
      %v3801 = vpop.f32.mrf.mxu0
      %v3802 = vadd.f32 0.0, %v3801
      %v3803 = vpop.f32.mrf.mxu0
      %3804 = vmatprep.mubr.f32.mxu0 0.0
      %3805 = vmatmul.mubr.f32.gmra.mxu0 %v3622
      %v3806 = vpop.f32.mrf.mxu0
      %v3807 = vadd.f32 0.0, %v3806
      %v3808 = vpop.f32.mrf.mxu0
      %3809 = vmatprep.mubr.f32.mxu0 0.0
      %3810 = vmatmul.mubr.f32.gmra.mxu0 %v3625
      %v3811 = vpop.f32.mrf.mxu0
      %v3812 = vadd.f32 0.0, %v3811
      %v3813 = vpop.f32.mrf.mxu0
      %3814 = vmatprep.mubr.f32.mxu0 0.0
      %3815 = vmatmul.mubr.f32.gmra.mxu0 %v3628
      %v3816 = vpop.f32.mrf.mxu0
      %v3817 = vadd.f32 0.0, %v3816
      %v3818 = vpop.f32.mrf.mxu0
      %3819 = vmatprep.mubr.f32.mxu0 0.0
      %3820 = vmatmul.mubr.f32.gmra.mxu0 %v3631
      %v3821 = vpop.f32.mrf.mxu0
      %v3822 = vadd.f32 0.0, %v3821
      %v3823 = vpop.f32.mrf.mxu0
      %3824 = vmatprep.mubr.f32.mxu0 0.0
      %3825 = vmatmul.mubr.f32.gmra.mxu0 %v3634
      %v3826 = vpop.f32.mrf.mxu0
      %v3827 = vadd.f32 0.0, %v3826
      %v3828 = vpop.f32.mrf.mxu0
      %3829 = vmatprep.mubr.f32.mxu0 0.0
      %3830 = vmatmul.mubr.f32.gmra.mxu0 %v3637
      %v3831 = vpop.f32.mrf.mxu0
      %v3832 = vadd.f32 0.0, %v3831
      %v3833 = vpop.f32.mrf.mxu0
      %3834 = vmatprep.mubr.f32.mxu0 0.0
      %3835 = vmatmul.mubr.f32.gmra.mxu0 %v3640
      %v3836 = vpop.f32.mrf.mxu0
      %v3837 = vadd.f32 0.0, %v3836
      %v3838 = vpop.f32.mrf.mxu0
      %3839 = vmatprep.mubr.f32.mxu0 0.0
      %3840 = vmatmul.mubr.f32.gmra.mxu0 %v3643
      %v3841 = vpop.f32.mrf.mxu0
      %v3842 = vadd.f32 0.0, %v3841
      %v3843 = vpop.f32.mrf.mxu0
      %3844 = vmatprep.mubr.f32.mxu0 0.0
      %3845 = vmatmul.mubr.f32.gmra.mxu0 %v3646
      %v3846 = vpop.f32.mrf.mxu0
      %v3847 = vadd.f32 0.0, %v3846
      %v3848 = vpop.f32.mrf.mxu0
      %3849 = vmatprep.mubr.f32.mxu0 0.0
      %3850 = vmatmul.mubr.f32.gmra.mxu0 %v3649
      %v3851 = vpop.f32.mrf.mxu0
      %v3852 = vadd.f32 0.0, %v3851
      %v3853 = vpop.f32.mrf.mxu0
      %3854 = vmatprep.mubr.f32.mxu0 0.0
      %3855 = vmatmul.mubr.f32.gmra.mxu0 %v3652
      %v3856 = vpop.f32.mrf.mxu0
      %v3857 = vadd.f32 0.0, %v3856
      %v3858 = vpop.f32.mrf.mxu0
      %3859 = vmatprep.mubr.f32.mxu0 0.0
      %3860 = vmatmul.mubr.f32.gmra.mxu0 %v3655
      %v3861 = vpop.f32.mrf.mxu0
      %v3862 = vadd.f32 0.0, %v3861
      %v3863 = vpop.f32.mrf.mxu0
      %3864 = vmatprep.mubr.f32.mxu0 0.0
      %3865 = vmatmul.mubr.f32.gmra.mxu0 %v3658
      %v3866 = vpop.f32.mrf.mxu0
      %v3867 = vadd.f32 0.0, %v3866
      %v3868 = vpop.f32.mrf.mxu0
      %3869 = vmatprep.mubr.f32.mxu0 0.0
      %3870 = vmatmul.mubr.f32.gmra.mxu0 %v3661
      %v3871 = vpop.f32.mrf.mxu0
      %v3872 = vadd.f32 0.0, %v3871
      %v3873 = vpop.f32.mrf.mxu0
      %3874 = vmatprep.mubr.f32.mxu0 0.0
      %3875 = vmatmul.mubr.f32.gmra.mxu0 %v3664
      %v3876 = vpop.f32.mrf.mxu0
      %v3877 = vadd.f32 0.0, %v3876
      %v3878 = vpop.f32.mrf.mxu0
      %3879 = vmatprep.mubr.f32.mxu0 0.0
      %3880 = vmatmul.mubr.f32.gmra.mxu0 %v3667
      %v3881 = vpop.f32.mrf.mxu0
      %v3882 = vadd.f32 0.0, %v3881
      %v3883 = vpop.f32.mrf.mxu0
      %3884 = vmatprep.mubr.f32.mxu0 0.0
      %3885 = vmatmul.mubr.f32.gmra.mxu0 %v3670
      %v3886 = vpop.f32.mrf.mxu0
      %v3887 = vadd.f32 0.0, %v3886
      %v3888 = vpop.f32.mrf.mxu0
      %3889 = vmatprep.mubr.f32.mxu0 0.0
      %3890 = vmatmul.mubr.f32.gmra.mxu0 %v3673
      %v3891 = vpop.f32.mrf.mxu0
      %v3892 = vadd.f32 0.0, %v3891
      %v3893 = vpop.f32.mrf.mxu0
      %3894 = vmatprep.mubr.f32.mxu0 0.0
      %3895 = vmatmul.mubr.f32.gmra.mxu0 %v3676
      %v3896 = vpop.f32.mrf.mxu0
      %v3897 = vadd.f32 0.0, %v3896
      %v3898 = vpop.f32.mrf.mxu0
      %3899 = vmatprep.mubr.f32.mxu0 0.0
      %3900 = vmatmul.mubr.f32.gmra.mxu0 %v3679
      %v3901 = vpop.f32.mrf.mxu0
      %v3902 = vadd.f32 0.0, %v3901
      %v3903 = vpop.f32.mrf.mxu0
      %3904 = vmatprep.mubr.f32.mxu0 0.0
      %3905 = vmatmul.mubr.f32.gmra.mxu0 %v3682
      %v3906 = vpop.f32.mrf.mxu0
      %v3907 = vadd.f32 0.0, %v3906
      %v3908 = vpop.f32.mrf.mxu0
      %3909 = vmatprep.mubr.f32.mxu0 0.0
      %3910 = vmatmul.mubr.f32.gmra.mxu0 %v3685
      %v3911 = vpop.f32.mrf.mxu0
      %v3912 = vadd.f32 0.0, %v3911
      %v3913 = vpop.f32.mrf.mxu0
      %3914 = vdwg.mxu0
      %v3915 = vadd.f32 %v3525, %v3757
      %v3916 = vadd.f32 %v3526, %v3762
      %v3917 = vadd.f32 %v3527, %v3767
      %v3918 = vadd.f32 %v3528, %v3772
      %v3919 = vadd.f32 %v3529, %v3777
      %v3920 = vadd.f32 %v3530, %v3782
      %v3921 = vadd.f32 %v3531, %v3787
      %v3922 = vadd.f32 %v3532, %v3792
      %v3923 = vadd.f32 %v3533, %v3797
      %v3924 = vadd.f32 %v3534, %v3802
      %v3925 = vadd.f32 %v3535, %v3807
      %v3926 = vadd.f32 %v3536, %v3812
      %v3927 = vadd.f32 %v3537, %v3817
      %v3928 = vadd.f32 %v3538, %v3822
      %v3929 = vadd.f32 %v3539, %v3827
      %v3930 = vadd.f32 %v3540, %v3832
      %v3931 = vadd.f32 %v3541, %v3837
      %v3932 = vadd.f32 %v3542, %v3842
      %v3933 = vadd.f32 %v3543, %v3847
      %v3934 = vadd.f32 %v3544, %v3852
      %v3935 = vadd.f32 %v3545, %v3857
      %v3936 = vadd.f32 %v3546, %v3862
      %v3937 = vadd.f32 %v3547, %v3867
      %v3938 = vadd.f32 %v3548, %v3872
      %v3939 = vadd.f32 %v3549, %v3877
      %v3940 = vadd.f32 %v3550, %v3882
      %v3941 = vadd.f32 %v3551, %v3887
      %v3942 = vadd.f32 %v3552, %v3892
      %v3943 = vadd.f32 %v3553, %v3897
      %v3944 = vadd.f32 %v3554, %v3902
      %v3945 = vadd.f32 %v3555, %v3907
      %v3946 = vadd.f32 %v3556, %v3912
      %v3947 = vld [vmem:[%s4] sm:$0x1]
      %v3949 = vlaneseq
      %v3950 = vshrl.u32 %v3949, 7
      %v3951 = vsub.s32 0, %v3950
      %v3952 = vrot.slane %v3947, %v3951
      %v3954 = vadd.f32 %v3915, %v3952
      %v3955 = vadd.f32 %v3916, %v3952
      %v3956 = vadd.f32 %v3917, %v3952
      %v3957 = vadd.f32 %v3918, %v3952
      %v3958 = vadd.f32 %v3919, %v3952
      %v3959 = vadd.f32 %v3920, %v3952
      %v3960 = vadd.f32 %v3921, %v3952
      %v3961 = vadd.f32 %v3922, %v3952
      %v3962 = vadd.f32 %v3923, %v3952
      %v3963 = vadd.f32 %v3924, %v3952
      %v3964 = vadd.f32 %v3925, %v3952
      %v3965 = vadd.f32 %v3926, %v3952
      %v3966 = vadd.f32 %v3927, %v3952
      %v3967 = vadd.f32 %v3928, %v3952
      %v3968 = vadd.f32 %v3929, %v3952
      %v3969 = vadd.f32 %v3930, %v3952
      %v3970 = vadd.f32 %v3931, %v3952
      %v3971 = vadd.f32 %v3932, %v3952
      %v3972 = vadd.f32 %v3933, %v3952
      %v3973 = vadd.f32 %v3934, %v3952
      %v3974 = vadd.f32 %v3935, %v3952
      %v3975 = vadd.f32 %v3936, %v3952
      %v3976 = vadd.f32 %v3937, %v3952
      %v3977 = vadd.f32 %v3938, %v3952
      %v3978 = vadd.f32 %v3939, %v3952
      %v3979 = vadd.f32 %v3940, %v3952
      %v3980 = vadd.f32 %v3941, %v3952
      %v3981 = vadd.f32 %v3942, %v3952
      %v3982 = vadd.f32 %v3943, %v3952
      %v3983 = vadd.f32 %v3944, %v3952
      %v3984 = vadd.f32 %v3945, %v3952
      %v3985 = vadd.f32 %v3946, %v3952
      %v3986 = vmax.f32 %v3954, 0.0
      %v3987 = vmax.f32 %v3955, 0.0
      %v3988 = vmax.f32 %v3956, 0.0
      %v3989 = vmax.f32 %v3957, 0.0
      %v3990 = vmax.f32 %v3958, 0.0
      %v3991 = vmax.f32 %v3959, 0.0
      %v3992 = vmax.f32 %v3960, 0.0
      %v3993 = vmax.f32 %v3961, 0.0
      %v3994 = vmax.f32 %v3962, 0.0
      %v3995 = vmax.f32 %v3963, 0.0
      %v3996 = vmax.f32 %v3964, 0.0
      %v3997 = vmax.f32 %v3965, 0.0
      %v3998 = vmax.f32 %v3966, 0.0
      %v3999 = vmax.f32 %v3967, 0.0
      %v4000 = vmax.f32 %v3968, 0.0
      %v4001 = vmax.f32 %v3969, 0.0
      %v4002 = vmax.f32 %v3970, 0.0
      %v4003 = vmax.f32 %v3971, 0.0
      %v4004 = vmax.f32 %v3972, 0.0
      %v4005 = vmax.f32 %v3973, 0.0
      %v4006 = vmax.f32 %v3974, 0.0
      %v4007 = vmax.f32 %v3975, 0.0
      %v4008 = vmax.f32 %v3976, 0.0
      %v4009 = vmax.f32 %v3977, 0.0
      %v4010 = vmax.f32 %v3978, 0.0
      %v4011 = vmax.f32 %v3979, 0.0
      %v4012 = vmax.f32 %v3980, 0.0
      %v4013 = vmax.f32 %v3981, 0.0
      %v4014 = vmax.f32 %v3982, 0.0
      %v4015 = vmax.f32 %v3983, 0.0
      %v4016 = vmax.f32 %v3984, 0.0
      %v4017 = vmax.f32 %v3985, 0.0
      %s4018 = scalar_lea.vmem [#allocation3], 24
      %vm4019 = vcmask 64512
      %4020 = vst.msk [vmem:[%s4018 + $0x1] sm:$0xff] %vm4019, %v3986
      %4021 = vst.msk [vmem:[%s4018 + $0x9] sm:$0xff] %vm4019, %v3987
      %4022 = vst.msk [vmem:[%s4018 + $0x19] sm:$0xff] %vm4019, %v3988
      %4023 = vst.msk [vmem:[%s4018 + $0x21] sm:$0xff] %vm4019, %v3989
      %4024 = vst.msk [vmem:[%s4018 + $0x31] sm:$0xff] %vm4019, %v3990
      %4025 = vst.msk [vmem:[%s4018 + $0x39] sm:$0xff] %vm4019, %v3991
      %4026 = vst.msk [vmem:[%s4018 + $0x49] sm:$0xff] %vm4019, %v3992
      %4027 = vst.msk [vmem:[%s4018 + $0x51] sm:$0xff] %vm4019, %v3993
      %4028 = vst.msk [vmem:[%s4018 + $0x61] sm:$0xff] %vm4019, %v3994
      %4029 = vst.msk [vmem:[%s4018 + $0x69] sm:$0xff] %vm4019, %v3995
      %4030 = vst.msk [vmem:[%s4018 + $0x79] sm:$0xff] %vm4019, %v3996
      %4031 = vst.msk [vmem:[%s4018 + $0x81] sm:$0xff] %vm4019, %v3997
      %4032 = vst.msk [vmem:[%s4018 + $0x91] sm:$0xff] %vm4019, %v3998
      %4033 = vst.msk [vmem:[%s4018 + $0x99] sm:$0xff] %vm4019, %v3999
      %4034 = vst.msk [vmem:[%s4018 + $0xa9] sm:$0xff] %vm4019, %v4000
      %4035 = vst.msk [vmem:[%s4018 + $0xb1] sm:$0xff] %vm4019, %v4001
      %4036 = vst.msk [vmem:[%s4018 + $0xc1] sm:$0xff] %vm4019, %v4002
      %4037 = vst.msk [vmem:[%s4018 + $0xc9] sm:$0xff] %vm4019, %v4003
      %4038 = vst.msk [vmem:[%s4018 + $0xd9] sm:$0xff] %vm4019, %v4004
      %4039 = vst.msk [vmem:[%s4018 + $0xe1] sm:$0xff] %vm4019, %v4005
      %4040 = vst.msk [vmem:[%s4018 + $0xf1] sm:$0xff] %vm4019, %v4006
      %4041 = vst.msk [vmem:[%s4018 + $0xf9] sm:$0xff] %vm4019, %v4007
      %4042 = vst.msk [vmem:[%s4018 + $0x109] sm:$0xff] %vm4019, %v4008
      %4043 = vst.msk [vmem:[%s4018 + $0x111] sm:$0xff] %vm4019, %v4009
      %4044 = vst.msk [vmem:[%s4018 + $0x121] sm:$0xff] %vm4019, %v4010
      %4045 = vst.msk [vmem:[%s4018 + $0x129] sm:$0xff] %vm4019, %v4011
      %4046 = vst.msk [vmem:[%s4018 + $0x139] sm:$0xff] %vm4019, %v4012
      %4047 = vst.msk [vmem:[%s4018 + $0x141] sm:$0xff] %vm4019, %v4013
      %4048 = vst.msk [vmem:[%s4018 + $0x151] sm:$0xff] %vm4019, %v4014
      %4049 = vst.msk [vmem:[%s4018 + $0x159] sm:$0xff] %vm4019, %v4015
      %4050 = vst.msk [vmem:[%s4018 + $0x169] sm:$0xff] %vm4019, %v4016
      %4051 = vst.msk [vmem:[%s4018 + $0x171] sm:$0xff] %vm4019, %v4017
      %4052 = vst.msk [vmem:[#allocation3] sm:$0xff] %vm4019, 0.0
      %4053 = vst.msk [vmem:[#allocation3 + $0x8] sm:$0xff] %vm4019, 0.0
      %vm4054 = vcmask 58368
      %4055 = vst.msk [vmem:[#allocation3 + $0x10] sm:$0x3] %vm4054, 0.0
      %s4056 = scalar_lea.vmem [#allocation3], 408
      %4057 = vst.msk [vmem:[%s4056] sm:$0xff] %vm4019, 0.0
      %4058 = vst.msk [vmem:[%s4056 + $0x8] sm:$0xff] %vm4019, 0.0
      %4059 = vst.msk [vmem:[%s4056 + $0x10] sm:$0x3] %vm4054, 0.0
      %vm4060 = vcmask 57344
      %4061 = vst.msk [vmem:[#allocation3] sm:$0x1] %vm4060, 0.0
      %4062 = vst.msk [vmem:[#allocation3 + $0x18] sm:$0x1] %vm4060, 0.0
      %4063 = vst.msk [vmem:[#allocation3 + $0x30] sm:$0x1] %vm4060, 0.0
      %4064 = vst.msk [vmem:[#allocation3 + $0x48] sm:$0x1] %vm4060, 0.0
      %4065 = vst.msk [vmem:[#allocation3 + $0x60] sm:$0x1] %vm4060, 0.0
      %4066 = vst.msk [vmem:[#allocation3 + $0x78] sm:$0x1] %vm4060, 0.0
      %4067 = vst.msk [vmem:[#allocation3 + $0x90] sm:$0x1] %vm4060, 0.0
      %4068 = vst.msk [vmem:[#allocation3 + $0xa8] sm:$0x1] %vm4060, 0.0
      %4069 = vst.msk [vmem:[#allocation3 + $0xc0] sm:$0x1] %vm4060, 0.0
      %4070 = vst.msk [vmem:[#allocation3 + $0xd8] sm:$0x1] %vm4060, 0.0
      %4071 = vst.msk [vmem:[#allocation3 + $0xf0] sm:$0x1] %vm4060, 0.0
      %4072 = vst.msk [vmem:[#allocation3 + $0x108] sm:$0x1] %vm4060, 0.0
      %4073 = vst.msk [vmem:[#allocation3 + $0x120] sm:$0x1] %vm4060, 0.0
      %4074 = vst.msk [vmem:[#allocation3 + $0x138] sm:$0x1] %vm4060, 0.0
      %4075 = vst.msk [vmem:[#allocation3 + $0x150] sm:$0x1] %vm4060, 0.0
      %4076 = vst.msk [vmem:[#allocation3 + $0x168] sm:$0x1] %vm4060, 0.0
      %4077 = vst.msk [vmem:[#allocation3 + $0x180] sm:$0x1] %vm4060, 0.0
      %4078 = vst.msk [vmem:[#allocation3 + $0x198] sm:$0x1] %vm4060, 0.0
      %4079 = vst.msk [vmem:[#allocation3 + $0x11] sm:$0x1] %vm4060, 0.0
      %4080 = vst.msk [vmem:[#allocation3 + $0x29] sm:$0x1] %vm4060, 0.0
      %4081 = vst.msk [vmem:[#allocation3 + $0x41] sm:$0x1] %vm4060, 0.0
      %4082 = vst.msk [vmem:[#allocation3 + $0x59] sm:$0x1] %vm4060, 0.0
      %4083 = vst.msk [vmem:[#allocation3 + $0x71] sm:$0x1] %vm4060, 0.0
      %4084 = vst.msk [vmem:[#allocation3 + $0x89] sm:$0x1] %vm4060, 0.0
      %4085 = vst.msk [vmem:[#allocation3 + $0xa1] sm:$0x1] %vm4060, 0.0
      %4086 = vst.msk [vmem:[#allocation3 + $0xb9] sm:$0x1] %vm4060, 0.0
      %4087 = vst.msk [vmem:[#allocation3 + $0xd1] sm:$0x1] %vm4060, 0.0
      %4088 = vst.msk [vmem:[#allocation3 + $0xe9] sm:$0x1] %vm4060, 0.0
      %4089 = vst.msk [vmem:[#allocation3 + $0x101] sm:$0x1] %vm4060, 0.0
      %4090 = vst.msk [vmem:[#allocation3 + $0x119] sm:$0x1] %vm4060, 0.0
      %4091 = vst.msk [vmem:[#allocation3 + $0x131] sm:$0x1] %vm4060, 0.0
      %4092 = vst.msk [vmem:[#allocation3 + $0x149] sm:$0x1] %vm4060, 0.0
      %4093 = vst.msk [vmem:[#allocation3 + $0x161] sm:$0x1] %vm4060, 0.0
      %4094 = vst.msk [vmem:[#allocation3 + $0x179] sm:$0x1] %vm4060, 0.0
      %4095 = vst.msk [vmem:[#allocation3 + $0x191] sm:$0x1] %vm4060, 0.0
      %4096 = vst.msk [vmem:[#allocation3 + $0x1a9] sm:$0x1] %vm4060, 0.0
      %v4097 = vld [vmem:[#allocation3] sm:$0xff]
      %v4098 = vld [vmem:[#allocation3 + $0x8] sm:$0xff]
      %v4099 = vld [vmem:[#allocation3 + $0x18] sm:$0xff]
      %v4100 = vld [vmem:[#allocation3 + $0x20] sm:$0xff]
      %v4101 = vld [vmem:[#allocation3 + $0x30] sm:$0xff]
      %v4102 = vld [vmem:[#allocation3 + $0x38] sm:$0xff]
      %v4103 = vld [vmem:[#allocation3 + $0x48] sm:$0xff]
      %v4104 = vld [vmem:[#allocation3 + $0x50] sm:$0xff]
      %v4105 = vld [vmem:[#allocation3 + $0x60] sm:$0xff]
      %v4106 = vld [vmem:[#allocation3 + $0x68] sm:$0xff]
      %v4107 = vld [vmem:[#allocation3 + $0x78] sm:$0xff]
      %v4108 = vld [vmem:[#allocation3 + $0x80] sm:$0xff]
      %v4109 = vld [vmem:[#allocation3 + $0x90] sm:$0xff]
      %v4110 = vld [vmem:[#allocation3 + $0x98] sm:$0xff]
      %v4111 = vld [vmem:[#allocation3 + $0xa8] sm:$0xff]
      %v4112 = vld [vmem:[#allocation3 + $0xb0] sm:$0xff]
      %v4113 = vld [vmem:[#allocation3 + $0xc0] sm:$0xff]
      %v4114 = vld [vmem:[#allocation3 + $0xc8] sm:$0xff]
      %v4115 = vld [vmem:[#allocation3 + $0xd8] sm:$0xff]
      %v4116 = vld [vmem:[#allocation3 + $0xe0] sm:$0xff]
      %v4117 = vld [vmem:[#allocation3 + $0xf0] sm:$0xff]
      %v4118 = vld [vmem:[#allocation3 + $0xf8] sm:$0xff]
      %v4119 = vld [vmem:[#allocation3 + $0x108] sm:$0xff]
      %v4120 = vld [vmem:[#allocation3 + $0x110] sm:$0xff]
      %v4121 = vld [vmem:[#allocation3 + $0x120] sm:$0xff]
      %v4122 = vld [vmem:[#allocation3 + $0x128] sm:$0xff]
      %v4123 = vld [vmem:[#allocation3 + $0x138] sm:$0xff]
      %v4124 = vld [vmem:[#allocation3 + $0x140] sm:$0xff]
      %v4125 = vld [vmem:[#allocation3 + $0x150] sm:$0xff]
      %v4126 = vld [vmem:[#allocation3 + $0x158] sm:$0xff]
      %v4127 = vld [vmem:[#allocation3 + $0x168] sm:$0xff]
      %v4128 = vld [vmem:[#allocation3 + $0x170] sm:$0xff]
      %v4129 = vld [vmem:[%s5] sm:$0xff]
      %v4130 = vld [vmem:[#allocation3 + $0x1] sm:$0xff]
      %v4131 = vld [vmem:[#allocation3 + $0x9] sm:$0xff]
      %v4132 = vld [vmem:[#allocation3 + $0x19] sm:$0xff]
      %v4133 = vld [vmem:[#allocation3 + $0x21] sm:$0xff]
      %v4134 = vld [vmem:[#allocation3 + $0x31] sm:$0xff]
      %v4135 = vld [vmem:[#allocation3 + $0x39] sm:$0xff]
      %v4136 = vld [vmem:[#allocation3 + $0x49] sm:$0xff]
      %v4137 = vld [vmem:[#allocation3 + $0x51] sm:$0xff]
      %v4138 = vld [vmem:[#allocation3 + $0x61] sm:$0xff]
      %v4139 = vld [vmem:[#allocation3 + $0x69] sm:$0xff]
      %v4140 = vld [vmem:[#allocation3 + $0x79] sm:$0xff]
      %v4141 = vld [vmem:[#allocation3 + $0x81] sm:$0xff]
      %v4142 = vld [vmem:[#allocation3 + $0x91] sm:$0xff]
      %v4143 = vld [vmem:[#allocation3 + $0x99] sm:$0xff]
      %v4144 = vld [vmem:[#allocation3 + $0xa9] sm:$0xff]
      %v4145 = vld [vmem:[#allocation3 + $0xb1] sm:$0xff]
      %v4146 = vld [vmem:[#allocation3 + $0xc1] sm:$0xff]
      %v4147 = vld [vmem:[#allocation3 + $0xc9] sm:$0xff]
      %v4148 = vld [vmem:[#allocation3 + $0xd9] sm:$0xff]
      %v4149 = vld [vmem:[#allocation3 + $0xe1] sm:$0xff]
      %v4150 = vld [vmem:[#allocation3 + $0xf1] sm:$0xff]
      %v4151 = vld [vmem:[#allocation3 + $0xf9] sm:$0xff]
      %v4152 = vld [vmem:[#allocation3 + $0x109] sm:$0xff]
      %v4153 = vld [vmem:[#allocation3 + $0x111] sm:$0xff]
      %v4154 = vld [vmem:[#allocation3 + $0x121] sm:$0xff]
      %v4155 = vld [vmem:[#allocation3 + $0x129] sm:$0xff]
      %v4156 = vld [vmem:[#allocation3 + $0x139] sm:$0xff]
      %v4157 = vld [vmem:[#allocation3 + $0x141] sm:$0xff]
      %v4158 = vld [vmem:[#allocation3 + $0x151] sm:$0xff]
      %v4159 = vld [vmem:[#allocation3 + $0x159] sm:$0xff]
      %v4160 = vld [vmem:[#allocation3 + $0x169] sm:$0xff]
      %v4161 = vld [vmem:[#allocation3 + $0x171] sm:$0xff]
      %s4162 = scalar_lea.vmem %s5, 8
      %v4163 = vld [vmem:[%s4162] sm:$0xff]
      %v4165 = vsel %vm4019, %v4130, 0
      %v4168 = vsel %vm4019, %v4131, 0
      %v4171 = vsel %vm4019, %v4132, 0
      %v4174 = vsel %vm4019, %v4133, 0
      %v4177 = vsel %vm4019, %v4134, 0
      %v4180 = vsel %vm4019, %v4135, 0
      %v4183 = vsel %vm4019, %v4136, 0
      %v4186 = vsel %vm4019, %v4137, 0
      %v4189 = vsel %vm4019, %v4138, 0
      %v4192 = vsel %vm4019, %v4139, 0
      %v4195 = vsel %vm4019, %v4140, 0
      %v4198 = vsel %vm4019, %v4141, 0
      %v4201 = vsel %vm4019, %v4142, 0
      %v4204 = vsel %vm4019, %v4143, 0
      %v4207 = vsel %vm4019, %v4144, 0
      %v4210 = vsel %vm4019, %v4145, 0
      %v4213 = vsel %vm4019, %v4146, 0
      %v4216 = vsel %vm4019, %v4147, 0
      %v4219 = vsel %vm4019, %v4148, 0
      %v4222 = vsel %vm4019, %v4149, 0
      %v4225 = vsel %vm4019, %v4150, 0
      %v4228 = vsel %vm4019, %v4151, 0
      %v4231 = vsel %vm4019, %v4152, 0
      %v4234 = vsel %vm4019, %v4153, 0
      %v4237 = vsel %vm4019, %v4154, 0
      %v4240 = vsel %vm4019, %v4155, 0
      %v4243 = vsel %vm4019, %v4156, 0
      %v4246 = vsel %vm4019, %v4157, 0
      %v4249 = vsel %vm4019, %v4158, 0
      %v4252 = vsel %vm4019, %v4159, 0
      %v4255 = vsel %vm4019, %v4160, 0
      %v4258 = vsel %vm4019, %v4161, 0
      %4260 = vmatprep.subr.mxu0 0.0
      %4261 = vmatpush1.msra.mxu0 0.0
      %4262 = vmatprep.subr.mxu0 0.0
      %4263 = vmatpush1.msra.mxu0 0.0
      %4264 = vmatprep.subr.mxu0 0.0
      %4265 = vmatpush1.msra.mxu0 0.0
      %4266 = vmatprep.subr.mxu0 0.0
      %4267 = vmatpush1.msra.mxu0 0.0
      %4268 = vmatprep.subr.mxu0 0.0
      %4269 = vmatpush1.msra.mxu0 0.0
      %4270 = vmatprep.subr.mxu0 0.0
      %4271 = vmatpush1.msra.mxu0 0.0
      %4272 = vmatprep.subr.mxu0 0.0
      %4273 = vmatpush1.msra.mxu0 0.0
      %4274 = vmatprep.subr.mxu0 0.0
      %4275 = vmatpush1.msra.mxu0 0.0
      %4276 = vmatprep.subr.mxu0 0.0
      %4277 = vmatpush1.msra.mxu0 0.0
      %4278 = vmatprep.subr.mxu0 0.0
      %4279 = vmatpush1.msra.mxu0 0.0
      %4280 = vmatprep.subr.mxu0 0.0
      %4281 = vmatpush1.msra.mxu0 0.0
      %4282 = vmatprep.subr.mxu0 0.0
      %4283 = vmatpush1.msra.mxu0 0.0
      %4284 = vmatprep.subr.mxu0 0.0
      %4285 = vmatpush1.msra.mxu0 0.0
      %4286 = vmatprep.subr.mxu0 0.0
      %4287 = vmatpush1.msra.mxu0 0.0
      %4288 = vmatprep.subr.mxu0 0.0
      %4289 = vmatpush1.msra.mxu0 0.0
      %4290 = vmatprep.subr.mxu0 0.0
      %4291 = vmatpush1.msra.mxu0 %v4163
      %4292 = vmatprep.subr.mxu0 0.0
      %4293 = vmatpush2.msra.mxu0 0.0
      %4294 = vmatprep.subr.mxu0 0.0
      %4295 = vmatpush2.msra.mxu0 0.0
      %4296 = vmatprep.subr.mxu0 0.0
      %4297 = vmatpush2.msra.mxu0 0.0
      %4298 = vmatprep.subr.mxu0 0.0
      %4299 = vmatpush2.msra.mxu0 0.0
      %4300 = vmatprep.subr.mxu0 0.0
      %4301 = vmatpush2.msra.mxu0 0.0
      %4302 = vmatprep.subr.mxu0 0.0
      %4303 = vmatpush2.msra.mxu0 0.0
      %4304 = vmatprep.subr.mxu0 0.0
      %4305 = vmatpush2.msra.mxu0 0.0
      %4306 = vmatprep.subr.mxu0 0.0
      %4307 = vmatpush2.msra.mxu0 0.0
      %4308 = vmatprep.subr.mxu0 0.0
      %4309 = vmatpush2.msra.mxu0 0.0
      %4310 = vmatprep.subr.mxu0 0.0
      %4311 = vmatpush2.msra.mxu0 0.0
      %4312 = vmatprep.subr.mxu0 0.0
      %4313 = vmatpush2.msra.mxu0 0.0
      %4314 = vmatprep.subr.mxu0 0.0
      %4315 = vmatpush2.msra.mxu0 0.0
      %4316 = vmatprep.subr.mxu0 0.0
      %4317 = vmatpush2.msra.mxu0 0.0
      %4318 = vmatprep.subr.mxu0 0.0
      %4319 = vmatpush2.msra.mxu0 0.0
      %4320 = vmatprep.subr.mxu0 0.0
      %4321 = vmatpush2.msra.mxu0 0.0
      %4322 = vmatprep.subr.mxu0 0.0
      %4323 = vmatpush2.msra.mxu0 0.0
      %4324 = vmatprep.mubr.f32.mxu0 0.0
      %4325 = vmatmul.mubr.f32.gmra.mxu0 %v4165
      %v4326 = vpop.f32.mrf.mxu0
      %v4327 = vadd.f32 0.0, %v4326
      %v4328 = vpop.f32.mrf.mxu0
      %4329 = vmatprep.mubr.f32.mxu0 0.0
      %4330 = vmatmul.mubr.f32.gmra.mxu0 %v4168
      %v4331 = vpop.f32.mrf.mxu0
      %v4332 = vadd.f32 0.0, %v4331
      %v4333 = vpop.f32.mrf.mxu0
      %4334 = vmatprep.mubr.f32.mxu0 0.0
      %4335 = vmatmul.mubr.f32.gmra.mxu0 %v4171
      %v4336 = vpop.f32.mrf.mxu0
      %v4337 = vadd.f32 0.0, %v4336
      %v4338 = vpop.f32.mrf.mxu0
      %4339 = vmatprep.mubr.f32.mxu0 0.0
      %4340 = vmatmul.mubr.f32.gmra.mxu0 %v4174
      %v4341 = vpop.f32.mrf.mxu0
      %v4342 = vadd.f32 0.0, %v4341
      %v4343 = vpop.f32.mrf.mxu0
      %4344 = vmatprep.mubr.f32.mxu0 0.0
      %4345 = vmatmul.mubr.f32.gmra.mxu0 %v4177
      %v4346 = vpop.f32.mrf.mxu0
      %v4347 = vadd.f32 0.0, %v4346
      %v4348 = vpop.f32.mrf.mxu0
      %4349 = vmatprep.mubr.f32.mxu0 0.0
      %4350 = vmatmul.mubr.f32.gmra.mxu0 %v4180
      %v4351 = vpop.f32.mrf.mxu0
      %v4352 = vadd.f32 0.0, %v4351
      %v4353 = vpop.f32.mrf.mxu0
      %4354 = vmatprep.mubr.f32.mxu0 0.0
      %4355 = vmatmul.mubr.f32.gmra.mxu0 %v4183
      %v4356 = vpop.f32.mrf.mxu0
      %v4357 = vadd.f32 0.0, %v4356
      %v4358 = vpop.f32.mrf.mxu0
      %4359 = vmatprep.mubr.f32.mxu0 0.0
      %4360 = vmatmul.mubr.f32.gmra.mxu0 %v4186
      %v4361 = vpop.f32.mrf.mxu0
      %v4362 = vadd.f32 0.0, %v4361
      %v4363 = vpop.f32.mrf.mxu0
      %4364 = vmatprep.mubr.f32.mxu0 0.0
      %4365 = vmatmul.mubr.f32.gmra.mxu0 %v4189
      %v4366 = vpop.f32.mrf.mxu0
      %v4367 = vadd.f32 0.0, %v4366
      %v4368 = vpop.f32.mrf.mxu0
      %4369 = vmatprep.mubr.f32.mxu0 0.0
      %4370 = vmatmul.mubr.f32.gmra.mxu0 %v4192
      %v4371 = vpop.f32.mrf.mxu0
      %v4372 = vadd.f32 0.0, %v4371
      %v4373 = vpop.f32.mrf.mxu0
      %4374 = vmatprep.mubr.f32.mxu0 0.0
      %4375 = vmatmul.mubr.f32.gmra.mxu0 %v4195
      %v4376 = vpop.f32.mrf.mxu0
      %v4377 = vadd.f32 0.0, %v4376
      %v4378 = vpop.f32.mrf.mxu0
      %4379 = vmatprep.mubr.f32.mxu0 0.0
      %4380 = vmatmul.mubr.f32.gmra.mxu0 %v4198
      %v4381 = vpop.f32.mrf.mxu0
      %v4382 = vadd.f32 0.0, %v4381
      %v4383 = vpop.f32.mrf.mxu0
      %4384 = vmatprep.mubr.f32.mxu0 0.0
      %4385 = vmatmul.mubr.f32.gmra.mxu0 %v4201
      %v4386 = vpop.f32.mrf.mxu0
      %v4387 = vadd.f32 0.0, %v4386
      %v4388 = vpop.f32.mrf.mxu0
      %4389 = vmatprep.mubr.f32.mxu0 0.0
      %4390 = vmatmul.mubr.f32.gmra.mxu0 %v4204
      %v4391 = vpop.f32.mrf.mxu0
      %v4392 = vadd.f32 0.0, %v4391
      %v4393 = vpop.f32.mrf.mxu0
      %4394 = vmatprep.mubr.f32.mxu0 0.0
      %4395 = vmatmul.mubr.f32.gmra.mxu0 %v4207
      %v4396 = vpop.f32.mrf.mxu0
      %v4397 = vadd.f32 0.0, %v4396
      %v4398 = vpop.f32.mrf.mxu0
      %4399 = vmatprep.mubr.f32.mxu0 0.0
      %4400 = vmatmul.mubr.f32.gmra.mxu0 %v4210
      %v4401 = vpop.f32.mrf.mxu0
      %v4402 = vadd.f32 0.0, %v4401
      %v4403 = vpop.f32.mrf.mxu0
      %4404 = vmatprep.mubr.f32.mxu0 0.0
      %4405 = vmatmul.mubr.f32.gmra.mxu0 %v4213
      %v4406 = vpop.f32.mrf.mxu0
      %v4407 = vadd.f32 0.0, %v4406
      %v4408 = vpop.f32.mrf.mxu0
      %4409 = vmatprep.mubr.f32.mxu0 0.0
      %4410 = vmatmul.mubr.f32.gmra.mxu0 %v4216
      %v4411 = vpop.f32.mrf.mxu0
      %v4412 = vadd.f32 0.0, %v4411
      %v4413 = vpop.f32.mrf.mxu0
      %4414 = vmatprep.mubr.f32.mxu0 0.0
      %4415 = vmatmul.mubr.f32.gmra.mxu0 %v4219
      %v4416 = vpop.f32.mrf.mxu0
      %v4417 = vadd.f32 0.0, %v4416
      %v4418 = vpop.f32.mrf.mxu0
      %4419 = vmatprep.mubr.f32.mxu0 0.0
      %4420 = vmatmul.mubr.f32.gmra.mxu0 %v4222
      %v4421 = vpop.f32.mrf.mxu0
      %v4422 = vadd.f32 0.0, %v4421
      %v4423 = vpop.f32.mrf.mxu0
      %4424 = vmatprep.mubr.f32.mxu0 0.0
      %4425 = vmatmul.mubr.f32.gmra.mxu0 %v4225
      %v4426 = vpop.f32.mrf.mxu0
      %v4427 = vadd.f32 0.0, %v4426
      %v4428 = vpop.f32.mrf.mxu0
      %4429 = vmatprep.mubr.f32.mxu0 0.0
      %4430 = vmatmul.mubr.f32.gmra.mxu0 %v4228
      %v4431 = vpop.f32.mrf.mxu0
      %v4432 = vadd.f32 0.0, %v4431
      %v4433 = vpop.f32.mrf.mxu0
      %4434 = vmatprep.mubr.f32.mxu0 0.0
      %4435 = vmatmul.mubr.f32.gmra.mxu0 %v4231
      %v4436 = vpop.f32.mrf.mxu0
      %v4437 = vadd.f32 0.0, %v4436
      %v4438 = vpop.f32.mrf.mxu0
      %4439 = vmatprep.mubr.f32.mxu0 0.0
      %4440 = vmatmul.mubr.f32.gmra.mxu0 %v4234
      %v4441 = vpop.f32.mrf.mxu0
      %v4442 = vadd.f32 0.0, %v4441
      %v4443 = vpop.f32.mrf.mxu0
      %4444 = vmatprep.mubr.f32.mxu0 0.0
      %4445 = vmatmul.mubr.f32.gmra.mxu0 %v4237
      %v4446 = vpop.f32.mrf.mxu0
      %v4447 = vadd.f32 0.0, %v4446
      %v4448 = vpop.f32.mrf.mxu0
      %4449 = vmatprep.mubr.f32.mxu0 0.0
      %4450 = vmatmul.mubr.f32.gmra.mxu0 %v4240
      %v4451 = vpop.f32.mrf.mxu0
      %v4452 = vadd.f32 0.0, %v4451
      %v4453 = vpop.f32.mrf.mxu0
      %4454 = vmatprep.mubr.f32.mxu0 0.0
      %4455 = vmatmul.mubr.f32.gmra.mxu0 %v4243
      %v4456 = vpop.f32.mrf.mxu0
      %v4457 = vadd.f32 0.0, %v4456
      %v4458 = vpop.f32.mrf.mxu0
      %4459 = vmatprep.mubr.f32.mxu0 0.0
      %4460 = vmatmul.mubr.f32.gmra.mxu0 %v4246
      %v4461 = vpop.f32.mrf.mxu0
      %v4462 = vadd.f32 0.0, %v4461
      %v4463 = vpop.f32.mrf.mxu0
      %4464 = vmatprep.mubr.f32.mxu0 0.0
      %4465 = vmatmul.mubr.f32.gmra.mxu0 %v4249
      %v4466 = vpop.f32.mrf.mxu0
      %v4467 = vadd.f32 0.0, %v4466
      %v4468 = vpop.f32.mrf.mxu0
      %4469 = vmatprep.mubr.f32.mxu0 0.0
      %4470 = vmatmul.mubr.f32.gmra.mxu0 %v4252
      %v4471 = vpop.f32.mrf.mxu0
      %v4472 = vadd.f32 0.0, %v4471
      %v4473 = vpop.f32.mrf.mxu0
      %4474 = vmatprep.mubr.f32.mxu0 0.0
      %4475 = vmatmul.mubr.f32.gmra.mxu0 %v4255
      %v4476 = vpop.f32.mrf.mxu0
      %v4477 = vadd.f32 0.0, %v4476
      %v4478 = vpop.f32.mrf.mxu0
      %4479 = vmatprep.mubr.f32.mxu0 0.0
      %4480 = vmatmul.mubr.f32.gmra.mxu0 %v4258
      %v4481 = vpop.f32.mrf.mxu0
      %v4482 = vadd.f32 0.0, %v4481
      %v4483 = vpop.f32.mrf.mxu0
      %4484 = vdwg.mxu0
      %v4486 = vsel %vm4019, %v4097, 0
      %v4489 = vsel %vm4019, %v4098, 0
      %v4492 = vsel %vm4019, %v4099, 0
      %v4495 = vsel %vm4019, %v4100, 0
      %v4498 = vsel %vm4019, %v4101, 0
      %v4501 = vsel %vm4019, %v4102, 0
      %v4504 = vsel %vm4019, %v4103, 0
      %v4507 = vsel %vm4019, %v4104, 0
      %v4510 = vsel %vm4019, %v4105, 0
      %v4513 = vsel %vm4019, %v4106, 0
      %v4516 = vsel %vm4019, %v4107, 0
      %v4519 = vsel %vm4019, %v4108, 0
      %v4522 = vsel %vm4019, %v4109, 0
      %v4525 = vsel %vm4019, %v4110, 0
      %v4528 = vsel %vm4019, %v4111, 0
      %v4531 = vsel %vm4019, %v4112, 0
      %v4534 = vsel %vm4019, %v4113, 0
      %v4537 = vsel %vm4019, %v4114, 0
      %v4540 = vsel %vm4019, %v4115, 0
      %v4543 = vsel %vm4019, %v4116, 0
      %v4546 = vsel %vm4019, %v4117, 0
      %v4549 = vsel %vm4019, %v4118, 0
      %v4552 = vsel %vm4019, %v4119, 0
      %v4555 = vsel %vm4019, %v4120, 0
      %v4558 = vsel %vm4019, %v4121, 0
      %v4561 = vsel %vm4019, %v4122, 0
      %v4564 = vsel %vm4019, %v4123, 0
      %v4567 = vsel %vm4019, %v4124, 0
      %v4570 = vsel %vm4019, %v4125, 0
      %v4573 = vsel %vm4019, %v4126, 0
      %v4576 = vsel %vm4019, %v4127, 0
      %v4579 = vsel %vm4019, %v4128, 0
      %4581 = vmatprep.subr.mxu0 0.0
      %4582 = vmatpush1.msra.mxu0 0.0
      %4583 = vmatprep.subr.mxu0 0.0
      %4584 = vmatpush1.msra.mxu0 0.0
      %4585 = vmatprep.subr.mxu0 0.0
      %4586 = vmatpush1.msra.mxu0 0.0
      %4587 = vmatprep.subr.mxu0 0.0
      %4588 = vmatpush1.msra.mxu0 0.0
      %4589 = vmatprep.subr.mxu0 0.0
      %4590 = vmatpush1.msra.mxu0 0.0
      %4591 = vmatprep.subr.mxu0 0.0
      %4592 = vmatpush1.msra.mxu0 0.0
      %4593 = vmatprep.subr.mxu0 0.0
      %4594 = vmatpush1.msra.mxu0 0.0
      %4595 = vmatprep.subr.mxu0 0.0
      %4596 = vmatpush1.msra.mxu0 0.0
      %4597 = vmatprep.subr.mxu0 0.0
      %4598 = vmatpush1.msra.mxu0 0.0
      %4599 = vmatprep.subr.mxu0 0.0
      %4600 = vmatpush1.msra.mxu0 0.0
      %4601 = vmatprep.subr.mxu0 0.0
      %4602 = vmatpush1.msra.mxu0 0.0
      %4603 = vmatprep.subr.mxu0 0.0
      %4604 = vmatpush1.msra.mxu0 0.0
      %4605 = vmatprep.subr.mxu0 0.0
      %4606 = vmatpush1.msra.mxu0 0.0
      %4607 = vmatprep.subr.mxu0 0.0
      %4608 = vmatpush1.msra.mxu0 0.0
      %4609 = vmatprep.subr.mxu0 0.0
      %4610 = vmatpush1.msra.mxu0 0.0
      %4611 = vmatprep.subr.mxu0 0.0
      %4612 = vmatpush1.msra.mxu0 %v4129
      %4613 = vmatprep.subr.mxu0 0.0
      %4614 = vmatpush2.msra.mxu0 0.0
      %4615 = vmatprep.subr.mxu0 0.0
      %4616 = vmatpush2.msra.mxu0 0.0
      %4617 = vmatprep.subr.mxu0 0.0
      %4618 = vmatpush2.msra.mxu0 0.0
      %4619 = vmatprep.subr.mxu0 0.0
      %4620 = vmatpush2.msra.mxu0 0.0
      %4621 = vmatprep.subr.mxu0 0.0
      %4622 = vmatpush2.msra.mxu0 0.0
      %4623 = vmatprep.subr.mxu0 0.0
      %4624 = vmatpush2.msra.mxu0 0.0
      %4625 = vmatprep.subr.mxu0 0.0
      %4626 = vmatpush2.msra.mxu0 0.0
      %4627 = vmatprep.subr.mxu0 0.0
      %4628 = vmatpush2.msra.mxu0 0.0
      %4629 = vmatprep.subr.mxu0 0.0
      %4630 = vmatpush2.msra.mxu0 0.0
      %4631 = vmatprep.subr.mxu0 0.0
      %4632 = vmatpush2.msra.mxu0 0.0
      %4633 = vmatprep.subr.mxu0 0.0
      %4634 = vmatpush2.msra.mxu0 0.0
      %4635 = vmatprep.subr.mxu0 0.0
      %4636 = vmatpush2.msra.mxu0 0.0
      %4637 = vmatprep.subr.mxu0 0.0
      %4638 = vmatpush2.msra.mxu0 0.0
      %4639 = vmatprep.subr.mxu0 0.0
      %4640 = vmatpush2.msra.mxu0 0.0
      %4641 = vmatprep.subr.mxu0 0.0
      %4642 = vmatpush2.msra.mxu0 0.0
      %4643 = vmatprep.subr.mxu0 0.0
      %4644 = vmatpush2.msra.mxu0 0.0
      %4645 = vmatprep.mubr.f32.mxu0 0.0
      %4646 = vmatmul.mubr.f32.gmra.mxu0 %v4486
      %v4647 = vpop.f32.mrf.mxu0
      %v4648 = vadd.f32 %v4327, %v4647
      %v4649 = vpop.f32.mrf.mxu0
      %4650 = vmatprep.mubr.f32.mxu0 0.0
      %4651 = vmatmul.mubr.f32.gmra.mxu0 %v4489
      %v4652 = vpop.f32.mrf.mxu0
      %v4653 = vadd.f32 %v4332, %v4652
      %v4654 = vpop.f32.mrf.mxu0
      %4655 = vmatprep.mubr.f32.mxu0 0.0
      %4656 = vmatmul.mubr.f32.gmra.mxu0 %v4492
      %v4657 = vpop.f32.mrf.mxu0
      %v4658 = vadd.f32 %v4337, %v4657
      %v4659 = vpop.f32.mrf.mxu0
      %4660 = vmatprep.mubr.f32.mxu0 0.0
      %4661 = vmatmul.mubr.f32.gmra.mxu0 %v4495
      %v4662 = vpop.f32.mrf.mxu0
      %v4663 = vadd.f32 %v4342, %v4662
      %v4664 = vpop.f32.mrf.mxu0
      %4665 = vmatprep.mubr.f32.mxu0 0.0
      %4666 = vmatmul.mubr.f32.gmra.mxu0 %v4498
      %v4667 = vpop.f32.mrf.mxu0
      %v4668 = vadd.f32 %v4347, %v4667
      %v4669 = vpop.f32.mrf.mxu0
      %4670 = vmatprep.mubr.f32.mxu0 0.0
      %4671 = vmatmul.mubr.f32.gmra.mxu0 %v4501
      %v4672 = vpop.f32.mrf.mxu0
      %v4673 = vadd.f32 %v4352, %v4672
      %v4674 = vpop.f32.mrf.mxu0
      %4675 = vmatprep.mubr.f32.mxu0 0.0
      %4676 = vmatmul.mubr.f32.gmra.mxu0 %v4504
      %v4677 = vpop.f32.mrf.mxu0
      %v4678 = vadd.f32 %v4357, %v4677
      %v4679 = vpop.f32.mrf.mxu0
      %4680 = vmatprep.mubr.f32.mxu0 0.0
      %4681 = vmatmul.mubr.f32.gmra.mxu0 %v4507
      %v4682 = vpop.f32.mrf.mxu0
      %v4683 = vadd.f32 %v4362, %v4682
      %v4684 = vpop.f32.mrf.mxu0
      %4685 = vmatprep.mubr.f32.mxu0 0.0
      %4686 = vmatmul.mubr.f32.gmra.mxu0 %v4510
      %v4687 = vpop.f32.mrf.mxu0
      %v4688 = vadd.f32 %v4367, %v4687
      %v4689 = vpop.f32.mrf.mxu0
      %4690 = vmatprep.mubr.f32.mxu0 0.0
      %4691 = vmatmul.mubr.f32.gmra.mxu0 %v4513
      %v4692 = vpop.f32.mrf.mxu0
      %v4693 = vadd.f32 %v4372, %v4692
      %v4694 = vpop.f32.mrf.mxu0
      %4695 = vmatprep.mubr.f32.mxu0 0.0
      %4696 = vmatmul.mubr.f32.gmra.mxu0 %v4516
      %v4697 = vpop.f32.mrf.mxu0
      %v4698 = vadd.f32 %v4377, %v4697
      %v4699 = vpop.f32.mrf.mxu0
      %4700 = vmatprep.mubr.f32.mxu0 0.0
      %4701 = vmatmul.mubr.f32.gmra.mxu0 %v4519
      %v4702 = vpop.f32.mrf.mxu0
      %v4703 = vadd.f32 %v4382, %v4702
      %v4704 = vpop.f32.mrf.mxu0
      %4705 = vmatprep.mubr.f32.mxu0 0.0
      %4706 = vmatmul.mubr.f32.gmra.mxu0 %v4522
      %v4707 = vpop.f32.mrf.mxu0
      %v4708 = vadd.f32 %v4387, %v4707
      %v4709 = vpop.f32.mrf.mxu0
      %4710 = vmatprep.mubr.f32.mxu0 0.0
      %4711 = vmatmul.mubr.f32.gmra.mxu0 %v4525
      %v4712 = vpop.f32.mrf.mxu0
      %v4713 = vadd.f32 %v4392, %v4712
      %v4714 = vpop.f32.mrf.mxu0
      %4715 = vmatprep.mubr.f32.mxu0 0.0
      %4716 = vmatmul.mubr.f32.gmra.mxu0 %v4528
      %v4717 = vpop.f32.mrf.mxu0
      %v4718 = vadd.f32 %v4397, %v4717
      %v4719 = vpop.f32.mrf.mxu0
      %4720 = vmatprep.mubr.f32.mxu0 0.0
      %4721 = vmatmul.mubr.f32.gmra.mxu0 %v4531
      %v4722 = vpop.f32.mrf.mxu0
      %v4723 = vadd.f32 %v4402, %v4722
      %v4724 = vpop.f32.mrf.mxu0
      %4725 = vmatprep.mubr.f32.mxu0 0.0
      %4726 = vmatmul.mubr.f32.gmra.mxu0 %v4534
      %v4727 = vpop.f32.mrf.mxu0
      %v4728 = vadd.f32 %v4407, %v4727
      %v4729 = vpop.f32.mrf.mxu0
      %4730 = vmatprep.mubr.f32.mxu0 0.0
      %4731 = vmatmul.mubr.f32.gmra.mxu0 %v4537
      %v4732 = vpop.f32.mrf.mxu0
      %v4733 = vadd.f32 %v4412, %v4732
      %v4734 = vpop.f32.mrf.mxu0
      %4735 = vmatprep.mubr.f32.mxu0 0.0
      %4736 = vmatmul.mubr.f32.gmra.mxu0 %v4540
      %v4737 = vpop.f32.mrf.mxu0
      %v4738 = vadd.f32 %v4417, %v4737
      %v4739 = vpop.f32.mrf.mxu0
      %4740 = vmatprep.mubr.f32.mxu0 0.0
      %4741 = vmatmul.mubr.f32.gmra.mxu0 %v4543
      %v4742 = vpop.f32.mrf.mxu0
      %v4743 = vadd.f32 %v4422, %v4742
      %v4744 = vpop.f32.mrf.mxu0
      %4745 = vmatprep.mubr.f32.mxu0 0.0
      %4746 = vmatmul.mubr.f32.gmra.mxu0 %v4546
      %v4747 = vpop.f32.mrf.mxu0
      %v4748 = vadd.f32 %v4427, %v4747
      %v4749 = vpop.f32.mrf.mxu0
      %4750 = vmatprep.mubr.f32.mxu0 0.0
      %4751 = vmatmul.mubr.f32.gmra.mxu0 %v4549
      %v4752 = vpop.f32.mrf.mxu0
      %v4753 = vadd.f32 %v4432, %v4752
      %v4754 = vpop.f32.mrf.mxu0
      %4755 = vmatprep.mubr.f32.mxu0 0.0
      %4756 = vmatmul.mubr.f32.gmra.mxu0 %v4552
      %v4757 = vpop.f32.mrf.mxu0
      %v4758 = vadd.f32 %v4437, %v4757
      %v4759 = vpop.f32.mrf.mxu0
      %4760 = vmatprep.mubr.f32.mxu0 0.0
      %4761 = vmatmul.mubr.f32.gmra.mxu0 %v4555
      %v4762 = vpop.f32.mrf.mxu0
      %v4763 = vadd.f32 %v4442, %v4762
      %v4764 = vpop.f32.mrf.mxu0
      %4765 = vmatprep.mubr.f32.mxu0 0.0
      %4766 = vmatmul.mubr.f32.gmra.mxu0 %v4558
      %v4767 = vpop.f32.mrf.mxu0
      %v4768 = vadd.f32 %v4447, %v4767
      %v4769 = vpop.f32.mrf.mxu0
      %4770 = vmatprep.mubr.f32.mxu0 0.0
      %4771 = vmatmul.mubr.f32.gmra.mxu0 %v4561
      %v4772 = vpop.f32.mrf.mxu0
      %v4773 = vadd.f32 %v4452, %v4772
      %v4774 = vpop.f32.mrf.mxu0
      %4775 = vmatprep.mubr.f32.mxu0 0.0
      %4776 = vmatmul.mubr.f32.gmra.mxu0 %v4564
      %v4777 = vpop.f32.mrf.mxu0
      %v4778 = vadd.f32 %v4457, %v4777
      %v4779 = vpop.f32.mrf.mxu0
      %4780 = vmatprep.mubr.f32.mxu0 0.0
      %4781 = vmatmul.mubr.f32.gmra.mxu0 %v4567
      %v4782 = vpop.f32.mrf.mxu0
      %v4783 = vadd.f32 %v4462, %v4782
      %v4784 = vpop.f32.mrf.mxu0
      %4785 = vmatprep.mubr.f32.mxu0 0.0
      %4786 = vmatmul.mubr.f32.gmra.mxu0 %v4570
      %v4787 = vpop.f32.mrf.mxu0
      %v4788 = vadd.f32 %v4467, %v4787
      %v4789 = vpop.f32.mrf.mxu0
      %4790 = vmatprep.mubr.f32.mxu0 0.0
      %4791 = vmatmul.mubr.f32.gmra.mxu0 %v4573
      %v4792 = vpop.f32.mrf.mxu0
      %v4793 = vadd.f32 %v4472, %v4792
      %v4794 = vpop.f32.mrf.mxu0
      %4795 = vmatprep.mubr.f32.mxu0 0.0
      %4796 = vmatmul.mubr.f32.gmra.mxu0 %v4576
      %v4797 = vpop.f32.mrf.mxu0
      %v4798 = vadd.f32 %v4477, %v4797
      %v4799 = vpop.f32.mrf.mxu0
      %4800 = vmatprep.mubr.f32.mxu0 0.0
      %4801 = vmatmul.mubr.f32.gmra.mxu0 %v4579
      %v4802 = vpop.f32.mrf.mxu0
      %v4803 = vadd.f32 %v4482, %v4802
      %v4804 = vpop.f32.mrf.mxu0
      %4805 = vdwg.mxu0
      %v4806 = vld [vmem:[#allocation3 + $0x2] sm:$0xff]
      %v4807 = vld [vmem:[#allocation3 + $0xa] sm:$0xff]
      %v4808 = vld [vmem:[#allocation3 + $0x1a] sm:$0xff]
      %v4809 = vld [vmem:[#allocation3 + $0x22] sm:$0xff]
      %v4810 = vld [vmem:[#allocation3 + $0x32] sm:$0xff]
      %v4811 = vld [vmem:[#allocation3 + $0x3a] sm:$0xff]
      %v4812 = vld [vmem:[#allocation3 + $0x4a] sm:$0xff]
      %v4813 = vld [vmem:[#allocation3 + $0x52] sm:$0xff]
      %v4814 = vld [vmem:[#allocation3 + $0x62] sm:$0xff]
      %v4815 = vld [vmem:[#allocation3 + $0x6a] sm:$0xff]
      %v4816 = vld [vmem:[#allocation3 + $0x7a] sm:$0xff]
      %v4817 = vld [vmem:[#allocation3 + $0x82] sm:$0xff]
      %v4818 = vld [vmem:[#allocation3 + $0x92] sm:$0xff]
      %v4819 = vld [vmem:[#allocation3 + $0x9a] sm:$0xff]
      %v4820 = vld [vmem:[#allocation3 + $0xaa] sm:$0xff]
      %v4821 = vld [vmem:[#allocation3 + $0xb2] sm:$0xff]
      %v4822 = vld [vmem:[#allocation3 + $0xc2] sm:$0xff]
      %v4823 = vld [vmem:[#allocation3 + $0xca] sm:$0xff]
      %v4824 = vld [vmem:[#allocation3 + $0xda] sm:$0xff]
      %v4825 = vld [vmem:[#allocation3 + $0xe2] sm:$0xff]
      %v4826 = vld [vmem:[#allocation3 + $0xf2] sm:$0xff]
      %v4827 = vld [vmem:[#allocation3 + $0xfa] sm:$0xff]
      %v4828 = vld [vmem:[#allocation3 + $0x10a] sm:$0xff]
      %v4829 = vld [vmem:[#allocation3 + $0x112] sm:$0xff]
      %v4830 = vld [vmem:[#allocation3 + $0x122] sm:$0xff]
      %v4831 = vld [vmem:[#allocation3 + $0x12a] sm:$0xff]
      %v4832 = vld [vmem:[#allocation3 + $0x13a] sm:$0xff]
      %v4833 = vld [vmem:[#allocation3 + $0x142] sm:$0xff]
      %v4834 = vld [vmem:[#allocation3 + $0x152] sm:$0xff]
      %v4835 = vld [vmem:[#allocation3 + $0x15a] sm:$0xff]
      %v4836 = vld [vmem:[#allocation3 + $0x16a] sm:$0xff]
      %v4837 = vld [vmem:[#allocation3 + $0x172] sm:$0xff]
      %s4838 = scalar_lea.vmem %s5, 16
      %v4839 = vld [vmem:[%s4838] sm:$0xff]
      %v4841 = vsel %vm4019, %v4806, 0
      %v4844 = vsel %vm4019, %v4807, 0
      %v4847 = vsel %vm4019, %v4808, 0
      %v4850 = vsel %vm4019, %v4809, 0
      %v4853 = vsel %vm4019, %v4810, 0
      %v4856 = vsel %vm4019, %v4811, 0
      %v4859 = vsel %vm4019, %v4812, 0
      %v4862 = vsel %vm4019, %v4813, 0
      %v4865 = vsel %vm4019, %v4814, 0
      %v4868 = vsel %vm4019, %v4815, 0
      %v4871 = vsel %vm4019, %v4816, 0
      %v4874 = vsel %vm4019, %v4817, 0
      %v4877 = vsel %vm4019, %v4818, 0
      %v4880 = vsel %vm4019, %v4819, 0
      %v4883 = vsel %vm4019, %v4820, 0
      %v4886 = vsel %vm4019, %v4821, 0
      %v4889 = vsel %vm4019, %v4822, 0
      %v4892 = vsel %vm4019, %v4823, 0
      %v4895 = vsel %vm4019, %v4824, 0
      %v4898 = vsel %vm4019, %v4825, 0
      %v4901 = vsel %vm4019, %v4826, 0
      %v4904 = vsel %vm4019, %v4827, 0
      %v4907 = vsel %vm4019, %v4828, 0
      %v4910 = vsel %vm4019, %v4829, 0
      %v4913 = vsel %vm4019, %v4830, 0
      %v4916 = vsel %vm4019, %v4831, 0
      %v4919 = vsel %vm4019, %v4832, 0
      %v4922 = vsel %vm4019, %v4833, 0
      %v4925 = vsel %vm4019, %v4834, 0
      %v4928 = vsel %vm4019, %v4835, 0
      %v4931 = vsel %vm4019, %v4836, 0
      %v4934 = vsel %vm4019, %v4837, 0
      %4936 = vmatprep.subr.mxu0 0.0
      %4937 = vmatpush1.msra.mxu0 0.0
      %4938 = vmatprep.subr.mxu0 0.0
      %4939 = vmatpush1.msra.mxu0 0.0
      %4940 = vmatprep.subr.mxu0 0.0
      %4941 = vmatpush1.msra.mxu0 0.0
      %4942 = vmatprep.subr.mxu0 0.0
      %4943 = vmatpush1.msra.mxu0 0.0
      %4944 = vmatprep.subr.mxu0 0.0
      %4945 = vmatpush1.msra.mxu0 0.0
      %4946 = vmatprep.subr.mxu0 0.0
      %4947 = vmatpush1.msra.mxu0 0.0
      %4948 = vmatprep.subr.mxu0 0.0
      %4949 = vmatpush1.msra.mxu0 0.0
      %4950 = vmatprep.subr.mxu0 0.0
      %4951 = vmatpush1.msra.mxu0 0.0
      %4952 = vmatprep.subr.mxu0 0.0
      %4953 = vmatpush1.msra.mxu0 0.0
      %4954 = vmatprep.subr.mxu0 0.0
      %4955 = vmatpush1.msra.mxu0 0.0
      %4956 = vmatprep.subr.mxu0 0.0
      %4957 = vmatpush1.msra.mxu0 0.0
      %4958 = vmatprep.subr.mxu0 0.0
      %4959 = vmatpush1.msra.mxu0 0.0
      %4960 = vmatprep.subr.mxu0 0.0
      %4961 = vmatpush1.msra.mxu0 0.0
      %4962 = vmatprep.subr.mxu0 0.0
      %4963 = vmatpush1.msra.mxu0 0.0
      %4964 = vmatprep.subr.mxu0 0.0
      %4965 = vmatpush1.msra.mxu0 0.0
      %4966 = vmatprep.subr.mxu0 0.0
      %4967 = vmatpush1.msra.mxu0 %v4839
      %4968 = vmatprep.subr.mxu0 0.0
      %4969 = vmatpush2.msra.mxu0 0.0
      %4970 = vmatprep.subr.mxu0 0.0
      %4971 = vmatpush2.msra.mxu0 0.0
      %4972 = vmatprep.subr.mxu0 0.0
      %4973 = vmatpush2.msra.mxu0 0.0
      %4974 = vmatprep.subr.mxu0 0.0
      %4975 = vmatpush2.msra.mxu0 0.0
      %4976 = vmatprep.subr.mxu0 0.0
      %4977 = vmatpush2.msra.mxu0 0.0
      %4978 = vmatprep.subr.mxu0 0.0
      %4979 = vmatpush2.msra.mxu0 0.0
      %4980 = vmatprep.subr.mxu0 0.0
      %4981 = vmatpush2.msra.mxu0 0.0
      %4982 = vmatprep.subr.mxu0 0.0
      %4983 = vmatpush2.msra.mxu0 0.0
      %4984 = vmatprep.subr.mxu0 0.0
      %4985 = vmatpush2.msra.mxu0 0.0
      %4986 = vmatprep.subr.mxu0 0.0
      %4987 = vmatpush2.msra.mxu0 0.0
      %4988 = vmatprep.subr.mxu0 0.0
      %4989 = vmatpush2.msra.mxu0 0.0
      %4990 = vmatprep.subr.mxu0 0.0
      %4991 = vmatpush2.msra.mxu0 0.0
      %4992 = vmatprep.subr.mxu0 0.0
      %4993 = vmatpush2.msra.mxu0 0.0
      %4994 = vmatprep.subr.mxu0 0.0
      %4995 = vmatpush2.msra.mxu0 0.0
      %4996 = vmatprep.subr.mxu0 0.0
      %4997 = vmatpush2.msra.mxu0 0.0
      %4998 = vmatprep.subr.mxu0 0.0
      %4999 = vmatpush2.msra.mxu0 0.0
      %5000 = vmatprep.mubr.f32.mxu0 0.0
      %5001 = vmatmul.mubr.f32.gmra.mxu0 %v4841
      %v5002 = vpop.f32.mrf.mxu0
      %v5003 = vadd.f32 0.0, %v5002
      %v5004 = vpop.f32.mrf.mxu0
      %5005 = vmatprep.mubr.f32.mxu0 0.0
      %5006 = vmatmul.mubr.f32.gmra.mxu0 %v4844
      %v5007 = vpop.f32.mrf.mxu0
      %v5008 = vadd.f32 0.0, %v5007
      %v5009 = vpop.f32.mrf.mxu0
      %5010 = vmatprep.mubr.f32.mxu0 0.0
      %5011 = vmatmul.mubr.f32.gmra.mxu0 %v4847
      %v5012 = vpop.f32.mrf.mxu0
      %v5013 = vadd.f32 0.0, %v5012
      %v5014 = vpop.f32.mrf.mxu0
      %5015 = vmatprep.mubr.f32.mxu0 0.0
      %5016 = vmatmul.mubr.f32.gmra.mxu0 %v4850
      %v5017 = vpop.f32.mrf.mxu0
      %v5018 = vadd.f32 0.0, %v5017
      %v5019 = vpop.f32.mrf.mxu0
      %5020 = vmatprep.mubr.f32.mxu0 0.0
      %5021 = vmatmul.mubr.f32.gmra.mxu0 %v4853
      %v5022 = vpop.f32.mrf.mxu0
      %v5023 = vadd.f32 0.0, %v5022
      %v5024 = vpop.f32.mrf.mxu0
      %5025 = vmatprep.mubr.f32.mxu0 0.0
      %5026 = vmatmul.mubr.f32.gmra.mxu0 %v4856
      %v5027 = vpop.f32.mrf.mxu0
      %v5028 = vadd.f32 0.0, %v5027
      %v5029 = vpop.f32.mrf.mxu0
      %5030 = vmatprep.mubr.f32.mxu0 0.0
      %5031 = vmatmul.mubr.f32.gmra.mxu0 %v4859
      %v5032 = vpop.f32.mrf.mxu0
      %v5033 = vadd.f32 0.0, %v5032
      %v5034 = vpop.f32.mrf.mxu0
      %5035 = vmatprep.mubr.f32.mxu0 0.0
      %5036 = vmatmul.mubr.f32.gmra.mxu0 %v4862
      %v5037 = vpop.f32.mrf.mxu0
      %v5038 = vadd.f32 0.0, %v5037
      %v5039 = vpop.f32.mrf.mxu0
      %5040 = vmatprep.mubr.f32.mxu0 0.0
      %5041 = vmatmul.mubr.f32.gmra.mxu0 %v4865
      %v5042 = vpop.f32.mrf.mxu0
      %v5043 = vadd.f32 0.0, %v5042
      %v5044 = vpop.f32.mrf.mxu0
      %5045 = vmatprep.mubr.f32.mxu0 0.0
      %5046 = vmatmul.mubr.f32.gmra.mxu0 %v4868
      %v5047 = vpop.f32.mrf.mxu0
      %v5048 = vadd.f32 0.0, %v5047
      %v5049 = vpop.f32.mrf.mxu0
      %5050 = vmatprep.mubr.f32.mxu0 0.0
      %5051 = vmatmul.mubr.f32.gmra.mxu0 %v4871
      %v5052 = vpop.f32.mrf.mxu0
      %v5053 = vadd.f32 0.0, %v5052
      %v5054 = vpop.f32.mrf.mxu0
      %5055 = vmatprep.mubr.f32.mxu0 0.0
      %5056 = vmatmul.mubr.f32.gmra.mxu0 %v4874
      %v5057 = vpop.f32.mrf.mxu0
      %v5058 = vadd.f32 0.0, %v5057
      %v5059 = vpop.f32.mrf.mxu0
      %5060 = vmatprep.mubr.f32.mxu0 0.0
      %5061 = vmatmul.mubr.f32.gmra.mxu0 %v4877
      %v5062 = vpop.f32.mrf.mxu0
      %v5063 = vadd.f32 0.0, %v5062
      %v5064 = vpop.f32.mrf.mxu0
      %5065 = vmatprep.mubr.f32.mxu0 0.0
      %5066 = vmatmul.mubr.f32.gmra.mxu0 %v4880
      %v5067 = vpop.f32.mrf.mxu0
      %v5068 = vadd.f32 0.0, %v5067
      %v5069 = vpop.f32.mrf.mxu0
      %5070 = vmatprep.mubr.f32.mxu0 0.0
      %5071 = vmatmul.mubr.f32.gmra.mxu0 %v4883
      %v5072 = vpop.f32.mrf.mxu0
      %v5073 = vadd.f32 0.0, %v5072
      %v5074 = vpop.f32.mrf.mxu0
      %5075 = vmatprep.mubr.f32.mxu0 0.0
      %5076 = vmatmul.mubr.f32.gmra.mxu0 %v4886
      %v5077 = vpop.f32.mrf.mxu0
      %v5078 = vadd.f32 0.0, %v5077
      %v5079 = vpop.f32.mrf.mxu0
      %5080 = vmatprep.mubr.f32.mxu0 0.0
      %5081 = vmatmul.mubr.f32.gmra.mxu0 %v4889
      %v5082 = vpop.f32.mrf.mxu0
      %v5083 = vadd.f32 0.0, %v5082
      %v5084 = vpop.f32.mrf.mxu0
      %5085 = vmatprep.mubr.f32.mxu0 0.0
      %5086 = vmatmul.mubr.f32.gmra.mxu0 %v4892
      %v5087 = vpop.f32.mrf.mxu0
      %v5088 = vadd.f32 0.0, %v5087
      %v5089 = vpop.f32.mrf.mxu0
      %5090 = vmatprep.mubr.f32.mxu0 0.0
      %5091 = vmatmul.mubr.f32.gmra.mxu0 %v4895
      %v5092 = vpop.f32.mrf.mxu0
      %v5093 = vadd.f32 0.0, %v5092
      %v5094 = vpop.f32.mrf.mxu0
      %5095 = vmatprep.mubr.f32.mxu0 0.0
      %5096 = vmatmul.mubr.f32.gmra.mxu0 %v4898
      %v5097 = vpop.f32.mrf.mxu0
      %v5098 = vadd.f32 0.0, %v5097
      %v5099 = vpop.f32.mrf.mxu0
      %5100 = vmatprep.mubr.f32.mxu0 0.0
      %5101 = vmatmul.mubr.f32.gmra.mxu0 %v4901
      %v5102 = vpop.f32.mrf.mxu0
      %v5103 = vadd.f32 0.0, %v5102
      %v5104 = vpop.f32.mrf.mxu0
      %5105 = vmatprep.mubr.f32.mxu0 0.0
      %5106 = vmatmul.mubr.f32.gmra.mxu0 %v4904
      %v5107 = vpop.f32.mrf.mxu0
      %v5108 = vadd.f32 0.0, %v5107
      %v5109 = vpop.f32.mrf.mxu0
      %5110 = vmatprep.mubr.f32.mxu0 0.0
      %5111 = vmatmul.mubr.f32.gmra.mxu0 %v4907
      %v5112 = vpop.f32.mrf.mxu0
      %v5113 = vadd.f32 0.0, %v5112
      %v5114 = vpop.f32.mrf.mxu0
      %5115 = vmatprep.mubr.f32.mxu0 0.0
      %5116 = vmatmul.mubr.f32.gmra.mxu0 %v4910
      %v5117 = vpop.f32.mrf.mxu0
      %v5118 = vadd.f32 0.0, %v5117
      %v5119 = vpop.f32.mrf.mxu0
      %5120 = vmatprep.mubr.f32.mxu0 0.0
      %5121 = vmatmul.mubr.f32.gmra.mxu0 %v4913
      %v5122 = vpop.f32.mrf.mxu0
      %v5123 = vadd.f32 0.0, %v5122
      %v5124 = vpop.f32.mrf.mxu0
      %5125 = vmatprep.mubr.f32.mxu0 0.0
      %5126 = vmatmul.mubr.f32.gmra.mxu0 %v4916
      %v5127 = vpop.f32.mrf.mxu0
      %v5128 = vadd.f32 0.0, %v5127
      %v5129 = vpop.f32.mrf.mxu0
      %5130 = vmatprep.mubr.f32.mxu0 0.0
      %5131 = vmatmul.mubr.f32.gmra.mxu0 %v4919
      %v5132 = vpop.f32.mrf.mxu0
      %v5133 = vadd.f32 0.0, %v5132
      %v5134 = vpop.f32.mrf.mxu0
      %5135 = vmatprep.mubr.f32.mxu0 0.0
      %5136 = vmatmul.mubr.f32.gmra.mxu0 %v4922
      %v5137 = vpop.f32.mrf.mxu0
      %v5138 = vadd.f32 0.0, %v5137
      %v5139 = vpop.f32.mrf.mxu0
      %5140 = vmatprep.mubr.f32.mxu0 0.0
      %5141 = vmatmul.mubr.f32.gmra.mxu0 %v4925
      %v5142 = vpop.f32.mrf.mxu0
      %v5143 = vadd.f32 0.0, %v5142
      %v5144 = vpop.f32.mrf.mxu0
      %5145 = vmatprep.mubr.f32.mxu0 0.0
      %5146 = vmatmul.mubr.f32.gmra.mxu0 %v4928
      %v5147 = vpop.f32.mrf.mxu0
      %v5148 = vadd.f32 0.0, %v5147
      %v5149 = vpop.f32.mrf.mxu0
      %5150 = vmatprep.mubr.f32.mxu0 0.0
      %5151 = vmatmul.mubr.f32.gmra.mxu0 %v4931
      %v5152 = vpop.f32.mrf.mxu0
      %v5153 = vadd.f32 0.0, %v5152
      %v5154 = vpop.f32.mrf.mxu0
      %5155 = vmatprep.mubr.f32.mxu0 0.0
      %5156 = vmatmul.mubr.f32.gmra.mxu0 %v4934
      %v5157 = vpop.f32.mrf.mxu0
      %v5158 = vadd.f32 0.0, %v5157
      %v5159 = vpop.f32.mrf.mxu0
      %5160 = vdwg.mxu0
      %v5161 = vadd.f32 %v4648, %v5003
      %v5162 = vadd.f32 %v4653, %v5008
      %v5163 = vadd.f32 %v4658, %v5013
      %v5164 = vadd.f32 %v4663, %v5018
      %v5165 = vadd.f32 %v4668, %v5023
      %v5166 = vadd.f32 %v4673, %v5028
      %v5167 = vadd.f32 %v4678, %v5033
      %v5168 = vadd.f32 %v4683, %v5038
      %v5169 = vadd.f32 %v4688, %v5043
      %v5170 = vadd.f32 %v4693, %v5048
      %v5171 = vadd.f32 %v4698, %v5053
      %v5172 = vadd.f32 %v4703, %v5058
      %v5173 = vadd.f32 %v4708, %v5063
      %v5174 = vadd.f32 %v4713, %v5068
      %v5175 = vadd.f32 %v4718, %v5073
      %v5176 = vadd.f32 %v4723, %v5078
      %v5177 = vadd.f32 %v4728, %v5083
      %v5178 = vadd.f32 %v4733, %v5088
      %v5179 = vadd.f32 %v4738, %v5093
      %v5180 = vadd.f32 %v4743, %v5098
      %v5181 = vadd.f32 %v4748, %v5103
      %v5182 = vadd.f32 %v4753, %v5108
      %v5183 = vadd.f32 %v4758, %v5113
      %v5184 = vadd.f32 %v4763, %v5118
      %v5185 = vadd.f32 %v4768, %v5123
      %v5186 = vadd.f32 %v4773, %v5128
      %v5187 = vadd.f32 %v4778, %v5133
      %v5188 = vadd.f32 %v4783, %v5138
      %v5189 = vadd.f32 %v4788, %v5143
      %v5190 = vadd.f32 %v4793, %v5148
      %v5191 = vadd.f32 %v4798, %v5153
      %v5192 = vadd.f32 %v4803, %v5158
      %v5193 = vld [vmem:[%s4018] sm:$0xff]
      %v5194 = vld [vmem:[%s4018 + $0x8] sm:$0xff]
      %v5195 = vld [vmem:[%s4018 + $0x18] sm:$0xff]
      %v5196 = vld [vmem:[%s4018 + $0x20] sm:$0xff]
      %v5197 = vld [vmem:[%s4018 + $0x30] sm:$0xff]
      %v5198 = vld [vmem:[%s4018 + $0x38] sm:$0xff]
      %v5199 = vld [vmem:[%s4018 + $0x48] sm:$0xff]
      %v5200 = vld [vmem:[%s4018 + $0x50] sm:$0xff]
      %v5201 = vld [vmem:[%s4018 + $0x60] sm:$0xff]
      %v5202 = vld [vmem:[%s4018 + $0x68] sm:$0xff]
      %v5203 = vld [vmem:[%s4018 + $0x78] sm:$0xff]
      %v5204 = vld [vmem:[%s4018 + $0x80] sm:$0xff]
      %v5205 = vld [vmem:[%s4018 + $0x90] sm:$0xff]
      %v5206 = vld [vmem:[%s4018 + $0x98] sm:$0xff]
      %v5207 = vld [vmem:[%s4018 + $0xa8] sm:$0xff]
      %v5208 = vld [vmem:[%s4018 + $0xb0] sm:$0xff]
      %v5209 = vld [vmem:[%s4018 + $0xc0] sm:$0xff]
      %v5210 = vld [vmem:[%s4018 + $0xc8] sm:$0xff]
      %v5211 = vld [vmem:[%s4018 + $0xd8] sm:$0xff]
      %v5212 = vld [vmem:[%s4018 + $0xe0] sm:$0xff]
      %v5213 = vld [vmem:[%s4018 + $0xf0] sm:$0xff]
      %v5214 = vld [vmem:[%s4018 + $0xf8] sm:$0xff]
      %v5215 = vld [vmem:[%s4018 + $0x108] sm:$0xff]
      %v5216 = vld [vmem:[%s4018 + $0x110] sm:$0xff]
      %v5217 = vld [vmem:[%s4018 + $0x120] sm:$0xff]
      %v5218 = vld [vmem:[%s4018 + $0x128] sm:$0xff]
      %v5219 = vld [vmem:[%s4018 + $0x138] sm:$0xff]
      %v5220 = vld [vmem:[%s4018 + $0x140] sm:$0xff]
      %v5221 = vld [vmem:[%s4018 + $0x150] sm:$0xff]
      %v5222 = vld [vmem:[%s4018 + $0x158] sm:$0xff]
      %v5223 = vld [vmem:[%s4018 + $0x168] sm:$0xff]
      %v5224 = vld [vmem:[%s4018 + $0x170] sm:$0xff]
      %s5225 = scalar_lea.vmem %s5, 24
      %v5226 = vld [vmem:[%s5225] sm:$0xff]
      %v5228 = vsel %vm4019, %v5193, 0
      %v5231 = vsel %vm4019, %v5194, 0
      %v5234 = vsel %vm4019, %v5195, 0
      %v5237 = vsel %vm4019, %v5196, 0
      %v5240 = vsel %vm4019, %v5197, 0
      %v5243 = vsel %vm4019, %v5198, 0
      %v5246 = vsel %vm4019, %v5199, 0
      %v5249 = vsel %vm4019, %v5200, 0
      %v5252 = vsel %vm4019, %v5201, 0
      %v5255 = vsel %vm4019, %v5202, 0
      %v5258 = vsel %vm4019, %v5203, 0
      %v5261 = vsel %vm4019, %v5204, 0
      %v5264 = vsel %vm4019, %v5205, 0
      %v5267 = vsel %vm4019, %v5206, 0
      %v5270 = vsel %vm4019, %v5207, 0
      %v5273 = vsel %vm4019, %v5208, 0
      %v5276 = vsel %vm4019, %v5209, 0
      %v5279 = vsel %vm4019, %v5210, 0
      %v5282 = vsel %vm4019, %v5211, 0
      %v5285 = vsel %vm4019, %v5212, 0
      %v5288 = vsel %vm4019, %v5213, 0
      %v5291 = vsel %vm4019, %v5214, 0
      %v5294 = vsel %vm4019, %v5215, 0
      %v5297 = vsel %vm4019, %v5216, 0
      %v5300 = vsel %vm4019, %v5217, 0
      %v5303 = vsel %vm4019, %v5218, 0
      %v5306 = vsel %vm4019, %v5219, 0
      %v5309 = vsel %vm4019, %v5220, 0
      %v5312 = vsel %vm4019, %v5221, 0
      %v5315 = vsel %vm4019, %v5222, 0
      %v5318 = vsel %vm4019, %v5223, 0
      %v5321 = vsel %vm4019, %v5224, 0
      %5323 = vmatprep.subr.mxu0 0.0
      %5324 = vmatpush1.msra.mxu0 0.0
      %5325 = vmatprep.subr.mxu0 0.0
      %5326 = vmatpush1.msra.mxu0 0.0
      %5327 = vmatprep.subr.mxu0 0.0
      %5328 = vmatpush1.msra.mxu0 0.0
      %5329 = vmatprep.subr.mxu0 0.0
      %5330 = vmatpush1.msra.mxu0 0.0
      %5331 = vmatprep.subr.mxu0 0.0
      %5332 = vmatpush1.msra.mxu0 0.0
      %5333 = vmatprep.subr.mxu0 0.0
      %5334 = vmatpush1.msra.mxu0 0.0
      %5335 = vmatprep.subr.mxu0 0.0
      %5336 = vmatpush1.msra.mxu0 0.0
      %5337 = vmatprep.subr.mxu0 0.0
      %5338 = vmatpush1.msra.mxu0 0.0
      %5339 = vmatprep.subr.mxu0 0.0
      %5340 = vmatpush1.msra.mxu0 0.0
      %5341 = vmatprep.subr.mxu0 0.0
      %5342 = vmatpush1.msra.mxu0 0.0
      %5343 = vmatprep.subr.mxu0 0.0
      %5344 = vmatpush1.msra.mxu0 0.0
      %5345 = vmatprep.subr.mxu0 0.0
      %5346 = vmatpush1.msra.mxu0 0.0
      %5347 = vmatprep.subr.mxu0 0.0
      %5348 = vmatpush1.msra.mxu0 0.0
      %5349 = vmatprep.subr.mxu0 0.0
      %5350 = vmatpush1.msra.mxu0 0.0
      %5351 = vmatprep.subr.mxu0 0.0
      %5352 = vmatpush1.msra.mxu0 0.0
      %5353 = vmatprep.subr.mxu0 0.0
      %5354 = vmatpush1.msra.mxu0 %v5226
      %5355 = vmatprep.subr.mxu0 0.0
      %5356 = vmatpush2.msra.mxu0 0.0
      %5357 = vmatprep.subr.mxu0 0.0
      %5358 = vmatpush2.msra.mxu0 0.0
      %5359 = vmatprep.subr.mxu0 0.0
      %5360 = vmatpush2.msra.mxu0 0.0
      %5361 = vmatprep.subr.mxu0 0.0
      %5362 = vmatpush2.msra.mxu0 0.0
      %5363 = vmatprep.subr.mxu0 0.0
      %5364 = vmatpush2.msra.mxu0 0.0
      %5365 = vmatprep.subr.mxu0 0.0
      %5366 = vmatpush2.msra.mxu0 0.0
      %5367 = vmatprep.subr.mxu0 0.0
      %5368 = vmatpush2.msra.mxu0 0.0
      %5369 = vmatprep.subr.mxu0 0.0
      %5370 = vmatpush2.msra.mxu0 0.0
      %5371 = vmatprep.subr.mxu0 0.0
      %5372 = vmatpush2.msra.mxu0 0.0
      %5373 = vmatprep.subr.mxu0 0.0
      %5374 = vmatpush2.msra.mxu0 0.0
      %5375 = vmatprep.subr.mxu0 0.0
      %5376 = vmatpush2.msra.mxu0 0.0
      %5377 = vmatprep.subr.mxu0 0.0
      %5378 = vmatpush2.msra.mxu0 0.0
      %5379 = vmatprep.subr.mxu0 0.0
      %5380 = vmatpush2.msra.mxu0 0.0
      %5381 = vmatprep.subr.mxu0 0.0
      %5382 = vmatpush2.msra.mxu0 0.0
      %5383 = vmatprep.subr.mxu0 0.0
      %5384 = vmatpush2.msra.mxu0 0.0
      %5385 = vmatprep.subr.mxu0 0.0
      %5386 = vmatpush2.msra.mxu0 0.0
      %5387 = vmatprep.mubr.f32.mxu0 0.0
      %5388 = vmatmul.mubr.f32.gmra.mxu0 %v5228
      %v5389 = vpop.f32.mrf.mxu0
      %v5390 = vadd.f32 0.0, %v5389
      %v5391 = vpop.f32.mrf.mxu0
      %5392 = vmatprep.mubr.f32.mxu0 0.0
      %5393 = vmatmul.mubr.f32.gmra.mxu0 %v5231
      %v5394 = vpop.f32.mrf.mxu0
      %v5395 = vadd.f32 0.0, %v5394
      %v5396 = vpop.f32.mrf.mxu0
      %5397 = vmatprep.mubr.f32.mxu0 0.0
      %5398 = vmatmul.mubr.f32.gmra.mxu0 %v5234
      %v5399 = vpop.f32.mrf.mxu0
      %v5400 = vadd.f32 0.0, %v5399
      %v5401 = vpop.f32.mrf.mxu0
      %5402 = vmatprep.mubr.f32.mxu0 0.0
      %5403 = vmatmul.mubr.f32.gmra.mxu0 %v5237
      %v5404 = vpop.f32.mrf.mxu0
      %v5405 = vadd.f32 0.0, %v5404
      %v5406 = vpop.f32.mrf.mxu0
      %5407 = vmatprep.mubr.f32.mxu0 0.0
      %5408 = vmatmul.mubr.f32.gmra.mxu0 %v5240
      %v5409 = vpop.f32.mrf.mxu0
      %v5410 = vadd.f32 0.0, %v5409
      %v5411 = vpop.f32.mrf.mxu0
      %5412 = vmatprep.mubr.f32.mxu0 0.0
      %5413 = vmatmul.mubr.f32.gmra.mxu0 %v5243
      %v5414 = vpop.f32.mrf.mxu0
      %v5415 = vadd.f32 0.0, %v5414
      %v5416 = vpop.f32.mrf.mxu0
      %5417 = vmatprep.mubr.f32.mxu0 0.0
      %5418 = vmatmul.mubr.f32.gmra.mxu0 %v5246
      %v5419 = vpop.f32.mrf.mxu0
      %v5420 = vadd.f32 0.0, %v5419
      %v5421 = vpop.f32.mrf.mxu0
      %5422 = vmatprep.mubr.f32.mxu0 0.0
      %5423 = vmatmul.mubr.f32.gmra.mxu0 %v5249
      %v5424 = vpop.f32.mrf.mxu0
      %v5425 = vadd.f32 0.0, %v5424
      %v5426 = vpop.f32.mrf.mxu0
      %5427 = vmatprep.mubr.f32.mxu0 0.0
      %5428 = vmatmul.mubr.f32.gmra.mxu0 %v5252
      %v5429 = vpop.f32.mrf.mxu0
      %v5430 = vadd.f32 0.0, %v5429
      %v5431 = vpop.f32.mrf.mxu0
      %5432 = vmatprep.mubr.f32.mxu0 0.0
      %5433 = vmatmul.mubr.f32.gmra.mxu0 %v5255
      %v5434 = vpop.f32.mrf.mxu0
      %v5435 = vadd.f32 0.0, %v5434
      %v5436 = vpop.f32.mrf.mxu0
      %5437 = vmatprep.mubr.f32.mxu0 0.0
      %5438 = vmatmul.mubr.f32.gmra.mxu0 %v5258
      %v5439 = vpop.f32.mrf.mxu0
      %v5440 = vadd.f32 0.0, %v5439
      %v5441 = vpop.f32.mrf.mxu0
      %5442 = vmatprep.mubr.f32.mxu0 0.0
      %5443 = vmatmul.mubr.f32.gmra.mxu0 %v5261
      %v5444 = vpop.f32.mrf.mxu0
      %v5445 = vadd.f32 0.0, %v5444
      %v5446 = vpop.f32.mrf.mxu0
      %5447 = vmatprep.mubr.f32.mxu0 0.0
      %5448 = vmatmul.mubr.f32.gmra.mxu0 %v5264
      %v5449 = vpop.f32.mrf.mxu0
      %v5450 = vadd.f32 0.0, %v5449
      %v5451 = vpop.f32.mrf.mxu0
      %5452 = vmatprep.mubr.f32.mxu0 0.0
      %5453 = vmatmul.mubr.f32.gmra.mxu0 %v5267
      %v5454 = vpop.f32.mrf.mxu0
      %v5455 = vadd.f32 0.0, %v5454
      %v5456 = vpop.f32.mrf.mxu0
      %5457 = vmatprep.mubr.f32.mxu0 0.0
      %5458 = vmatmul.mubr.f32.gmra.mxu0 %v5270
      %v5459 = vpop.f32.mrf.mxu0
      %v5460 = vadd.f32 0.0, %v5459
      %v5461 = vpop.f32.mrf.mxu0
      %5462 = vmatprep.mubr.f32.mxu0 0.0
      %5463 = vmatmul.mubr.f32.gmra.mxu0 %v5273
      %v5464 = vpop.f32.mrf.mxu0
      %v5465 = vadd.f32 0.0, %v5464
      %v5466 = vpop.f32.mrf.mxu0
      %5467 = vmatprep.mubr.f32.mxu0 0.0
      %5468 = vmatmul.mubr.f32.gmra.mxu0 %v5276
      %v5469 = vpop.f32.mrf.mxu0
      %v5470 = vadd.f32 0.0, %v5469
      %v5471 = vpop.f32.mrf.mxu0
      %5472 = vmatprep.mubr.f32.mxu0 0.0
      %5473 = vmatmul.mubr.f32.gmra.mxu0 %v5279
      %v5474 = vpop.f32.mrf.mxu0
      %v5475 = vadd.f32 0.0, %v5474
      %v5476 = vpop.f32.mrf.mxu0
      %5477 = vmatprep.mubr.f32.mxu0 0.0
      %5478 = vmatmul.mubr.f32.gmra.mxu0 %v5282
      %v5479 = vpop.f32.mrf.mxu0
      %v5480 = vadd.f32 0.0, %v5479
      %v5481 = vpop.f32.mrf.mxu0
      %5482 = vmatprep.mubr.f32.mxu0 0.0
      %5483 = vmatmul.mubr.f32.gmra.mxu0 %v5285
      %v5484 = vpop.f32.mrf.mxu0
      %v5485 = vadd.f32 0.0, %v5484
      %v5486 = vpop.f32.mrf.mxu0
      %5487 = vmatprep.mubr.f32.mxu0 0.0
      %5488 = vmatmul.mubr.f32.gmra.mxu0 %v5288
      %v5489 = vpop.f32.mrf.mxu0
      %v5490 = vadd.f32 0.0, %v5489
      %v5491 = vpop.f32.mrf.mxu0
      %5492 = vmatprep.mubr.f32.mxu0 0.0
      %5493 = vmatmul.mubr.f32.gmra.mxu0 %v5291
      %v5494 = vpop.f32.mrf.mxu0
      %v5495 = vadd.f32 0.0, %v5494
      %v5496 = vpop.f32.mrf.mxu0
      %5497 = vmatprep.mubr.f32.mxu0 0.0
      %5498 = vmatmul.mubr.f32.gmra.mxu0 %v5294
      %v5499 = vpop.f32.mrf.mxu0
      %v5500 = vadd.f32 0.0, %v5499
      %v5501 = vpop.f32.mrf.mxu0
      %5502 = vmatprep.mubr.f32.mxu0 0.0
      %5503 = vmatmul.mubr.f32.gmra.mxu0 %v5297
      %v5504 = vpop.f32.mrf.mxu0
      %v5505 = vadd.f32 0.0, %v5504
      %v5506 = vpop.f32.mrf.mxu0
      %5507 = vmatprep.mubr.f32.mxu0 0.0
      %5508 = vmatmul.mubr.f32.gmra.mxu0 %v5300
      %v5509 = vpop.f32.mrf.mxu0
      %v5510 = vadd.f32 0.0, %v5509
      %v5511 = vpop.f32.mrf.mxu0
      %5512 = vmatprep.mubr.f32.mxu0 0.0
      %5513 = vmatmul.mubr.f32.gmra.mxu0 %v5303
      %v5514 = vpop.f32.mrf.mxu0
      %v5515 = vadd.f32 0.0, %v5514
      %v5516 = vpop.f32.mrf.mxu0
      %5517 = vmatprep.mubr.f32.mxu0 0.0
      %5518 = vmatmul.mubr.f32.gmra.mxu0 %v5306
      %v5519 = vpop.f32.mrf.mxu0
      %v5520 = vadd.f32 0.0, %v5519
      %v5521 = vpop.f32.mrf.mxu0
      %5522 = vmatprep.mubr.f32.mxu0 0.0
      %5523 = vmatmul.mubr.f32.gmra.mxu0 %v5309
      %v5524 = vpop.f32.mrf.mxu0
      %v5525 = vadd.f32 0.0, %v5524
      %v5526 = vpop.f32.mrf.mxu0
      %5527 = vmatprep.mubr.f32.mxu0 0.0
      %5528 = vmatmul.mubr.f32.gmra.mxu0 %v5312
      %v5529 = vpop.f32.mrf.mxu0
      %v5530 = vadd.f32 0.0, %v5529
      %v5531 = vpop.f32.mrf.mxu0
      %5532 = vmatprep.mubr.f32.mxu0 0.0
      %5533 = vmatmul.mubr.f32.gmra.mxu0 %v5315
      %v5534 = vpop.f32.mrf.mxu0
      %v5535 = vadd.f32 0.0, %v5534
      %v5536 = vpop.f32.mrf.mxu0
      %5537 = vmatprep.mubr.f32.mxu0 0.0
      %5538 = vmatmul.mubr.f32.gmra.mxu0 %v5318
      %v5539 = vpop.f32.mrf.mxu0
      %v5540 = vadd.f32 0.0, %v5539
      %v5541 = vpop.f32.mrf.mxu0
      %5542 = vmatprep.mubr.f32.mxu0 0.0
      %5543 = vmatmul.mubr.f32.gmra.mxu0 %v5321
      %v5544 = vpop.f32.mrf.mxu0
      %v5545 = vadd.f32 0.0, %v5544
      %v5546 = vpop.f32.mrf.mxu0
      %5547 = vdwg.mxu0
      %v5548 = vadd.f32 %v5161, %v5390
      %v5549 = vadd.f32 %v5162, %v5395
      %v5550 = vadd.f32 %v5163, %v5400
      %v5551 = vadd.f32 %v5164, %v5405
      %v5552 = vadd.f32 %v5165, %v5410
      %v5553 = vadd.f32 %v5166, %v5415
      %v5554 = vadd.f32 %v5167, %v5420
      %v5555 = vadd.f32 %v5168, %v5425
      %v5556 = vadd.f32 %v5169, %v5430
      %v5557 = vadd.f32 %v5170, %v5435
      %v5558 = vadd.f32 %v5171, %v5440
      %v5559 = vadd.f32 %v5172, %v5445
      %v5560 = vadd.f32 %v5173, %v5450
      %v5561 = vadd.f32 %v5174, %v5455
      %v5562 = vadd.f32 %v5175, %v5460
      %v5563 = vadd.f32 %v5176, %v5465
      %v5564 = vadd.f32 %v5177, %v5470
      %v5565 = vadd.f32 %v5178, %v5475
      %v5566 = vadd.f32 %v5179, %v5480
      %v5567 = vadd.f32 %v5180, %v5485
      %v5568 = vadd.f32 %v5181, %v5490
      %v5569 = vadd.f32 %v5182, %v5495
      %v5570 = vadd.f32 %v5183, %v5500
      %v5571 = vadd.f32 %v5184, %v5505
      %v5572 = vadd.f32 %v5185, %v5510
      %v5573 = vadd.f32 %v5186, %v5515
      %v5574 = vadd.f32 %v5187, %v5520
      %v5575 = vadd.f32 %v5188, %v5525
      %v5576 = vadd.f32 %v5189, %v5530
      %v5577 = vadd.f32 %v5190, %v5535
      %v5578 = vadd.f32 %v5191, %v5540
      %v5579 = vadd.f32 %v5192, %v5545
      %v5580 = vld [vmem:[%s4018 + $0x1] sm:$0xff]
      %v5581 = vld [vmem:[%s4018 + $0x9] sm:$0xff]
      %v5582 = vld [vmem:[%s4018 + $0x19] sm:$0xff]
      %v5583 = vld [vmem:[%s4018 + $0x21] sm:$0xff]
      %v5584 = vld [vmem:[%s4018 + $0x31] sm:$0xff]
      %v5585 = vld [vmem:[%s4018 + $0x39] sm:$0xff]
      %v5586 = vld [vmem:[%s4018 + $0x49] sm:$0xff]
      %v5587 = vld [vmem:[%s4018 + $0x51] sm:$0xff]
      %v5588 = vld [vmem:[%s4018 + $0x61] sm:$0xff]
      %v5589 = vld [vmem:[%s4018 + $0x69] sm:$0xff]
      %v5590 = vld [vmem:[%s4018 + $0x79] sm:$0xff]
      %v5591 = vld [vmem:[%s4018 + $0x81] sm:$0xff]
      %v5592 = vld [vmem:[%s4018 + $0x91] sm:$0xff]
      %v5593 = vld [vmem:[%s4018 + $0x99] sm:$0xff]
      %v5594 = vld [vmem:[%s4018 + $0xa9] sm:$0xff]
      %v5595 = vld [vmem:[%s4018 + $0xb1] sm:$0xff]
      %v5596 = vld [vmem:[%s4018 + $0xc1] sm:$0xff]
      %v5597 = vld [vmem:[%s4018 + $0xc9] sm:$0xff]
      %v5598 = vld [vmem:[%s4018 + $0xd9] sm:$0xff]
      %v5599 = vld [vmem:[%s4018 + $0xe1] sm:$0xff]
      %v5600 = vld [vmem:[%s4018 + $0xf1] sm:$0xff]
      %v5601 = vld [vmem:[%s4018 + $0xf9] sm:$0xff]
      %v5602 = vld [vmem:[%s4018 + $0x109] sm:$0xff]
      %v5603 = vld [vmem:[%s4018 + $0x111] sm:$0xff]
      %v5604 = vld [vmem:[%s4018 + $0x121] sm:$0xff]
      %v5605 = vld [vmem:[%s4018 + $0x129] sm:$0xff]
      %v5606 = vld [vmem:[%s4018 + $0x139] sm:$0xff]
      %v5607 = vld [vmem:[%s4018 + $0x141] sm:$0xff]
      %v5608 = vld [vmem:[%s4018 + $0x151] sm:$0xff]
      %v5609 = vld [vmem:[%s4018 + $0x159] sm:$0xff]
      %v5610 = vld [vmem:[%s4018 + $0x169] sm:$0xff]
      %v5611 = vld [vmem:[%s4018 + $0x171] sm:$0xff]
      %s5612 = scalar_lea.vmem %s5, 32
      %v5613 = vld [vmem:[%s5612] sm:$0xff]
      %v5615 = vsel %vm4019, %v5580, 0
      %v5618 = vsel %vm4019, %v5581, 0
      %v5621 = vsel %vm4019, %v5582, 0
      %v5624 = vsel %vm4019, %v5583, 0
      %v5627 = vsel %vm4019, %v5584, 0
      %v5630 = vsel %vm4019, %v5585, 0
      %v5633 = vsel %vm4019, %v5586, 0
      %v5636 = vsel %vm4019, %v5587, 0
      %v5639 = vsel %vm4019, %v5588, 0
      %v5642 = vsel %vm4019, %v5589, 0
      %v5645 = vsel %vm4019, %v5590, 0
      %v5648 = vsel %vm4019, %v5591, 0
      %v5651 = vsel %vm4019, %v5592, 0
      %v5654 = vsel %vm4019, %v5593, 0
      %v5657 = vsel %vm4019, %v5594, 0
      %v5660 = vsel %vm4019, %v5595, 0
      %v5663 = vsel %vm4019, %v5596, 0
      %v5666 = vsel %vm4019, %v5597, 0
      %v5669 = vsel %vm4019, %v5598, 0
      %v5672 = vsel %vm4019, %v5599, 0
      %v5675 = vsel %vm4019, %v5600, 0
      %v5678 = vsel %vm4019, %v5601, 0
      %v5681 = vsel %vm4019, %v5602, 0
      %v5684 = vsel %vm4019, %v5603, 0
      %v5687 = vsel %vm4019, %v5604, 0
      %v5690 = vsel %vm4019, %v5605, 0
      %v5693 = vsel %vm4019, %v5606, 0
      %v5696 = vsel %vm4019, %v5607, 0
      %v5699 = vsel %vm4019, %v5608, 0
      %v5702 = vsel %vm4019, %v5609, 0
      %v5705 = vsel %vm4019, %v5610, 0
      %v5708 = vsel %vm4019, %v5611, 0
      %5710 = vmatprep.subr.mxu0 0.0
      %5711 = vmatpush1.msra.mxu0 0.0
      %5712 = vmatprep.subr.mxu0 0.0
      %5713 = vmatpush1.msra.mxu0 0.0
      %5714 = vmatprep.subr.mxu0 0.0
      %5715 = vmatpush1.msra.mxu0 0.0
      %5716 = vmatprep.subr.mxu0 0.0
      %5717 = vmatpush1.msra.mxu0 0.0
      %5718 = vmatprep.subr.mxu0 0.0
      %5719 = vmatpush1.msra.mxu0 0.0
      %5720 = vmatprep.subr.mxu0 0.0
      %5721 = vmatpush1.msra.mxu0 0.0
      %5722 = vmatprep.subr.mxu0 0.0
      %5723 = vmatpush1.msra.mxu0 0.0
      %5724 = vmatprep.subr.mxu0 0.0
      %5725 = vmatpush1.msra.mxu0 0.0
      %5726 = vmatprep.subr.mxu0 0.0
      %5727 = vmatpush1.msra.mxu0 0.0
      %5728 = vmatprep.subr.mxu0 0.0
      %5729 = vmatpush1.msra.mxu0 0.0
      %5730 = vmatprep.subr.mxu0 0.0
      %5731 = vmatpush1.msra.mxu0 0.0
      %5732 = vmatprep.subr.mxu0 0.0
      %5733 = vmatpush1.msra.mxu0 0.0
      %5734 = vmatprep.subr.mxu0 0.0
      %5735 = vmatpush1.msra.mxu0 0.0
      %5736 = vmatprep.subr.mxu0 0.0
      %5737 = vmatpush1.msra.mxu0 0.0
      %5738 = vmatprep.subr.mxu0 0.0
      %5739 = vmatpush1.msra.mxu0 0.0
      %5740 = vmatprep.subr.mxu0 0.0
      %5741 = vmatpush1.msra.mxu0 %v5613
      %5742 = vmatprep.subr.mxu0 0.0
      %5743 = vmatpush2.msra.mxu0 0.0
      %5744 = vmatprep.subr.mxu0 0.0
      %5745 = vmatpush2.msra.mxu0 0.0
      %5746 = vmatprep.subr.mxu0 0.0
      %5747 = vmatpush2.msra.mxu0 0.0
      %5748 = vmatprep.subr.mxu0 0.0
      %5749 = vmatpush2.msra.mxu0 0.0
      %5750 = vmatprep.subr.mxu0 0.0
      %5751 = vmatpush2.msra.mxu0 0.0
      %5752 = vmatprep.subr.mxu0 0.0
      %5753 = vmatpush2.msra.mxu0 0.0
      %5754 = vmatprep.subr.mxu0 0.0
      %5755 = vmatpush2.msra.mxu0 0.0
      %5756 = vmatprep.subr.mxu0 0.0
      %5757 = vmatpush2.msra.mxu0 0.0
      %5758 = vmatprep.subr.mxu0 0.0
      %5759 = vmatpush2.msra.mxu0 0.0
      %5760 = vmatprep.subr.mxu0 0.0
      %5761 = vmatpush2.msra.mxu0 0.0
      %5762 = vmatprep.subr.mxu0 0.0
      %5763 = vmatpush2.msra.mxu0 0.0
      %5764 = vmatprep.subr.mxu0 0.0
      %5765 = vmatpush2.msra.mxu0 0.0
      %5766 = vmatprep.subr.mxu0 0.0
      %5767 = vmatpush2.msra.mxu0 0.0
      %5768 = vmatprep.subr.mxu0 0.0
      %5769 = vmatpush2.msra.mxu0 0.0
      %5770 = vmatprep.subr.mxu0 0.0
      %5771 = vmatpush2.msra.mxu0 0.0
      %5772 = vmatprep.subr.mxu0 0.0
      %5773 = vmatpush2.msra.mxu0 0.0
      %5774 = vmatprep.mubr.f32.mxu0 0.0
      %5775 = vmatmul.mubr.f32.gmra.mxu0 %v5615
      %v5776 = vpop.f32.mrf.mxu0
      %v5777 = vadd.f32 0.0, %v5776
      %v5778 = vpop.f32.mrf.mxu0
      %5779 = vmatprep.mubr.f32.mxu0 0.0
      %5780 = vmatmul.mubr.f32.gmra.mxu0 %v5618
      %v5781 = vpop.f32.mrf.mxu0
      %v5782 = vadd.f32 0.0, %v5781
      %v5783 = vpop.f32.mrf.mxu0
      %5784 = vmatprep.mubr.f32.mxu0 0.0
      %5785 = vmatmul.mubr.f32.gmra.mxu0 %v5621
      %v5786 = vpop.f32.mrf.mxu0
      %v5787 = vadd.f32 0.0, %v5786
      %v5788 = vpop.f32.mrf.mxu0
      %5789 = vmatprep.mubr.f32.mxu0 0.0
      %5790 = vmatmul.mubr.f32.gmra.mxu0 %v5624
      %v5791 = vpop.f32.mrf.mxu0
      %v5792 = vadd.f32 0.0, %v5791
      %v5793 = vpop.f32.mrf.mxu0
      %5794 = vmatprep.mubr.f32.mxu0 0.0
      %5795 = vmatmul.mubr.f32.gmra.mxu0 %v5627
      %v5796 = vpop.f32.mrf.mxu0
      %v5797 = vadd.f32 0.0, %v5796
      %v5798 = vpop.f32.mrf.mxu0
      %5799 = vmatprep.mubr.f32.mxu0 0.0
      %5800 = vmatmul.mubr.f32.gmra.mxu0 %v5630
      %v5801 = vpop.f32.mrf.mxu0
      %v5802 = vadd.f32 0.0, %v5801
      %v5803 = vpop.f32.mrf.mxu0
      %5804 = vmatprep.mubr.f32.mxu0 0.0
      %5805 = vmatmul.mubr.f32.gmra.mxu0 %v5633
      %v5806 = vpop.f32.mrf.mxu0
      %v5807 = vadd.f32 0.0, %v5806
      %v5808 = vpop.f32.mrf.mxu0
      %5809 = vmatprep.mubr.f32.mxu0 0.0
      %5810 = vmatmul.mubr.f32.gmra.mxu0 %v5636
      %v5811 = vpop.f32.mrf.mxu0
      %v5812 = vadd.f32 0.0, %v5811
      %v5813 = vpop.f32.mrf.mxu0
      %5814 = vmatprep.mubr.f32.mxu0 0.0
      %5815 = vmatmul.mubr.f32.gmra.mxu0 %v5639
      %v5816 = vpop.f32.mrf.mxu0
      %v5817 = vadd.f32 0.0, %v5816
      %v5818 = vpop.f32.mrf.mxu0
      %5819 = vmatprep.mubr.f32.mxu0 0.0
      %5820 = vmatmul.mubr.f32.gmra.mxu0 %v5642
      %v5821 = vpop.f32.mrf.mxu0
      %v5822 = vadd.f32 0.0, %v5821
      %v5823 = vpop.f32.mrf.mxu0
      %5824 = vmatprep.mubr.f32.mxu0 0.0
      %5825 = vmatmul.mubr.f32.gmra.mxu0 %v5645
      %v5826 = vpop.f32.mrf.mxu0
      %v5827 = vadd.f32 0.0, %v5826
      %v5828 = vpop.f32.mrf.mxu0
      %5829 = vmatprep.mubr.f32.mxu0 0.0
      %5830 = vmatmul.mubr.f32.gmra.mxu0 %v5648
      %v5831 = vpop.f32.mrf.mxu0
      %v5832 = vadd.f32 0.0, %v5831
      %v5833 = vpop.f32.mrf.mxu0
      %5834 = vmatprep.mubr.f32.mxu0 0.0
      %5835 = vmatmul.mubr.f32.gmra.mxu0 %v5651
      %v5836 = vpop.f32.mrf.mxu0
      %v5837 = vadd.f32 0.0, %v5836
      %v5838 = vpop.f32.mrf.mxu0
      %5839 = vmatprep.mubr.f32.mxu0 0.0
      %5840 = vmatmul.mubr.f32.gmra.mxu0 %v5654
      %v5841 = vpop.f32.mrf.mxu0
      %v5842 = vadd.f32 0.0, %v5841
      %v5843 = vpop.f32.mrf.mxu0
      %5844 = vmatprep.mubr.f32.mxu0 0.0
      %5845 = vmatmul.mubr.f32.gmra.mxu0 %v5657
      %v5846 = vpop.f32.mrf.mxu0
      %v5847 = vadd.f32 0.0, %v5846
      %v5848 = vpop.f32.mrf.mxu0
      %5849 = vmatprep.mubr.f32.mxu0 0.0
      %5850 = vmatmul.mubr.f32.gmra.mxu0 %v5660
      %v5851 = vpop.f32.mrf.mxu0
      %v5852 = vadd.f32 0.0, %v5851
      %v5853 = vpop.f32.mrf.mxu0
      %5854 = vmatprep.mubr.f32.mxu0 0.0
      %5855 = vmatmul.mubr.f32.gmra.mxu0 %v5663
      %v5856 = vpop.f32.mrf.mxu0
      %v5857 = vadd.f32 0.0, %v5856
      %v5858 = vpop.f32.mrf.mxu0
      %5859 = vmatprep.mubr.f32.mxu0 0.0
      %5860 = vmatmul.mubr.f32.gmra.mxu0 %v5666
      %v5861 = vpop.f32.mrf.mxu0
      %v5862 = vadd.f32 0.0, %v5861
      %v5863 = vpop.f32.mrf.mxu0
      %5864 = vmatprep.mubr.f32.mxu0 0.0
      %5865 = vmatmul.mubr.f32.gmra.mxu0 %v5669
      %v5866 = vpop.f32.mrf.mxu0
      %v5867 = vadd.f32 0.0, %v5866
      %v5868 = vpop.f32.mrf.mxu0
      %5869 = vmatprep.mubr.f32.mxu0 0.0
      %5870 = vmatmul.mubr.f32.gmra.mxu0 %v5672
      %v5871 = vpop.f32.mrf.mxu0
      %v5872 = vadd.f32 0.0, %v5871
      %v5873 = vpop.f32.mrf.mxu0
      %5874 = vmatprep.mubr.f32.mxu0 0.0
      %5875 = vmatmul.mubr.f32.gmra.mxu0 %v5675
      %v5876 = vpop.f32.mrf.mxu0
      %v5877 = vadd.f32 0.0, %v5876
      %v5878 = vpop.f32.mrf.mxu0
      %5879 = vmatprep.mubr.f32.mxu0 0.0
      %5880 = vmatmul.mubr.f32.gmra.mxu0 %v5678
      %v5881 = vpop.f32.mrf.mxu0
      %v5882 = vadd.f32 0.0, %v5881
      %v5883 = vpop.f32.mrf.mxu0
      %5884 = vmatprep.mubr.f32.mxu0 0.0
      %5885 = vmatmul.mubr.f32.gmra.mxu0 %v5681
      %v5886 = vpop.f32.mrf.mxu0
      %v5887 = vadd.f32 0.0, %v5886
      %v5888 = vpop.f32.mrf.mxu0
      %5889 = vmatprep.mubr.f32.mxu0 0.0
      %5890 = vmatmul.mubr.f32.gmra.mxu0 %v5684
      %v5891 = vpop.f32.mrf.mxu0
      %v5892 = vadd.f32 0.0, %v5891
      %v5893 = vpop.f32.mrf.mxu0
      %5894 = vmatprep.mubr.f32.mxu0 0.0
      %5895 = vmatmul.mubr.f32.gmra.mxu0 %v5687
      %v5896 = vpop.f32.mrf.mxu0
      %v5897 = vadd.f32 0.0, %v5896
      %v5898 = vpop.f32.mrf.mxu0
      %5899 = vmatprep.mubr.f32.mxu0 0.0
      %5900 = vmatmul.mubr.f32.gmra.mxu0 %v5690
      %v5901 = vpop.f32.mrf.mxu0
      %v5902 = vadd.f32 0.0, %v5901
      %v5903 = vpop.f32.mrf.mxu0
      %5904 = vmatprep.mubr.f32.mxu0 0.0
      %5905 = vmatmul.mubr.f32.gmra.mxu0 %v5693
      %v5906 = vpop.f32.mrf.mxu0
      %v5907 = vadd.f32 0.0, %v5906
      %v5908 = vpop.f32.mrf.mxu0
      %5909 = vmatprep.mubr.f32.mxu0 0.0
      %5910 = vmatmul.mubr.f32.gmra.mxu0 %v5696
      %v5911 = vpop.f32.mrf.mxu0
      %v5912 = vadd.f32 0.0, %v5911
      %v5913 = vpop.f32.mrf.mxu0
      %5914 = vmatprep.mubr.f32.mxu0 0.0
      %5915 = vmatmul.mubr.f32.gmra.mxu0 %v5699
      %v5916 = vpop.f32.mrf.mxu0
      %v5917 = vadd.f32 0.0, %v5916
      %v5918 = vpop.f32.mrf.mxu0
      %5919 = vmatprep.mubr.f32.mxu0 0.0
      %5920 = vmatmul.mubr.f32.gmra.mxu0 %v5702
      %v5921 = vpop.f32.mrf.mxu0
      %v5922 = vadd.f32 0.0, %v5921
      %v5923 = vpop.f32.mrf.mxu0
      %5924 = vmatprep.mubr.f32.mxu0 0.0
      %5925 = vmatmul.mubr.f32.gmra.mxu0 %v5705
      %v5926 = vpop.f32.mrf.mxu0
      %v5927 = vadd.f32 0.0, %v5926
      %v5928 = vpop.f32.mrf.mxu0
      %5929 = vmatprep.mubr.f32.mxu0 0.0
      %5930 = vmatmul.mubr.f32.gmra.mxu0 %v5708
      %v5931 = vpop.f32.mrf.mxu0
      %v5932 = vadd.f32 0.0, %v5931
      %v5933 = vpop.f32.mrf.mxu0
      %5934 = vdwg.mxu0
      %v5935 = vadd.f32 %v5548, %v5777
      %v5936 = vadd.f32 %v5549, %v5782
      %v5937 = vadd.f32 %v5550, %v5787
      %v5938 = vadd.f32 %v5551, %v5792
      %v5939 = vadd.f32 %v5552, %v5797
      %v5940 = vadd.f32 %v5553, %v5802
      %v5941 = vadd.f32 %v5554, %v5807
      %v5942 = vadd.f32 %v5555, %v5812
      %v5943 = vadd.f32 %v5556, %v5817
      %v5944 = vadd.f32 %v5557, %v5822
      %v5945 = vadd.f32 %v5558, %v5827
      %v5946 = vadd.f32 %v5559, %v5832
      %v5947 = vadd.f32 %v5560, %v5837
      %v5948 = vadd.f32 %v5561, %v5842
      %v5949 = vadd.f32 %v5562, %v5847
      %v5950 = vadd.f32 %v5563, %v5852
      %v5951 = vadd.f32 %v5564, %v5857
      %v5952 = vadd.f32 %v5565, %v5862
      %v5953 = vadd.f32 %v5566, %v5867
      %v5954 = vadd.f32 %v5567, %v5872
      %v5955 = vadd.f32 %v5568, %v5877
      %v5956 = vadd.f32 %v5569, %v5882
      %v5957 = vadd.f32 %v5570, %v5887
      %v5958 = vadd.f32 %v5571, %v5892
      %v5959 = vadd.f32 %v5572, %v5897
      %v5960 = vadd.f32 %v5573, %v5902
      %v5961 = vadd.f32 %v5574, %v5907
      %v5962 = vadd.f32 %v5575, %v5912
      %v5963 = vadd.f32 %v5576, %v5917
      %v5964 = vadd.f32 %v5577, %v5922
      %v5965 = vadd.f32 %v5578, %v5927
      %v5966 = vadd.f32 %v5579, %v5932
      %v5967 = vld [vmem:[%s4018 + $0x2] sm:$0xff]
      %v5968 = vld [vmem:[%s4018 + $0xa] sm:$0xff]
      %v5969 = vld [vmem:[%s4018 + $0x1a] sm:$0xff]
      %v5970 = vld [vmem:[%s4018 + $0x22] sm:$0xff]
      %v5971 = vld [vmem:[%s4018 + $0x32] sm:$0xff]
      %v5972 = vld [vmem:[%s4018 + $0x3a] sm:$0xff]
      %v5973 = vld [vmem:[%s4018 + $0x4a] sm:$0xff]
      %v5974 = vld [vmem:[%s4018 + $0x52] sm:$0xff]
      %v5975 = vld [vmem:[%s4018 + $0x62] sm:$0xff]
      %v5976 = vld [vmem:[%s4018 + $0x6a] sm:$0xff]
      %v5977 = vld [vmem:[%s4018 + $0x7a] sm:$0xff]
      %v5978 = vld [vmem:[%s4018 + $0x82] sm:$0xff]
      %v5979 = vld [vmem:[%s4018 + $0x92] sm:$0xff]
      %v5980 = vld [vmem:[%s4018 + $0x9a] sm:$0xff]
      %v5981 = vld [vmem:[%s4018 + $0xaa] sm:$0xff]
      %v5982 = vld [vmem:[%s4018 + $0xb2] sm:$0xff]
      %v5983 = vld [vmem:[%s4018 + $0xc2] sm:$0xff]
      %v5984 = vld [vmem:[%s4018 + $0xca] sm:$0xff]
      %v5985 = vld [vmem:[%s4018 + $0xda] sm:$0xff]
      %v5986 = vld [vmem:[%s4018 + $0xe2] sm:$0xff]
      %v5987 = vld [vmem:[%s4018 + $0xf2] sm:$0xff]
      %v5988 = vld [vmem:[%s4018 + $0xfa] sm:$0xff]
      %v5989 = vld [vmem:[%s4018 + $0x10a] sm:$0xff]
      %v5990 = vld [vmem:[%s4018 + $0x112] sm:$0xff]
      %v5991 = vld [vmem:[%s4018 + $0x122] sm:$0xff]
      %v5992 = vld [vmem:[%s4018 + $0x12a] sm:$0xff]
      %v5993 = vld [vmem:[%s4018 + $0x13a] sm:$0xff]
      %v5994 = vld [vmem:[%s4018 + $0x142] sm:$0xff]
      %v5995 = vld [vmem:[%s4018 + $0x152] sm:$0xff]
      %v5996 = vld [vmem:[%s4018 + $0x15a] sm:$0xff]
      %v5997 = vld [vmem:[%s4018 + $0x16a] sm:$0xff]
      %v5998 = vld [vmem:[%s4018 + $0x172] sm:$0xff]
      %s5999 = scalar_lea.vmem %s5, 40
      %v6000 = vld [vmem:[%s5999] sm:$0xff]
      %v6002 = vsel %vm4019, %v5967, 0
      %v6005 = vsel %vm4019, %v5968, 0
      %v6008 = vsel %vm4019, %v5969, 0
      %v6011 = vsel %vm4019, %v5970, 0
      %v6014 = vsel %vm4019, %v5971, 0
      %v6017 = vsel %vm4019, %v5972, 0
      %v6020 = vsel %vm4019, %v5973, 0
      %v6023 = vsel %vm4019, %v5974, 0
      %v6026 = vsel %vm4019, %v5975, 0
      %v6029 = vsel %vm4019, %v5976, 0
      %v6032 = vsel %vm4019, %v5977, 0
      %v6035 = vsel %vm4019, %v5978, 0
      %v6038 = vsel %vm4019, %v5979, 0
      %v6041 = vsel %vm4019, %v5980, 0
      %v6044 = vsel %vm4019, %v5981, 0
      %v6047 = vsel %vm4019, %v5982, 0
      %v6050 = vsel %vm4019, %v5983, 0
      %v6053 = vsel %vm4019, %v5984, 0
      %v6056 = vsel %vm4019, %v5985, 0
      %v6059 = vsel %vm4019, %v5986, 0
      %v6062 = vsel %vm4019, %v5987, 0
      %v6065 = vsel %vm4019, %v5988, 0
      %v6068 = vsel %vm4019, %v5989, 0
      %v6071 = vsel %vm4019, %v5990, 0
      %v6074 = vsel %vm4019, %v5991, 0
      %v6077 = vsel %vm4019, %v5992, 0
      %v6080 = vsel %vm4019, %v5993, 0
      %v6083 = vsel %vm4019, %v5994, 0
      %v6086 = vsel %vm4019, %v5995, 0
      %v6089 = vsel %vm4019, %v5996, 0
      %v6092 = vsel %vm4019, %v5997, 0
      %v6095 = vsel %vm4019, %v5998, 0
      %6097 = vmatprep.subr.mxu0 0.0
      %6098 = vmatpush1.msra.mxu0 0.0
      %6099 = vmatprep.subr.mxu0 0.0
      %6100 = vmatpush1.msra.mxu0 0.0
      %6101 = vmatprep.subr.mxu0 0.0
      %6102 = vmatpush1.msra.mxu0 0.0
      %6103 = vmatprep.subr.mxu0 0.0
      %6104 = vmatpush1.msra.mxu0 0.0
      %6105 = vmatprep.subr.mxu0 0.0
      %6106 = vmatpush1.msra.mxu0 0.0
      %6107 = vmatprep.subr.mxu0 0.0
      %6108 = vmatpush1.msra.mxu0 0.0
      %6109 = vmatprep.subr.mxu0 0.0
      %6110 = vmatpush1.msra.mxu0 0.0
      %6111 = vmatprep.subr.mxu0 0.0
      %6112 = vmatpush1.msra.mxu0 0.0
      %6113 = vmatprep.subr.mxu0 0.0
      %6114 = vmatpush1.msra.mxu0 0.0
      %6115 = vmatprep.subr.mxu0 0.0
      %6116 = vmatpush1.msra.mxu0 0.0
      %6117 = vmatprep.subr.mxu0 0.0
      %6118 = vmatpush1.msra.mxu0 0.0
      %6119 = vmatprep.subr.mxu0 0.0
      %6120 = vmatpush1.msra.mxu0 0.0
      %6121 = vmatprep.subr.mxu0 0.0
      %6122 = vmatpush1.msra.mxu0 0.0
      %6123 = vmatprep.subr.mxu0 0.0
      %6124 = vmatpush1.msra.mxu0 0.0
      %6125 = vmatprep.subr.mxu0 0.0
      %6126 = vmatpush1.msra.mxu0 0.0
      %6127 = vmatprep.subr.mxu0 0.0
      %6128 = vmatpush1.msra.mxu0 %v6000
      %6129 = vmatprep.subr.mxu0 0.0
      %6130 = vmatpush2.msra.mxu0 0.0
      %6131 = vmatprep.subr.mxu0 0.0
      %6132 = vmatpush2.msra.mxu0 0.0
      %6133 = vmatprep.subr.mxu0 0.0
      %6134 = vmatpush2.msra.mxu0 0.0
      %6135 = vmatprep.subr.mxu0 0.0
      %6136 = vmatpush2.msra.mxu0 0.0
      %6137 = vmatprep.subr.mxu0 0.0
      %6138 = vmatpush2.msra.mxu0 0.0
      %6139 = vmatprep.subr.mxu0 0.0
      %6140 = vmatpush2.msra.mxu0 0.0
      %6141 = vmatprep.subr.mxu0 0.0
      %6142 = vmatpush2.msra.mxu0 0.0
      %6143 = vmatprep.subr.mxu0 0.0
      %6144 = vmatpush2.msra.mxu0 0.0
      %6145 = vmatprep.subr.mxu0 0.0
      %6146 = vmatpush2.msra.mxu0 0.0
      %6147 = vmatprep.subr.mxu0 0.0
      %6148 = vmatpush2.msra.mxu0 0.0
      %6149 = vmatprep.subr.mxu0 0.0
      %6150 = vmatpush2.msra.mxu0 0.0
      %6151 = vmatprep.subr.mxu0 0.0
      %6152 = vmatpush2.msra.mxu0 0.0
      %6153 = vmatprep.subr.mxu0 0.0
      %6154 = vmatpush2.msra.mxu0 0.0
      %6155 = vmatprep.subr.mxu0 0.0
      %6156 = vmatpush2.msra.mxu0 0.0
      %6157 = vmatprep.subr.mxu0 0.0
      %6158 = vmatpush2.msra.mxu0 0.0
      %6159 = vmatprep.subr.mxu0 0.0
      %6160 = vmatpush2.msra.mxu0 0.0
      %6161 = vmatprep.mubr.f32.mxu0 0.0
      %6162 = vmatmul.mubr.f32.gmra.mxu0 %v6002
      %v6163 = vpop.f32.mrf.mxu0
      %v6164 = vadd.f32 0.0, %v6163
      %v6165 = vpop.f32.mrf.mxu0
      %6166 = vmatprep.mubr.f32.mxu0 0.0
      %6167 = vmatmul.mubr.f32.gmra.mxu0 %v6005
      %v6168 = vpop.f32.mrf.mxu0
      %v6169 = vadd.f32 0.0, %v6168
      %v6170 = vpop.f32.mrf.mxu0
      %6171 = vmatprep.mubr.f32.mxu0 0.0
      %6172 = vmatmul.mubr.f32.gmra.mxu0 %v6008
      %v6173 = vpop.f32.mrf.mxu0
      %v6174 = vadd.f32 0.0, %v6173
      %v6175 = vpop.f32.mrf.mxu0
      %6176 = vmatprep.mubr.f32.mxu0 0.0
      %6177 = vmatmul.mubr.f32.gmra.mxu0 %v6011
      %v6178 = vpop.f32.mrf.mxu0
      %v6179 = vadd.f32 0.0, %v6178
      %v6180 = vpop.f32.mrf.mxu0
      %6181 = vmatprep.mubr.f32.mxu0 0.0
      %6182 = vmatmul.mubr.f32.gmra.mxu0 %v6014
      %v6183 = vpop.f32.mrf.mxu0
      %v6184 = vadd.f32 0.0, %v6183
      %v6185 = vpop.f32.mrf.mxu0
      %6186 = vmatprep.mubr.f32.mxu0 0.0
      %6187 = vmatmul.mubr.f32.gmra.mxu0 %v6017
      %v6188 = vpop.f32.mrf.mxu0
      %v6189 = vadd.f32 0.0, %v6188
      %v6190 = vpop.f32.mrf.mxu0
      %6191 = vmatprep.mubr.f32.mxu0 0.0
      %6192 = vmatmul.mubr.f32.gmra.mxu0 %v6020
      %v6193 = vpop.f32.mrf.mxu0
      %v6194 = vadd.f32 0.0, %v6193
      %v6195 = vpop.f32.mrf.mxu0
      %6196 = vmatprep.mubr.f32.mxu0 0.0
      %6197 = vmatmul.mubr.f32.gmra.mxu0 %v6023
      %v6198 = vpop.f32.mrf.mxu0
      %v6199 = vadd.f32 0.0, %v6198
      %v6200 = vpop.f32.mrf.mxu0
      %6201 = vmatprep.mubr.f32.mxu0 0.0
      %6202 = vmatmul.mubr.f32.gmra.mxu0 %v6026
      %v6203 = vpop.f32.mrf.mxu0
      %v6204 = vadd.f32 0.0, %v6203
      %v6205 = vpop.f32.mrf.mxu0
      %6206 = vmatprep.mubr.f32.mxu0 0.0
      %6207 = vmatmul.mubr.f32.gmra.mxu0 %v6029
      %v6208 = vpop.f32.mrf.mxu0
      %v6209 = vadd.f32 0.0, %v6208
      %v6210 = vpop.f32.mrf.mxu0
      %6211 = vmatprep.mubr.f32.mxu0 0.0
      %6212 = vmatmul.mubr.f32.gmra.mxu0 %v6032
      %v6213 = vpop.f32.mrf.mxu0
      %v6214 = vadd.f32 0.0, %v6213
      %v6215 = vpop.f32.mrf.mxu0
      %6216 = vmatprep.mubr.f32.mxu0 0.0
      %6217 = vmatmul.mubr.f32.gmra.mxu0 %v6035
      %v6218 = vpop.f32.mrf.mxu0
      %v6219 = vadd.f32 0.0, %v6218
      %v6220 = vpop.f32.mrf.mxu0
      %6221 = vmatprep.mubr.f32.mxu0 0.0
      %6222 = vmatmul.mubr.f32.gmra.mxu0 %v6038
      %v6223 = vpop.f32.mrf.mxu0
      %v6224 = vadd.f32 0.0, %v6223
      %v6225 = vpop.f32.mrf.mxu0
      %6226 = vmatprep.mubr.f32.mxu0 0.0
      %6227 = vmatmul.mubr.f32.gmra.mxu0 %v6041
      %v6228 = vpop.f32.mrf.mxu0
      %v6229 = vadd.f32 0.0, %v6228
      %v6230 = vpop.f32.mrf.mxu0
      %6231 = vmatprep.mubr.f32.mxu0 0.0
      %6232 = vmatmul.mubr.f32.gmra.mxu0 %v6044
      %v6233 = vpop.f32.mrf.mxu0
      %v6234 = vadd.f32 0.0, %v6233
      %v6235 = vpop.f32.mrf.mxu0
      %6236 = vmatprep.mubr.f32.mxu0 0.0
      %6237 = vmatmul.mubr.f32.gmra.mxu0 %v6047
      %v6238 = vpop.f32.mrf.mxu0
      %v6239 = vadd.f32 0.0, %v6238
      %v6240 = vpop.f32.mrf.mxu0
      %6241 = vmatprep.mubr.f32.mxu0 0.0
      %6242 = vmatmul.mubr.f32.gmra.mxu0 %v6050
      %v6243 = vpop.f32.mrf.mxu0
      %v6244 = vadd.f32 0.0, %v6243
      %v6245 = vpop.f32.mrf.mxu0
      %6246 = vmatprep.mubr.f32.mxu0 0.0
      %6247 = vmatmul.mubr.f32.gmra.mxu0 %v6053
      %v6248 = vpop.f32.mrf.mxu0
      %v6249 = vadd.f32 0.0, %v6248
      %v6250 = vpop.f32.mrf.mxu0
      %6251 = vmatprep.mubr.f32.mxu0 0.0
      %6252 = vmatmul.mubr.f32.gmra.mxu0 %v6056
      %v6253 = vpop.f32.mrf.mxu0
      %v6254 = vadd.f32 0.0, %v6253
      %v6255 = vpop.f32.mrf.mxu0
      %6256 = vmatprep.mubr.f32.mxu0 0.0
      %6257 = vmatmul.mubr.f32.gmra.mxu0 %v6059
      %v6258 = vpop.f32.mrf.mxu0
      %v6259 = vadd.f32 0.0, %v6258
      %v6260 = vpop.f32.mrf.mxu0
      %6261 = vmatprep.mubr.f32.mxu0 0.0
      %6262 = vmatmul.mubr.f32.gmra.mxu0 %v6062
      %v6263 = vpop.f32.mrf.mxu0
      %v6264 = vadd.f32 0.0, %v6263
      %v6265 = vpop.f32.mrf.mxu0
      %6266 = vmatprep.mubr.f32.mxu0 0.0
      %6267 = vmatmul.mubr.f32.gmra.mxu0 %v6065
      %v6268 = vpop.f32.mrf.mxu0
      %v6269 = vadd.f32 0.0, %v6268
      %v6270 = vpop.f32.mrf.mxu0
      %6271 = vmatprep.mubr.f32.mxu0 0.0
      %6272 = vmatmul.mubr.f32.gmra.mxu0 %v6068
      %v6273 = vpop.f32.mrf.mxu0
      %v6274 = vadd.f32 0.0, %v6273
      %v6275 = vpop.f32.mrf.mxu0
      %6276 = vmatprep.mubr.f32.mxu0 0.0
      %6277 = vmatmul.mubr.f32.gmra.mxu0 %v6071
      %v6278 = vpop.f32.mrf.mxu0
      %v6279 = vadd.f32 0.0, %v6278
      %v6280 = vpop.f32.mrf.mxu0
      %6281 = vmatprep.mubr.f32.mxu0 0.0
      %6282 = vmatmul.mubr.f32.gmra.mxu0 %v6074
      %v6283 = vpop.f32.mrf.mxu0
      %v6284 = vadd.f32 0.0, %v6283
      %v6285 = vpop.f32.mrf.mxu0
      %6286 = vmatprep.mubr.f32.mxu0 0.0
      %6287 = vmatmul.mubr.f32.gmra.mxu0 %v6077
      %v6288 = vpop.f32.mrf.mxu0
      %v6289 = vadd.f32 0.0, %v6288
      %v6290 = vpop.f32.mrf.mxu0
      %6291 = vmatprep.mubr.f32.mxu0 0.0
      %6292 = vmatmul.mubr.f32.gmra.mxu0 %v6080
      %v6293 = vpop.f32.mrf.mxu0
      %v6294 = vadd.f32 0.0, %v6293
      %v6295 = vpop.f32.mrf.mxu0
      %6296 = vmatprep.mubr.f32.mxu0 0.0
      %6297 = vmatmul.mubr.f32.gmra.mxu0 %v6083
      %v6298 = vpop.f32.mrf.mxu0
      %v6299 = vadd.f32 0.0, %v6298
      %v6300 = vpop.f32.mrf.mxu0
      %6301 = vmatprep.mubr.f32.mxu0 0.0
      %6302 = vmatmul.mubr.f32.gmra.mxu0 %v6086
      %v6303 = vpop.f32.mrf.mxu0
      %v6304 = vadd.f32 0.0, %v6303
      %v6305 = vpop.f32.mrf.mxu0
      %6306 = vmatprep.mubr.f32.mxu0 0.0
      %6307 = vmatmul.mubr.f32.gmra.mxu0 %v6089
      %v6308 = vpop.f32.mrf.mxu0
      %v6309 = vadd.f32 0.0, %v6308
      %v6310 = vpop.f32.mrf.mxu0
      %6311 = vmatprep.mubr.f32.mxu0 0.0
      %6312 = vmatmul.mubr.f32.gmra.mxu0 %v6092
      %v6313 = vpop.f32.mrf.mxu0
      %v6314 = vadd.f32 0.0, %v6313
      %v6315 = vpop.f32.mrf.mxu0
      %6316 = vmatprep.mubr.f32.mxu0 0.0
      %6317 = vmatmul.mubr.f32.gmra.mxu0 %v6095
      %v6318 = vpop.f32.mrf.mxu0
      %v6319 = vadd.f32 0.0, %v6318
      %v6320 = vpop.f32.mrf.mxu0
      %6321 = vdwg.mxu0
      %v6322 = vadd.f32 %v5935, %v6164
      %v6323 = vadd.f32 %v5936, %v6169
      %v6324 = vadd.f32 %v5937, %v6174
      %v6325 = vadd.f32 %v5938, %v6179
      %v6326 = vadd.f32 %v5939, %v6184
      %v6327 = vadd.f32 %v5940, %v6189
      %v6328 = vadd.f32 %v5941, %v6194
      %v6329 = vadd.f32 %v5942, %v6199
      %v6330 = vadd.f32 %v5943, %v6204
      %v6331 = vadd.f32 %v5944, %v6209
      %v6332 = vadd.f32 %v5945, %v6214
      %v6333 = vadd.f32 %v5946, %v6219
      %v6334 = vadd.f32 %v5947, %v6224
      %v6335 = vadd.f32 %v5948, %v6229
      %v6336 = vadd.f32 %v5949, %v6234
      %v6337 = vadd.f32 %v5950, %v6239
      %v6338 = vadd.f32 %v5951, %v6244
      %v6339 = vadd.f32 %v5952, %v6249
      %v6340 = vadd.f32 %v5953, %v6254
      %v6341 = vadd.f32 %v5954, %v6259
      %v6342 = vadd.f32 %v5955, %v6264
      %v6343 = vadd.f32 %v5956, %v6269
      %v6344 = vadd.f32 %v5957, %v6274
      %v6345 = vadd.f32 %v5958, %v6279
      %v6346 = vadd.f32 %v5959, %v6284
      %v6347 = vadd.f32 %v5960, %v6289
      %v6348 = vadd.f32 %v5961, %v6294
      %v6349 = vadd.f32 %v5962, %v6299
      %v6350 = vadd.f32 %v5963, %v6304
      %v6351 = vadd.f32 %v5964, %v6309
      %v6352 = vadd.f32 %v5965, %v6314
      %v6353 = vadd.f32 %v5966, %v6319
      %s6354 = scalar_lea.vmem [#allocation3], 48
      %v6355 = vld [vmem:[%s6354] sm:$0xff]
      %v6356 = vld [vmem:[%s6354 + $0x8] sm:$0xff]
      %v6357 = vld [vmem:[%s6354 + $0x18] sm:$0xff]
      %v6358 = vld [vmem:[%s6354 + $0x20] sm:$0xff]
      %v6359 = vld [vmem:[%s6354 + $0x30] sm:$0xff]
      %v6360 = vld [vmem:[%s6354 + $0x38] sm:$0xff]
      %v6361 = vld [vmem:[%s6354 + $0x48] sm:$0xff]
      %v6362 = vld [vmem:[%s6354 + $0x50] sm:$0xff]
      %v6363 = vld [vmem:[%s6354 + $0x60] sm:$0xff]
      %v6364 = vld [vmem:[%s6354 + $0x68] sm:$0xff]
      %v6365 = vld [vmem:[%s6354 + $0x78] sm:$0xff]
      %v6366 = vld [vmem:[%s6354 + $0x80] sm:$0xff]
      %v6367 = vld [vmem:[%s6354 + $0x90] sm:$0xff]
      %v6368 = vld [vmem:[%s6354 + $0x98] sm:$0xff]
      %v6369 = vld [vmem:[%s6354 + $0xa8] sm:$0xff]
      %v6370 = vld [vmem:[%s6354 + $0xb0] sm:$0xff]
      %v6371 = vld [vmem:[%s6354 + $0xc0] sm:$0xff]
      %v6372 = vld [vmem:[%s6354 + $0xc8] sm:$0xff]
      %v6373 = vld [vmem:[%s6354 + $0xd8] sm:$0xff]
      %v6374 = vld [vmem:[%s6354 + $0xe0] sm:$0xff]
      %v6375 = vld [vmem:[%s6354 + $0xf0] sm:$0xff]
      %v6376 = vld [vmem:[%s6354 + $0xf8] sm:$0xff]
      %v6377 = vld [vmem:[%s6354 + $0x108] sm:$0xff]
      %v6378 = vld [vmem:[%s6354 + $0x110] sm:$0xff]
      %v6379 = vld [vmem:[%s6354 + $0x120] sm:$0xff]
      %v6380 = vld [vmem:[%s6354 + $0x128] sm:$0xff]
      %v6381 = vld [vmem:[%s6354 + $0x138] sm:$0xff]
      %v6382 = vld [vmem:[%s6354 + $0x140] sm:$0xff]
      %v6383 = vld [vmem:[%s6354 + $0x150] sm:$0xff]
      %v6384 = vld [vmem:[%s6354 + $0x158] sm:$0xff]
      %v6385 = vld [vmem:[%s6354 + $0x168] sm:$0xff]
      %v6386 = vld [vmem:[%s6354 + $0x170] sm:$0xff]
      %s6387 = scalar_lea.vmem %s5, 48
      %v6388 = vld [vmem:[%s6387] sm:$0xff]
      %v6390 = vsel %vm4019, %v6355, 0
      %v6393 = vsel %vm4019, %v6356, 0
      %v6396 = vsel %vm4019, %v6357, 0
      %v6399 = vsel %vm4019, %v6358, 0
      %v6402 = vsel %vm4019, %v6359, 0
      %v6405 = vsel %vm4019, %v6360, 0
      %v6408 = vsel %vm4019, %v6361, 0
      %v6411 = vsel %vm4019, %v6362, 0
      %v6414 = vsel %vm4019, %v6363, 0
      %v6417 = vsel %vm4019, %v6364, 0
      %v6420 = vsel %vm4019, %v6365, 0
      %v6423 = vsel %vm4019, %v6366, 0
      %v6426 = vsel %vm4019, %v6367, 0
      %v6429 = vsel %vm4019, %v6368, 0
      %v6432 = vsel %vm4019, %v6369, 0
      %v6435 = vsel %vm4019, %v6370, 0
      %v6438 = vsel %vm4019, %v6371, 0
      %v6441 = vsel %vm4019, %v6372, 0
      %v6444 = vsel %vm4019, %v6373, 0
      %v6447 = vsel %vm4019, %v6374, 0
      %v6450 = vsel %vm4019, %v6375, 0
      %v6453 = vsel %vm4019, %v6376, 0
      %v6456 = vsel %vm4019, %v6377, 0
      %v6459 = vsel %vm4019, %v6378, 0
      %v6462 = vsel %vm4019, %v6379, 0
      %v6465 = vsel %vm4019, %v6380, 0
      %v6468 = vsel %vm4019, %v6381, 0
      %v6471 = vsel %vm4019, %v6382, 0
      %v6474 = vsel %vm4019, %v6383, 0
      %v6477 = vsel %vm4019, %v6384, 0
      %v6480 = vsel %vm4019, %v6385, 0
      %v6483 = vsel %vm4019, %v6386, 0
      %6485 = vmatprep.subr.mxu0 0.0
      %6486 = vmatpush1.msra.mxu0 0.0
      %6487 = vmatprep.subr.mxu0 0.0
      %6488 = vmatpush1.msra.mxu0 0.0
      %6489 = vmatprep.subr.mxu0 0.0
      %6490 = vmatpush1.msra.mxu0 0.0
      %6491 = vmatprep.subr.mxu0 0.0
      %6492 = vmatpush1.msra.mxu0 0.0
      %6493 = vmatprep.subr.mxu0 0.0
      %6494 = vmatpush1.msra.mxu0 0.0
      %6495 = vmatprep.subr.mxu0 0.0
      %6496 = vmatpush1.msra.mxu0 0.0
      %6497 = vmatprep.subr.mxu0 0.0
      %6498 = vmatpush1.msra.mxu0 0.0
      %6499 = vmatprep.subr.mxu0 0.0
      %6500 = vmatpush1.msra.mxu0 0.0
      %6501 = vmatprep.subr.mxu0 0.0
      %6502 = vmatpush1.msra.mxu0 0.0
      %6503 = vmatprep.subr.mxu0 0.0
      %6504 = vmatpush1.msra.mxu0 0.0
      %6505 = vmatprep.subr.mxu0 0.0
      %6506 = vmatpush1.msra.mxu0 0.0
      %6507 = vmatprep.subr.mxu0 0.0
      %6508 = vmatpush1.msra.mxu0 0.0
      %6509 = vmatprep.subr.mxu0 0.0
      %6510 = vmatpush1.msra.mxu0 0.0
      %6511 = vmatprep.subr.mxu0 0.0
      %6512 = vmatpush1.msra.mxu0 0.0
      %6513 = vmatprep.subr.mxu0 0.0
      %6514 = vmatpush1.msra.mxu0 0.0
      %6515 = vmatprep.subr.mxu0 0.0
      %6516 = vmatpush1.msra.mxu0 %v6388
      %6517 = vmatprep.subr.mxu0 0.0
      %6518 = vmatpush2.msra.mxu0 0.0
      %6519 = vmatprep.subr.mxu0 0.0
      %6520 = vmatpush2.msra.mxu0 0.0
      %6521 = vmatprep.subr.mxu0 0.0
      %6522 = vmatpush2.msra.mxu0 0.0
      %6523 = vmatprep.subr.mxu0 0.0
      %6524 = vmatpush2.msra.mxu0 0.0
      %6525 = vmatprep.subr.mxu0 0.0
      %6526 = vmatpush2.msra.mxu0 0.0
      %6527 = vmatprep.subr.mxu0 0.0
      %6528 = vmatpush2.msra.mxu0 0.0
      %6529 = vmatprep.subr.mxu0 0.0
      %6530 = vmatpush2.msra.mxu0 0.0
      %6531 = vmatprep.subr.mxu0 0.0
      %6532 = vmatpush2.msra.mxu0 0.0
      %6533 = vmatprep.subr.mxu0 0.0
      %6534 = vmatpush2.msra.mxu0 0.0
      %6535 = vmatprep.subr.mxu0 0.0
      %6536 = vmatpush2.msra.mxu0 0.0
      %6537 = vmatprep.subr.mxu0 0.0
      %6538 = vmatpush2.msra.mxu0 0.0
      %6539 = vmatprep.subr.mxu0 0.0
      %6540 = vmatpush2.msra.mxu0 0.0
      %6541 = vmatprep.subr.mxu0 0.0
      %6542 = vmatpush2.msra.mxu0 0.0
      %6543 = vmatprep.subr.mxu0 0.0
      %6544 = vmatpush2.msra.mxu0 0.0
      %6545 = vmatprep.subr.mxu0 0.0
      %6546 = vmatpush2.msra.mxu0 0.0
      %6547 = vmatprep.subr.mxu0 0.0
      %6548 = vmatpush2.msra.mxu0 0.0
      %6549 = vmatprep.mubr.f32.mxu0 0.0
      %6550 = vmatmul.mubr.f32.gmra.mxu0 %v6390
      %v6551 = vpop.f32.mrf.mxu0
      %v6552 = vadd.f32 0.0, %v6551
      %v6553 = vpop.f32.mrf.mxu0
      %6554 = vmatprep.mubr.f32.mxu0 0.0
      %6555 = vmatmul.mubr.f32.gmra.mxu0 %v6393
      %v6556 = vpop.f32.mrf.mxu0
      %v6557 = vadd.f32 0.0, %v6556
      %v6558 = vpop.f32.mrf.mxu0
      %6559 = vmatprep.mubr.f32.mxu0 0.0
      %6560 = vmatmul.mubr.f32.gmra.mxu0 %v6396
      %v6561 = vpop.f32.mrf.mxu0
      %v6562 = vadd.f32 0.0, %v6561
      %v6563 = vpop.f32.mrf.mxu0
      %6564 = vmatprep.mubr.f32.mxu0 0.0
      %6565 = vmatmul.mubr.f32.gmra.mxu0 %v6399
      %v6566 = vpop.f32.mrf.mxu0
      %v6567 = vadd.f32 0.0, %v6566
      %v6568 = vpop.f32.mrf.mxu0
      %6569 = vmatprep.mubr.f32.mxu0 0.0
      %6570 = vmatmul.mubr.f32.gmra.mxu0 %v6402
      %v6571 = vpop.f32.mrf.mxu0
      %v6572 = vadd.f32 0.0, %v6571
      %v6573 = vpop.f32.mrf.mxu0
      %6574 = vmatprep.mubr.f32.mxu0 0.0
      %6575 = vmatmul.mubr.f32.gmra.mxu0 %v6405
      %v6576 = vpop.f32.mrf.mxu0
      %v6577 = vadd.f32 0.0, %v6576
      %v6578 = vpop.f32.mrf.mxu0
      %6579 = vmatprep.mubr.f32.mxu0 0.0
      %6580 = vmatmul.mubr.f32.gmra.mxu0 %v6408
      %v6581 = vpop.f32.mrf.mxu0
      %v6582 = vadd.f32 0.0, %v6581
      %v6583 = vpop.f32.mrf.mxu0
      %6584 = vmatprep.mubr.f32.mxu0 0.0
      %6585 = vmatmul.mubr.f32.gmra.mxu0 %v6411
      %v6586 = vpop.f32.mrf.mxu0
      %v6587 = vadd.f32 0.0, %v6586
      %v6588 = vpop.f32.mrf.mxu0
      %6589 = vmatprep.mubr.f32.mxu0 0.0
      %6590 = vmatmul.mubr.f32.gmra.mxu0 %v6414
      %v6591 = vpop.f32.mrf.mxu0
      %v6592 = vadd.f32 0.0, %v6591
      %v6593 = vpop.f32.mrf.mxu0
      %6594 = vmatprep.mubr.f32.mxu0 0.0
      %6595 = vmatmul.mubr.f32.gmra.mxu0 %v6417
      %v6596 = vpop.f32.mrf.mxu0
      %v6597 = vadd.f32 0.0, %v6596
      %v6598 = vpop.f32.mrf.mxu0
      %6599 = vmatprep.mubr.f32.mxu0 0.0
      %6600 = vmatmul.mubr.f32.gmra.mxu0 %v6420
      %v6601 = vpop.f32.mrf.mxu0
      %v6602 = vadd.f32 0.0, %v6601
      %v6603 = vpop.f32.mrf.mxu0
      %6604 = vmatprep.mubr.f32.mxu0 0.0
      %6605 = vmatmul.mubr.f32.gmra.mxu0 %v6423
      %v6606 = vpop.f32.mrf.mxu0
      %v6607 = vadd.f32 0.0, %v6606
      %v6608 = vpop.f32.mrf.mxu0
      %6609 = vmatprep.mubr.f32.mxu0 0.0
      %6610 = vmatmul.mubr.f32.gmra.mxu0 %v6426
      %v6611 = vpop.f32.mrf.mxu0
      %v6612 = vadd.f32 0.0, %v6611
      %v6613 = vpop.f32.mrf.mxu0
      %6614 = vmatprep.mubr.f32.mxu0 0.0
      %6615 = vmatmul.mubr.f32.gmra.mxu0 %v6429
      %v6616 = vpop.f32.mrf.mxu0
      %v6617 = vadd.f32 0.0, %v6616
      %v6618 = vpop.f32.mrf.mxu0
      %6619 = vmatprep.mubr.f32.mxu0 0.0
      %6620 = vmatmul.mubr.f32.gmra.mxu0 %v6432
      %v6621 = vpop.f32.mrf.mxu0
      %v6622 = vadd.f32 0.0, %v6621
      %v6623 = vpop.f32.mrf.mxu0
      %6624 = vmatprep.mubr.f32.mxu0 0.0
      %6625 = vmatmul.mubr.f32.gmra.mxu0 %v6435
      %v6626 = vpop.f32.mrf.mxu0
      %v6627 = vadd.f32 0.0, %v6626
      %v6628 = vpop.f32.mrf.mxu0
      %6629 = vmatprep.mubr.f32.mxu0 0.0
      %6630 = vmatmul.mubr.f32.gmra.mxu0 %v6438
      %v6631 = vpop.f32.mrf.mxu0
      %v6632 = vadd.f32 0.0, %v6631
      %v6633 = vpop.f32.mrf.mxu0
      %6634 = vmatprep.mubr.f32.mxu0 0.0
      %6635 = vmatmul.mubr.f32.gmra.mxu0 %v6441
      %v6636 = vpop.f32.mrf.mxu0
      %v6637 = vadd.f32 0.0, %v6636
      %v6638 = vpop.f32.mrf.mxu0
      %6639 = vmatprep.mubr.f32.mxu0 0.0
      %6640 = vmatmul.mubr.f32.gmra.mxu0 %v6444
      %v6641 = vpop.f32.mrf.mxu0
      %v6642 = vadd.f32 0.0, %v6641
      %v6643 = vpop.f32.mrf.mxu0
      %6644 = vmatprep.mubr.f32.mxu0 0.0
      %6645 = vmatmul.mubr.f32.gmra.mxu0 %v6447
      %v6646 = vpop.f32.mrf.mxu0
      %v6647 = vadd.f32 0.0, %v6646
      %v6648 = vpop.f32.mrf.mxu0
      %6649 = vmatprep.mubr.f32.mxu0 0.0
      %6650 = vmatmul.mubr.f32.gmra.mxu0 %v6450
      %v6651 = vpop.f32.mrf.mxu0
      %v6652 = vadd.f32 0.0, %v6651
      %v6653 = vpop.f32.mrf.mxu0
      %6654 = vmatprep.mubr.f32.mxu0 0.0
      %6655 = vmatmul.mubr.f32.gmra.mxu0 %v6453
      %v6656 = vpop.f32.mrf.mxu0
      %v6657 = vadd.f32 0.0, %v6656
      %v6658 = vpop.f32.mrf.mxu0
      %6659 = vmatprep.mubr.f32.mxu0 0.0
      %6660 = vmatmul.mubr.f32.gmra.mxu0 %v6456
      %v6661 = vpop.f32.mrf.mxu0
      %v6662 = vadd.f32 0.0, %v6661
      %v6663 = vpop.f32.mrf.mxu0
      %6664 = vmatprep.mubr.f32.mxu0 0.0
      %6665 = vmatmul.mubr.f32.gmra.mxu0 %v6459
      %v6666 = vpop.f32.mrf.mxu0
      %v6667 = vadd.f32 0.0, %v6666
      %v6668 = vpop.f32.mrf.mxu0
      %6669 = vmatprep.mubr.f32.mxu0 0.0
      %6670 = vmatmul.mubr.f32.gmra.mxu0 %v6462
      %v6671 = vpop.f32.mrf.mxu0
      %v6672 = vadd.f32 0.0, %v6671
      %v6673 = vpop.f32.mrf.mxu0
      %6674 = vmatprep.mubr.f32.mxu0 0.0
      %6675 = vmatmul.mubr.f32.gmra.mxu0 %v6465
      %v6676 = vpop.f32.mrf.mxu0
      %v6677 = vadd.f32 0.0, %v6676
      %v6678 = vpop.f32.mrf.mxu0
      %6679 = vmatprep.mubr.f32.mxu0 0.0
      %6680 = vmatmul.mubr.f32.gmra.mxu0 %v6468
      %v6681 = vpop.f32.mrf.mxu0
      %v6682 = vadd.f32 0.0, %v6681
      %v6683 = vpop.f32.mrf.mxu0
      %6684 = vmatprep.mubr.f32.mxu0 0.0
      %6685 = vmatmul.mubr.f32.gmra.mxu0 %v6471
      %v6686 = vpop.f32.mrf.mxu0
      %v6687 = vadd.f32 0.0, %v6686
      %v6688 = vpop.f32.mrf.mxu0
      %6689 = vmatprep.mubr.f32.mxu0 0.0
      %6690 = vmatmul.mubr.f32.gmra.mxu0 %v6474
      %v6691 = vpop.f32.mrf.mxu0
      %v6692 = vadd.f32 0.0, %v6691
      %v6693 = vpop.f32.mrf.mxu0
      %6694 = vmatprep.mubr.f32.mxu0 0.0
      %6695 = vmatmul.mubr.f32.gmra.mxu0 %v6477
      %v6696 = vpop.f32.mrf.mxu0
      %v6697 = vadd.f32 0.0, %v6696
      %v6698 = vpop.f32.mrf.mxu0
      %6699 = vmatprep.mubr.f32.mxu0 0.0
      %6700 = vmatmul.mubr.f32.gmra.mxu0 %v6480
      %v6701 = vpop.f32.mrf.mxu0
      %v6702 = vadd.f32 0.0, %v6701
      %v6703 = vpop.f32.mrf.mxu0
      %6704 = vmatprep.mubr.f32.mxu0 0.0
      %6705 = vmatmul.mubr.f32.gmra.mxu0 %v6483
      %v6706 = vpop.f32.mrf.mxu0
      %v6707 = vadd.f32 0.0, %v6706
      %v6708 = vpop.f32.mrf.mxu0
      %6709 = vdwg.mxu0
      %v6710 = vadd.f32 %v6322, %v6552
      %v6711 = vadd.f32 %v6323, %v6557
      %v6712 = vadd.f32 %v6324, %v6562
      %v6713 = vadd.f32 %v6325, %v6567
      %v6714 = vadd.f32 %v6326, %v6572
      %v6715 = vadd.f32 %v6327, %v6577
      %v6716 = vadd.f32 %v6328, %v6582
      %v6717 = vadd.f32 %v6329, %v6587
      %v6718 = vadd.f32 %v6330, %v6592
      %v6719 = vadd.f32 %v6331, %v6597
      %v6720 = vadd.f32 %v6332, %v6602
      %v6721 = vadd.f32 %v6333, %v6607
      %v6722 = vadd.f32 %v6334, %v6612
      %v6723 = vadd.f32 %v6335, %v6617
      %v6724 = vadd.f32 %v6336, %v6622
      %v6725 = vadd.f32 %v6337, %v6627
      %v6726 = vadd.f32 %v6338, %v6632
      %v6727 = vadd.f32 %v6339, %v6637
      %v6728 = vadd.f32 %v6340, %v6642
      %v6729 = vadd.f32 %v6341, %v6647
      %v6730 = vadd.f32 %v6342, %v6652
      %v6731 = vadd.f32 %v6343, %v6657
      %v6732 = vadd.f32 %v6344, %v6662
      %v6733 = vadd.f32 %v6345, %v6667
      %v6734 = vadd.f32 %v6346, %v6672
      %v6735 = vadd.f32 %v6347, %v6677
      %v6736 = vadd.f32 %v6348, %v6682
      %v6737 = vadd.f32 %v6349, %v6687
      %v6738 = vadd.f32 %v6350, %v6692
      %v6739 = vadd.f32 %v6351, %v6697
      %v6740 = vadd.f32 %v6352, %v6702
      %v6741 = vadd.f32 %v6353, %v6707
      %v6742 = vld [vmem:[%s6354 + $0x1] sm:$0xff]
      %v6743 = vld [vmem:[%s6354 + $0x9] sm:$0xff]
      %v6744 = vld [vmem:[%s6354 + $0x19] sm:$0xff]
      %v6745 = vld [vmem:[%s6354 + $0x21] sm:$0xff]
      %v6746 = vld [vmem:[%s6354 + $0x31] sm:$0xff]
      %v6747 = vld [vmem:[%s6354 + $0x39] sm:$0xff]
      %v6748 = vld [vmem:[%s6354 + $0x49] sm:$0xff]
      %v6749 = vld [vmem:[%s6354 + $0x51] sm:$0xff]
      %v6750 = vld [vmem:[%s6354 + $0x61] sm:$0xff]
      %v6751 = vld [vmem:[%s6354 + $0x69] sm:$0xff]
      %v6752 = vld [vmem:[%s6354 + $0x79] sm:$0xff]
      %v6753 = vld [vmem:[%s6354 + $0x81] sm:$0xff]
      %v6754 = vld [vmem:[%s6354 + $0x91] sm:$0xff]
      %v6755 = vld [vmem:[%s6354 + $0x99] sm:$0xff]
      %v6756 = vld [vmem:[%s6354 + $0xa9] sm:$0xff]
      %v6757 = vld [vmem:[%s6354 + $0xb1] sm:$0xff]
      %v6758 = vld [vmem:[%s6354 + $0xc1] sm:$0xff]
      %v6759 = vld [vmem:[%s6354 + $0xc9] sm:$0xff]
      %v6760 = vld [vmem:[%s6354 + $0xd9] sm:$0xff]
      %v6761 = vld [vmem:[%s6354 + $0xe1] sm:$0xff]
      %v6762 = vld [vmem:[%s6354 + $0xf1] sm:$0xff]
      %v6763 = vld [vmem:[%s6354 + $0xf9] sm:$0xff]
      %v6764 = vld [vmem:[%s6354 + $0x109] sm:$0xff]
      %v6765 = vld [vmem:[%s6354 + $0x111] sm:$0xff]
      %v6766 = vld [vmem:[%s6354 + $0x121] sm:$0xff]
      %v6767 = vld [vmem:[%s6354 + $0x129] sm:$0xff]
      %v6768 = vld [vmem:[%s6354 + $0x139] sm:$0xff]
      %v6769 = vld [vmem:[%s6354 + $0x141] sm:$0xff]
      %v6770 = vld [vmem:[%s6354 + $0x151] sm:$0xff]
      %v6771 = vld [vmem:[%s6354 + $0x159] sm:$0xff]
      %v6772 = vld [vmem:[%s6354 + $0x169] sm:$0xff]
      %v6773 = vld [vmem:[%s6354 + $0x171] sm:$0xff]
      %s6774 = scalar_lea.vmem %s5, 56
      %v6775 = vld [vmem:[%s6774] sm:$0xff]
      %v6777 = vsel %vm4019, %v6742, 0
      %v6780 = vsel %vm4019, %v6743, 0
      %v6783 = vsel %vm4019, %v6744, 0
      %v6786 = vsel %vm4019, %v6745, 0
      %v6789 = vsel %vm4019, %v6746, 0
      %v6792 = vsel %vm4019, %v6747, 0
      %v6795 = vsel %vm4019, %v6748, 0
      %v6798 = vsel %vm4019, %v6749, 0
      %v6801 = vsel %vm4019, %v6750, 0
      %v6804 = vsel %vm4019, %v6751, 0
      %v6807 = vsel %vm4019, %v6752, 0
      %v6810 = vsel %vm4019, %v6753, 0
      %v6813 = vsel %vm4019, %v6754, 0
      %v6816 = vsel %vm4019, %v6755, 0
      %v6819 = vsel %vm4019, %v6756, 0
      %v6822 = vsel %vm4019, %v6757, 0
      %v6825 = vsel %vm4019, %v6758, 0
      %v6828 = vsel %vm4019, %v6759, 0
      %v6831 = vsel %vm4019, %v6760, 0
      %v6834 = vsel %vm4019, %v6761, 0
      %v6837 = vsel %vm4019, %v6762, 0
      %v6840 = vsel %vm4019, %v6763, 0
      %v6843 = vsel %vm4019, %v6764, 0
      %v6846 = vsel %vm4019, %v6765, 0
      %v6849 = vsel %vm4019, %v6766, 0
      %v6852 = vsel %vm4019, %v6767, 0
      %v6855 = vsel %vm4019, %v6768, 0
      %v6858 = vsel %vm4019, %v6769, 0
      %v6861 = vsel %vm4019, %v6770, 0
      %v6864 = vsel %vm4019, %v6771, 0
      %v6867 = vsel %vm4019, %v6772, 0
      %v6870 = vsel %vm4019, %v6773, 0
      %6872 = vmatprep.subr.mxu0 0.0
      %6873 = vmatpush1.msra.mxu0 0.0
      %6874 = vmatprep.subr.mxu0 0.0
      %6875 = vmatpush1.msra.mxu0 0.0
      %6876 = vmatprep.subr.mxu0 0.0
      %6877 = vmatpush1.msra.mxu0 0.0
      %6878 = vmatprep.subr.mxu0 0.0
      %6879 = vmatpush1.msra.mxu0 0.0
      %6880 = vmatprep.subr.mxu0 0.0
      %6881 = vmatpush1.msra.mxu0 0.0
      %6882 = vmatprep.subr.mxu0 0.0
      %6883 = vmatpush1.msra.mxu0 0.0
      %6884 = vmatprep.subr.mxu0 0.0
      %6885 = vmatpush1.msra.mxu0 0.0
      %6886 = vmatprep.subr.mxu0 0.0
      %6887 = vmatpush1.msra.mxu0 0.0
      %6888 = vmatprep.subr.mxu0 0.0
      %6889 = vmatpush1.msra.mxu0 0.0
      %6890 = vmatprep.subr.mxu0 0.0
      %6891 = vmatpush1.msra.mxu0 0.0
      %6892 = vmatprep.subr.mxu0 0.0
      %6893 = vmatpush1.msra.mxu0 0.0
      %6894 = vmatprep.subr.mxu0 0.0
      %6895 = vmatpush1.msra.mxu0 0.0
      %6896 = vmatprep.subr.mxu0 0.0
      %6897 = vmatpush1.msra.mxu0 0.0
      %6898 = vmatprep.subr.mxu0 0.0
      %6899 = vmatpush1.msra.mxu0 0.0
      %6900 = vmatprep.subr.mxu0 0.0
      %6901 = vmatpush1.msra.mxu0 0.0
      %6902 = vmatprep.subr.mxu0 0.0
      %6903 = vmatpush1.msra.mxu0 %v6775
      %6904 = vmatprep.subr.mxu0 0.0
      %6905 = vmatpush2.msra.mxu0 0.0
      %6906 = vmatprep.subr.mxu0 0.0
      %6907 = vmatpush2.msra.mxu0 0.0
      %6908 = vmatprep.subr.mxu0 0.0
      %6909 = vmatpush2.msra.mxu0 0.0
      %6910 = vmatprep.subr.mxu0 0.0
      %6911 = vmatpush2.msra.mxu0 0.0
      %6912 = vmatprep.subr.mxu0 0.0
      %6913 = vmatpush2.msra.mxu0 0.0
      %6914 = vmatprep.subr.mxu0 0.0
      %6915 = vmatpush2.msra.mxu0 0.0
      %6916 = vmatprep.subr.mxu0 0.0
      %6917 = vmatpush2.msra.mxu0 0.0
      %6918 = vmatprep.subr.mxu0 0.0
      %6919 = vmatpush2.msra.mxu0 0.0
      %6920 = vmatprep.subr.mxu0 0.0
      %6921 = vmatpush2.msra.mxu0 0.0
      %6922 = vmatprep.subr.mxu0 0.0
      %6923 = vmatpush2.msra.mxu0 0.0
      %6924 = vmatprep.subr.mxu0 0.0
      %6925 = vmatpush2.msra.mxu0 0.0
      %6926 = vmatprep.subr.mxu0 0.0
      %6927 = vmatpush2.msra.mxu0 0.0
      %6928 = vmatprep.subr.mxu0 0.0
      %6929 = vmatpush2.msra.mxu0 0.0
      %6930 = vmatprep.subr.mxu0 0.0
      %6931 = vmatpush2.msra.mxu0 0.0
      %6932 = vmatprep.subr.mxu0 0.0
      %6933 = vmatpush2.msra.mxu0 0.0
      %6934 = vmatprep.subr.mxu0 0.0
      %6935 = vmatpush2.msra.mxu0 0.0
      %6936 = vmatprep.mubr.f32.mxu0 0.0
      %6937 = vmatmul.mubr.f32.gmra.mxu0 %v6777
      %v6938 = vpop.f32.mrf.mxu0
      %v6939 = vadd.f32 0.0, %v6938
      %v6940 = vpop.f32.mrf.mxu0
      %6941 = vmatprep.mubr.f32.mxu0 0.0
      %6942 = vmatmul.mubr.f32.gmra.mxu0 %v6780
      %v6943 = vpop.f32.mrf.mxu0
      %v6944 = vadd.f32 0.0, %v6943
      %v6945 = vpop.f32.mrf.mxu0
      %6946 = vmatprep.mubr.f32.mxu0 0.0
      %6947 = vmatmul.mubr.f32.gmra.mxu0 %v6783
      %v6948 = vpop.f32.mrf.mxu0
      %v6949 = vadd.f32 0.0, %v6948
      %v6950 = vpop.f32.mrf.mxu0
      %6951 = vmatprep.mubr.f32.mxu0 0.0
      %6952 = vmatmul.mubr.f32.gmra.mxu0 %v6786
      %v6953 = vpop.f32.mrf.mxu0
      %v6954 = vadd.f32 0.0, %v6953
      %v6955 = vpop.f32.mrf.mxu0
      %6956 = vmatprep.mubr.f32.mxu0 0.0
      %6957 = vmatmul.mubr.f32.gmra.mxu0 %v6789
      %v6958 = vpop.f32.mrf.mxu0
      %v6959 = vadd.f32 0.0, %v6958
      %v6960 = vpop.f32.mrf.mxu0
      %6961 = vmatprep.mubr.f32.mxu0 0.0
      %6962 = vmatmul.mubr.f32.gmra.mxu0 %v6792
      %v6963 = vpop.f32.mrf.mxu0
      %v6964 = vadd.f32 0.0, %v6963
      %v6965 = vpop.f32.mrf.mxu0
      %6966 = vmatprep.mubr.f32.mxu0 0.0
      %6967 = vmatmul.mubr.f32.gmra.mxu0 %v6795
      %v6968 = vpop.f32.mrf.mxu0
      %v6969 = vadd.f32 0.0, %v6968
      %v6970 = vpop.f32.mrf.mxu0
      %6971 = vmatprep.mubr.f32.mxu0 0.0
      %6972 = vmatmul.mubr.f32.gmra.mxu0 %v6798
      %v6973 = vpop.f32.mrf.mxu0
      %v6974 = vadd.f32 0.0, %v6973
      %v6975 = vpop.f32.mrf.mxu0
      %6976 = vmatprep.mubr.f32.mxu0 0.0
      %6977 = vmatmul.mubr.f32.gmra.mxu0 %v6801
      %v6978 = vpop.f32.mrf.mxu0
      %v6979 = vadd.f32 0.0, %v6978
      %v6980 = vpop.f32.mrf.mxu0
      %6981 = vmatprep.mubr.f32.mxu0 0.0
      %6982 = vmatmul.mubr.f32.gmra.mxu0 %v6804
      %v6983 = vpop.f32.mrf.mxu0
      %v6984 = vadd.f32 0.0, %v6983
      %v6985 = vpop.f32.mrf.mxu0
      %6986 = vmatprep.mubr.f32.mxu0 0.0
      %6987 = vmatmul.mubr.f32.gmra.mxu0 %v6807
      %v6988 = vpop.f32.mrf.mxu0
      %v6989 = vadd.f32 0.0, %v6988
      %v6990 = vpop.f32.mrf.mxu0
      %6991 = vmatprep.mubr.f32.mxu0 0.0
      %6992 = vmatmul.mubr.f32.gmra.mxu0 %v6810
      %v6993 = vpop.f32.mrf.mxu0
      %v6994 = vadd.f32 0.0, %v6993
      %v6995 = vpop.f32.mrf.mxu0
      %6996 = vmatprep.mubr.f32.mxu0 0.0
      %6997 = vmatmul.mubr.f32.gmra.mxu0 %v6813
      %v6998 = vpop.f32.mrf.mxu0
      %v6999 = vadd.f32 0.0, %v6998
      %v7000 = vpop.f32.mrf.mxu0
      %7001 = vmatprep.mubr.f32.mxu0 0.0
      %7002 = vmatmul.mubr.f32.gmra.mxu0 %v6816
      %v7003 = vpop.f32.mrf.mxu0
      %v7004 = vadd.f32 0.0, %v7003
      %v7005 = vpop.f32.mrf.mxu0
      %7006 = vmatprep.mubr.f32.mxu0 0.0
      %7007 = vmatmul.mubr.f32.gmra.mxu0 %v6819
      %v7008 = vpop.f32.mrf.mxu0
      %v7009 = vadd.f32 0.0, %v7008
      %v7010 = vpop.f32.mrf.mxu0
      %7011 = vmatprep.mubr.f32.mxu0 0.0
      %7012 = vmatmul.mubr.f32.gmra.mxu0 %v6822
      %v7013 = vpop.f32.mrf.mxu0
      %v7014 = vadd.f32 0.0, %v7013
      %v7015 = vpop.f32.mrf.mxu0
      %7016 = vmatprep.mubr.f32.mxu0 0.0
      %7017 = vmatmul.mubr.f32.gmra.mxu0 %v6825
      %v7018 = vpop.f32.mrf.mxu0
      %v7019 = vadd.f32 0.0, %v7018
      %v7020 = vpop.f32.mrf.mxu0
      %7021 = vmatprep.mubr.f32.mxu0 0.0
      %7022 = vmatmul.mubr.f32.gmra.mxu0 %v6828
      %v7023 = vpop.f32.mrf.mxu0
      %v7024 = vadd.f32 0.0, %v7023
      %v7025 = vpop.f32.mrf.mxu0
      %7026 = vmatprep.mubr.f32.mxu0 0.0
      %7027 = vmatmul.mubr.f32.gmra.mxu0 %v6831
      %v7028 = vpop.f32.mrf.mxu0
      %v7029 = vadd.f32 0.0, %v7028
      %v7030 = vpop.f32.mrf.mxu0
      %7031 = vmatprep.mubr.f32.mxu0 0.0
      %7032 = vmatmul.mubr.f32.gmra.mxu0 %v6834
      %v7033 = vpop.f32.mrf.mxu0
      %v7034 = vadd.f32 0.0, %v7033
      %v7035 = vpop.f32.mrf.mxu0
      %7036 = vmatprep.mubr.f32.mxu0 0.0
      %7037 = vmatmul.mubr.f32.gmra.mxu0 %v6837
      %v7038 = vpop.f32.mrf.mxu0
      %v7039 = vadd.f32 0.0, %v7038
      %v7040 = vpop.f32.mrf.mxu0
      %7041 = vmatprep.mubr.f32.mxu0 0.0
      %7042 = vmatmul.mubr.f32.gmra.mxu0 %v6840
      %v7043 = vpop.f32.mrf.mxu0
      %v7044 = vadd.f32 0.0, %v7043
      %v7045 = vpop.f32.mrf.mxu0
      %7046 = vmatprep.mubr.f32.mxu0 0.0
      %7047 = vmatmul.mubr.f32.gmra.mxu0 %v6843
      %v7048 = vpop.f32.mrf.mxu0
      %v7049 = vadd.f32 0.0, %v7048
      %v7050 = vpop.f32.mrf.mxu0
      %7051 = vmatprep.mubr.f32.mxu0 0.0
      %7052 = vmatmul.mubr.f32.gmra.mxu0 %v6846
      %v7053 = vpop.f32.mrf.mxu0
      %v7054 = vadd.f32 0.0, %v7053
      %v7055 = vpop.f32.mrf.mxu0
      %7056 = vmatprep.mubr.f32.mxu0 0.0
      %7057 = vmatmul.mubr.f32.gmra.mxu0 %v6849
      %v7058 = vpop.f32.mrf.mxu0
      %v7059 = vadd.f32 0.0, %v7058
      %v7060 = vpop.f32.mrf.mxu0
      %7061 = vmatprep.mubr.f32.mxu0 0.0
      %7062 = vmatmul.mubr.f32.gmra.mxu0 %v6852
      %v7063 = vpop.f32.mrf.mxu0
      %v7064 = vadd.f32 0.0, %v7063
      %v7065 = vpop.f32.mrf.mxu0
      %7066 = vmatprep.mubr.f32.mxu0 0.0
      %7067 = vmatmul.mubr.f32.gmra.mxu0 %v6855
      %v7068 = vpop.f32.mrf.mxu0
      %v7069 = vadd.f32 0.0, %v7068
      %v7070 = vpop.f32.mrf.mxu0
      %7071 = vmatprep.mubr.f32.mxu0 0.0
      %7072 = vmatmul.mubr.f32.gmra.mxu0 %v6858
      %v7073 = vpop.f32.mrf.mxu0
      %v7074 = vadd.f32 0.0, %v7073
      %v7075 = vpop.f32.mrf.mxu0
      %7076 = vmatprep.mubr.f32.mxu0 0.0
      %7077 = vmatmul.mubr.f32.gmra.mxu0 %v6861
      %v7078 = vpop.f32.mrf.mxu0
      %v7079 = vadd.f32 0.0, %v7078
      %v7080 = vpop.f32.mrf.mxu0
      %7081 = vmatprep.mubr.f32.mxu0 0.0
      %7082 = vmatmul.mubr.f32.gmra.mxu0 %v6864
      %v7083 = vpop.f32.mrf.mxu0
      %v7084 = vadd.f32 0.0, %v7083
      %v7085 = vpop.f32.mrf.mxu0
      %7086 = vmatprep.mubr.f32.mxu0 0.0
      %7087 = vmatmul.mubr.f32.gmra.mxu0 %v6867
      %v7088 = vpop.f32.mrf.mxu0
      %v7089 = vadd.f32 0.0, %v7088
      %v7090 = vpop.f32.mrf.mxu0
      %7091 = vmatprep.mubr.f32.mxu0 0.0
      %7092 = vmatmul.mubr.f32.gmra.mxu0 %v6870
      %v7093 = vpop.f32.mrf.mxu0
      %v7094 = vadd.f32 0.0, %v7093
      %v7095 = vpop.f32.mrf.mxu0
      %7096 = vdwg.mxu0
      %v7097 = vadd.f32 %v6710, %v6939
      %v7098 = vadd.f32 %v6711, %v6944
      %v7099 = vadd.f32 %v6712, %v6949
      %v7100 = vadd.f32 %v6713, %v6954
      %v7101 = vadd.f32 %v6714, %v6959
      %v7102 = vadd.f32 %v6715, %v6964
      %v7103 = vadd.f32 %v6716, %v6969
      %v7104 = vadd.f32 %v6717, %v6974
      %v7105 = vadd.f32 %v6718, %v6979
      %v7106 = vadd.f32 %v6719, %v6984
      %v7107 = vadd.f32 %v6720, %v6989
      %v7108 = vadd.f32 %v6721, %v6994
      %v7109 = vadd.f32 %v6722, %v6999
      %v7110 = vadd.f32 %v6723, %v7004
      %v7111 = vadd.f32 %v6724, %v7009
      %v7112 = vadd.f32 %v6725, %v7014
      %v7113 = vadd.f32 %v6726, %v7019
      %v7114 = vadd.f32 %v6727, %v7024
      %v7115 = vadd.f32 %v6728, %v7029
      %v7116 = vadd.f32 %v6729, %v7034
      %v7117 = vadd.f32 %v6730, %v7039
      %v7118 = vadd.f32 %v6731, %v7044
      %v7119 = vadd.f32 %v6732, %v7049
      %v7120 = vadd.f32 %v6733, %v7054
      %v7121 = vadd.f32 %v6734, %v7059
      %v7122 = vadd.f32 %v6735, %v7064
      %v7123 = vadd.f32 %v6736, %v7069
      %v7124 = vadd.f32 %v6737, %v7074
      %v7125 = vadd.f32 %v6738, %v7079
      %v7126 = vadd.f32 %v6739, %v7084
      %v7127 = vadd.f32 %v6740, %v7089
      %v7128 = vadd.f32 %v6741, %v7094
      %v7129 = vld [vmem:[%s6354 + $0x2] sm:$0xff]
      %v7130 = vld [vmem:[%s6354 + $0xa] sm:$0xff]
      %v7131 = vld [vmem:[%s6354 + $0x1a] sm:$0xff]
      %v7132 = vld [vmem:[%s6354 + $0x22] sm:$0xff]
      %v7133 = vld [vmem:[%s6354 + $0x32] sm:$0xff]
      %v7134 = vld [vmem:[%s6354 + $0x3a] sm:$0xff]
      %v7135 = vld [vmem:[%s6354 + $0x4a] sm:$0xff]
      %v7136 = vld [vmem:[%s6354 + $0x52] sm:$0xff]
      %v7137 = vld [vmem:[%s6354 + $0x62] sm:$0xff]
      %v7138 = vld [vmem:[%s6354 + $0x6a] sm:$0xff]
      %v7139 = vld [vmem:[%s6354 + $0x7a] sm:$0xff]
      %v7140 = vld [vmem:[%s6354 + $0x82] sm:$0xff]
      %v7141 = vld [vmem:[%s6354 + $0x92] sm:$0xff]
      %v7142 = vld [vmem:[%s6354 + $0x9a] sm:$0xff]
      %v7143 = vld [vmem:[%s6354 + $0xaa] sm:$0xff]
      %v7144 = vld [vmem:[%s6354 + $0xb2] sm:$0xff]
      %v7145 = vld [vmem:[%s6354 + $0xc2] sm:$0xff]
      %v7146 = vld [vmem:[%s6354 + $0xca] sm:$0xff]
      %v7147 = vld [vmem:[%s6354 + $0xda] sm:$0xff]
      %v7148 = vld [vmem:[%s6354 + $0xe2] sm:$0xff]
      %v7149 = vld [vmem:[%s6354 + $0xf2] sm:$0xff]
      %v7150 = vld [vmem:[%s6354 + $0xfa] sm:$0xff]
      %v7151 = vld [vmem:[%s6354 + $0x10a] sm:$0xff]
      %v7152 = vld [vmem:[%s6354 + $0x112] sm:$0xff]
      %v7153 = vld [vmem:[%s6354 + $0x122] sm:$0xff]
      %v7154 = vld [vmem:[%s6354 + $0x12a] sm:$0xff]
      %v7155 = vld [vmem:[%s6354 + $0x13a] sm:$0xff]
      %v7156 = vld [vmem:[%s6354 + $0x142] sm:$0xff]
      %v7157 = vld [vmem:[%s6354 + $0x152] sm:$0xff]
      %v7158 = vld [vmem:[%s6354 + $0x15a] sm:$0xff]
      %v7159 = vld [vmem:[%s6354 + $0x16a] sm:$0xff]
      %v7160 = vld [vmem:[%s6354 + $0x172] sm:$0xff]
      %s7161 = scalar_lea.vmem %s5, 64
      %v7162 = vld [vmem:[%s7161] sm:$0xff]
      %v7164 = vsel %vm4019, %v7129, 0
      %v7167 = vsel %vm4019, %v7130, 0
      %v7170 = vsel %vm4019, %v7131, 0
      %v7173 = vsel %vm4019, %v7132, 0
      %v7176 = vsel %vm4019, %v7133, 0
      %v7179 = vsel %vm4019, %v7134, 0
      %v7182 = vsel %vm4019, %v7135, 0
      %v7185 = vsel %vm4019, %v7136, 0
      %v7188 = vsel %vm4019, %v7137, 0
      %v7191 = vsel %vm4019, %v7138, 0
      %v7194 = vsel %vm4019, %v7139, 0
      %v7197 = vsel %vm4019, %v7140, 0
      %v7200 = vsel %vm4019, %v7141, 0
      %v7203 = vsel %vm4019, %v7142, 0
      %v7206 = vsel %vm4019, %v7143, 0
      %v7209 = vsel %vm4019, %v7144, 0
      %v7212 = vsel %vm4019, %v7145, 0
      %v7215 = vsel %vm4019, %v7146, 0
      %v7218 = vsel %vm4019, %v7147, 0
      %v7221 = vsel %vm4019, %v7148, 0
      %v7224 = vsel %vm4019, %v7149, 0
      %v7227 = vsel %vm4019, %v7150, 0
      %v7230 = vsel %vm4019, %v7151, 0
      %v7233 = vsel %vm4019, %v7152, 0
      %v7236 = vsel %vm4019, %v7153, 0
      %v7239 = vsel %vm4019, %v7154, 0
      %v7242 = vsel %vm4019, %v7155, 0
      %v7245 = vsel %vm4019, %v7156, 0
      %v7248 = vsel %vm4019, %v7157, 0
      %v7251 = vsel %vm4019, %v7158, 0
      %v7254 = vsel %vm4019, %v7159, 0
      %v7257 = vsel %vm4019, %v7160, 0
      %7259 = vmatprep.subr.mxu0 0.0
      %7260 = vmatpush1.msra.mxu0 0.0
      %7261 = vmatprep.subr.mxu0 0.0
      %7262 = vmatpush1.msra.mxu0 0.0
      %7263 = vmatprep.subr.mxu0 0.0
      %7264 = vmatpush1.msra.mxu0 0.0
      %7265 = vmatprep.subr.mxu0 0.0
      %7266 = vmatpush1.msra.mxu0 0.0
      %7267 = vmatprep.subr.mxu0 0.0
      %7268 = vmatpush1.msra.mxu0 0.0
      %7269 = vmatprep.subr.mxu0 0.0
      %7270 = vmatpush1.msra.mxu0 0.0
      %7271 = vmatprep.subr.mxu0 0.0
      %7272 = vmatpush1.msra.mxu0 0.0
      %7273 = vmatprep.subr.mxu0 0.0
      %7274 = vmatpush1.msra.mxu0 0.0
      %7275 = vmatprep.subr.mxu0 0.0
      %7276 = vmatpush1.msra.mxu0 0.0
      %7277 = vmatprep.subr.mxu0 0.0
      %7278 = vmatpush1.msra.mxu0 0.0
      %7279 = vmatprep.subr.mxu0 0.0
      %7280 = vmatpush1.msra.mxu0 0.0
      %7281 = vmatprep.subr.mxu0 0.0
      %7282 = vmatpush1.msra.mxu0 0.0
      %7283 = vmatprep.subr.mxu0 0.0
      %7284 = vmatpush1.msra.mxu0 0.0
      %7285 = vmatprep.subr.mxu0 0.0
      %7286 = vmatpush1.msra.mxu0 0.0
      %7287 = vmatprep.subr.mxu0 0.0
      %7288 = vmatpush1.msra.mxu0 0.0
      %7289 = vmatprep.subr.mxu0 0.0
      %7290 = vmatpush1.msra.mxu0 %v7162
      %7291 = vmatprep.subr.mxu0 0.0
      %7292 = vmatpush2.msra.mxu0 0.0
      %7293 = vmatprep.subr.mxu0 0.0
      %7294 = vmatpush2.msra.mxu0 0.0
      %7295 = vmatprep.subr.mxu0 0.0
      %7296 = vmatpush2.msra.mxu0 0.0
      %7297 = vmatprep.subr.mxu0 0.0
      %7298 = vmatpush2.msra.mxu0 0.0
      %7299 = vmatprep.subr.mxu0 0.0
      %7300 = vmatpush2.msra.mxu0 0.0
      %7301 = vmatprep.subr.mxu0 0.0
      %7302 = vmatpush2.msra.mxu0 0.0
      %7303 = vmatprep.subr.mxu0 0.0
      %7304 = vmatpush2.msra.mxu0 0.0
      %7305 = vmatprep.subr.mxu0 0.0
      %7306 = vmatpush2.msra.mxu0 0.0
      %7307 = vmatprep.subr.mxu0 0.0
      %7308 = vmatpush2.msra.mxu0 0.0
      %7309 = vmatprep.subr.mxu0 0.0
      %7310 = vmatpush2.msra.mxu0 0.0
      %7311 = vmatprep.subr.mxu0 0.0
      %7312 = vmatpush2.msra.mxu0 0.0
      %7313 = vmatprep.subr.mxu0 0.0
      %7314 = vmatpush2.msra.mxu0 0.0
      %7315 = vmatprep.subr.mxu0 0.0
      %7316 = vmatpush2.msra.mxu0 0.0
      %7317 = vmatprep.subr.mxu0 0.0
      %7318 = vmatpush2.msra.mxu0 0.0
      %7319 = vmatprep.subr.mxu0 0.0
      %7320 = vmatpush2.msra.mxu0 0.0
      %7321 = vmatprep.subr.mxu0 0.0
      %7322 = vmatpush2.msra.mxu0 0.0
      %7323 = vmatprep.mubr.f32.mxu0 0.0
      %7324 = vmatmul.mubr.f32.gmra.mxu0 %v7164
      %v7325 = vpop.f32.mrf.mxu0
      %v7326 = vadd.f32 0.0, %v7325
      %v7327 = vpop.f32.mrf.mxu0
      %7328 = vmatprep.mubr.f32.mxu0 0.0
      %7329 = vmatmul.mubr.f32.gmra.mxu0 %v7167
      %v7330 = vpop.f32.mrf.mxu0
      %v7331 = vadd.f32 0.0, %v7330
      %v7332 = vpop.f32.mrf.mxu0
      %7333 = vmatprep.mubr.f32.mxu0 0.0
      %7334 = vmatmul.mubr.f32.gmra.mxu0 %v7170
      %v7335 = vpop.f32.mrf.mxu0
      %v7336 = vadd.f32 0.0, %v7335
      %v7337 = vpop.f32.mrf.mxu0
      %7338 = vmatprep.mubr.f32.mxu0 0.0
      %7339 = vmatmul.mubr.f32.gmra.mxu0 %v7173
      %v7340 = vpop.f32.mrf.mxu0
      %v7341 = vadd.f32 0.0, %v7340
      %v7342 = vpop.f32.mrf.mxu0
      %7343 = vmatprep.mubr.f32.mxu0 0.0
      %7344 = vmatmul.mubr.f32.gmra.mxu0 %v7176
      %v7345 = vpop.f32.mrf.mxu0
      %v7346 = vadd.f32 0.0, %v7345
      %v7347 = vpop.f32.mrf.mxu0
      %7348 = vmatprep.mubr.f32.mxu0 0.0
      %7349 = vmatmul.mubr.f32.gmra.mxu0 %v7179
      %v7350 = vpop.f32.mrf.mxu0
      %v7351 = vadd.f32 0.0, %v7350
      %v7352 = vpop.f32.mrf.mxu0
      %7353 = vmatprep.mubr.f32.mxu0 0.0
      %7354 = vmatmul.mubr.f32.gmra.mxu0 %v7182
      %v7355 = vpop.f32.mrf.mxu0
      %v7356 = vadd.f32 0.0, %v7355
      %v7357 = vpop.f32.mrf.mxu0
      %7358 = vmatprep.mubr.f32.mxu0 0.0
      %7359 = vmatmul.mubr.f32.gmra.mxu0 %v7185
      %v7360 = vpop.f32.mrf.mxu0
      %v7361 = vadd.f32 0.0, %v7360
      %v7362 = vpop.f32.mrf.mxu0
      %7363 = vmatprep.mubr.f32.mxu0 0.0
      %7364 = vmatmul.mubr.f32.gmra.mxu0 %v7188
      %v7365 = vpop.f32.mrf.mxu0
      %v7366 = vadd.f32 0.0, %v7365
      %v7367 = vpop.f32.mrf.mxu0
      %7368 = vmatprep.mubr.f32.mxu0 0.0
      %7369 = vmatmul.mubr.f32.gmra.mxu0 %v7191
      %v7370 = vpop.f32.mrf.mxu0
      %v7371 = vadd.f32 0.0, %v7370
      %v7372 = vpop.f32.mrf.mxu0
      %7373 = vmatprep.mubr.f32.mxu0 0.0
      %7374 = vmatmul.mubr.f32.gmra.mxu0 %v7194
      %v7375 = vpop.f32.mrf.mxu0
      %v7376 = vadd.f32 0.0, %v7375
      %v7377 = vpop.f32.mrf.mxu0
      %7378 = vmatprep.mubr.f32.mxu0 0.0
      %7379 = vmatmul.mubr.f32.gmra.mxu0 %v7197
      %v7380 = vpop.f32.mrf.mxu0
      %v7381 = vadd.f32 0.0, %v7380
      %v7382 = vpop.f32.mrf.mxu0
      %7383 = vmatprep.mubr.f32.mxu0 0.0
      %7384 = vmatmul.mubr.f32.gmra.mxu0 %v7200
      %v7385 = vpop.f32.mrf.mxu0
      %v7386 = vadd.f32 0.0, %v7385
      %v7387 = vpop.f32.mrf.mxu0
      %7388 = vmatprep.mubr.f32.mxu0 0.0
      %7389 = vmatmul.mubr.f32.gmra.mxu0 %v7203
      %v7390 = vpop.f32.mrf.mxu0
      %v7391 = vadd.f32 0.0, %v7390
      %v7392 = vpop.f32.mrf.mxu0
      %7393 = vmatprep.mubr.f32.mxu0 0.0
      %7394 = vmatmul.mubr.f32.gmra.mxu0 %v7206
      %v7395 = vpop.f32.mrf.mxu0
      %v7396 = vadd.f32 0.0, %v7395
      %v7397 = vpop.f32.mrf.mxu0
      %7398 = vmatprep.mubr.f32.mxu0 0.0
      %7399 = vmatmul.mubr.f32.gmra.mxu0 %v7209
      %v7400 = vpop.f32.mrf.mxu0
      %v7401 = vadd.f32 0.0, %v7400
      %v7402 = vpop.f32.mrf.mxu0
      %7403 = vmatprep.mubr.f32.mxu0 0.0
      %7404 = vmatmul.mubr.f32.gmra.mxu0 %v7212
      %v7405 = vpop.f32.mrf.mxu0
      %v7406 = vadd.f32 0.0, %v7405
      %v7407 = vpop.f32.mrf.mxu0
      %7408 = vmatprep.mubr.f32.mxu0 0.0
      %7409 = vmatmul.mubr.f32.gmra.mxu0 %v7215
      %v7410 = vpop.f32.mrf.mxu0
      %v7411 = vadd.f32 0.0, %v7410
      %v7412 = vpop.f32.mrf.mxu0
      %7413 = vmatprep.mubr.f32.mxu0 0.0
      %7414 = vmatmul.mubr.f32.gmra.mxu0 %v7218
      %v7415 = vpop.f32.mrf.mxu0
      %v7416 = vadd.f32 0.0, %v7415
      %v7417 = vpop.f32.mrf.mxu0
      %7418 = vmatprep.mubr.f32.mxu0 0.0
      %7419 = vmatmul.mubr.f32.gmra.mxu0 %v7221
      %v7420 = vpop.f32.mrf.mxu0
      %v7421 = vadd.f32 0.0, %v7420
      %v7422 = vpop.f32.mrf.mxu0
      %7423 = vmatprep.mubr.f32.mxu0 0.0
      %7424 = vmatmul.mubr.f32.gmra.mxu0 %v7224
      %v7425 = vpop.f32.mrf.mxu0
      %v7426 = vadd.f32 0.0, %v7425
      %v7427 = vpop.f32.mrf.mxu0
      %7428 = vmatprep.mubr.f32.mxu0 0.0
      %7429 = vmatmul.mubr.f32.gmra.mxu0 %v7227
      %v7430 = vpop.f32.mrf.mxu0
      %v7431 = vadd.f32 0.0, %v7430
      %v7432 = vpop.f32.mrf.mxu0
      %7433 = vmatprep.mubr.f32.mxu0 0.0
      %7434 = vmatmul.mubr.f32.gmra.mxu0 %v7230
      %v7435 = vpop.f32.mrf.mxu0
      %v7436 = vadd.f32 0.0, %v7435
      %v7437 = vpop.f32.mrf.mxu0
      %7438 = vmatprep.mubr.f32.mxu0 0.0
      %7439 = vmatmul.mubr.f32.gmra.mxu0 %v7233
      %v7440 = vpop.f32.mrf.mxu0
      %v7441 = vadd.f32 0.0, %v7440
      %v7442 = vpop.f32.mrf.mxu0
      %7443 = vmatprep.mubr.f32.mxu0 0.0
      %7444 = vmatmul.mubr.f32.gmra.mxu0 %v7236
      %v7445 = vpop.f32.mrf.mxu0
      %v7446 = vadd.f32 0.0, %v7445
      %v7447 = vpop.f32.mrf.mxu0
      %7448 = vmatprep.mubr.f32.mxu0 0.0
      %7449 = vmatmul.mubr.f32.gmra.mxu0 %v7239
      %v7450 = vpop.f32.mrf.mxu0
      %v7451 = vadd.f32 0.0, %v7450
      %v7452 = vpop.f32.mrf.mxu0
      %7453 = vmatprep.mubr.f32.mxu0 0.0
      %7454 = vmatmul.mubr.f32.gmra.mxu0 %v7242
      %v7455 = vpop.f32.mrf.mxu0
      %v7456 = vadd.f32 0.0, %v7455
      %v7457 = vpop.f32.mrf.mxu0
      %7458 = vmatprep.mubr.f32.mxu0 0.0
      %7459 = vmatmul.mubr.f32.gmra.mxu0 %v7245
      %v7460 = vpop.f32.mrf.mxu0
      %v7461 = vadd.f32 0.0, %v7460
      %v7462 = vpop.f32.mrf.mxu0
      %7463 = vmatprep.mubr.f32.mxu0 0.0
      %7464 = vmatmul.mubr.f32.gmra.mxu0 %v7248
      %v7465 = vpop.f32.mrf.mxu0
      %v7466 = vadd.f32 0.0, %v7465
      %v7467 = vpop.f32.mrf.mxu0
      %7468 = vmatprep.mubr.f32.mxu0 0.0
      %7469 = vmatmul.mubr.f32.gmra.mxu0 %v7251
      %v7470 = vpop.f32.mrf.mxu0
      %v7471 = vadd.f32 0.0, %v7470
      %v7472 = vpop.f32.mrf.mxu0
      %7473 = vmatprep.mubr.f32.mxu0 0.0
      %7474 = vmatmul.mubr.f32.gmra.mxu0 %v7254
      %v7475 = vpop.f32.mrf.mxu0
      %v7476 = vadd.f32 0.0, %v7475
      %v7477 = vpop.f32.mrf.mxu0
      %7478 = vmatprep.mubr.f32.mxu0 0.0
      %7479 = vmatmul.mubr.f32.gmra.mxu0 %v7257
      %v7480 = vpop.f32.mrf.mxu0
      %v7481 = vadd.f32 0.0, %v7480
      %v7482 = vpop.f32.mrf.mxu0
      %7483 = vdwg.mxu0
      %v7484 = vadd.f32 %v7097, %v7326
      %v7485 = vadd.f32 %v7098, %v7331
      %v7486 = vadd.f32 %v7099, %v7336
      %v7487 = vadd.f32 %v7100, %v7341
      %v7488 = vadd.f32 %v7101, %v7346
      %v7489 = vadd.f32 %v7102, %v7351
      %v7490 = vadd.f32 %v7103, %v7356
      %v7491 = vadd.f32 %v7104, %v7361
      %v7492 = vadd.f32 %v7105, %v7366
      %v7493 = vadd.f32 %v7106, %v7371
      %v7494 = vadd.f32 %v7107, %v7376
      %v7495 = vadd.f32 %v7108, %v7381
      %v7496 = vadd.f32 %v7109, %v7386
      %v7497 = vadd.f32 %v7110, %v7391
      %v7498 = vadd.f32 %v7111, %v7396
      %v7499 = vadd.f32 %v7112, %v7401
      %v7500 = vadd.f32 %v7113, %v7406
      %v7501 = vadd.f32 %v7114, %v7411
      %v7502 = vadd.f32 %v7115, %v7416
      %v7503 = vadd.f32 %v7116, %v7421
      %v7504 = vadd.f32 %v7117, %v7426
      %v7505 = vadd.f32 %v7118, %v7431
      %v7506 = vadd.f32 %v7119, %v7436
      %v7507 = vadd.f32 %v7120, %v7441
      %v7508 = vadd.f32 %v7121, %v7446
      %v7509 = vadd.f32 %v7122, %v7451
      %v7510 = vadd.f32 %v7123, %v7456
      %v7511 = vadd.f32 %v7124, %v7461
      %v7512 = vadd.f32 %v7125, %v7466
      %v7513 = vadd.f32 %v7126, %v7471
      %v7514 = vadd.f32 %v7127, %v7476
      %v7515 = vadd.f32 %v7128, %v7481
      %v7516 = vld [vmem:[%s421 + $0x1] sm:$0xff]
      %v7517 = vld [vmem:[%s421 + $0x9] sm:$0xff]
      %v7518 = vld [vmem:[%s421 + $0x19] sm:$0xff]
      %v7519 = vld [vmem:[%s421 + $0x21] sm:$0xff]
      %v7520 = vld [vmem:[%s421 + $0x31] sm:$0xff]
      %v7521 = vld [vmem:[%s421 + $0x39] sm:$0xff]
      %v7522 = vld [vmem:[%s421 + $0x49] sm:$0xff]
      %v7523 = vld [vmem:[%s421 + $0x51] sm:$0xff]
      %v7524 = vld [vmem:[%s421 + $0x61] sm:$0xff]
      %v7525 = vld [vmem:[%s421 + $0x69] sm:$0xff]
      %v7526 = vld [vmem:[%s421 + $0x79] sm:$0xff]
      %v7527 = vld [vmem:[%s421 + $0x81] sm:$0xff]
      %v7528 = vld [vmem:[%s421 + $0x91] sm:$0xff]
      %v7529 = vld [vmem:[%s421 + $0x99] sm:$0xff]
      %v7530 = vld [vmem:[%s421 + $0xa9] sm:$0xff]
      %v7531 = vld [vmem:[%s421 + $0xb1] sm:$0xff]
      %v7532 = vld [vmem:[%s421 + $0xc1] sm:$0xff]
      %v7533 = vld [vmem:[%s421 + $0xc9] sm:$0xff]
      %v7534 = vld [vmem:[%s421 + $0xd9] sm:$0xff]
      %v7535 = vld [vmem:[%s421 + $0xe1] sm:$0xff]
      %v7536 = vld [vmem:[%s421 + $0xf1] sm:$0xff]
      %v7537 = vld [vmem:[%s421 + $0xf9] sm:$0xff]
      %v7538 = vld [vmem:[%s421 + $0x109] sm:$0xff]
      %v7539 = vld [vmem:[%s421 + $0x111] sm:$0xff]
      %v7540 = vld [vmem:[%s421 + $0x121] sm:$0xff]
      %v7541 = vld [vmem:[%s421 + $0x129] sm:$0xff]
      %v7542 = vld [vmem:[%s421 + $0x139] sm:$0xff]
      %v7543 = vld [vmem:[%s421 + $0x141] sm:$0xff]
      %v7544 = vld [vmem:[%s421 + $0x151] sm:$0xff]
      %v7545 = vld [vmem:[%s421 + $0x159] sm:$0xff]
      %v7546 = vld [vmem:[%s421 + $0x169] sm:$0xff]
      %v7547 = vld [vmem:[%s421 + $0x171] sm:$0xff]
      %v7548 = vld [vmem:[%s6] sm:$0xf]
      %v7550 = vsel %vm422, %v7516, 0
      %v7553 = vsel %vm422, %v7517, 0
      %v7556 = vsel %vm422, %v7518, 0
      %v7559 = vsel %vm422, %v7519, 0
      %v7562 = vsel %vm422, %v7520, 0
      %v7565 = vsel %vm422, %v7521, 0
      %v7568 = vsel %vm422, %v7522, 0
      %v7571 = vsel %vm422, %v7523, 0
      %v7574 = vsel %vm422, %v7524, 0
      %v7577 = vsel %vm422, %v7525, 0
      %v7580 = vsel %vm422, %v7526, 0
      %v7583 = vsel %vm422, %v7527, 0
      %v7586 = vsel %vm422, %v7528, 0
      %v7589 = vsel %vm422, %v7529, 0
      %v7592 = vsel %vm422, %v7530, 0
      %v7595 = vsel %vm422, %v7531, 0
      %v7598 = vsel %vm422, %v7532, 0
      %v7601 = vsel %vm422, %v7533, 0
      %v7604 = vsel %vm422, %v7534, 0
      %v7607 = vsel %vm422, %v7535, 0
      %v7610 = vsel %vm422, %v7536, 0
      %v7613 = vsel %vm422, %v7537, 0
      %v7616 = vsel %vm422, %v7538, 0
      %v7619 = vsel %vm422, %v7539, 0
      %v7622 = vsel %vm422, %v7540, 0
      %v7625 = vsel %vm422, %v7541, 0
      %v7628 = vsel %vm422, %v7542, 0
      %v7631 = vsel %vm422, %v7543, 0
      %v7634 = vsel %vm422, %v7544, 0
      %v7637 = vsel %vm422, %v7545, 0
      %v7640 = vsel %vm422, %v7546, 0
      %v7643 = vsel %vm422, %v7547, 0
      %v7646 = vsel %vm663, %v7548, 0
      %7648 = vmatprep.subr.mxu0 0.0
      %7649 = vmatpush1.msra.mxu0 0.0
      %7650 = vmatprep.subr.mxu0 0.0
      %7651 = vmatpush1.msra.mxu0 0.0
      %7652 = vmatprep.subr.mxu0 0.0
      %7653 = vmatpush1.msra.mxu0 0.0
      %7654 = vmatprep.subr.mxu0 0.0
      %7655 = vmatpush1.msra.mxu0 0.0
      %7656 = vmatprep.subr.mxu0 0.0
      %7657 = vmatpush1.msra.mxu0 0.0
      %7658 = vmatprep.subr.mxu0 0.0
      %7659 = vmatpush1.msra.mxu0 0.0
      %7660 = vmatprep.subr.mxu0 0.0
      %7661 = vmatpush1.msra.mxu0 0.0
      %7662 = vmatprep.subr.mxu0 0.0
      %7663 = vmatpush1.msra.mxu0 0.0
      %7664 = vmatprep.subr.mxu0 0.0
      %7665 = vmatpush1.msra.mxu0 0.0
      %7666 = vmatprep.subr.mxu0 0.0
      %7667 = vmatpush1.msra.mxu0 0.0
      %7668 = vmatprep.subr.mxu0 0.0
      %7669 = vmatpush1.msra.mxu0 0.0
      %7670 = vmatprep.subr.mxu0 0.0
      %7671 = vmatpush1.msra.mxu0 0.0
      %7672 = vmatprep.subr.mxu0 0.0
      %7673 = vmatpush1.msra.mxu0 0.0
      %7674 = vmatprep.subr.mxu0 0.0
      %7675 = vmatpush1.msra.mxu0 0.0
      %7676 = vmatprep.subr.mxu0 0.0
      %7677 = vmatpush1.msra.mxu0 0.0
      %7678 = vmatprep.subr.mxu0 0.0
      %7679 = vmatpush1.msra.mxu0 %v7646
      %7680 = vmatprep.subr.mxu0 0.0
      %7681 = vmatpush2.msra.mxu0 0.0
      %7682 = vmatprep.subr.mxu0 0.0
      %7683 = vmatpush2.msra.mxu0 0.0
      %7684 = vmatprep.subr.mxu0 0.0
      %7685 = vmatpush2.msra.mxu0 0.0
      %7686 = vmatprep.subr.mxu0 0.0
      %7687 = vmatpush2.msra.mxu0 0.0
      %7688 = vmatprep.subr.mxu0 0.0
      %7689 = vmatpush2.msra.mxu0 0.0
      %7690 = vmatprep.subr.mxu0 0.0
      %7691 = vmatpush2.msra.mxu0 0.0
      %7692 = vmatprep.subr.mxu0 0.0
      %7693 = vmatpush2.msra.mxu0 0.0
      %7694 = vmatprep.subr.mxu0 0.0
      %7695 = vmatpush2.msra.mxu0 0.0
      %7696 = vmatprep.subr.mxu0 0.0
      %7697 = vmatpush2.msra.mxu0 0.0
      %7698 = vmatprep.subr.mxu0 0.0
      %7699 = vmatpush2.msra.mxu0 0.0
      %7700 = vmatprep.subr.mxu0 0.0
      %7701 = vmatpush2.msra.mxu0 0.0
      %7702 = vmatprep.subr.mxu0 0.0
      %7703 = vmatpush2.msra.mxu0 0.0
      %7704 = vmatprep.subr.mxu0 0.0
      %7705 = vmatpush2.msra.mxu0 0.0
      %7706 = vmatprep.subr.mxu0 0.0
      %7707 = vmatpush2.msra.mxu0 0.0
      %7708 = vmatprep.subr.mxu0 0.0
      %7709 = vmatpush2.msra.mxu0 0.0
      %7710 = vmatprep.subr.mxu0 0.0
      %7711 = vmatpush2.msra.mxu0 0.0
      %7712 = vmatprep.mubr.f32.mxu0 0.0
      %7713 = vmatmul.mubr.f32.gmra.mxu0 %v7550
      %v7714 = vpop.f32.mrf.mxu0
      %v7715 = vadd.f32 %v7484, %v7714
      %v7716 = vpop.f32.mrf.mxu0
      %7717 = vmatprep.mubr.f32.mxu0 0.0
      %7718 = vmatmul.mubr.f32.gmra.mxu0 %v7553
      %v7719 = vpop.f32.mrf.mxu0
      %v7720 = vadd.f32 %v7485, %v7719
      %v7721 = vpop.f32.mrf.mxu0
      %7722 = vmatprep.mubr.f32.mxu0 0.0
      %7723 = vmatmul.mubr.f32.gmra.mxu0 %v7556
      %v7724 = vpop.f32.mrf.mxu0
      %v7725 = vadd.f32 %v7486, %v7724
      %v7726 = vpop.f32.mrf.mxu0
      %7727 = vmatprep.mubr.f32.mxu0 0.0
      %7728 = vmatmul.mubr.f32.gmra.mxu0 %v7559
      %v7729 = vpop.f32.mrf.mxu0
      %v7730 = vadd.f32 %v7487, %v7729
      %v7731 = vpop.f32.mrf.mxu0
      %7732 = vmatprep.mubr.f32.mxu0 0.0
      %7733 = vmatmul.mubr.f32.gmra.mxu0 %v7562
      %v7734 = vpop.f32.mrf.mxu0
      %v7735 = vadd.f32 %v7488, %v7734
      %v7736 = vpop.f32.mrf.mxu0
      %7737 = vmatprep.mubr.f32.mxu0 0.0
      %7738 = vmatmul.mubr.f32.gmra.mxu0 %v7565
      %v7739 = vpop.f32.mrf.mxu0
      %v7740 = vadd.f32 %v7489, %v7739
      %v7741 = vpop.f32.mrf.mxu0
      %7742 = vmatprep.mubr.f32.mxu0 0.0
      %7743 = vmatmul.mubr.f32.gmra.mxu0 %v7568
      %v7744 = vpop.f32.mrf.mxu0
      %v7745 = vadd.f32 %v7490, %v7744
      %v7746 = vpop.f32.mrf.mxu0
      %7747 = vmatprep.mubr.f32.mxu0 0.0
      %7748 = vmatmul.mubr.f32.gmra.mxu0 %v7571
      %v7749 = vpop.f32.mrf.mxu0
      %v7750 = vadd.f32 %v7491, %v7749
      %v7751 = vpop.f32.mrf.mxu0
      %7752 = vmatprep.mubr.f32.mxu0 0.0
      %7753 = vmatmul.mubr.f32.gmra.mxu0 %v7574
      %v7754 = vpop.f32.mrf.mxu0
      %v7755 = vadd.f32 %v7492, %v7754
      %v7756 = vpop.f32.mrf.mxu0
      %7757 = vmatprep.mubr.f32.mxu0 0.0
      %7758 = vmatmul.mubr.f32.gmra.mxu0 %v7577
      %v7759 = vpop.f32.mrf.mxu0
      %v7760 = vadd.f32 %v7493, %v7759
      %v7761 = vpop.f32.mrf.mxu0
      %7762 = vmatprep.mubr.f32.mxu0 0.0
      %7763 = vmatmul.mubr.f32.gmra.mxu0 %v7580
      %v7764 = vpop.f32.mrf.mxu0
      %v7765 = vadd.f32 %v7494, %v7764
      %v7766 = vpop.f32.mrf.mxu0
      %7767 = vmatprep.mubr.f32.mxu0 0.0
      %7768 = vmatmul.mubr.f32.gmra.mxu0 %v7583
      %v7769 = vpop.f32.mrf.mxu0
      %v7770 = vadd.f32 %v7495, %v7769
      %v7771 = vpop.f32.mrf.mxu0
      %7772 = vmatprep.mubr.f32.mxu0 0.0
      %7773 = vmatmul.mubr.f32.gmra.mxu0 %v7586
      %v7774 = vpop.f32.mrf.mxu0
      %v7775 = vadd.f32 %v7496, %v7774
      %v7776 = vpop.f32.mrf.mxu0
      %7777 = vmatprep.mubr.f32.mxu0 0.0
      %7778 = vmatmul.mubr.f32.gmra.mxu0 %v7589
      %v7779 = vpop.f32.mrf.mxu0
      %v7780 = vadd.f32 %v7497, %v7779
      %v7781 = vpop.f32.mrf.mxu0
      %7782 = vmatprep.mubr.f32.mxu0 0.0
      %7783 = vmatmul.mubr.f32.gmra.mxu0 %v7592
      %v7784 = vpop.f32.mrf.mxu0
      %v7785 = vadd.f32 %v7498, %v7784
      %v7786 = vpop.f32.mrf.mxu0
      %7787 = vmatprep.mubr.f32.mxu0 0.0
      %7788 = vmatmul.mubr.f32.gmra.mxu0 %v7595
      %v7789 = vpop.f32.mrf.mxu0
      %v7790 = vadd.f32 %v7499, %v7789
      %v7791 = vpop.f32.mrf.mxu0
      %7792 = vmatprep.mubr.f32.mxu0 0.0
      %7793 = vmatmul.mubr.f32.gmra.mxu0 %v7598
      %v7794 = vpop.f32.mrf.mxu0
      %v7795 = vadd.f32 %v7500, %v7794
      %v7796 = vpop.f32.mrf.mxu0
      %7797 = vmatprep.mubr.f32.mxu0 0.0
      %7798 = vmatmul.mubr.f32.gmra.mxu0 %v7601
      %v7799 = vpop.f32.mrf.mxu0
      %v7800 = vadd.f32 %v7501, %v7799
      %v7801 = vpop.f32.mrf.mxu0
      %7802 = vmatprep.mubr.f32.mxu0 0.0
      %7803 = vmatmul.mubr.f32.gmra.mxu0 %v7604
      %v7804 = vpop.f32.mrf.mxu0
      %v7805 = vadd.f32 %v7502, %v7804
      %v7806 = vpop.f32.mrf.mxu0
      %7807 = vmatprep.mubr.f32.mxu0 0.0
      %7808 = vmatmul.mubr.f32.gmra.mxu0 %v7607
      %v7809 = vpop.f32.mrf.mxu0
      %v7810 = vadd.f32 %v7503, %v7809
      %v7811 = vpop.f32.mrf.mxu0
      %7812 = vmatprep.mubr.f32.mxu0 0.0
      %7813 = vmatmul.mubr.f32.gmra.mxu0 %v7610
      %v7814 = vpop.f32.mrf.mxu0
      %v7815 = vadd.f32 %v7504, %v7814
      %v7816 = vpop.f32.mrf.mxu0
      %7817 = vmatprep.mubr.f32.mxu0 0.0
      %7818 = vmatmul.mubr.f32.gmra.mxu0 %v7613
      %v7819 = vpop.f32.mrf.mxu0
      %v7820 = vadd.f32 %v7505, %v7819
      %v7821 = vpop.f32.mrf.mxu0
      %7822 = vmatprep.mubr.f32.mxu0 0.0
      %7823 = vmatmul.mubr.f32.gmra.mxu0 %v7616
      %v7824 = vpop.f32.mrf.mxu0
      %v7825 = vadd.f32 %v7506, %v7824
      %v7826 = vpop.f32.mrf.mxu0
      %7827 = vmatprep.mubr.f32.mxu0 0.0
      %7828 = vmatmul.mubr.f32.gmra.mxu0 %v7619
      %v7829 = vpop.f32.mrf.mxu0
      %v7830 = vadd.f32 %v7507, %v7829
      %v7831 = vpop.f32.mrf.mxu0
      %7832 = vmatprep.mubr.f32.mxu0 0.0
      %7833 = vmatmul.mubr.f32.gmra.mxu0 %v7622
      %v7834 = vpop.f32.mrf.mxu0
      %v7835 = vadd.f32 %v7508, %v7834
      %v7836 = vpop.f32.mrf.mxu0
      %7837 = vmatprep.mubr.f32.mxu0 0.0
      %7838 = vmatmul.mubr.f32.gmra.mxu0 %v7625
      %v7839 = vpop.f32.mrf.mxu0
      %v7840 = vadd.f32 %v7509, %v7839
      %v7841 = vpop.f32.mrf.mxu0
      %7842 = vmatprep.mubr.f32.mxu0 0.0
      %7843 = vmatmul.mubr.f32.gmra.mxu0 %v7628
      %v7844 = vpop.f32.mrf.mxu0
      %v7845 = vadd.f32 %v7510, %v7844
      %v7846 = vpop.f32.mrf.mxu0
      %7847 = vmatprep.mubr.f32.mxu0 0.0
      %7848 = vmatmul.mubr.f32.gmra.mxu0 %v7631
      %v7849 = vpop.f32.mrf.mxu0
      %v7850 = vadd.f32 %v7511, %v7849
      %v7851 = vpop.f32.mrf.mxu0
      %7852 = vmatprep.mubr.f32.mxu0 0.0
      %7853 = vmatmul.mubr.f32.gmra.mxu0 %v7634
      %v7854 = vpop.f32.mrf.mxu0
      %v7855 = vadd.f32 %v7512, %v7854
      %v7856 = vpop.f32.mrf.mxu0
      %7857 = vmatprep.mubr.f32.mxu0 0.0
      %7858 = vmatmul.mubr.f32.gmra.mxu0 %v7637
      %v7859 = vpop.f32.mrf.mxu0
      %v7860 = vadd.f32 %v7513, %v7859
      %v7861 = vpop.f32.mrf.mxu0
      %7862 = vmatprep.mubr.f32.mxu0 0.0
      %7863 = vmatmul.mubr.f32.gmra.mxu0 %v7640
      %v7864 = vpop.f32.mrf.mxu0
      %v7865 = vadd.f32 %v7514, %v7864
      %v7866 = vpop.f32.mrf.mxu0
      %7867 = vmatprep.mubr.f32.mxu0 0.0
      %7868 = vmatmul.mubr.f32.gmra.mxu0 %v7643
      %v7869 = vpop.f32.mrf.mxu0
      %v7870 = vadd.f32 %v7515, %v7869
      %v7871 = vpop.f32.mrf.mxu0
      %7872 = vdwg.mxu0
      %7873 = vst.msk [vmem:[%s278] sm:$0xff] %vm4019, %v7715
      %7874 = vst.msk [vmem:[%s278 + $0x8] sm:$0xff] %vm4019, %v7720
      %7875 = vst.msk [vmem:[%s278 + $0x10] sm:$0xff] %vm4019, %v7725
      %7876 = vst.msk [vmem:[%s278 + $0x18] sm:$0xff] %vm4019, %v7730
      %7877 = vst.msk [vmem:[%s278 + $0x20] sm:$0xff] %vm4019, %v7735
      %7878 = vst.msk [vmem:[%s278 + $0x28] sm:$0xff] %vm4019, %v7740
      %7879 = vst.msk [vmem:[%s278 + $0x30] sm:$0xff] %vm4019, %v7745
      %7880 = vst.msk [vmem:[%s278 + $0x38] sm:$0xff] %vm4019, %v7750
      %7881 = vst.msk [vmem:[%s278 + $0x40] sm:$0xff] %vm4019, %v7755
      %7882 = vst.msk [vmem:[%s278 + $0x48] sm:$0xff] %vm4019, %v7760
      %7883 = vst.msk [vmem:[%s278 + $0x50] sm:$0xff] %vm4019, %v7765
      %7884 = vst.msk [vmem:[%s278 + $0x58] sm:$0xff] %vm4019, %v7770
      %7885 = vst.msk [vmem:[%s278 + $0x60] sm:$0xff] %vm4019, %v7775
      %7886 = vst.msk [vmem:[%s278 + $0x68] sm:$0xff] %vm4019, %v7780
      %7887 = vst.msk [vmem:[%s278 + $0x70] sm:$0xff] %vm4019, %v7785
      %7888 = vst.msk [vmem:[%s278 + $0x78] sm:$0xff] %vm4019, %v7790
      %7889 = vst.msk [vmem:[%s278 + $0x80] sm:$0xff] %vm4019, %v7795
      %7890 = vst.msk [vmem:[%s278 + $0x88] sm:$0xff] %vm4019, %v7800
      %7891 = vst.msk [vmem:[%s278 + $0x90] sm:$0xff] %vm4019, %v7805
      %7892 = vst.msk [vmem:[%s278 + $0x98] sm:$0xff] %vm4019, %v7810
      %7893 = vst.msk [vmem:[%s278 + $0xa0] sm:$0xff] %vm4019, %v7815
      %7894 = vst.msk [vmem:[%s278 + $0xa8] sm:$0xff] %vm4019, %v7820
      %7895 = vst.msk [vmem:[%s278 + $0xb0] sm:$0xff] %vm4019, %v7825
      %7896 = vst.msk [vmem:[%s278 + $0xb8] sm:$0xff] %vm4019, %v7830
      %7897 = vst.msk [vmem:[%s278 + $0xc0] sm:$0xff] %vm4019, %v7835
      %7898 = vst.msk [vmem:[%s278 + $0xc8] sm:$0xff] %vm4019, %v7840
      %7899 = vst.msk [vmem:[%s278 + $0xd0] sm:$0xff] %vm4019, %v7845
      %7900 = vst.msk [vmem:[%s278 + $0xd8] sm:$0xff] %vm4019, %v7850
      %7901 = vst.msk [vmem:[%s278 + $0xe0] sm:$0xff] %vm4019, %v7855
      %7902 = vst.msk [vmem:[%s278 + $0xe8] sm:$0xff] %vm4019, %v7860
      %7903 = vst.msk [vmem:[%s278 + $0xf0] sm:$0xff] %vm4019, %v7865
      %7904 = vst.msk [vmem:[%s278 + $0xf8] sm:$0xff] %vm4019, %v7870
      %p7905 = scmp.lt.s32.totalorder %s18, 1
      %s7906 = scalar_select %p7905, %s18, 1
      %s7907 = smul.addr %s7906, 32
      %s7908 = smul.addr %s7907, 8
      %s7909 = scalar_lea.vmem %s7, %s7908
      // Predicated region
      $region49: #{tpu_custom_call.1} parent=47 // pred_check
        %p7910 = pneg %p188
      $region50: #{tpu_custom_call.1} parent=47 // pred_check_branch
        %7912 = sbr.rel (%p7910) target = $region52
      $region51: #{tpu_custom_call.1} parent=47 // pred_region
        _
      $region52: #{tpu_custom_call.1} parent=47 // pred_fallthru
        _
    $region48: #{tpu_custom_call.1} parent=5 // pred_fallthru
      _
    %p7913 = scmp.le.s32.totalorder 2, %s13
    // Predicated region
    $region53: #{tpu_custom_call.1} parent=5 // pred_check
      %p7914 = pneg %p7913
    $region54: #{tpu_custom_call.1} parent=5 // pred_check_branch
      %7916 = sbr.rel (%p7914) target = $region56
    $region55: #{tpu_custom_call.1} parent=5 // pred_region
      %s7917 = ssub.s32 %s13, 2
      // Predicated region
      $region57: #{tpu_custom_call.1} parent=55 // pred_check
        %p7918 = pneg %p194
      $region58: #{tpu_custom_call.1} parent=55 // pred_check_branch
        %7920 = sbr.rel (%p7918) target = $region60
      $region59: #{tpu_custom_call.1} parent=55 // pred_region
        %p7921 = scmp.lt.s32.totalorder %s19, 1
        %s7922 = scalar_select %p7921, %s19, 1
        %s7923 = smul.addr %s7922, 32
        %s7924 = smul.addr %s7923, 8
        %s7925 = scalar_lea.vmem %s7, %s7924
      $region60: #{tpu_custom_call.1} parent=55 // pred_fallthru
        _
    $region56: #{tpu_custom_call.1} parent=5 // pred_fallthru
      _
  $region6: #{tpu_custom_call.1} parent=0 // loop_footer
    %s17 = sadd.s32 1, %s13
  $region7: #{tpu_custom_call.1} parent=0 // loop_footer_branch
    %12 = sbr.rel target = $region3
  $region8: #{tpu_custom_call.1} parent=0 // loop_exit
    _

</llo_original>
